<compile_context>
chip_gen: v6e
topology: v6e:2x2x1
jax: 0.10.0
libtpu: 0.0.40
codegen_flags: <defaults>
</compile_context>

<pallas_src>
import functools

import jax
import jax.numpy as jnp
from jax.experimental import pallas as pl
from jax.experimental.pallas import tpu as pltpu

# ------------------------- toy configuration ---------------------------------
B = 2                 # batch
C = 3                 # image channels
IMG = 32              # image size
PATCH = 16            # patch size (ViT base uses 16)
GRID = IMG // PATCH   # 2
NPATCH = GRID * GRID  # 4 patches
NTOK = NPATCH + 1     # +cls
CPP = C * PATCH * PATCH
D = 32                # vision_width == text hidden_size == encoder_width
NHEAD = 4
DH = D // NHEAD
VIT_DEPTH = 2
VIT_MLP = 4 * D
TXT_DEPTH = 2
TXT_MLP = 4 * D
VOCAB = 64
SEQ = 8
MAX_POS = 64
ENC_TOKEN_ID = 3      # stands in for tokenizer.enc_token_id ('[ENC]')
VIT_EPS = 1e-6        # timm LayerNorm eps
BERT_EPS = 1e-12      # BERT LayerNorm eps
ATT_SCALE = DH ** -0.5
VMEM_LIMIT = 48 * 1024 * 1024   # explicit scoped VMEM; headroom under v7x's 64 MiB


# --------------------- in-kernel helpers (f32 math) ---------------------------
def _ln(x, g, b, eps):
    mean = jnp.mean(x, axis=-1, keepdims=True)
    var = jnp.mean(jnp.square(x - mean), axis=-1, keepdims=True)
    return (x - mean) * jax.lax.rsqrt(var + eps) * g + b


def _mha(q_in, kv_in, sq, sk, bb, mask, qw, qb, kw, kb, vw, vb, ow, ob, ctx_sc):
    """Multi-head attention fused with the output projection.

    q_in:  (bb*sq, D) bf16 flattened queries (all batch rows).
    kv_in: (bb*sk, D) bf16 flattened keys/values.
    qw/kw/vw: (NHEAD, D, DH) bf16, qb/kb/vb: (NHEAD, 1, DH) f32  (lane-0 aligned).
    ow: (NHEAD, DH, D) bf16, ob: (1, D) f32.
    mask: None or (bb, sk) additive f32 key-padding mask.
    ctx_sc: (bb*sq, D) f32 VMEM scratch used to re-assemble the flat context.
    Returns (bb*sq, D) f32.
    concat_h(softmax(q_h k_h^T) v_h) @ W_o == sum_h o_h @ W_o[h]  (per-head acc).
    """
    parts = [None] * bb
    for h in range(NHEAD):
        # Projections on the full flattened slab (max M for the MXU).
        q = jnp.dot(q_in, qw[h], preferred_element_type=jnp.float32) + qb[h]
        k = jnp.dot(kv_in, kw[h], preferred_element_type=jnp.float32) + kb[h]
        v = jnp.dot(kv_in, vw[h], preferred_element_type=jnp.float32) + vb[h]
        qh = q.astype(jnp.bfloat16)
        kh = k.astype(jnp.bfloat16)
        vh = v.astype(jnp.bfloat16)
        # Per-batch score / softmax / PV (batch rows must not attend to each other).
        for b in range(bb):
            qs = qh[b * sq:(b + 1) * sq, :]
            ks = kh[b * sk:(b + 1) * sk, :]
            vs = vh[b * sk:(b + 1) * sk, :]
            s = jax.lax.dot_general(qs, ks, (((1,), (1,)), ((), ())),
                                    preferred_element_type=jnp.float32) * ATT_SCALE
            if mask is not None:
                s = s + mask[b:b + 1, :]          # (1, sk) broadcasts over queries
            s = s - jnp.max(s, axis=-1, keepdims=True)
            p = jnp.exp(s)
            p = p * pl.reciprocal(jnp.sum(p, axis=-1, keepdims=True), approx=True)
            o = jnp.dot(p.astype(jnp.bfloat16), vs,
                        preferred_element_type=jnp.float32)           # (sq, DH)
            part = jnp.dot(o.astype(jnp.bfloat16), ow[h],
                           preferred_element_type=jnp.float32)        # (sq, D)
            parts[b] = part if parts[b] is None else parts[b] + part
    for b in range(bb):
        ctx_sc[b * sq:(b + 1) * sq, :] = parts[b]
    return ctx_sc[...] + ob


# ------------------------- fused ViT encoder kernel ---------------------------
def _vit_kernel(patches_ref, pw_ref, pb_ref, cls_ref, pos_ref,
                n1g_ref, n1b_ref,
                qw_ref, qb_ref, kw_ref, kb_ref, vw_ref, vb_ref,
                ow_ref, ob_ref, n2g_ref, n2b_ref,
                f1w_ref, f1b_ref, f2w_ref, f2b_ref,
                ng_ref, nb_ref,
                o_ref, ctx_sc, *, bb):
    # Patch embedding on all bb*NPATCH rows at once (bf16 x bf16 -> f32 acc).
    pe = jnp.dot(patches_ref[0], pw_ref[...],
                 preferred_element_type=jnp.float32) + pb_ref[...]     # (bb*NPATCH, D)

    # Assemble x = [cls; patch_embeds] + pos for every batch row via scratch stores.
    pos = pos_ref[...]
    cls = cls_ref[...]
    for b in range(bb):
        ctx_sc[b * NTOK:b * NTOK + 1, :] = cls + pos[0:1, :]
        ctx_sc[b * NTOK + 1:(b + 1) * NTOK, :] = (
            pe[b * NPATCH:(b + 1) * NPATCH, :] + pos[1:, :])
    x = ctx_sc[...]                                                    # (bb*NTOK, D) f32

    for l in range(VIT_DEPTH):          # depth=2 -> static unroll is fine here
        h = _ln(x, n1g_ref[l], n1b_ref[l], VIT_EPS).astype(jnp.bfloat16)
        ctx = _mha(h, h, NTOK, NTOK, bb, None,
                   qw_ref[l], qb_ref[l], kw_ref[l], kb_ref[l],
                   vw_ref[l], vb_ref[l], ow_ref[l], ob_ref[l], ctx_sc)
        x = x + ctx
        h = _ln(x, n2g_ref[l], n2b_ref[l], VIT_EPS).astype(jnp.bfloat16)
        h = jax.nn.gelu(
            jnp.dot(h, f1w_ref[l], preferred_element_type=jnp.float32) + f1b_ref[l],
            approximate=True).astype(jnp.bfloat16)
        x = x + jnp.dot(h, f2w_ref[l], preferred_element_type=jnp.float32) + f2b_ref[l]

    o_ref[0] = _ln(x, ng_ref[...], nb_ref[...], VIT_EPS).astype(o_ref.dtype)


# ------------------------ fused BERT encoder kernel ---------------------------
def _bert_kernel(*refs, has_cross, bb):
    if has_cross:
        (x_ref, m_ref, enc_ref, eg_ref, eb_ref,
         sqw, sqb, skw, skb, svw, svb, sow, sob, slg, slb,
         cqw, cqb, ckw, ckb, cvw, cvb, cow, cob, clg, clb,
         fiw, fib, fow, fob, flg, flb,
         o_ref, ctx_sc) = refs
    else:
        (x_ref, m_ref, eg_ref, eb_ref,
         sqw, sqb, skw, skb, svw, svb, sow, sob, slg, slb,
         fiw, fib, fow, fob, flg, flb,
         o_ref, ctx_sc) = refs
        enc_ref = None

    x = _ln(x_ref[0].astype(jnp.float32), eg_ref[...], eb_ref[...], BERT_EPS)
    mask = m_ref[0]                                    # (bb, SEQ) additive f32 mask
    enc = enc_ref[0] if has_cross else None            # (bb*NTOK, D) bf16
    sv = NTOK if has_cross else 0

    for l in range(TXT_DEPTH):
        # self-attention + post-LN residual
        hb = x.astype(jnp.bfloat16)
        ctx = _mha(hb, hb, SEQ, SEQ, bb, mask,
                   sqw[l], sqb[l], skw[l], skb[l], svw[l], svb[l],
                   sow[l], sob[l], ctx_sc)
        x = _ln(ctx + x, slg[l], slb[l], BERT_EPS)
        if has_cross:
            # cross-attention to image embeds; image mask is all-ones -> no additive mask
            hb = x.astype(jnp.bfloat16)
            ctx = _mha(hb, enc, SEQ, sv, bb, None,
                       cqw[l], cqb[l], ckw[l], ckb[l], cvw[l], cvb[l],
                       cow[l], cob[l], ctx_sc)
            x = _ln(ctx + x, clg[l], clb[l], BERT_EPS)
        # feed-forward + post-LN residual
        hb = x.astype(jnp.bfloat16)
        hmid = jax.nn.gelu(
            jnp.dot(hb, fiw[l], preferred_element_type=jnp.float32) + fib[l],
            approximate=True).astype(jnp.bfloat16)
        x = _ln(jnp.dot(hmid, fow[l], preferred_element_type=jnp.float32) + fob[l] + x,
                flg[l], flb[l], BERT_EPS)

    o_ref[0] = x.astype(o_ref.dtype)


# ------------------------------- parameters ----------------------------------
def init_params(key):
    keys = iter(jax.random.split(key, 96))
    bf = jnp.bfloat16

    def nrm(shape, dtype=jnp.float32):
        return (0.02 * jax.random.normal(next(keys), shape, dtype=jnp.float32)
                ).astype(dtype)

    zeros = lambda s: jnp.zeros(s, jnp.float32)
    ones = lambda s: jnp.ones(s, jnp.float32)
    L, Lt, H = VIT_DEPTH, TXT_DEPTH, NHEAD

    # Matmul weights in bf16 (halved DMA bytes / VMEM, native MXU path);
    # biases / LN params / cls / pos in f32 (added after f32 accumulation).
    vit = dict(
        patch_w=nrm((CPP, D), bf), patch_b=zeros((1, D)),
        cls_token=nrm((1, D)), pos_embed=nrm((NTOK, D)),
        n1_g=ones((L, 1, D)), n1_b=zeros((L, 1, D)),
        q_w=nrm((L, H, D, DH), bf), q_b=zeros((L, H, 1, DH)),
        k_w=nrm((L, H, D, DH), bf), k_b=zeros((L, H, 1, DH)),
        v_w=nrm((L, H, D, DH), bf), v_b=zeros((L, H, 1, DH)),
        o_w=nrm((L, H, DH, D), bf), o_b=zeros((L, 1, D)),
        n2_g=ones((L, 1, D)), n2_b=zeros((L, 1, D)),
        fc1_w=nrm((L, D, VIT_MLP), bf), fc1_b=zeros((L, 1, VIT_MLP)),
        fc2_w=nrm((L, VIT_MLP, D), bf), fc2_b=zeros((L, 1, D)),
        norm_g=ones((1, D)), norm_b=zeros((1, D)),
    )
    bert = dict(
        word_emb=nrm((VOCAB, D)), pos_emb=nrm((MAX_POS, D)),
        emb_ln_g=ones((1, D)), emb_ln_b=zeros((1, D)),
        sa_q_w=nrm((Lt, H, D, DH), bf), sa_q_b=zeros((Lt, H, 1, DH)),
        sa_k_w=nrm((Lt, H, D, DH), bf), sa_k_b=zeros((Lt, H, 1, DH)),
        sa_v_w=nrm((Lt, H, D, DH), bf), sa_v_b=zeros((Lt, H, 1, DH)),
        sa_o_w=nrm((Lt, H, DH, D), bf), sa_o_b=zeros((Lt, 1, D)),
        sa_ln_g=ones((Lt, 1, D)), sa_ln_b=zeros((Lt, 1, D)),
        ca_q_w=nrm((Lt, H, D, DH), bf), ca_q_b=zeros((Lt, H, 1, DH)),
        ca_k_w=nrm((Lt, H, D, DH), bf), ca_k_b=zeros((Lt, H, 1, DH)),
        ca_v_w=nrm((Lt, H, D, DH), bf), ca_v_b=zeros((Lt, H, 1, DH)),
        ca_o_w=nrm((Lt, H, DH, D), bf), ca_o_b=zeros((Lt, 1, D)),
        ca_ln_g=ones((Lt, 1, D)), ca_ln_b=zeros((Lt, 1, D)),
        ff_i_w=nrm((Lt, D, TXT_MLP), bf), ff_i_b=zeros((Lt, 1, TXT_MLP)),
        ff_o_w=nrm((Lt, TXT_MLP, D), bf), ff_o_b=zeros((Lt, 1, D)),
        ff_ln_g=ones((Lt, 1, D)), ff_ln_b=zeros((Lt, 1, D)),
    )
    return dict(vit=vit, bert=bert)


# ------------------------------- wrappers -------------------------------------
def _const_spec(a):
    """Full-array block, same block for every grid step (weights DMA'd once)."""
    nd = a.ndim
    return pl.BlockSpec(a.shape, lambda i, _nd=nd: (0,) * _nd)


def _pick_bb(b):
    """Batch rows per program: full batch on 1-TC chips (v5e/v6e), split on v7x."""
    try:
        kind = jax.devices()[0].device_kind.lower()
    except Exception:  # pragma: no cover - defensive
        kind = ""
    if "v7" in kind and b % 2 == 0:
        return max(1, b // 2)
    return b


def _compiler_params():
    return pltpu.CompilerParams(dimension_semantics=("parallel",),
                                vmem_limit_bytes=VMEM_LIMIT)


def vit_forward(p, image):
    b = image.shape[0]
    bb = _pick_bb(b)
    nblk = b // bb
    # Conv2d(patch, stride=patch) == patchify with (c, ph, pw) flatten order + matmul
    x = image.reshape(b, C, GRID, PATCH, GRID, PATCH)
    patches = x.transpose(0, 2, 4, 1, 3, 5).reshape(nblk, bb * NPATCH, CPP)
    patches = patches.astype(jnp.bfloat16)

    weights = [p["patch_w"], p["patch_b"], p["cls_token"], p["pos_embed"],
               p["n1_g"], p["n1_b"],
               p["q_w"], p["q_b"], p["k_w"], p["k_b"], p["v_w"], p["v_b"],
               p["o_w"], p["o_b"], p["n2_g"], p["n2_b"],
               p["fc1_w"], p["fc1_b"], p["fc2_w"], p["fc2_b"],
               p["norm_g"], p["norm_b"]]
    in_specs = ([pl.BlockSpec((1, bb * NPATCH, CPP), lambda i: (i, 0, 0))]
                + [_const_spec(w) for w in weights])
    out = pl.pallas_call(
        functools.partial(_vit_kernel, bb=bb),
        grid=(nblk,),
        in_specs=in_specs,
        out_specs=pl.BlockSpec((1, bb * NTOK, D), lambda i: (i, 0, 0)),
        out_shape=jax.ShapeDtypeStruct((nblk, bb * NTOK, D), jnp.float32),
        scratch_shapes=[pltpu.VMEM((bb * NTOK, D), jnp.float32)],
        compiler_params=_compiler_params(),
    )(patches, *weights)
    return out.reshape(b, NTOK, D)


def bert_forward(p, input_ids, attention_mask, enc_hidden=None):
    b, seq = input_ids.shape
    bb = _pick_bb(b)
    nblk = b // bb
    # word + position embeddings (token_type omitted, as in BLIP's med BERT)
    x = jnp.take(p["word_emb"], input_ids, axis=0) + p["pos_emb"][None, :seq, :]
    x = x.reshape(nblk, bb * seq, D).astype(jnp.bfloat16)
    # additive key-padding mask kept at (nblk, bb, seq): no head/query broadcast in HBM
    add_mask = ((1.0 - attention_mask.astype(jnp.float32)) * -10000.0
                ).reshape(nblk, bb, seq)
    has_cross = enc_hidden is not None

    inputs = [x, add_mask]
    in_specs = [pl.BlockSpec((1, bb * seq, D), lambda i: (i, 0, 0)),
                pl.BlockSpec((1, bb, seq), lambda i: (i, 0, 0))]
    if has_cross:
        sv = enc_hidden.shape[1]
        enc = enc_hidden.reshape(nblk, bb * sv, D).astype(jnp.bfloat16)
        inputs.append(enc)
        in_specs.append(pl.BlockSpec((1, bb * sv, D), lambda i: (i, 0, 0)))

    weights = [p["emb_ln_g"], p["emb_ln_b"],
               p["sa_q_w"], p["sa_q_b"], p["sa_k_w"], p["sa_k_b"],
               p["sa_v_w"], p["sa_v_b"], p["sa_o_w"], p["sa_o_b"],
               p["sa_ln_g"], p["sa_ln_b"]]
    if has_cross:
        weights += [p["ca_q_w"], p["ca_q_b"], p["ca_k_w"], p["ca_k_b"],
                    p["ca_v_w"], p["ca_v_b"], p["ca_o_w"], p["ca_o_b"],
                    p["ca_ln_g"], p["ca_ln_b"]]
    weights += [p["ff_i_w"], p["ff_i_b"], p["ff_o_w"], p["ff_o_b"],
                p["ff_ln_g"], p["ff_ln_b"]]
    inputs += weights
    in_specs += [_const_spec(w) for w in weights]

    out = pl.pallas_call(
        functools.partial(_bert_kernel, has_cross=has_cross, bb=bb),
        grid=(nblk,),
        in_specs=in_specs,
        out_specs=pl.BlockSpec((1, bb * seq, D), lambda i: (i, 0, 0)),
        out_shape=jax.ShapeDtypeStruct((nblk, bb * seq, D), jnp.float32),
        scratch_shapes=[pltpu.VMEM((bb * seq, D), jnp.float32)],
        compiler_params=_compiler_params(),
    )(*inputs)
    return out.reshape(b, seq, D)


# ---------------------------- BLIP_Base.forward --------------------------------
def blip_base_forward(params, image, input_ids, attention_mask, mode):
    assert mode in ("image", "text", "multimodal"), \
        "mode parameter must be image, text, or multimodal"
    if mode == "image":
        return vit_forward(params["vit"], image)
    if mode == "text":
        return bert_forward(params["bert"], input_ids, attention_mask)
    # multimodal: image_atts = ones -> cross-attention additive mask is identically 0
    image_embeds = vit_forward(params["vit"], image)
    input_ids = input_ids.at[:, 0].set(ENC_TOKEN_ID)   # text.input_ids[:, 0] = enc_token_id
    return bert_forward(params["bert"], input_ids, attention_mask,
                        enc_hidden=image_embeds)


# ----------------------------------- main --------------------------------------
if __name__ == "__main__":
    key = jax.random.PRNGKey(0)
    pkey, ikey, tkey = jax.random.split(key, 3)

    params = init_params(pkey)
    image = jax.random.normal(ikey, (B, C, IMG, IMG), dtype=jnp.float32)

    # TODO(synk): BertTokenizer has no JAX/Pallas equivalent; use deterministic
    # synthetic token ids + all-ones attention mask in place of tokenizer(caption).
    input_ids = jax.random.randint(tkey, (B, SEQ), 5, VOCAB, dtype=jnp.int32)
    input_ids = input_ids.at[:, 0].set(1)  # bos-like token
    attention_mask = jnp.ones((B, SEQ), dtype=jnp.int32)

    forward = jax.jit(blip_base_forward, static_argnames=("mode",))
    img_out = forward(params, image, input_ids, attention_mask, mode="image")
    txt_out = forward(params, image, input_ids, attention_mask, mode="text")
    mm_out = forward(params, image, input_ids, attention_mask, mode="multimodal")
    jax.block_until_ready((img_out, txt_out, mm_out))

    assert img_out.shape == (B, NTOK, D)
    assert txt_out.shape == (B, SEQ, D)
    assert mm_out.shape == (B, SEQ, D)
    print("KERNEL_OK")
</pallas_src>

<mosaic_0001>
module attributes {stable_mosaic.version = 11 : i64} {
  func.func @_vit_kernel(%arg0: i32, %arg1: memref<1x8x768xbf16, #tpu.memory_space<vmem>>, %arg2: memref<768x32xbf16, #tpu.memory_space<vmem>>, %arg3: memref<1x32xf32, #tpu.memory_space<vmem>>, %arg4: memref<1x32xf32, #tpu.memory_space<vmem>>, %arg5: memref<5x32xf32, #tpu.memory_space<vmem>>, %arg6: memref<2x1x32xf32, #tpu.memory_space<vmem>>, %arg7: memref<2x1x32xf32, #tpu.memory_space<vmem>>, %arg8: memref<2x4x32x8xbf16, #tpu.memory_space<vmem>>, %arg9: memref<2x4x1x8xf32, #tpu.memory_space<vmem>>, %arg10: memref<2x4x32x8xbf16, #tpu.memory_space<vmem>>, %arg11: memref<2x4x1x8xf32, #tpu.memory_space<vmem>>, %arg12: memref<2x4x32x8xbf16, #tpu.memory_space<vmem>>, %arg13: memref<2x4x1x8xf32, #tpu.memory_space<vmem>>, %arg14: memref<2x4x8x32xbf16, #tpu.memory_space<vmem>>, %arg15: memref<2x1x32xf32, #tpu.memory_space<vmem>>, %arg16: memref<2x1x32xf32, #tpu.memory_space<vmem>>, %arg17: memref<2x1x32xf32, #tpu.memory_space<vmem>>, %arg18: memref<2x32x128xbf16, #tpu.memory_space<vmem>>, %arg19: memref<2x1x128xf32, #tpu.memory_space<vmem>>, %arg20: memref<2x128x32xbf16, #tpu.memory_space<vmem>>, %arg21: memref<2x1x32xf32, #tpu.memory_space<vmem>>, %arg22: memref<1x32xf32, #tpu.memory_space<vmem>>, %arg23: memref<1x32xf32, #tpu.memory_space<vmem>>, %arg24: memref<1x10x32xf32, #tpu.memory_space<vmem>>, %arg25: memref<10x32xf32, #tpu.memory_space<vmem>>) attributes {dimension_semantics = [#tpu.dimension_semantics<parallel>], iteration_bounds = array<i64: 1>, scalar_prefetch = 0 : i64, scratch_operands = 1 : i64, tpu.core_type = #tpu.core_type<tc>, window_params = [{transform_indices = @transform_0, window_bounds = array<i64: 1, 8, 768>}, {pipeline_mode = #tpu.pipeline_mode<synchronous>, transform_indices = @transform_1, window_bounds = array<i64: 768, 32>}, {pipeline_mode = #tpu.pipeline_mode<synchronous>, transform_indices = @transform_2, window_bounds = array<i64: 1, 32>}, {pipeline_mode = #tpu.pipeline_mode<synchronous>, transform_indices = @transform_3, window_bounds = array<i64: 1, 32>}, {pipeline_mode = #tpu.pipeline_mode<synchronous>, transform_indices = @transform_4, window_bounds = array<i64: 5, 32>}, {pipeline_mode = #tpu.pipeline_mode<synchronous>, transform_indices = @transform_5, window_bounds = array<i64: 2, 1, 32>}, {pipeline_mode = #tpu.pipeline_mode<synchronous>, transform_indices = @transform_6, window_bounds = array<i64: 2, 1, 32>}, {pipeline_mode = #tpu.pipeline_mode<synchronous>, transform_indices = @transform_7, window_bounds = array<i64: 2, 4, 32, 8>}, {pipeline_mode = #tpu.pipeline_mode<synchronous>, transform_indices = @transform_8, window_bounds = array<i64: 2, 4, 1, 8>}, {pipeline_mode = #tpu.pipeline_mode<synchronous>, transform_indices = @transform_9, window_bounds = array<i64: 2, 4, 32, 8>}, {pipeline_mode = #tpu.pipeline_mode<synchronous>, transform_indices = @transform_10, window_bounds = array<i64: 2, 4, 1, 8>}, {pipeline_mode = #tpu.pipeline_mode<synchronous>, transform_indices = @transform_11, window_bounds = array<i64: 2, 4, 32, 8>}, {pipeline_mode = #tpu.pipeline_mode<synchronous>, transform_indices = @transform_12, window_bounds = array<i64: 2, 4, 1, 8>}, {pipeline_mode = #tpu.pipeline_mode<synchronous>, transform_indices = @transform_13, window_bounds = array<i64: 2, 4, 8, 32>}, {pipeline_mode = #tpu.pipeline_mode<synchronous>, transform_indices = @transform_14, window_bounds = array<i64: 2, 1, 32>}, {pipeline_mode = #tpu.pipeline_mode<synchronous>, transform_indices = @transform_15, window_bounds = array<i64: 2, 1, 32>}, {pipeline_mode = #tpu.pipeline_mode<synchronous>, transform_indices = @transform_16, window_bounds = array<i64: 2, 1, 32>}, {pipeline_mode = #tpu.pipeline_mode<synchronous>, transform_indices = @transform_17, window_bounds = array<i64: 2, 32, 128>}, {pipeline_mode = #tpu.pipeline_mode<synchronous>, transform_indices = @transform_18, window_bounds = array<i64: 2, 1, 128>}, {pipeline_mode = #tpu.pipeline_mode<synchronous>, transform_indices = @transform_19, window_bounds = array<i64: 2, 128, 32>}, {pipeline_mode = #tpu.pipeline_mode<synchronous>, transform_indices = @transform_20, window_bounds = array<i64: 2, 1, 32>}, {pipeline_mode = #tpu.pipeline_mode<synchronous>, transform_indices = @transform_21, window_bounds = array<i64: 1, 32>}, {pipeline_mode = #tpu.pipeline_mode<synchronous>, transform_indices = @transform_22, window_bounds = array<i64: 1, 32>}, {transform_indices = @transform_23, window_bounds = array<i64: 1, 10, 32>}]} {
    %c0 = arith.constant 0 : index
    %c0_0 = arith.constant 0 : index
    %c0_1 = arith.constant 0 : index
    %0 = vector.load %arg1[%c0, %c0_0, %c0_1] : memref<1x8x768xbf16, #tpu.memory_space<vmem>>, vector<1x8x768xbf16>
    %1 = vector.shape_cast %0 : vector<1x8x768xbf16> to vector<8x768xbf16>
    %c0_2 = arith.constant 0 : index
    %c0_3 = arith.constant 0 : index
    %2 = vector.load %arg2[%c0_2, %c0_3] : memref<768x32xbf16, #tpu.memory_space<vmem>>, vector<768x32xbf16>
    %cst = arith.constant dense<0.000000e+00> : vector<8x32xf32>
    %3 = tpu.matmul %1, %2, %cst {dimension_numbers = #tpu.dot_dimension_numbers<[1], [0], [0], [1], [0, 0, 1, 1], [], []>} : vector<8x768xbf16>, vector<768x32xbf16>, vector<8x32xf32> -> vector<8x32xf32>
    %c0_4 = arith.constant 0 : index
    %c0_5 = arith.constant 0 : index
    %4 = vector.load %arg3[%c0_4, %c0_5] : memref<1x32xf32, #tpu.memory_space<vmem>>, vector<1x32xf32>
    %5 = vector.broadcast %4 : vector<1x32xf32> to vector<8x32xf32>
    %6 = arith.addf %3, %5 : vector<8x32xf32>
    %c0_6 = arith.constant 0 : index
    %c0_7 = arith.constant 0 : index
    %7 = vector.load %arg5[%c0_6, %c0_7] : memref<5x32xf32, #tpu.memory_space<vmem>>, vector<5x32xf32>
    %c0_8 = arith.constant 0 : index
    %c0_9 = arith.constant 0 : index
    %8 = vector.load %arg4[%c0_8, %c0_9] : memref<1x32xf32, #tpu.memory_space<vmem>>, vector<1x32xf32>
    %9 = vector.extract_strided_slice %7 {offsets = [0, 0], sizes = [1, 32], strides = [1, 1]} : vector<5x32xf32> to vector<1x32xf32>
    %10 = arith.addf %8, %9 : vector<1x32xf32>
    %c0_10 = arith.constant 0 : index
    %c0_11 = arith.constant 0 : index
    %11 = vector.load %arg25[%c0_10, %c0_11] : memref<10x32xf32, #tpu.memory_space<vmem>>, vector<1x32xf32>
    tpu.vector_store %arg25[%c0_10, %c0_11], %10 {strides = array<i32>} : memref<10x32xf32, #tpu.memory_space<vmem>>, vector<1x32xf32>,
    %12 = vector.extract_strided_slice %6 {offsets = [0, 0], sizes = [4, 32], strides = [1, 1]} : vector<8x32xf32> to vector<4x32xf32>
    %13 = vector.extract_strided_slice %7 {offsets = [1, 0], sizes = [4, 32], strides = [1, 1]} : vector<5x32xf32> to vector<4x32xf32>
    %14 = arith.addf %12, %13 : vector<4x32xf32>
    %c1 = arith.constant 1 : index
    %c0_12 = arith.constant 0 : index
    %15 = vector.load %arg25[%c1, %c0_12] : memref<10x32xf32, #tpu.memory_space<vmem>>, vector<4x32xf32>
    tpu.vector_store %arg25[%c1, %c0_12], %14 {strides = array<i32>} : memref<10x32xf32, #tpu.memory_space<vmem>>, vector<4x32xf32>,
    %16 = vector.extract_strided_slice %7 {offsets = [0, 0], sizes = [1, 32], strides = [1, 1]} : vector<5x32xf32> to vector<1x32xf32>
    %17 = arith.addf %8, %16 : vector<1x32xf32>
    %c5 = arith.constant 5 : index
    %c0_13 = arith.constant 0 : index
    %18 = vector.load %arg25[%c5, %c0_13] : memref<10x32xf32, #tpu.memory_space<vmem>>, vector<1x32xf32>
    tpu.vector_store %arg25[%c5, %c0_13], %17 {strides = array<i32>} : memref<10x32xf32, #tpu.memory_space<vmem>>, vector<1x32xf32>,
    %19 = vector.extract_strided_slice %6 {offsets = [4, 0], sizes = [4, 32], strides = [1, 1]} : vector<8x32xf32> to vector<4x32xf32>
    %20 = vector.extract_strided_slice %7 {offsets = [1, 0], sizes = [4, 32], strides = [1, 1]} : vector<5x32xf32> to vector<4x32xf32>
    %21 = arith.addf %19, %20 : vector<4x32xf32>
    %c6 = arith.constant 6 : index
    %c0_14 = arith.constant 0 : index
    %22 = vector.load %arg25[%c6, %c0_14] : memref<10x32xf32, #tpu.memory_space<vmem>>, vector<4x32xf32>
    tpu.vector_store %arg25[%c6, %c0_14], %21 {strides = array<i32>} : memref<10x32xf32, #tpu.memory_space<vmem>>, vector<4x32xf32>,
    %c0_15 = arith.constant 0 : index
    %c0_16 = arith.constant 0 : index
    %23 = vector.load %arg25[%c0_15, %c0_16] : memref<10x32xf32, #tpu.memory_space<vmem>>, vector<10x32xf32>
    %c0_17 = arith.constant 0 : index
    %c0_18 = arith.constant 0 : index
    %c0_19 = arith.constant 0 : index
    %24 = vector.load %arg6[%c0_17, %c0_18, %c0_19] : memref<2x1x32xf32, #tpu.memory_space<vmem>>, vector<1x1x32xf32>
    %25 = vector.shape_cast %24 : vector<1x1x32xf32> to vector<1x32xf32>
    %c0_20 = arith.constant 0 : index
    %c0_21 = arith.constant 0 : index
    %c0_22 = arith.constant 0 : index
    %26 = vector.load %arg7[%c0_20, %c0_21, %c0_22] : memref<2x1x32xf32, #tpu.memory_space<vmem>>, vector<1x1x32xf32>
    %27 = vector.shape_cast %26 : vector<1x1x32xf32> to vector<1x32xf32>
    %cst_23 = arith.constant dense<0.000000e+00> : vector<10xf32>
    %28 = vector.multi_reduction <add>, %23, %cst_23 [1] : vector<10x32xf32> to vector<10xf32>
    %29 = vector.shape_cast %28 : vector<10xf32> to vector<10x1xf32>
    %cst_24 = arith.constant 3.200000e+01 : f32
    %30 = vector.broadcast %cst_24 : f32 to vector<10x1xf32>
    %31 = arith.divf %29, %30 : vector<10x1xf32>
    %32 = vector.broadcast %31 : vector<10x1xf32> to vector<10x32xf32>
    %33 = arith.subf %23, %32 : vector<10x32xf32>
    %34 = arith.mulf %33, %33 : vector<10x32xf32>
    %cst_25 = arith.constant dense<0.000000e+00> : vector<10xf32>
    %35 = vector.multi_reduction <add>, %34, %cst_25 [1] : vector<10x32xf32> to vector<10xf32>
    %36 = vector.shape_cast %35 : vector<10xf32> to vector<10x1xf32>
    %cst_26 = arith.constant 3.200000e+01 : f32
    %37 = vector.broadcast %cst_26 : f32 to vector<10x1xf32>
    %38 = arith.divf %36, %37 : vector<10x1xf32>
    %39 = vector.broadcast %31 : vector<10x1xf32> to vector<10x32xf32>
    %40 = arith.subf %23, %39 : vector<10x32xf32>
    %cst_27 = arith.constant 9.99999997E-7 : f32
    %41 = vector.broadcast %cst_27 : f32 to vector<10x1xf32>
    %42 = arith.addf %38, %41 : vector<10x1xf32>
    %43 = math.rsqrt %42 : vector<10x1xf32>
    %44 = vector.broadcast %43 : vector<10x1xf32> to vector<10x32xf32>
    %45 = arith.mulf %40, %44 : vector<10x32xf32>
    %46 = vector.broadcast %25 : vector<1x32xf32> to vector<10x32xf32>
    %47 = arith.mulf %45, %46 : vector<10x32xf32>
    %48 = vector.broadcast %27 : vector<1x32xf32> to vector<10x32xf32>
    %49 = arith.addf %47, %48 : vector<10x32xf32>
    %50 = arith.truncf %49 : vector<10x32xf32> to vector<10x32xbf16>
    %c0_28 = arith.constant 0 : index
    %c0_29 = arith.constant 0 : index
    %c0_30 = arith.constant 0 : index
    %c0_31 = arith.constant 0 : index
    %51 = vector.load %arg8[%c0_28, %c0_29, %c0_30, %c0_31] : memref<2x4x32x8xbf16, #tpu.memory_space<vmem>>, vector<1x4x32x8xbf16>
    %52 = vector.shape_cast %51 : vector<1x4x32x8xbf16> to vector<4x32x8xbf16>
    %c0_32 = arith.constant 0 : index
    %c0_33 = arith.constant 0 : index
    %c0_34 = arith.constant 0 : index
    %c0_35 = arith.constant 0 : index
    %53 = vector.load %arg9[%c0_32, %c0_33, %c0_34, %c0_35] : memref<2x4x1x8xf32, #tpu.memory_space<vmem>>, vector<1x4x1x8xf32>
    %54 = vector.shape_cast %53 : vector<1x4x1x8xf32> to vector<4x1x8xf32>
    %c0_36 = arith.constant 0 : index
    %c0_37 = arith.constant 0 : index
    %c0_38 = arith.constant 0 : index
    %c0_39 = arith.constant 0 : index
    %55 = vector.load %arg10[%c0_36, %c0_37, %c0_38, %c0_39] : memref<2x4x32x8xbf16, #tpu.memory_space<vmem>>, vector<1x4x32x8xbf16>
    %56 = vector.shape_cast %55 : vector<1x4x32x8xbf16> to vector<4x32x8xbf16>
    %c0_40 = arith.constant 0 : index
    %c0_41 = arith.constant 0 : index
    %c0_42 = arith.constant 0 : index
    %c0_43 = arith.constant 0 : index
    %57 = vector.load %arg11[%c0_40, %c0_41, %c0_42, %c0_43] : memref<2x4x1x8xf32, #tpu.memory_space<vmem>>, vector<1x4x1x8xf32>
    %58 = vector.shape_cast %57 : vector<1x4x1x8xf32> to vector<4x1x8xf32>
    %c0_44 = arith.constant 0 : index
    %c0_45 = arith.constant 0 : index
    %c0_46 = arith.constant 0 : index
    %c0_47 = arith.constant 0 : index
    %59 = vector.load %arg12[%c0_44, %c0_45, %c0_46, %c0_47] : memref<2x4x32x8xbf16, #tpu.memory_space<vmem>>, vector<1x4x32x8xbf16>
    %60 = vector.shape_cast %59 : vector<1x4x32x8xbf16> to vector<4x32x8xbf16>
    %c0_48 = arith.constant 0 : index
    %c0_49 = arith.constant 0 : index
    %c0_50 = arith.constant 0 : index
    %c0_51 = arith.constant 0 : index
    %61 = vector.load %arg13[%c0_48, %c0_49, %c0_50, %c0_51] : memref<2x4x1x8xf32, #tpu.memory_space<vmem>>, vector<1x4x1x8xf32>
    %62 = vector.shape_cast %61 : vector<1x4x1x8xf32> to vector<4x1x8xf32>
    %c0_52 = arith.constant 0 : index
    %c0_53 = arith.constant 0 : index
    %c0_54 = arith.constant 0 : index
    %c0_55 = arith.constant 0 : index
    %63 = vector.load %arg14[%c0_52, %c0_53, %c0_54, %c0_55] : memref<2x4x8x32xbf16, #tpu.memory_space<vmem>>, vector<1x4x8x32xbf16>
    %64 = vector.shape_cast %63 : vector<1x4x8x32xbf16> to vector<4x8x32xbf16>
    %c0_56 = arith.constant 0 : index
    %c0_57 = arith.constant 0 : index
    %c0_58 = arith.constant 0 : index
    %65 = vector.load %arg15[%c0_56, %c0_57, %c0_58] : memref<2x1x32xf32, #tpu.memory_space<vmem>>, vector<1x1x32xf32>
    %66 = vector.shape_cast %65 : vector<1x1x32xf32> to vector<1x32xf32>
    %67 = vector.extract_strided_slice %52 {offsets = [0, 0, 0], sizes = [1, 32, 8], strides = [1, 1, 1]} : vector<4x32x8xbf16> to vector<1x32x8xbf16>
    %68 = vector.shape_cast %67 : vector<1x32x8xbf16> to vector<32x8xbf16>
    %cst_59 = arith.constant dense<0.000000e+00> : vector<10x8xf32>
    %69 = tpu.matmul %50, %68, %cst_59 {dimension_numbers = #tpu.dot_dimension_numbers<[1], [0], [0], [1], [0, 0, 1, 1], [], []>} : vector<10x32xbf16>, vector<32x8xbf16>, vector<10x8xf32> -> vector<10x8xf32>
    %70 = vector.extract_strided_slice %54 {offsets = [0, 0, 0], sizes = [1, 1, 8], strides = [1, 1, 1]} : vector<4x1x8xf32> to vector<1x1x8xf32>
    %71 = vector.shape_cast %70 : vector<1x1x8xf32> to vector<1x8xf32>
    %72 = vector.broadcast %71 : vector<1x8xf32> to vector<10x8xf32>
    %73 = arith.addf %69, %72 : vector<10x8xf32>
    %74 = vector.extract_strided_slice %56 {offsets = [0, 0, 0], sizes = [1, 32, 8], strides = [1, 1, 1]} : vector<4x32x8xbf16> to vector<1x32x8xbf16>
    %75 = vector.shape_cast %74 : vector<1x32x8xbf16> to vector<32x8xbf16>
    %cst_60 = arith.constant dense<0.000000e+00> : vector<10x8xf32>
    %76 = tpu.matmul %50, %75, %cst_60 {dimension_numbers = #tpu.dot_dimension_numbers<[1], [0], [0], [1], [0, 0, 1, 1], [], []>} : vector<10x32xbf16>, vector<32x8xbf16>, vector<10x8xf32> -> vector<10x8xf32>
    %77 = vector.extract_strided_slice %58 {offsets = [0, 0, 0], sizes = [1, 1, 8], strides = [1, 1, 1]} : vector<4x1x8xf32> to vector<1x1x8xf32>
    %78 = vector.shape_cast %77 : vector<1x1x8xf32> to vector<1x8xf32>
    %79 = vector.broadcast %78 : vector<1x8xf32> to vector<10x8xf32>
    %80 = arith.addf %76, %79 : vector<10x8xf32>
    %81 = vector.extract_strided_slice %60 {offsets = [0, 0, 0], sizes = [1, 32, 8], strides = [1, 1, 1]} : vector<4x32x8xbf16> to vector<1x32x8xbf16>
    %82 = vector.shape_cast %81 : vector<1x32x8xbf16> to vector<32x8xbf16>
    %cst_61 = arith.constant dense<0.000000e+00> : vector<10x8xf32>
    %83 = tpu.matmul %50, %82, %cst_61 {dimension_numbers = #tpu.dot_dimension_numbers<[1], [0], [0], [1], [0, 0, 1, 1], [], []>} : vector<10x32xbf16>, vector<32x8xbf16>, vector<10x8xf32> -> vector<10x8xf32>
    %84 = vector.extract_strided_slice %62 {offsets = [0, 0, 0], sizes = [1, 1, 8], strides = [1, 1, 1]} : vector<4x1x8xf32> to vector<1x1x8xf32>
    %85 = vector.shape_cast %84 : vector<1x1x8xf32> to vector<1x8xf32>
    %86 = vector.broadcast %85 : vector<1x8xf32> to vector<10x8xf32>
    %87 = arith.addf %83, %86 : vector<10x8xf32>
    %88 = arith.truncf %73 : vector<10x8xf32> to vector<10x8xbf16>
    %89 = arith.truncf %80 : vector<10x8xf32> to vector<10x8xbf16>
    %90 = arith.truncf %87 : vector<10x8xf32> to vector<10x8xbf16>
    %91 = vector.extract_strided_slice %88 {offsets = [0, 0], sizes = [5, 8], strides = [1, 1]} : vector<10x8xbf16> to vector<5x8xbf16>
    %92 = vector.extract_strided_slice %89 {offsets = [0, 0], sizes = [5, 8], strides = [1, 1]} : vector<10x8xbf16> to vector<5x8xbf16>
    %93 = vector.extract_strided_slice %90 {offsets = [0, 0], sizes = [5, 8], strides = [1, 1]} : vector<10x8xbf16> to vector<5x8xbf16>
    %cst_62 = arith.constant dense<0.000000e+00> : vector<5x5xf32>
    %94 = tpu.matmul %91, %92, %cst_62 {dimension_numbers = #tpu.dot_dimension_numbers<[1], [1], [0], [0], [0, 0, 1, 0], [], []>} : vector<5x8xbf16>, vector<5x8xbf16>, vector<5x5xf32> -> vector<5x5xf32>
    %cst_63 = arith.constant 0.353553385 : f32
    %95 = vector.broadcast %cst_63 : f32 to vector<5x5xf32>
    %96 = arith.mulf %94, %95 : vector<5x5xf32>
    %cst_64 = arith.constant dense<0xFF800000> : vector<5xf32>
    %97 = vector.multi_reduction <maximumf>, %96, %cst_64 [1] : vector<5x5xf32> to vector<5xf32>
    %98 = vector.shape_cast %97 : vector<5xf32> to vector<5x1xf32>
    %99 = vector.broadcast %98 : vector<5x1xf32> to vector<5x5xf32>
    %100 = arith.subf %96, %99 : vector<5x5xf32>
    %101 = math.exp %100 : vector<5x5xf32>
    %cst_65 = arith.constant dense<0.000000e+00> : vector<5xf32>
    %102 = vector.multi_reduction <add>, %101, %cst_65 [1] : vector<5x5xf32> to vector<5xf32>
    %103 = vector.shape_cast %102 : vector<5xf32> to vector<5x1xf32>
    %104 = tpu.reciprocal %103 {approx = true} : vector<5x1xf32> -> vector<5x1xf32>
    %105 = vector.broadcast %104 : vector<5x1xf32> to vector<5x5xf32>
    %106 = arith.mulf %101, %105 : vector<5x5xf32>
    %107 = arith.truncf %106 : vector<5x5xf32> to vector<5x5xbf16>
    %cst_66 = arith.constant dense<0.000000e+00> : vector<5x8xf32>
    %108 = tpu.matmul %107, %93, %cst_66 {dimension_numbers = #tpu.dot_dimension_numbers<[1], [0], [0], [1], [0, 0, 1, 1], [], []>} : vector<5x5xbf16>, vector<5x8xbf16>, vector<5x8xf32> -> vector<5x8xf32>
    %109 = arith.truncf %108 : vector<5x8xf32> to vector<5x8xbf16>
    %110 = vector.extract_strided_slice %64 {offsets = [0, 0, 0], sizes = [1, 8, 32], strides = [1, 1, 1]} : vector<4x8x32xbf16> to vector<1x8x32xbf16>
    %111 = vector.shape_cast %110 : vector<1x8x32xbf16> to vector<8x32xbf16>
    %cst_67 = arith.constant dense<0.000000e+00> : vector<5x32xf32>
    %112 = tpu.matmul %109, %111, %cst_67 {dimension_numbers = #tpu.dot_dimension_numbers<[1], [0], [0], [1], [0, 0, 1, 1], [], []>} : vector<5x8xbf16>, vector<8x32xbf16>, vector<5x32xf32> -> vector<5x32xf32>
    %113 = vector.extract_strided_slice %88 {offsets = [5, 0], sizes = [5, 8], strides = [1, 1]} : vector<10x8xbf16> to vector<5x8xbf16>
    %114 = vector.extract_strided_slice %89 {offsets = [5, 0], sizes = [5, 8], strides = [1, 1]} : vector<10x8xbf16> to vector<5x8xbf16>
    %115 = vector.extract_strided_slice %90 {offsets = [5, 0], sizes = [5, 8], strides = [1, 1]} : vector<10x8xbf16> to vector<5x8xbf16>
    %cst_68 = arith.constant dense<0.000000e+00> : vector<5x5xf32>
    %116 = tpu.matmul %113, %114, %cst_68 {dimension_numbers = #tpu.dot_dimension_numbers<[1], [1], [0], [0], [0, 0, 1, 0], [], []>} : vector<5x8xbf16>, vector<5x8xbf16>, vector<5x5xf32> -> vector<5x5xf32>
    %cst_69 = arith.constant 0.353553385 : f32
    %117 = vector.broadcast %cst_69 : f32 to vector<5x5xf32>
    %118 = arith.mulf %116, %117 : vector<5x5xf32>
    %cst_70 = arith.constant dense<0xFF800000> : vector<5xf32>
    %119 = vector.multi_reduction <maximumf>, %118, %cst_70 [1] : vector<5x5xf32> to vector<5xf32>
    %120 = vector.shape_cast %119 : vector<5xf32> to vector<5x1xf32>
    %121 = vector.broadcast %120 : vector<5x1xf32> to vector<5x5xf32>
    %122 = arith.subf %118, %121 : vector<5x5xf32>
    %123 = math.exp %122 : vector<5x5xf32>
    %cst_71 = arith.constant dense<0.000000e+00> : vector<5xf32>
    %124 = vector.multi_reduction <add>, %123, %cst_71 [1] : vector<5x5xf32> to vector<5xf32>
    %125 = vector.shape_cast %124 : vector<5xf32> to vector<5x1xf32>
    %126 = tpu.reciprocal %125 {approx = true} : vector<5x1xf32> -> vector<5x1xf32>
    %127 = vector.broadcast %126 : vector<5x1xf32> to vector<5x5xf32>
    %128 = arith.mulf %123, %127 : vector<5x5xf32>
    %129 = arith.truncf %128 : vector<5x5xf32> to vector<5x5xbf16>
    %cst_72 = arith.constant dense<0.000000e+00> : vector<5x8xf32>
    %130 = tpu.matmul %129, %115, %cst_72 {dimension_numbers = #tpu.dot_dimension_numbers<[1], [0], [0], [1], [0, 0, 1, 1], [], []>} : vector<5x5xbf16>, vector<5x8xbf16>, vector<5x8xf32> -> vector<5x8xf32>
    %131 = arith.truncf %130 : vector<5x8xf32> to vector<5x8xbf16>
    %132 = vector.extract_strided_slice %64 {offsets = [0, 0, 0], sizes = [1, 8, 32], strides = [1, 1, 1]} : vector<4x8x32xbf16> to vector<1x8x32xbf16>
    %133 = vector.shape_cast %132 : vector<1x8x32xbf16> to vector<8x32xbf16>
    %cst_73 = arith.constant dense<0.000000e+00> : vector<5x32xf32>
    %134 = tpu.matmul %131, %133, %cst_73 {dimension_numbers = #tpu.dot_dimension_numbers<[1], [0], [0], [1], [0, 0, 1, 1], [], []>} : vector<5x8xbf16>, vector<8x32xbf16>, vector<5x32xf32> -> vector<5x32xf32>
    %135 = vector.extract_strided_slice %52 {offsets = [1, 0, 0], sizes = [1, 32, 8], strides = [1, 1, 1]} : vector<4x32x8xbf16> to vector<1x32x8xbf16>
    %136 = vector.shape_cast %135 : vector<1x32x8xbf16> to vector<32x8xbf16>
    %cst_74 = arith.constant dense<0.000000e+00> : vector<10x8xf32>
    %137 = tpu.matmul %50, %136, %cst_74 {dimension_numbers = #tpu.dot_dimension_numbers<[1], [0], [0], [1], [0, 0, 1, 1], [], []>} : vector<10x32xbf16>, vector<32x8xbf16>, vector<10x8xf32> -> vector<10x8xf32>
    %138 = vector.extract_strided_slice %54 {offsets = [1, 0, 0], sizes = [1, 1, 8], strides = [1, 1, 1]} : vector<4x1x8xf32> to vector<1x1x8xf32>
    %139 = vector.shape_cast %138 : vector<1x1x8xf32> to vector<1x8xf32>
    %140 = vector.broadcast %139 : vector<1x8xf32> to vector<10x8xf32>
    %141 = arith.addf %137, %140 : vector<10x8xf32>
    %142 = vector.extract_strided_slice %56 {offsets = [1, 0, 0], sizes = [1, 32, 8], strides = [1, 1, 1]} : vector<4x32x8xbf16> to vector<1x32x8xbf16>
    %143 = vector.shape_cast %142 : vector<1x32x8xbf16> to vector<32x8xbf16>
    %cst_75 = arith.constant dense<0.000000e+00> : vector<10x8xf32>
    %144 = tpu.matmul %50, %143, %cst_75 {dimension_numbers = #tpu.dot_dimension_numbers<[1], [0], [0], [1], [0, 0, 1, 1], [], []>} : vector<10x32xbf16>, vector<32x8xbf16>, vector<10x8xf32> -> vector<10x8xf32>
    %145 = vector.extract_strided_slice %58 {offsets = [1, 0, 0], sizes = [1, 1, 8], strides = [1, 1, 1]} : vector<4x1x8xf32> to vector<1x1x8xf32>
    %146 = vector.shape_cast %145 : vector<1x1x8xf32> to vector<1x8xf32>
    %147 = vector.broadcast %146 : vector<1x8xf32> to vector<10x8xf32>
    %148 = arith.addf %144, %147 : vector<10x8xf32>
    %149 = vector.extract_strided_slice %60 {offsets = [1, 0, 0], sizes = [1, 32, 8], strides = [1, 1, 1]} : vector<4x32x8xbf16> to vector<1x32x8xbf16>
    %150 = vector.shape_cast %149 : vector<1x32x8xbf16> to vector<32x8xbf16>
    %cst_76 = arith.constant dense<0.000000e+00> : vector<10x8xf32>
    %151 = tpu.matmul %50, %150, %cst_76 {dimension_numbers = #tpu.dot_dimension_numbers<[1], [0], [0], [1], [0, 0, 1, 1], [], []>} : vector<10x32xbf16>, vector<32x8xbf16>, vector<10x8xf32> -> vector<10x8xf32>
    %152 = vector.extract_strided_slice %62 {offsets = [1, 0, 0], sizes = [1, 1, 8], strides = [1, 1, 1]} : vector<4x1x8xf32> to vector<1x1x8xf32>
    %153 = vector.shape_cast %152 : vector<1x1x8xf32> to vector<1x8xf32>
    %154 = vector.broadcast %153 : vector<1x8xf32> to vector<10x8xf32>
    %155 = arith.addf %151, %154 : vector<10x8xf32>
    %156 = arith.truncf %141 : vector<10x8xf32> to vector<10x8xbf16>
    %157 = arith.truncf %148 : vector<10x8xf32> to vector<10x8xbf16>
    %158 = arith.truncf %155 : vector<10x8xf32> to vector<10x8xbf16>
    %159 = vector.extract_strided_slice %156 {offsets = [0, 0], sizes = [5, 8], strides = [1, 1]} : vector<10x8xbf16> to vector<5x8xbf16>
    %160 = vector.extract_strided_slice %157 {offsets = [0, 0], sizes = [5, 8], strides = [1, 1]} : vector<10x8xbf16> to vector<5x8xbf16>
    %161 = vector.extract_strided_slice %158 {offsets = [0, 0], sizes = [5, 8], strides = [1, 1]} : vector<10x8xbf16> to vector<5x8xbf16>
    %cst_77 = arith.constant dense<0.000000e+00> : vector<5x5xf32>
    %162 = tpu.matmul %159, %160, %cst_77 {dimension_numbers = #tpu.dot_dimension_numbers<[1], [1], [0], [0], [0, 0, 1, 0], [], []>} : vector<5x8xbf16>, vector<5x8xbf16>, vector<5x5xf32> -> vector<5x5xf32>
    %cst_78 = arith.constant 0.353553385 : f32
    %163 = vector.broadcast %cst_78 : f32 to vector<5x5xf32>
    %164 = arith.mulf %162, %163 : vector<5x5xf32>
    %cst_79 = arith.constant dense<0xFF800000> : vector<5xf32>
    %165 = vector.multi_reduction <maximumf>, %164, %cst_79 [1] : vector<5x5xf32> to vector<5xf32>
    %166 = vector.shape_cast %165 : vector<5xf32> to vector<5x1xf32>
    %167 = vector.broadcast %166 : vector<5x1xf32> to vector<5x5xf32>
    %168 = arith.subf %164, %167 : vector<5x5xf32>
    %169 = math.exp %168 : vector<5x5xf32>
    %cst_80 = arith.constant dense<0.000000e+00> : vector<5xf32>
    %170 = vector.multi_reduction <add>, %169, %cst_80 [1] : vector<5x5xf32> to vector<5xf32>
    %171 = vector.shape_cast %170 : vector<5xf32> to vector<5x1xf32>
    %172 = tpu.reciprocal %171 {approx = true} : vector<5x1xf32> -> vector<5x1xf32>
    %173 = vector.broadcast %172 : vector<5x1xf32> to vector<5x5xf32>
    %174 = arith.mulf %169, %173 : vector<5x5xf32>
    %175 = arith.truncf %174 : vector<5x5xf32> to vector<5x5xbf16>
    %cst_81 = arith.constant dense<0.000000e+00> : vector<5x8xf32>
    %176 = tpu.matmul %175, %161, %cst_81 {dimension_numbers = #tpu.dot_dimension_numbers<[1], [0], [0], [1], [0, 0, 1, 1], [], []>} : vector<5x5xbf16>, vector<5x8xbf16>, vector<5x8xf32> -> vector<5x8xf32>
    %177 = arith.truncf %176 : vector<5x8xf32> to vector<5x8xbf16>
    %178 = vector.extract_strided_slice %64 {offsets = [1, 0, 0], sizes = [1, 8, 32], strides = [1, 1, 1]} : vector<4x8x32xbf16> to vector<1x8x32xbf16>
    %179 = vector.shape_cast %178 : vector<1x8x32xbf16> to vector<8x32xbf16>
    %cst_82 = arith.constant dense<0.000000e+00> : vector<5x32xf32>
    %180 = tpu.matmul %177, %179, %cst_82 {dimension_numbers = #tpu.dot_dimension_numbers<[1], [0], [0], [1], [0, 0, 1, 1], [], []>} : vector<5x8xbf16>, vector<8x32xbf16>, vector<5x32xf32> -> vector<5x32xf32>
    %181 = arith.addf %112, %180 : vector<5x32xf32>
    %182 = vector.extract_strided_slice %156 {offsets = [5, 0], sizes = [5, 8], strides = [1, 1]} : vector<10x8xbf16> to vector<5x8xbf16>
    %183 = vector.extract_strided_slice %157 {offsets = [5, 0], sizes = [5, 8], strides = [1, 1]} : vector<10x8xbf16> to vector<5x8xbf16>
    %184 = vector.extract_strided_slice %158 {offsets = [5, 0], sizes = [5, 8], strides = [1, 1]} : vector<10x8xbf16> to vector<5x8xbf16>
    %cst_83 = arith.constant dense<0.000000e+00> : vector<5x5xf32>
    %185 = tpu.matmul %182, %183, %cst_83 {dimension_numbers = #tpu.dot_dimension_numbers<[1], [1], [0], [0], [0, 0, 1, 0], [], []>} : vector<5x8xbf16>, vector<5x8xbf16>, vector<5x5xf32> -> vector<5x5xf32>
    %cst_84 = arith.constant 0.353553385 : f32
    %186 = vector.broadcast %cst_84 : f32 to vector<5x5xf32>
    %187 = arith.mulf %185, %186 : vector<5x5xf32>
    %cst_85 = arith.constant dense<0xFF800000> : vector<5xf32>
    %188 = vector.multi_reduction <maximumf>, %187, %cst_85 [1] : vector<5x5xf32> to vector<5xf32>
    %189 = vector.shape_cast %188 : vector<5xf32> to vector<5x1xf32>
    %190 = vector.broadcast %189 : vector<5x1xf32> to vector<5x5xf32>
    %191 = arith.subf %187, %190 : vector<5x5xf32>
    %192 = math.exp %191 : vector<5x5xf32>
    %cst_86 = arith.constant dense<0.000000e+00> : vector<5xf32>
    %193 = vector.multi_reduction <add>, %192, %cst_86 [1] : vector<5x5xf32> to vector<5xf32>
    %194 = vector.shape_cast %193 : vector<5xf32> to vector<5x1xf32>
    %195 = tpu.reciprocal %194 {approx = true} : vector<5x1xf32> -> vector<5x1xf32>
    %196 = vector.broadcast %195 : vector<5x1xf32> to vector<5x5xf32>
    %197 = arith.mulf %192, %196 : vector<5x5xf32>
    %198 = arith.truncf %197 : vector<5x5xf32> to vector<5x5xbf16>
    %cst_87 = arith.constant dense<0.000000e+00> : vector<5x8xf32>
    %199 = tpu.matmul %198, %184, %cst_87 {dimension_numbers = #tpu.dot_dimension_numbers<[1], [0], [0], [1], [0, 0, 1, 1], [], []>} : vector<5x5xbf16>, vector<5x8xbf16>, vector<5x8xf32> -> vector<5x8xf32>
    %200 = arith.truncf %199 : vector<5x8xf32> to vector<5x8xbf16>
    %201 = vector.extract_strided_slice %64 {offsets = [1, 0, 0], sizes = [1, 8, 32], strides = [1, 1, 1]} : vector<4x8x32xbf16> to vector<1x8x32xbf16>
    %202 = vector.shape_cast %201 : vector<1x8x32xbf16> to vector<8x32xbf16>
    %cst_88 = arith.constant dense<0.000000e+00> : vector<5x32xf32>
    %203 = tpu.matmul %200, %202, %cst_88 {dimension_numbers = #tpu.dot_dimension_numbers<[1], [0], [0], [1], [0, 0, 1, 1], [], []>} : vector<5x8xbf16>, vector<8x32xbf16>, vector<5x32xf32> -> vector<5x32xf32>
    %204 = arith.addf %134, %203 : vector<5x32xf32>
    %205 = vector.extract_strided_slice %52 {offsets = [2, 0, 0], sizes = [1, 32, 8], strides = [1, 1, 1]} : vector<4x32x8xbf16> to vector<1x32x8xbf16>
    %206 = vector.shape_cast %205 : vector<1x32x8xbf16> to vector<32x8xbf16>
    %cst_89 = arith.constant dense<0.000000e+00> : vector<10x8xf32>
    %207 = tpu.matmul %50, %206, %cst_89 {dimension_numbers = #tpu.dot_dimension_numbers<[1], [0], [0], [1], [0, 0, 1, 1], [], []>} : vector<10x32xbf16>, vector<32x8xbf16>, vector<10x8xf32> -> vector<10x8xf32>
    %208 = vector.extract_strided_slice %54 {offsets = [2, 0, 0], sizes = [1, 1, 8], strides = [1, 1, 1]} : vector<4x1x8xf32> to vector<1x1x8xf32>
    %209 = vector.shape_cast %208 : vector<1x1x8xf32> to vector<1x8xf32>
    %210 = vector.broadcast %209 : vector<1x8xf32> to vector<10x8xf32>
    %211 = arith.addf %207, %210 : vector<10x8xf32>
    %212 = vector.extract_strided_slice %56 {offsets = [2, 0, 0], sizes = [1, 32, 8], strides = [1, 1, 1]} : vector<4x32x8xbf16> to vector<1x32x8xbf16>
    %213 = vector.shape_cast %212 : vector<1x32x8xbf16> to vector<32x8xbf16>
    %cst_90 = arith.constant dense<0.000000e+00> : vector<10x8xf32>
    %214 = tpu.matmul %50, %213, %cst_90 {dimension_numbers = #tpu.dot_dimension_numbers<[1], [0], [0], [1], [0, 0, 1, 1], [], []>} : vector<10x32xbf16>, vector<32x8xbf16>, vector<10x8xf32> -> vector<10x8xf32>
    %215 = vector.extract_strided_slice %58 {offsets = [2, 0, 0], sizes = [1, 1, 8], strides = [1, 1, 1]} : vector<4x1x8xf32> to vector<1x1x8xf32>
    %216 = vector.shape_cast %215 : vector<1x1x8xf32> to vector<1x8xf32>
    %217 = vector.broadcast %216 : vector<1x8xf32> to vector<10x8xf32>
    %218 = arith.addf %214, %217 : vector<10x8xf32>
    %219 = vector.extract_strided_slice %60 {offsets = [2, 0, 0], sizes = [1, 32, 8], strides = [1, 1, 1]} : vector<4x32x8xbf16> to vector<1x32x8xbf16>
    %220 = vector.shape_cast %219 : vector<1x32x8xbf16> to vector<32x8xbf16>
    %cst_91 = arith.constant dense<0.000000e+00> : vector<10x8xf32>
    %221 = tpu.matmul %50, %220, %cst_91 {dimension_numbers = #tpu.dot_dimension_numbers<[1], [0], [0], [1], [0, 0, 1, 1], [], []>} : vector<10x32xbf16>, vector<32x8xbf16>, vector<10x8xf32> -> vector<10x8xf32>
    %222 = vector.extract_strided_slice %62 {offsets = [2, 0, 0], sizes = [1, 1, 8], strides = [1, 1, 1]} : vector<4x1x8xf32> to vector<1x1x8xf32>
    %223 = vector.shape_cast %222 : vector<1x1x8xf32> to vector<1x8xf32>
    %224 = vector.broadcast %223 : vector<1x8xf32> to vector<10x8xf32>
    %225 = arith.addf %221, %224 : vector<10x8xf32>
    %226 = arith.truncf %211 : vector<10x8xf32> to vector<10x8xbf16>
    %227 = arith.truncf %218 : vector<10x8xf32> to vector<10x8xbf16>
    %228 = arith.truncf %225 : vector<10x8xf32> to vector<10x8xbf16>
    %229 = vector.extract_strided_slice %226 {offsets = [0, 0], sizes = [5, 8], strides = [1, 1]} : vector<10x8xbf16> to vector<5x8xbf16>
    %230 = vector.extract_strided_slice %227 {offsets = [0, 0], sizes = [5, 8], strides = [1, 1]} : vector<10x8xbf16> to vector<5x8xbf16>
    %231 = vector.extract_strided_slice %228 {offsets = [0, 0], sizes = [5, 8], strides = [1, 1]} : vector<10x8xbf16> to vector<5x8xbf16>
    %cst_92 = arith.constant dense<0.000000e+00> : vector<5x5xf32>
    %232 = tpu.matmul %229, %230, %cst_92 {dimension_numbers = #tpu.dot_dimension_numbers<[1], [1], [0], [0], [0, 0, 1, 0], [], []>} : vector<5x8xbf16>, vector<5x8xbf16>, vector<5x5xf32> -> vector<5x5xf32>
    %cst_93 = arith.constant 0.353553385 : f32
    %233 = vector.broadcast %cst_93 : f32 to vector<5x5xf32>
    %234 = arith.mulf %232, %233 : vector<5x5xf32>
    %cst_94 = arith.constant dense<0xFF800000> : vector<5xf32>
    %235 = vector.multi_reduction <maximumf>, %234, %cst_94 [1] : vector<5x5xf32> to vector<5xf32>
    %236 = vector.shape_cast %235 : vector<5xf32> to vector<5x1xf32>
    %237 = vector.broadcast %236 : vector<5x1xf32> to vector<5x5xf32>
    %238 = arith.subf %234, %237 : vector<5x5xf32>
    %239 = math.exp %238 : vector<5x5xf32>
    %cst_95 = arith.constant dense<0.000000e+00> : vector<5xf32>
    %240 = vector.multi_reduction <add>, %239, %cst_95 [1] : vector<5x5xf32> to vector<5xf32>
    %241 = vector.shape_cast %240 : vector<5xf32> to vector<5x1xf32>
    %242 = tpu.reciprocal %241 {approx = true} : vector<5x1xf32> -> vector<5x1xf32>
    %243 = vector.broadcast %242 : vector<5x1xf32> to vector<5x5xf32>
    %244 = arith.mulf %239, %243 : vector<5x5xf32>
    %245 = arith.truncf %244 : vector<5x5xf32> to vector<5x5xbf16>
    %cst_96 = arith.constant dense<0.000000e+00> : vector<5x8xf32>
    %246 = tpu.matmul %245, %231, %cst_96 {dimension_numbers = #tpu.dot_dimension_numbers<[1], [0], [0], [1], [0, 0, 1, 1], [], []>} : vector<5x5xbf16>, vector<5x8xbf16>, vector<5x8xf32> -> vector<5x8xf32>
    %247 = arith.truncf %246 : vector<5x8xf32> to vector<5x8xbf16>
    %248 = vector.extract_strided_slice %64 {offsets = [2, 0, 0], sizes = [1, 8, 32], strides = [1, 1, 1]} : vector<4x8x32xbf16> to vector<1x8x32xbf16>
    %249 = vector.shape_cast %248 : vector<1x8x32xbf16> to vector<8x32xbf16>
    %cst_97 = arith.constant dense<0.000000e+00> : vector<5x32xf32>
    %250 = tpu.matmul %247, %249, %cst_97 {dimension_numbers = #tpu.dot_dimension_numbers<[1], [0], [0], [1], [0, 0, 1, 1], [], []>} : vector<5x8xbf16>, vector<8x32xbf16>, vector<5x32xf32> -> vector<5x32xf32>
    %251 = arith.addf %181, %250 : vector<5x32xf32>
    %252 = vector.extract_strided_slice %226 {offsets = [5, 0], sizes = [5, 8], strides = [1, 1]} : vector<10x8xbf16> to vector<5x8xbf16>
    %253 = vector.extract_strided_slice %227 {offsets = [5, 0], sizes = [5, 8], strides = [1, 1]} : vector<10x8xbf16> to vector<5x8xbf16>
    %254 = vector.extract_strided_slice %228 {offsets = [5, 0], sizes = [5, 8], strides = [1, 1]} : vector<10x8xbf16> to vector<5x8xbf16>
    %cst_98 = arith.constant dense<0.000000e+00> : vector<5x5xf32>
    %255 = tpu.matmul %252, %253, %cst_98 {dimension_numbers = #tpu.dot_dimension_numbers<[1], [1], [0], [0], [0, 0, 1, 0], [], []>} : vector<5x8xbf16>, vector<5x8xbf16>, vector<5x5xf32> -> vector<5x5xf32>
    %cst_99 = arith.constant 0.353553385 : f32
    %256 = vector.broadcast %cst_99 : f32 to vector<5x5xf32>
    %257 = arith.mulf %255, %256 : vector<5x5xf32>
    %cst_100 = arith.constant dense<0xFF800000> : vector<5xf32>
    %258 = vector.multi_reduction <maximumf>, %257, %cst_100 [1] : vector<5x5xf32> to vector<5xf32>
    %259 = vector.shape_cast %258 : vector<5xf32> to vector<5x1xf32>
    %260 = vector.broadcast %259 : vector<5x1xf32> to vector<5x5xf32>
    %261 = arith.subf %257, %260 : vector<5x5xf32>
    %262 = math.exp %261 : vector<5x5xf32>
    %cst_101 = arith.constant dense<0.000000e+00> : vector<5xf32>
    %263 = vector.multi_reduction <add>, %262, %cst_101 [1] : vector<5x5xf32> to vector<5xf32>
    %264 = vector.shape_cast %263 : vector<5xf32> to vector<5x1xf32>
    %265 = tpu.reciprocal %264 {approx = true} : vector<5x1xf32> -> vector<5x1xf32>
    %266 = vector.broadcast %265 : vector<5x1xf32> to vector<5x5xf32>
    %267 = arith.mulf %262, %266 : vector<5x5xf32>
    %268 = arith.truncf %267 : vector<5x5xf32> to vector<5x5xbf16>
    %cst_102 = arith.constant dense<0.000000e+00> : vector<5x8xf32>
    %269 = tpu.matmul %268, %254, %cst_102 {dimension_numbers = #tpu.dot_dimension_numbers<[1], [0], [0], [1], [0, 0, 1, 1], [], []>} : vector<5x5xbf16>, vector<5x8xbf16>, vector<5x8xf32> -> vector<5x8xf32>
    %270 = arith.truncf %269 : vector<5x8xf32> to vector<5x8xbf16>
    %271 = vector.extract_strided_slice %64 {offsets = [2, 0, 0], sizes = [1, 8, 32], strides = [1, 1, 1]} : vector<4x8x32xbf16> to vector<1x8x32xbf16>
    %272 = vector.shape_cast %271 : vector<1x8x32xbf16> to vector<8x32xbf16>
    %cst_103 = arith.constant dense<0.000000e+00> : vector<5x32xf32>
    %273 = tpu.matmul %270, %272, %cst_103 {dimension_numbers = #tpu.dot_dimension_numbers<[1], [0], [0], [1], [0, 0, 1, 1], [], []>} : vector<5x8xbf16>, vector<8x32xbf16>, vector<5x32xf32> -> vector<5x32xf32>
    %274 = arith.addf %204, %273 : vector<5x32xf32>
    %275 = vector.extract_strided_slice %52 {offsets = [3, 0, 0], sizes = [1, 32, 8], strides = [1, 1, 1]} : vector<4x32x8xbf16> to vector<1x32x8xbf16>
    %276 = vector.shape_cast %275 : vector<1x32x8xbf16> to vector<32x8xbf16>
    %cst_104 = arith.constant dense<0.000000e+00> : vector<10x8xf32>
    %277 = tpu.matmul %50, %276, %cst_104 {dimension_numbers = #tpu.dot_dimension_numbers<[1], [0], [0], [1], [0, 0, 1, 1], [], []>} : vector<10x32xbf16>, vector<32x8xbf16>, vector<10x8xf32> -> vector<10x8xf32>
    %278 = vector.extract_strided_slice %54 {offsets = [3, 0, 0], sizes = [1, 1, 8], strides = [1, 1, 1]} : vector<4x1x8xf32> to vector<1x1x8xf32>
    %279 = vector.shape_cast %278 : vector<1x1x8xf32> to vector<1x8xf32>
    %280 = vector.broadcast %279 : vector<1x8xf32> to vector<10x8xf32>
    %281 = arith.addf %277, %280 : vector<10x8xf32>
    %282 = vector.extract_strided_slice %56 {offsets = [3, 0, 0], sizes = [1, 32, 8], strides = [1, 1, 1]} : vector<4x32x8xbf16> to vector<1x32x8xbf16>
    %283 = vector.shape_cast %282 : vector<1x32x8xbf16> to vector<32x8xbf16>
    %cst_105 = arith.constant dense<0.000000e+00> : vector<10x8xf32>
    %284 = tpu.matmul %50, %283, %cst_105 {dimension_numbers = #tpu.dot_dimension_numbers<[1], [0], [0], [1], [0, 0, 1, 1], [], []>} : vector<10x32xbf16>, vector<32x8xbf16>, vector<10x8xf32> -> vector<10x8xf32>
    %285 = vector.extract_strided_slice %58 {offsets = [3, 0, 0], sizes = [1, 1, 8], strides = [1, 1, 1]} : vector<4x1x8xf32> to vector<1x1x8xf32>
    %286 = vector.shape_cast %285 : vector<1x1x8xf32> to vector<1x8xf32>
    %287 = vector.broadcast %286 : vector<1x8xf32> to vector<10x8xf32>
    %288 = arith.addf %284, %287 : vector<10x8xf32>
    %289 = vector.extract_strided_slice %60 {offsets = [3, 0, 0], sizes = [1, 32, 8], strides = [1, 1, 1]} : vector<4x32x8xbf16> to vector<1x32x8xbf16>
    %290 = vector.shape_cast %289 : vector<1x32x8xbf16> to vector<32x8xbf16>
    %cst_106 = arith.constant dense<0.000000e+00> : vector<10x8xf32>
    %291 = tpu.matmul %50, %290, %cst_106 {dimension_numbers = #tpu.dot_dimension_numbers<[1], [0], [0], [1], [0, 0, 1, 1], [], []>} : vector<10x32xbf16>, vector<32x8xbf16>, vector<10x8xf32> -> vector<10x8xf32>
    %292 = vector.extract_strided_slice %62 {offsets = [3, 0, 0], sizes = [1, 1, 8], strides = [1, 1, 1]} : vector<4x1x8xf32> to vector<1x1x8xf32>
    %293 = vector.shape_cast %292 : vector<1x1x8xf32> to vector<1x8xf32>
    %294 = vector.broadcast %293 : vector<1x8xf32> to vector<10x8xf32>
    %295 = arith.addf %291, %294 : vector<10x8xf32>
    %296 = arith.truncf %281 : vector<10x8xf32> to vector<10x8xbf16>
    %297 = arith.truncf %288 : vector<10x8xf32> to vector<10x8xbf16>
    %298 = arith.truncf %295 : vector<10x8xf32> to vector<10x8xbf16>
    %299 = vector.extract_strided_slice %296 {offsets = [0, 0], sizes = [5, 8], strides = [1, 1]} : vector<10x8xbf16> to vector<5x8xbf16>
    %300 = vector.extract_strided_slice %297 {offsets = [0, 0], sizes = [5, 8], strides = [1, 1]} : vector<10x8xbf16> to vector<5x8xbf16>
    %301 = vector.extract_strided_slice %298 {offsets = [0, 0], sizes = [5, 8], strides = [1, 1]} : vector<10x8xbf16> to vector<5x8xbf16>
    %cst_107 = arith.constant dense<0.000000e+00> : vector<5x5xf32>
    %302 = tpu.matmul %299, %300, %cst_107 {dimension_numbers = #tpu.dot_dimension_numbers<[1], [1], [0], [0], [0, 0, 1, 0], [], []>} : vector<5x8xbf16>, vector<5x8xbf16>, vector<5x5xf32> -> vector<5x5xf32>
    %cst_108 = arith.constant 0.353553385 : f32
    %303 = vector.broadcast %cst_108 : f32 to vector<5x5xf32>
    %304 = arith.mulf %302, %303 : vector<5x5xf32>
    %cst_109 = arith.constant dense<0xFF800000> : vector<5xf32>
    %305 = vector.multi_reduction <maximumf>, %304, %cst_109 [1] : vector<5x5xf32> to vector<5xf32>
    %306 = vector.shape_cast %305 : vector<5xf32> to vector<5x1xf32>
    %307 = vector.broadcast %306 : vector<5x1xf32> to vector<5x5xf32>
    %308 = arith.subf %304, %307 : vector<5x5xf32>
    %309 = math.exp %308 : vector<5x5xf32>
    %cst_110 = arith.constant dense<0.000000e+00> : vector<5xf32>
    %310 = vector.multi_reduction <add>, %309, %cst_110 [1] : vector<5x5xf32> to vector<5xf32>
    %311 = vector.shape_cast %310 : vector<5xf32> to vector<5x1xf32>
    %312 = tpu.reciprocal %311 {approx = true} : vector<5x1xf32> -> vector<5x1xf32>
    %313 = vector.broadcast %312 : vector<5x1xf32> to vector<5x5xf32>
    %314 = arith.mulf %309, %313 : vector<5x5xf32>
    %315 = arith.truncf %314 : vector<5x5xf32> to vector<5x5xbf16>
    %cst_111 = arith.constant dense<0.000000e+00> : vector<5x8xf32>
    %316 = tpu.matmul %315, %301, %cst_111 {dimension_numbers = #tpu.dot_dimension_numbers<[1], [0], [0], [1], [0, 0, 1, 1], [], []>} : vector<5x5xbf16>, vector<5x8xbf16>, vector<5x8xf32> -> vector<5x8xf32>
    %317 = arith.truncf %316 : vector<5x8xf32> to vector<5x8xbf16>
    %318 = vector.extract_strided_slice %64 {offsets = [3, 0, 0], sizes = [1, 8, 32], strides = [1, 1, 1]} : vector<4x8x32xbf16> to vector<1x8x32xbf16>
    %319 = vector.shape_cast %318 : vector<1x8x32xbf16> to vector<8x32xbf16>
    %cst_112 = arith.constant dense<0.000000e+00> : vector<5x32xf32>
    %320 = tpu.matmul %317, %319, %cst_112 {dimension_numbers = #tpu.dot_dimension_numbers<[1], [0], [0], [1], [0, 0, 1, 1], [], []>} : vector<5x8xbf16>, vector<8x32xbf16>, vector<5x32xf32> -> vector<5x32xf32>
    %321 = arith.addf %251, %320 : vector<5x32xf32>
    %322 = vector.extract_strided_slice %296 {offsets = [5, 0], sizes = [5, 8], strides = [1, 1]} : vector<10x8xbf16> to vector<5x8xbf16>
    %323 = vector.extract_strided_slice %297 {offsets = [5, 0], sizes = [5, 8], strides = [1, 1]} : vector<10x8xbf16> to vector<5x8xbf16>
    %324 = vector.extract_strided_slice %298 {offsets = [5, 0], sizes = [5, 8], strides = [1, 1]} : vector<10x8xbf16> to vector<5x8xbf16>
    %cst_113 = arith.constant dense<0.000000e+00> : vector<5x5xf32>
    %325 = tpu.matmul %322, %323, %cst_113 {dimension_numbers = #tpu.dot_dimension_numbers<[1], [1], [0], [0], [0, 0, 1, 0], [], []>} : vector<5x8xbf16>, vector<5x8xbf16>, vector<5x5xf32> -> vector<5x5xf32>
    %cst_114 = arith.constant 0.353553385 : f32
    %326 = vector.broadcast %cst_114 : f32 to vector<5x5xf32>
    %327 = arith.mulf %325, %326 : vector<5x5xf32>
    %cst_115 = arith.constant dense<0xFF800000> : vector<5xf32>
    %328 = vector.multi_reduction <maximumf>, %327, %cst_115 [1] : vector<5x5xf32> to vector<5xf32>
    %329 = vector.shape_cast %328 : vector<5xf32> to vector<5x1xf32>
    %330 = vector.broadcast %329 : vector<5x1xf32> to vector<5x5xf32>
    %331 = arith.subf %327, %330 : vector<5x5xf32>
    %332 = math.exp %331 : vector<5x5xf32>
    %cst_116 = arith.constant dense<0.000000e+00> : vector<5xf32>
    %333 = vector.multi_reduction <add>, %332, %cst_116 [1] : vector<5x5xf32> to vector<5xf32>
    %334 = vector.shape_cast %333 : vector<5xf32> to vector<5x1xf32>
    %335 = tpu.reciprocal %334 {approx = true} : vector<5x1xf32> -> vector<5x1xf32>
    %336 = vector.broadcast %335 : vector<5x1xf32> to vector<5x5xf32>
    %337 = arith.mulf %332, %336 : vector<5x5xf32>
    %338 = arith.truncf %337 : vector<5x5xf32> to vector<5x5xbf16>
    %cst_117 = arith.constant dense<0.000000e+00> : vector<5x8xf32>
    %339 = tpu.matmul %338, %324, %cst_117 {dimension_numbers = #tpu.dot_dimension_numbers<[1], [0], [0], [1], [0, 0, 1, 1], [], []>} : vector<5x5xbf16>, vector<5x8xbf16>, vector<5x8xf32> -> vector<5x8xf32>
    %340 = arith.truncf %339 : vector<5x8xf32> to vector<5x8xbf16>
    %341 = vector.extract_strided_slice %64 {offsets = [3, 0, 0], sizes = [1, 8, 32], strides = [1, 1, 1]} : vector<4x8x32xbf16> to vector<1x8x32xbf16>
    %342 = vector.shape_cast %341 : vector<1x8x32xbf16> to vector<8x32xbf16>
    %cst_118 = arith.constant dense<0.000000e+00> : vector<5x32xf32>
    %343 = tpu.matmul %340, %342, %cst_118 {dimension_numbers = #tpu.dot_dimension_numbers<[1], [0], [0], [1], [0, 0, 1, 1], [], []>} : vector<5x8xbf16>, vector<8x32xbf16>, vector<5x32xf32> -> vector<5x32xf32>
    %344 = arith.addf %274, %343 : vector<5x32xf32>
    %c0_119 = arith.constant 0 : index
    %c0_120 = arith.constant 0 : index
    %345 = vector.load %arg25[%c0_119, %c0_120] : memref<10x32xf32, #tpu.memory_space<vmem>>, vector<5x32xf32>
    tpu.vector_store %arg25[%c0_119, %c0_120], %321 {strides = array<i32>} : memref<10x32xf32, #tpu.memory_space<vmem>>, vector<5x32xf32>,
    %c5_121 = arith.constant 5 : index
    %c0_122 = arith.constant 0 : index
    %346 = vector.load %arg25[%c5_121, %c0_122] : memref<10x32xf32, #tpu.memory_space<vmem>>, vector<5x32xf32>
    tpu.vector_store %arg25[%c5_121, %c0_122], %344 {strides = array<i32>} : memref<10x32xf32, #tpu.memory_space<vmem>>, vector<5x32xf32>,
    %c0_123 = arith.constant 0 : index
    %c0_124 = arith.constant 0 : index
    %347 = vector.load %arg25[%c0_123, %c0_124] : memref<10x32xf32, #tpu.memory_space<vmem>>, vector<10x32xf32>
    %348 = vector.broadcast %66 : vector<1x32xf32> to vector<10x32xf32>
    %349 = arith.addf %347, %348 : vector<10x32xf32>
    %350 = arith.addf %23, %349 : vector<10x32xf32>
    %c0_125 = arith.constant 0 : index
    %c0_126 = arith.constant 0 : index
    %c0_127 = arith.constant 0 : index
    %351 = vector.load %arg16[%c0_125, %c0_126, %c0_127] : memref<2x1x32xf32, #tpu.memory_space<vmem>>, vector<1x1x32xf32>
    %352 = vector.shape_cast %351 : vector<1x1x32xf32> to vector<1x32xf32>
    %c0_128 = arith.constant 0 : index
    %c0_129 = arith.constant 0 : index
    %c0_130 = arith.constant 0 : index
    %353 = vector.load %arg17[%c0_128, %c0_129, %c0_130] : memref<2x1x32xf32, #tpu.memory_space<vmem>>, vector<1x1x32xf32>
    %354 = vector.shape_cast %353 : vector<1x1x32xf32> to vector<1x32xf32>
    %cst_131 = arith.constant dense<0.000000e+00> : vector<10xf32>
    %355 = vector.multi_reduction <add>, %350, %cst_131 [1] : vector<10x32xf32> to vector<10xf32>
    %356 = vector.shape_cast %355 : vector<10xf32> to vector<10x1xf32>
    %cst_132 = arith.constant 3.200000e+01 : f32
    %357 = vector.broadcast %cst_132 : f32 to vector<10x1xf32>
    %358 = arith.divf %356, %357 : vector<10x1xf32>
    %359 = vector.broadcast %358 : vector<10x1xf32> to vector<10x32xf32>
    %360 = arith.subf %350, %359 : vector<10x32xf32>
    %361 = arith.mulf %360, %360 : vector<10x32xf32>
    %cst_133 = arith.constant dense<0.000000e+00> : vector<10xf32>
    %362 = vector.multi_reduction <add>, %361, %cst_133 [1] : vector<10x32xf32> to vector<10xf32>
    %363 = vector.shape_cast %362 : vector<10xf32> to vector<10x1xf32>
    %cst_134 = arith.constant 3.200000e+01 : f32
    %364 = vector.broadcast %cst_134 : f32 to vector<10x1xf32>
    %365 = arith.divf %363, %364 : vector<10x1xf32>
    %366 = vector.broadcast %358 : vector<10x1xf32> to vector<10x32xf32>
    %367 = arith.subf %350, %366 : vector<10x32xf32>
    %cst_135 = arith.constant 9.99999997E-7 : f32
    %368 = vector.broadcast %cst_135 : f32 to vector<10x1xf32>
    %369 = arith.addf %365, %368 : vector<10x1xf32>
    %370 = math.rsqrt %369 : vector<10x1xf32>
    %371 = vector.broadcast %370 : vector<10x1xf32> to vector<10x32xf32>
    %372 = arith.mulf %367, %371 : vector<10x32xf32>
    %373 = vector.broadcast %352 : vector<1x32xf32> to vector<10x32xf32>
    %374 = arith.mulf %372, %373 : vector<10x32xf32>
    %375 = vector.broadcast %354 : vector<1x32xf32> to vector<10x32xf32>
    %376 = arith.addf %374, %375 : vector<10x32xf32>
    %377 = arith.truncf %376 : vector<10x32xf32> to vector<10x32xbf16>
    %c0_136 = arith.constant 0 : index
    %c0_137 = arith.constant 0 : index
    %c0_138 = arith.constant 0 : index
    %378 = vector.load %arg18[%c0_136, %c0_137, %c0_138] : memref<2x32x128xbf16, #tpu.memory_space<vmem>>, vector<1x32x128xbf16>
    %379 = vector.shape_cast %378 : vector<1x32x128xbf16> to vector<32x128xbf16>
    %cst_139 = arith.constant dense<0.000000e+00> : vector<10x128xf32>
    %380 = tpu.matmul %377, %379, %cst_139 {dimension_numbers = #tpu.dot_dimension_numbers<[1], [0], [0], [1], [0, 0, 1, 1], [], []>} : vector<10x32xbf16>, vector<32x128xbf16>, vector<10x128xf32> -> vector<10x128xf32>
    %c0_140 = arith.constant 0 : index
    %c0_141 = arith.constant 0 : index
    %c0_142 = arith.constant 0 : index
    %381 = vector.load %arg19[%c0_140, %c0_141, %c0_142] : memref<2x1x128xf32, #tpu.memory_space<vmem>>, vector<1x1x128xf32>
    %382 = vector.shape_cast %381 : vector<1x1x128xf32> to vector<1x128xf32>
    %383 = vector.broadcast %382 : vector<1x128xf32> to vector<10x128xf32>
    %384 = arith.addf %380, %383 : vector<10x128xf32>
    %385 = arith.mulf %384, %384 : vector<10x128xf32>
    %386 = arith.mulf %384, %385 : vector<10x128xf32>
    %cst_143 = arith.constant 4.471500e-02 : f32
    %387 = vector.broadcast %cst_143 : f32 to vector<10x128xf32>
    %388 = arith.mulf %387, %386 : vector<10x128xf32>
    %389 = arith.addf %384, %388 : vector<10x128xf32>
    %cst_144 = arith.constant 0.797884583 : f32
    %390 = vector.broadcast %cst_144 : f32 to vector<10x128xf32>
    %391 = arith.mulf %390, %389 : vector<10x128xf32>
    %392 = math.tanh %391 : vector<10x128xf32>
    %cst_145 = arith.constant 1.000000e+00 : f32
    %393 = vector.broadcast %cst_145 : f32 to vector<10x128xf32>
    %394 = arith.addf %393, %392 : vector<10x128xf32>
    %cst_146 = arith.constant 5.000000e-01 : f32
    %395 = vector.broadcast %cst_146 : f32 to vector<10x128xf32>
    %396 = arith.mulf %395, %394 : vector<10x128xf32>
    %397 = arith.mulf %384, %396 : vector<10x128xf32>
    %398 = arith.truncf %397 : vector<10x128xf32> to vector<10x128xbf16>
    %c0_147 = arith.constant 0 : index
    %c0_148 = arith.constant 0 : index
    %c0_149 = arith.constant 0 : index
    %399 = vector.load %arg20[%c0_147, %c0_148, %c0_149] : memref<2x128x32xbf16, #tpu.memory_space<vmem>>, vector<1x128x32xbf16>
    %400 = vector.shape_cast %399 : vector<1x128x32xbf16> to vector<128x32xbf16>
    %cst_150 = arith.constant dense<0.000000e+00> : vector<10x32xf32>
    %401 = tpu.matmul %398, %400, %cst_150 {dimension_numbers = #tpu.dot_dimension_numbers<[1], [0], [0], [1], [0, 0, 1, 1], [], []>} : vector<10x128xbf16>, vector<128x32xbf16>, vector<10x32xf32> -> vector<10x32xf32>
    %402 = arith.addf %350, %401 : vector<10x32xf32>
    %c0_151 = arith.constant 0 : index
    %c0_152 = arith.constant 0 : index
    %c0_153 = arith.constant 0 : index
    %403 = vector.load %arg21[%c0_151, %c0_152, %c0_153] : memref<2x1x32xf32, #tpu.memory_space<vmem>>, vector<1x1x32xf32>
    %404 = vector.shape_cast %403 : vector<1x1x32xf32> to vector<1x32xf32>
    %405 = vector.broadcast %404 : vector<1x32xf32> to vector<10x32xf32>
    %406 = arith.addf %402, %405 : vector<10x32xf32>
    %c1_154 = arith.constant 1 : index
    %c0_155 = arith.constant 0 : index
    %c0_156 = arith.constant 0 : index
    %407 = vector.load %arg6[%c1_154, %c0_155, %c0_156] : memref<2x1x32xf32, #tpu.memory_space<vmem>>, vector<1x1x32xf32>
    %408 = vector.shape_cast %407 : vector<1x1x32xf32> to vector<1x32xf32>
    %c1_157 = arith.constant 1 : index
    %c0_158 = arith.constant 0 : index
    %c0_159 = arith.constant 0 : index
    %409 = vector.load %arg7[%c1_157, %c0_158, %c0_159] : memref<2x1x32xf32, #tpu.memory_space<vmem>>, vector<1x1x32xf32>
    %410 = vector.shape_cast %409 : vector<1x1x32xf32> to vector<1x32xf32>
    %cst_160 = arith.constant dense<0.000000e+00> : vector<10xf32>
    %411 = vector.multi_reduction <add>, %406, %cst_160 [1] : vector<10x32xf32> to vector<10xf32>
    %412 = vector.shape_cast %411 : vector<10xf32> to vector<10x1xf32>
    %cst_161 = arith.constant 3.200000e+01 : f32
    %413 = vector.broadcast %cst_161 : f32 to vector<10x1xf32>
    %414 = arith.divf %412, %413 : vector<10x1xf32>
    %415 = vector.broadcast %414 : vector<10x1xf32> to vector<10x32xf32>
    %416 = arith.subf %406, %415 : vector<10x32xf32>
    %417 = arith.mulf %416, %416 : vector<10x32xf32>
    %cst_162 = arith.constant dense<0.000000e+00> : vector<10xf32>
    %418 = vector.multi_reduction <add>, %417, %cst_162 [1] : vector<10x32xf32> to vector<10xf32>
    %419 = vector.shape_cast %418 : vector<10xf32> to vector<10x1xf32>
    %cst_163 = arith.constant 3.200000e+01 : f32
    %420 = vector.broadcast %cst_163 : f32 to vector<10x1xf32>
    %421 = arith.divf %419, %420 : vector<10x1xf32>
    %422 = vector.broadcast %414 : vector<10x1xf32> to vector<10x32xf32>
    %423 = arith.subf %406, %422 : vector<10x32xf32>
    %cst_164 = arith.constant 9.99999997E-7 : f32
    %424 = vector.broadcast %cst_164 : f32 to vector<10x1xf32>
    %425 = arith.addf %421, %424 : vector<10x1xf32>
    %426 = math.rsqrt %425 : vector<10x1xf32>
    %427 = vector.broadcast %426 : vector<10x1xf32> to vector<10x32xf32>
    %428 = arith.mulf %423, %427 : vector<10x32xf32>
    %429 = vector.broadcast %408 : vector<1x32xf32> to vector<10x32xf32>
    %430 = arith.mulf %428, %429 : vector<10x32xf32>
    %431 = vector.broadcast %410 : vector<1x32xf32> to vector<10x32xf32>
    %432 = arith.addf %430, %431 : vector<10x32xf32>
    %433 = arith.truncf %432 : vector<10x32xf32> to vector<10x32xbf16>
    %c1_165 = arith.constant 1 : index
    %c0_166 = arith.constant 0 : index
    %c0_167 = arith.constant 0 : index
    %c0_168 = arith.constant 0 : index
    %434 = vector.load %arg8[%c1_165, %c0_166, %c0_167, %c0_168] : memref<2x4x32x8xbf16, #tpu.memory_space<vmem>>, vector<1x4x32x8xbf16>
    %435 = vector.shape_cast %434 : vector<1x4x32x8xbf16> to vector<4x32x8xbf16>
    %c1_169 = arith.constant 1 : index
    %c0_170 = arith.constant 0 : index
    %c0_171 = arith.constant 0 : index
    %c0_172 = arith.constant 0 : index
    %436 = vector.load %arg9[%c1_169, %c0_170, %c0_171, %c0_172] : memref<2x4x1x8xf32, #tpu.memory_space<vmem>>, vector<1x4x1x8xf32>
    %437 = vector.shape_cast %436 : vector<1x4x1x8xf32> to vector<4x1x8xf32>
    %c1_173 = arith.constant 1 : index
    %c0_174 = arith.constant 0 : index
    %c0_175 = arith.constant 0 : index
    %c0_176 = arith.constant 0 : index
    %438 = vector.load %arg10[%c1_173, %c0_174, %c0_175, %c0_176] : memref<2x4x32x8xbf16, #tpu.memory_space<vmem>>, vector<1x4x32x8xbf16>
    %439 = vector.shape_cast %438 : vector<1x4x32x8xbf16> to vector<4x32x8xbf16>
    %c1_177 = arith.constant 1 : index
    %c0_178 = arith.constant 0 : index
    %c0_179 = arith.constant 0 : index
    %c0_180 = arith.constant 0 : index
    %440 = vector.load %arg11[%c1_177, %c0_178, %c0_179, %c0_180] : memref<2x4x1x8xf32, #tpu.memory_space<vmem>>, vector<1x4x1x8xf32>
    %441 = vector.shape_cast %440 : vector<1x4x1x8xf32> to vector<4x1x8xf32>
    %c1_181 = arith.constant 1 : index
    %c0_182 = arith.constant 0 : index
    %c0_183 = arith.constant 0 : index
    %c0_184 = arith.constant 0 : index
    %442 = vector.load %arg12[%c1_181, %c0_182, %c0_183, %c0_184] : memref<2x4x32x8xbf16, #tpu.memory_space<vmem>>, vector<1x4x32x8xbf16>
    %443 = vector.shape_cast %442 : vector<1x4x32x8xbf16> to vector<4x32x8xbf16>
    %c1_185 = arith.constant 1 : index
    %c0_186 = arith.constant 0 : index
    %c0_187 = arith.constant 0 : index
    %c0_188 = arith.constant 0 : index
    %444 = vector.load %arg13[%c1_185, %c0_186, %c0_187, %c0_188] : memref<2x4x1x8xf32, #tpu.memory_space<vmem>>, vector<1x4x1x8xf32>
    %445 = vector.shape_cast %444 : vector<1x4x1x8xf32> to vector<4x1x8xf32>
    %c1_189 = arith.constant 1 : index
    %c0_190 = arith.constant 0 : index
    %c0_191 = arith.constant 0 : index
    %c0_192 = arith.constant 0 : index
    %446 = vector.load %arg14[%c1_189, %c0_190, %c0_191, %c0_192] : memref<2x4x8x32xbf16, #tpu.memory_space<vmem>>, vector<1x4x8x32xbf16>
    %447 = vector.shape_cast %446 : vector<1x4x8x32xbf16> to vector<4x8x32xbf16>
    %c1_193 = arith.constant 1 : index
    %c0_194 = arith.constant 0 : index
    %c0_195 = arith.constant 0 : index
    %448 = vector.load %arg15[%c1_193, %c0_194, %c0_195] : memref<2x1x32xf32, #tpu.memory_space<vmem>>, vector<1x1x32xf32>
    %449 = vector.shape_cast %448 : vector<1x1x32xf32> to vector<1x32xf32>
    %450 = vector.extract_strided_slice %435 {offsets = [0, 0, 0], sizes = [1, 32, 8], strides = [1, 1, 1]} : vector<4x32x8xbf16> to vector<1x32x8xbf16>
    %451 = vector.shape_cast %450 : vector<1x32x8xbf16> to vector<32x8xbf16>
    %cst_196 = arith.constant dense<0.000000e+00> : vector<10x8xf32>
    %452 = tpu.matmul %433, %451, %cst_196 {dimension_numbers = #tpu.dot_dimension_numbers<[1], [0], [0], [1], [0, 0, 1, 1], [], []>} : vector<10x32xbf16>, vector<32x8xbf16>, vector<10x8xf32> -> vector<10x8xf32>
    %453 = vector.extract_strided_slice %437 {offsets = [0, 0, 0], sizes = [1, 1, 8], strides = [1, 1, 1]} : vector<4x1x8xf32> to vector<1x1x8xf32>
    %454 = vector.shape_cast %453 : vector<1x1x8xf32> to vector<1x8xf32>
    %455 = vector.broadcast %454 : vector<1x8xf32> to vector<10x8xf32>
    %456 = arith.addf %452, %455 : vector<10x8xf32>
    %457 = vector.extract_strided_slice %439 {offsets = [0, 0, 0], sizes = [1, 32, 8], strides = [1, 1, 1]} : vector<4x32x8xbf16> to vector<1x32x8xbf16>
    %458 = vector.shape_cast %457 : vector<1x32x8xbf16> to vector<32x8xbf16>
    %cst_197 = arith.constant dense<0.000000e+00> : vector<10x8xf32>
    %459 = tpu.matmul %433, %458, %cst_197 {dimension_numbers = #tpu.dot_dimension_numbers<[1], [0], [0], [1], [0, 0, 1, 1], [], []>} : vector<10x32xbf16>, vector<32x8xbf16>, vector<10x8xf32> -> vector<10x8xf32>
    %460 = vector.extract_strided_slice %441 {offsets = [0, 0, 0], sizes = [1, 1, 8], strides = [1, 1, 1]} : vector<4x1x8xf32> to vector<1x1x8xf32>
    %461 = vector.shape_cast %460 : vector<1x1x8xf32> to vector<1x8xf32>
    %462 = vector.broadcast %461 : vector<1x8xf32> to vector<10x8xf32>
    %463 = arith.addf %459, %462 : vector<10x8xf32>
    %464 = vector.extract_strided_slice %443 {offsets = [0, 0, 0], sizes = [1, 32, 8], strides = [1, 1, 1]} : vector<4x32x8xbf16> to vector<1x32x8xbf16>
    %465 = vector.shape_cast %464 : vector<1x32x8xbf16> to vector<32x8xbf16>
    %cst_198 = arith.constant dense<0.000000e+00> : vector<10x8xf32>
    %466 = tpu.matmul %433, %465, %cst_198 {dimension_numbers = #tpu.dot_dimension_numbers<[1], [0], [0], [1], [0, 0, 1, 1], [], []>} : vector<10x32xbf16>, vector<32x8xbf16>, vector<10x8xf32> -> vector<10x8xf32>
    %467 = vector.extract_strided_slice %445 {offsets = [0, 0, 0], sizes = [1, 1, 8], strides = [1, 1, 1]} : vector<4x1x8xf32> to vector<1x1x8xf32>
    %468 = vector.shape_cast %467 : vector<1x1x8xf32> to vector<1x8xf32>
    %469 = vector.broadcast %468 : vector<1x8xf32> to vector<10x8xf32>
    %470 = arith.addf %466, %469 : vector<10x8xf32>
    %471 = arith.truncf %456 : vector<10x8xf32> to vector<10x8xbf16>
    %472 = arith.truncf %463 : vector<10x8xf32> to vector<10x8xbf16>
    %473 = arith.truncf %470 : vector<10x8xf32> to vector<10x8xbf16>
    %474 = vector.extract_strided_slice %471 {offsets = [0, 0], sizes = [5, 8], strides = [1, 1]} : vector<10x8xbf16> to vector<5x8xbf16>
    %475 = vector.extract_strided_slice %472 {offsets = [0, 0], sizes = [5, 8], strides = [1, 1]} : vector<10x8xbf16> to vector<5x8xbf16>
    %476 = vector.extract_strided_slice %473 {offsets = [0, 0], sizes = [5, 8], strides = [1, 1]} : vector<10x8xbf16> to vector<5x8xbf16>
    %cst_199 = arith.constant dense<0.000000e+00> : vector<5x5xf32>
    %477 = tpu.matmul %474, %475, %cst_199 {dimension_numbers = #tpu.dot_dimension_numbers<[1], [1], [0], [0], [0, 0, 1, 0], [], []>} : vector<5x8xbf16>, vector<5x8xbf16>, vector<5x5xf32> -> vector<5x5xf32>
    %cst_200 = arith.constant 0.353553385 : f32
    %478 = vector.broadcast %cst_200 : f32 to vector<5x5xf32>
    %479 = arith.mulf %477, %478 : vector<5x5xf32>
    %cst_201 = arith.constant dense<0xFF800000> : vector<5xf32>
    %480 = vector.multi_reduction <maximumf>, %479, %cst_201 [1] : vector<5x5xf32> to vector<5xf32>
    %481 = vector.shape_cast %480 : vector<5xf32> to vector<5x1xf32>
    %482 = vector.broadcast %481 : vector<5x1xf32> to vector<5x5xf32>
    %483 = arith.subf %479, %482 : vector<5x5xf32>
    %484 = math.exp %483 : vector<5x5xf32>
    %cst_202 = arith.constant dense<0.000000e+00> : vector<5xf32>
    %485 = vector.multi_reduction <add>, %484, %cst_202 [1] : vector<5x5xf32> to vector<5xf32>
    %486 = vector.shape_cast %485 : vector<5xf32> to vector<5x1xf32>
    %487 = tpu.reciprocal %486 {approx = true} : vector<5x1xf32> -> vector<5x1xf32>
    %488 = vector.broadcast %487 : vector<5x1xf32> to vector<5x5xf32>
    %489 = arith.mulf %484, %488 : vector<5x5xf32>
    %490 = arith.truncf %489 : vector<5x5xf32> to vector<5x5xbf16>
    %cst_203 = arith.constant dense<0.000000e+00> : vector<5x8xf32>
    %491 = tpu.matmul %490, %476, %cst_203 {dimension_numbers = #tpu.dot_dimension_numbers<[1], [0], [0], [1], [0, 0, 1, 1], [], []>} : vector<5x5xbf16>, vector<5x8xbf16>, vector<5x8xf32> -> vector<5x8xf32>
    %492 = arith.truncf %491 : vector<5x8xf32> to vector<5x8xbf16>
    %493 = vector.extract_strided_slice %447 {offsets = [0, 0, 0], sizes = [1, 8, 32], strides = [1, 1, 1]} : vector<4x8x32xbf16> to vector<1x8x32xbf16>
    %494 = vector.shape_cast %493 : vector<1x8x32xbf16> to vector<8x32xbf16>
    %cst_204 = arith.constant dense<0.000000e+00> : vector<5x32xf32>
    %495 = tpu.matmul %492, %494, %cst_204 {dimension_numbers = #tpu.dot_dimension_numbers<[1], [0], [0], [1], [0, 0, 1, 1], [], []>} : vector<5x8xbf16>, vector<8x32xbf16>, vector<5x32xf32> -> vector<5x32xf32>
    %496 = vector.extract_strided_slice %471 {offsets = [5, 0], sizes = [5, 8], strides = [1, 1]} : vector<10x8xbf16> to vector<5x8xbf16>
    %497 = vector.extract_strided_slice %472 {offsets = [5, 0], sizes = [5, 8], strides = [1, 1]} : vector<10x8xbf16> to vector<5x8xbf16>
    %498 = vector.extract_strided_slice %473 {offsets = [5, 0], sizes = [5, 8], strides = [1, 1]} : vector<10x8xbf16> to vector<5x8xbf16>
    %cst_205 = arith.constant dense<0.000000e+00> : vector<5x5xf32>
    %499 = tpu.matmul %496, %497, %cst_205 {dimension_numbers = #tpu.dot_dimension_numbers<[1], [1], [0], [0], [0, 0, 1, 0], [], []>} : vector<5x8xbf16>, vector<5x8xbf16>, vector<5x5xf32> -> vector<5x5xf32>
    %cst_206 = arith.constant 0.353553385 : f32
    %500 = vector.broadcast %cst_206 : f32 to vector<5x5xf32>
    %501 = arith.mulf %499, %500 : vector<5x5xf32>
    %cst_207 = arith.constant dense<0xFF800000> : vector<5xf32>
    %502 = vector.multi_reduction <maximumf>, %501, %cst_207 [1] : vector<5x5xf32> to vector<5xf32>
    %503 = vector.shape_cast %502 : vector<5xf32> to vector<5x1xf32>
    %504 = vector.broadcast %503 : vector<5x1xf32> to vector<5x5xf32>
    %505 = arith.subf %501, %504 : vector<5x5xf32>
    %506 = math.exp %505 : vector<5x5xf32>
    %cst_208 = arith.constant dense<0.000000e+00> : vector<5xf32>
    %507 = vector.multi_reduction <add>, %506, %cst_208 [1] : vector<5x5xf32> to vector<5xf32>
    %508 = vector.shape_cast %507 : vector<5xf32> to vector<5x1xf32>
    %509 = tpu.reciprocal %508 {approx = true} : vector<5x1xf32> -> vector<5x1xf32>
    %510 = vector.broadcast %509 : vector<5x1xf32> to vector<5x5xf32>
    %511 = arith.mulf %506, %510 : vector<5x5xf32>
    %512 = arith.truncf %511 : vector<5x5xf32> to vector<5x5xbf16>
    %cst_209 = arith.constant dense<0.000000e+00> : vector<5x8xf32>
    %513 = tpu.matmul %512, %498, %cst_209 {dimension_numbers = #tpu.dot_dimension_numbers<[1], [0], [0], [1], [0, 0, 1, 1], [], []>} : vector<5x5xbf16>, vector<5x8xbf16>, vector<5x8xf32> -> vector<5x8xf32>
    %514 = arith.truncf %513 : vector<5x8xf32> to vector<5x8xbf16>
    %515 = vector.extract_strided_slice %447 {offsets = [0, 0, 0], sizes = [1, 8, 32], strides = [1, 1, 1]} : vector<4x8x32xbf16> to vector<1x8x32xbf16>
    %516 = vector.shape_cast %515 : vector<1x8x32xbf16> to vector<8x32xbf16>
    %cst_210 = arith.constant dense<0.000000e+00> : vector<5x32xf32>
    %517 = tpu.matmul %514, %516, %cst_210 {dimension_numbers = #tpu.dot_dimension_numbers<[1], [0], [0], [1], [0, 0, 1, 1], [], []>} : vector<5x8xbf16>, vector<8x32xbf16>, vector<5x32xf32> -> vector<5x32xf32>
    %518 = vector.extract_strided_slice %435 {offsets = [1, 0, 0], sizes = [1, 32, 8], strides = [1, 1, 1]} : vector<4x32x8xbf16> to vector<1x32x8xbf16>
    %519 = vector.shape_cast %518 : vector<1x32x8xbf16> to vector<32x8xbf16>
    %cst_211 = arith.constant dense<0.000000e+00> : vector<10x8xf32>
    %520 = tpu.matmul %433, %519, %cst_211 {dimension_numbers = #tpu.dot_dimension_numbers<[1], [0], [0], [1], [0, 0, 1, 1], [], []>} : vector<10x32xbf16>, vector<32x8xbf16>, vector<10x8xf32> -> vector<10x8xf32>
    %521 = vector.extract_strided_slice %437 {offsets = [1, 0, 0], sizes = [1, 1, 8], strides = [1, 1, 1]} : vector<4x1x8xf32> to vector<1x1x8xf32>
    %522 = vector.shape_cast %521 : vector<1x1x8xf32> to vector<1x8xf32>
    %523 = vector.broadcast %522 : vector<1x8xf32> to vector<10x8xf32>
    %524 = arith.addf %520, %523 : vector<10x8xf32>
    %525 = vector.extract_strided_slice %439 {offsets = [1, 0, 0], sizes = [1, 32, 8], strides = [1, 1, 1]} : vector<4x32x8xbf16> to vector<1x32x8xbf16>
    %526 = vector.shape_cast %525 : vector<1x32x8xbf16> to vector<32x8xbf16>
    %cst_212 = arith.constant dense<0.000000e+00> : vector<10x8xf32>
    %527 = tpu.matmul %433, %526, %cst_212 {dimension_numbers = #tpu.dot_dimension_numbers<[1], [0], [0], [1], [0, 0, 1, 1], [], []>} : vector<10x32xbf16>, vector<32x8xbf16>, vector<10x8xf32> -> vector<10x8xf32>
    %528 = vector.extract_strided_slice %441 {offsets = [1, 0, 0], sizes = [1, 1, 8], strides = [1, 1, 1]} : vector<4x1x8xf32> to vector<1x1x8xf32>
    %529 = vector.shape_cast %528 : vector<1x1x8xf32> to vector<1x8xf32>
    %530 = vector.broadcast %529 : vector<1x8xf32> to vector<10x8xf32>
    %531 = arith.addf %527, %530 : vector<10x8xf32>
    %532 = vector.extract_strided_slice %443 {offsets = [1, 0, 0], sizes = [1, 32, 8], strides = [1, 1, 1]} : vector<4x32x8xbf16> to vector<1x32x8xbf16>
    %533 = vector.shape_cast %532 : vector<1x32x8xbf16> to vector<32x8xbf16>
    %cst_213 = arith.constant dense<0.000000e+00> : vector<10x8xf32>
    %534 = tpu.matmul %433, %533, %cst_213 {dimension_numbers = #tpu.dot_dimension_numbers<[1], [0], [0], [1], [0, 0, 1, 1], [], []>} : vector<10x32xbf16>, vector<32x8xbf16>, vector<10x8xf32> -> vector<10x8xf32>
    %535 = vector.extract_strided_slice %445 {offsets = [1, 0, 0], sizes = [1, 1, 8], strides = [1, 1, 1]} : vector<4x1x8xf32> to vector<1x1x8xf32>
    %536 = vector.shape_cast %535 : vector<1x1x8xf32> to vector<1x8xf32>
    %537 = vector.broadcast %536 : vector<1x8xf32> to vector<10x8xf32>
    %538 = arith.addf %534, %537 : vector<10x8xf32>
    %539 = arith.truncf %524 : vector<10x8xf32> to vector<10x8xbf16>
    %540 = arith.truncf %531 : vector<10x8xf32> to vector<10x8xbf16>
    %541 = arith.truncf %538 : vector<10x8xf32> to vector<10x8xbf16>
    %542 = vector.extract_strided_slice %539 {offsets = [0, 0], sizes = [5, 8], strides = [1, 1]} : vector<10x8xbf16> to vector<5x8xbf16>
    %543 = vector.extract_strided_slice %540 {offsets = [0, 0], sizes = [5, 8], strides = [1, 1]} : vector<10x8xbf16> to vector<5x8xbf16>
    %544 = vector.extract_strided_slice %541 {offsets = [0, 0], sizes = [5, 8], strides = [1, 1]} : vector<10x8xbf16> to vector<5x8xbf16>
    %cst_214 = arith.constant dense<0.000000e+00> : vector<5x5xf32>
    %545 = tpu.matmul %542, %543, %cst_214 {dimension_numbers = #tpu.dot_dimension_numbers<[1], [1], [0], [0], [0, 0, 1, 0], [], []>} : vector<5x8xbf16>, vector<5x8xbf16>, vector<5x5xf32> -> vector<5x5xf32>
    %cst_215 = arith.constant 0.353553385 : f32
    %546 = vector.broadcast %cst_215 : f32 to vector<5x5xf32>
    %547 = arith.mulf %545, %546 : vector<5x5xf32>
    %cst_216 = arith.constant dense<0xFF800000> : vector<5xf32>
    %548 = vector.multi_reduction <maximumf>, %547, %cst_216 [1] : vector<5x5xf32> to vector<5xf32>
    %549 = vector.shape_cast %548 : vector<5xf32> to vector<5x1xf32>
    %550 = vector.broadcast %549 : vector<5x1xf32> to vector<5x5xf32>
    %551 = arith.subf %547, %550 : vector<5x5xf32>
    %552 = math.exp %551 : vector<5x5xf32>
    %cst_217 = arith.constant dense<0.000000e+00> : vector<5xf32>
    %553 = vector.multi_reduction <add>, %552, %cst_217 [1] : vector<5x5xf32> to vector<5xf32>
    %554 = vector.shape_cast %553 : vector<5xf32> to vector<5x1xf32>
    %555 = tpu.reciprocal %554 {approx = true} : vector<5x1xf32> -> vector<5x1xf32>
    %556 = vector.broadcast %555 : vector<5x1xf32> to vector<5x5xf32>
    %557 = arith.mulf %552, %556 : vector<5x5xf32>
    %558 = arith.truncf %557 : vector<5x5xf32> to vector<5x5xbf16>
    %cst_218 = arith.constant dense<0.000000e+00> : vector<5x8xf32>
    %559 = tpu.matmul %558, %544, %cst_218 {dimension_numbers = #tpu.dot_dimension_numbers<[1], [0], [0], [1], [0, 0, 1, 1], [], []>} : vector<5x5xbf16>, vector<5x8xbf16>, vector<5x8xf32> -> vector<5x8xf32>
    %560 = arith.truncf %559 : vector<5x8xf32> to vector<5x8xbf16>
    %561 = vector.extract_strided_slice %447 {offsets = [1, 0, 0], sizes = [1, 8, 32], strides = [1, 1, 1]} : vector<4x8x32xbf16> to vector<1x8x32xbf16>
    %562 = vector.shape_cast %561 : vector<1x8x32xbf16> to vector<8x32xbf16>
    %cst_219 = arith.constant dense<0.000000e+00> : vector<5x32xf32>
    %563 = tpu.matmul %560, %562, %cst_219 {dimension_numbers = #tpu.dot_dimension_numbers<[1], [0], [0], [1], [0, 0, 1, 1], [], []>} : vector<5x8xbf16>, vector<8x32xbf16>, vector<5x32xf32> -> vector<5x32xf32>
    %564 = arith.addf %495, %563 : vector<5x32xf32>
    %565 = vector.extract_strided_slice %539 {offsets = [5, 0], sizes = [5, 8], strides = [1, 1]} : vector<10x8xbf16> to vector<5x8xbf16>
    %566 = vector.extract_strided_slice %540 {offsets = [5, 0], sizes = [5, 8], strides = [1, 1]} : vector<10x8xbf16> to vector<5x8xbf16>
    %567 = vector.extract_strided_slice %541 {offsets = [5, 0], sizes = [5, 8], strides = [1, 1]} : vector<10x8xbf16> to vector<5x8xbf16>
    %cst_220 = arith.constant dense<0.000000e+00> : vector<5x5xf32>
    %568 = tpu.matmul %565, %566, %cst_220 {dimension_numbers = #tpu.dot_dimension_numbers<[1], [1], [0], [0], [0, 0, 1, 0], [], []>} : vector<5x8xbf16>, vector<5x8xbf16>, vector<5x5xf32> -> vector<5x5xf32>
    %cst_221 = arith.constant 0.353553385 : f32
    %569 = vector.broadcast %cst_221 : f32 to vector<5x5xf32>
    %570 = arith.mulf %568, %569 : vector<5x5xf32>
    %cst_222 = arith.constant dense<0xFF800000> : vector<5xf32>
    %571 = vector.multi_reduction <maximumf>, %570, %cst_222 [1] : vector<5x5xf32> to vector<5xf32>
    %572 = vector.shape_cast %571 : vector<5xf32> to vector<5x1xf32>
    %573 = vector.broadcast %572 : vector<5x1xf32> to vector<5x5xf32>
    %574 = arith.subf %570, %573 : vector<5x5xf32>
    %575 = math.exp %574 : vector<5x5xf32>
    %cst_223 = arith.constant dense<0.000000e+00> : vector<5xf32>
    %576 = vector.multi_reduction <add>, %575, %cst_223 [1] : vector<5x5xf32> to vector<5xf32>
    %577 = vector.shape_cast %576 : vector<5xf32> to vector<5x1xf32>
    %578 = tpu.reciprocal %577 {approx = true} : vector<5x1xf32> -> vector<5x1xf32>
    %579 = vector.broadcast %578 : vector<5x1xf32> to vector<5x5xf32>
    %580 = arith.mulf %575, %579 : vector<5x5xf32>
    %581 = arith.truncf %580 : vector<5x5xf32> to vector<5x5xbf16>
    %cst_224 = arith.constant dense<0.000000e+00> : vector<5x8xf32>
    %582 = tpu.matmul %581, %567, %cst_224 {dimension_numbers = #tpu.dot_dimension_numbers<[1], [0], [0], [1], [0, 0, 1, 1], [], []>} : vector<5x5xbf16>, vector<5x8xbf16>, vector<5x8xf32> -> vector<5x8xf32>
    %583 = arith.truncf %582 : vector<5x8xf32> to vector<5x8xbf16>
    %584 = vector.extract_strided_slice %447 {offsets = [1, 0, 0], sizes = [1, 8, 32], strides = [1, 1, 1]} : vector<4x8x32xbf16> to vector<1x8x32xbf16>
    %585 = vector.shape_cast %584 : vector<1x8x32xbf16> to vector<8x32xbf16>
    %cst_225 = arith.constant dense<0.000000e+00> : vector<5x32xf32>
    %586 = tpu.matmul %583, %585, %cst_225 {dimension_numbers = #tpu.dot_dimension_numbers<[1], [0], [0], [1], [0, 0, 1, 1], [], []>} : vector<5x8xbf16>, vector<8x32xbf16>, vector<5x32xf32> -> vector<5x32xf32>
    %587 = arith.addf %517, %586 : vector<5x32xf32>
    %588 = vector.extract_strided_slice %435 {offsets = [2, 0, 0], sizes = [1, 32, 8], strides = [1, 1, 1]} : vector<4x32x8xbf16> to vector<1x32x8xbf16>
    %589 = vector.shape_cast %588 : vector<1x32x8xbf16> to vector<32x8xbf16>
    %cst_226 = arith.constant dense<0.000000e+00> : vector<10x8xf32>
    %590 = tpu.matmul %433, %589, %cst_226 {dimension_numbers = #tpu.dot_dimension_numbers<[1], [0], [0], [1], [0, 0, 1, 1], [], []>} : vector<10x32xbf16>, vector<32x8xbf16>, vector<10x8xf32> -> vector<10x8xf32>
    %591 = vector.extract_strided_slice %437 {offsets = [2, 0, 0], sizes = [1, 1, 8], strides = [1, 1, 1]} : vector<4x1x8xf32> to vector<1x1x8xf32>
    %592 = vector.shape_cast %591 : vector<1x1x8xf32> to vector<1x8xf32>
    %593 = vector.broadcast %592 : vector<1x8xf32> to vector<10x8xf32>
    %594 = arith.addf %590, %593 : vector<10x8xf32>
    %595 = vector.extract_strided_slice %439 {offsets = [2, 0, 0], sizes = [1, 32, 8], strides = [1, 1, 1]} : vector<4x32x8xbf16> to vector<1x32x8xbf16>
    %596 = vector.shape_cast %595 : vector<1x32x8xbf16> to vector<32x8xbf16>
    %cst_227 = arith.constant dense<0.000000e+00> : vector<10x8xf32>
    %597 = tpu.matmul %433, %596, %cst_227 {dimension_numbers = #tpu.dot_dimension_numbers<[1], [0], [0], [1], [0, 0, 1, 1], [], []>} : vector<10x32xbf16>, vector<32x8xbf16>, vector<10x8xf32> -> vector<10x8xf32>
    %598 = vector.extract_strided_slice %441 {offsets = [2, 0, 0], sizes = [1, 1, 8], strides = [1, 1, 1]} : vector<4x1x8xf32> to vector<1x1x8xf32>
    %599 = vector.shape_cast %598 : vector<1x1x8xf32> to vector<1x8xf32>
    %600 = vector.broadcast %599 : vector<1x8xf32> to vector<10x8xf32>
    %601 = arith.addf %597, %600 : vector<10x8xf32>
    %602 = vector.extract_strided_slice %443 {offsets = [2, 0, 0], sizes = [1, 32, 8], strides = [1, 1, 1]} : vector<4x32x8xbf16> to vector<1x32x8xbf16>
    %603 = vector.shape_cast %602 : vector<1x32x8xbf16> to vector<32x8xbf16>
    %cst_228 = arith.constant dense<0.000000e+00> : vector<10x8xf32>
    %604 = tpu.matmul %433, %603, %cst_228 {dimension_numbers = #tpu.dot_dimension_numbers<[1], [0], [0], [1], [0, 0, 1, 1], [], []>} : vector<10x32xbf16>, vector<32x8xbf16>, vector<10x8xf32> -> vector<10x8xf32>
    %605 = vector.extract_strided_slice %445 {offsets = [2, 0, 0], sizes = [1, 1, 8], strides = [1, 1, 1]} : vector<4x1x8xf32> to vector<1x1x8xf32>
    %606 = vector.shape_cast %605 : vector<1x1x8xf32> to vector<1x8xf32>
    %607 = vector.broadcast %606 : vector<1x8xf32> to vector<10x8xf32>
    %608 = arith.addf %604, %607 : vector<10x8xf32>
    %609 = arith.truncf %594 : vector<10x8xf32> to vector<10x8xbf16>
    %610 = arith.truncf %601 : vector<10x8xf32> to vector<10x8xbf16>
    %611 = arith.truncf %608 : vector<10x8xf32> to vector<10x8xbf16>
    %612 = vector.extract_strided_slice %609 {offsets = [0, 0], sizes = [5, 8], strides = [1, 1]} : vector<10x8xbf16> to vector<5x8xbf16>
    %613 = vector.extract_strided_slice %610 {offsets = [0, 0], sizes = [5, 8], strides = [1, 1]} : vector<10x8xbf16> to vector<5x8xbf16>
    %614 = vector.extract_strided_slice %611 {offsets = [0, 0], sizes = [5, 8], strides = [1, 1]} : vector<10x8xbf16> to vector<5x8xbf16>
    %cst_229 = arith.constant dense<0.000000e+00> : vector<5x5xf32>
    %615 = tpu.matmul %612, %613, %cst_229 {dimension_numbers = #tpu.dot_dimension_numbers<[1], [1], [0], [0], [0, 0, 1, 0], [], []>} : vector<5x8xbf16>, vector<5x8xbf16>, vector<5x5xf32> -> vector<5x5xf32>
    %cst_230 = arith.constant 0.353553385 : f32
    %616 = vector.broadcast %cst_230 : f32 to vector<5x5xf32>
    %617 = arith.mulf %615, %616 : vector<5x5xf32>
    %cst_231 = arith.constant dense<0xFF800000> : vector<5xf32>
    %618 = vector.multi_reduction <maximumf>, %617, %cst_231 [1] : vector<5x5xf32> to vector<5xf32>
    %619 = vector.shape_cast %618 : vector<5xf32> to vector<5x1xf32>
    %620 = vector.broadcast %619 : vector<5x1xf32> to vector<5x5xf32>
    %621 = arith.subf %617, %620 : vector<5x5xf32>
    %622 = math.exp %621 : vector<5x5xf32>
    %cst_232 = arith.constant dense<0.000000e+00> : vector<5xf32>
    %623 = vector.multi_reduction <add>, %622, %cst_232 [1] : vector<5x5xf32> to vector<5xf32>
    %624 = vector.shape_cast %623 : vector<5xf32> to vector<5x1xf32>
    %625 = tpu.reciprocal %624 {approx = true} : vector<5x1xf32> -> vector<5x1xf32>
    %626 = vector.broadcast %625 : vector<5x1xf32> to vector<5x5xf32>
    %627 = arith.mulf %622, %626 : vector<5x5xf32>
    %628 = arith.truncf %627 : vector<5x5xf32> to vector<5x5xbf16>
    %cst_233 = arith.constant dense<0.000000e+00> : vector<5x8xf32>
    %629 = tpu.matmul %628, %614, %cst_233 {dimension_numbers = #tpu.dot_dimension_numbers<[1], [0], [0], [1], [0, 0, 1, 1], [], []>} : vector<5x5xbf16>, vector<5x8xbf16>, vector<5x8xf32> -> vector<5x8xf32>
    %630 = arith.truncf %629 : vector<5x8xf32> to vector<5x8xbf16>
    %631 = vector.extract_strided_slice %447 {offsets = [2, 0, 0], sizes = [1, 8, 32], strides = [1, 1, 1]} : vector<4x8x32xbf16> to vector<1x8x32xbf16>
    %632 = vector.shape_cast %631 : vector<1x8x32xbf16> to vector<8x32xbf16>
    %cst_234 = arith.constant dense<0.000000e+00> : vector<5x32xf32>
    %633 = tpu.matmul %630, %632, %cst_234 {dimension_numbers = #tpu.dot_dimension_numbers<[1], [0], [0], [1], [0, 0, 1, 1], [], []>} : vector<5x8xbf16>, vector<8x32xbf16>, vector<5x32xf32> -> vector<5x32xf32>
    %634 = arith.addf %564, %633 : vector<5x32xf32>
    %635 = vector.extract_strided_slice %609 {offsets = [5, 0], sizes = [5, 8], strides = [1, 1]} : vector<10x8xbf16> to vector<5x8xbf16>
    %636 = vector.extract_strided_slice %610 {offsets = [5, 0], sizes = [5, 8], strides = [1, 1]} : vector<10x8xbf16> to vector<5x8xbf16>
    %637 = vector.extract_strided_slice %611 {offsets = [5, 0], sizes = [5, 8], strides = [1, 1]} : vector<10x8xbf16> to vector<5x8xbf16>
    %cst_235 = arith.constant dense<0.000000e+00> : vector<5x5xf32>
    %638 = tpu.matmul %635, %636, %cst_235 {dimension_numbers = #tpu.dot_dimension_numbers<[1], [1], [0], [0], [0, 0, 1, 0], [], []>} : vector<5x8xbf16>, vector<5x8xbf16>, vector<5x5xf32> -> vector<5x5xf32>
    %cst_236 = arith.constant 0.353553385 : f32
    %639 = vector.broadcast %cst_236 : f32 to vector<5x5xf32>
    %640 = arith.mulf %638, %639 : vector<5x5xf32>
    %cst_237 = arith.constant dense<0xFF800000> : vector<5xf32>
    %641 = vector.multi_reduction <maximumf>, %640, %cst_237 [1] : vector<5x5xf32> to vector<5xf32>
    %642 = vector.shape_cast %641 : vector<5xf32> to vector<5x1xf32>
    %643 = vector.broadcast %642 : vector<5x1xf32> to vector<5x5xf32>
    %644 = arith.subf %640, %643 : vector<5x5xf32>
    %645 = math.exp %644 : vector<5x5xf32>
    %cst_238 = arith.constant dense<0.000000e+00> : vector<5xf32>
    %646 = vector.multi_reduction <add>, %645, %cst_238 [1] : vector<5x5xf32> to vector<5xf32>
    %647 = vector.shape_cast %646 : vector<5xf32> to vector<5x1xf32>
    %648 = tpu.reciprocal %647 {approx = true} : vector<5x1xf32> -> vector<5x1xf32>
    %649 = vector.broadcast %648 : vector<5x1xf32> to vector<5x5xf32>
    %650 = arith.mulf %645, %649 : vector<5x5xf32>
    %651 = arith.truncf %650 : vector<5x5xf32> to vector<5x5xbf16>
    %cst_239 = arith.constant dense<0.000000e+00> : vector<5x8xf32>
    %652 = tpu.matmul %651, %637, %cst_239 {dimension_numbers = #tpu.dot_dimension_numbers<[1], [0], [0], [1], [0, 0, 1, 1], [], []>} : vector<5x5xbf16>, vector<5x8xbf16>, vector<5x8xf32> -> vector<5x8xf32>
    %653 = arith.truncf %652 : vector<5x8xf32> to vector<5x8xbf16>
    %654 = vector.extract_strided_slice %447 {offsets = [2, 0, 0], sizes = [1, 8, 32], strides = [1, 1, 1]} : vector<4x8x32xbf16> to vector<1x8x32xbf16>
    %655 = vector.shape_cast %654 : vector<1x8x32xbf16> to vector<8x32xbf16>
    %cst_240 = arith.constant dense<0.000000e+00> : vector<5x32xf32>
    %656 = tpu.matmul %653, %655, %cst_240 {dimension_numbers = #tpu.dot_dimension_numbers<[1], [0], [0], [1], [0, 0, 1, 1], [], []>} : vector<5x8xbf16>, vector<8x32xbf16>, vector<5x32xf32> -> vector<5x32xf32>
    %657 = arith.addf %587, %656 : vector<5x32xf32>
    %658 = vector.extract_strided_slice %435 {offsets = [3, 0, 0], sizes = [1, 32, 8], strides = [1, 1, 1]} : vector<4x32x8xbf16> to vector<1x32x8xbf16>
    %659 = vector.shape_cast %658 : vector<1x32x8xbf16> to vector<32x8xbf16>
    %cst_241 = arith.constant dense<0.000000e+00> : vector<10x8xf32>
    %660 = tpu.matmul %433, %659, %cst_241 {dimension_numbers = #tpu.dot_dimension_numbers<[1], [0], [0], [1], [0, 0, 1, 1], [], []>} : vector<10x32xbf16>, vector<32x8xbf16>, vector<10x8xf32> -> vector<10x8xf32>
    %661 = vector.extract_strided_slice %437 {offsets = [3, 0, 0], sizes = [1, 1, 8], strides = [1, 1, 1]} : vector<4x1x8xf32> to vector<1x1x8xf32>
    %662 = vector.shape_cast %661 : vector<1x1x8xf32> to vector<1x8xf32>
    %663 = vector.broadcast %662 : vector<1x8xf32> to vector<10x8xf32>
    %664 = arith.addf %660, %663 : vector<10x8xf32>
    %665 = vector.extract_strided_slice %439 {offsets = [3, 0, 0], sizes = [1, 32, 8], strides = [1, 1, 1]} : vector<4x32x8xbf16> to vector<1x32x8xbf16>
    %666 = vector.shape_cast %665 : vector<1x32x8xbf16> to vector<32x8xbf16>
    %cst_242 = arith.constant dense<0.000000e+00> : vector<10x8xf32>
    %667 = tpu.matmul %433, %666, %cst_242 {dimension_numbers = #tpu.dot_dimension_numbers<[1], [0], [0], [1], [0, 0, 1, 1], [], []>} : vector<10x32xbf16>, vector<32x8xbf16>, vector<10x8xf32> -> vector<10x8xf32>
    %668 = vector.extract_strided_slice %441 {offsets = [3, 0, 0], sizes = [1, 1, 8], strides = [1, 1, 1]} : vector<4x1x8xf32> to vector<1x1x8xf32>
    %669 = vector.shape_cast %668 : vector<1x1x8xf32> to vector<1x8xf32>
    %670 = vector.broadcast %669 : vector<1x8xf32> to vector<10x8xf32>
    %671 = arith.addf %667, %670 : vector<10x8xf32>
    %672 = vector.extract_strided_slice %443 {offsets = [3, 0, 0], sizes = [1, 32, 8], strides = [1, 1, 1]} : vector<4x32x8xbf16> to vector<1x32x8xbf16>
    %673 = vector.shape_cast %672 : vector<1x32x8xbf16> to vector<32x8xbf16>
    %cst_243 = arith.constant dense<0.000000e+00> : vector<10x8xf32>
    %674 = tpu.matmul %433, %673, %cst_243 {dimension_numbers = #tpu.dot_dimension_numbers<[1], [0], [0], [1], [0, 0, 1, 1], [], []>} : vector<10x32xbf16>, vector<32x8xbf16>, vector<10x8xf32> -> vector<10x8xf32>
    %675 = vector.extract_strided_slice %445 {offsets = [3, 0, 0], sizes = [1, 1, 8], strides = [1, 1, 1]} : vector<4x1x8xf32> to vector<1x1x8xf32>
    %676 = vector.shape_cast %675 : vector<1x1x8xf32> to vector<1x8xf32>
    %677 = vector.broadcast %676 : vector<1x8xf32> to vector<10x8xf32>
    %678 = arith.addf %674, %677 : vector<10x8xf32>
    %679 = arith.truncf %664 : vector<10x8xf32> to vector<10x8xbf16>
    %680 = arith.truncf %671 : vector<10x8xf32> to vector<10x8xbf16>
    %681 = arith.truncf %678 : vector<10x8xf32> to vector<10x8xbf16>
    %682 = vector.extract_strided_slice %679 {offsets = [0, 0], sizes = [5, 8], strides = [1, 1]} : vector<10x8xbf16> to vector<5x8xbf16>
    %683 = vector.extract_strided_slice %680 {offsets = [0, 0], sizes = [5, 8], strides = [1, 1]} : vector<10x8xbf16> to vector<5x8xbf16>
    %684 = vector.extract_strided_slice %681 {offsets = [0, 0], sizes = [5, 8], strides = [1, 1]} : vector<10x8xbf16> to vector<5x8xbf16>
    %cst_244 = arith.constant dense<0.000000e+00> : vector<5x5xf32>
    %685 = tpu.matmul %682, %683, %cst_244 {dimension_numbers = #tpu.dot_dimension_numbers<[1], [1], [0], [0], [0, 0, 1, 0], [], []>} : vector<5x8xbf16>, vector<5x8xbf16>, vector<5x5xf32> -> vector<5x5xf32>
    %cst_245 = arith.constant 0.353553385 : f32
    %686 = vector.broadcast %cst_245 : f32 to vector<5x5xf32>
    %687 = arith.mulf %685, %686 : vector<5x5xf32>
    %cst_246 = arith.constant dense<0xFF800000> : vector<5xf32>
    %688 = vector.multi_reduction <maximumf>, %687, %cst_246 [1] : vector<5x5xf32> to vector<5xf32>
    %689 = vector.shape_cast %688 : vector<5xf32> to vector<5x1xf32>
    %690 = vector.broadcast %689 : vector<5x1xf32> to vector<5x5xf32>
    %691 = arith.subf %687, %690 : vector<5x5xf32>
    %692 = math.exp %691 : vector<5x5xf32>
    %cst_247 = arith.constant dense<0.000000e+00> : vector<5xf32>
    %693 = vector.multi_reduction <add>, %692, %cst_247 [1] : vector<5x5xf32> to vector<5xf32>
    %694 = vector.shape_cast %693 : vector<5xf32> to vector<5x1xf32>
    %695 = tpu.reciprocal %694 {approx = true} : vector<5x1xf32> -> vector<5x1xf32>
    %696 = vector.broadcast %695 : vector<5x1xf32> to vector<5x5xf32>
    %697 = arith.mulf %692, %696 : vector<5x5xf32>
    %698 = arith.truncf %697 : vector<5x5xf32> to vector<5x5xbf16>
    %cst_248 = arith.constant dense<0.000000e+00> : vector<5x8xf32>
    %699 = tpu.matmul %698, %684, %cst_248 {dimension_numbers = #tpu.dot_dimension_numbers<[1], [0], [0], [1], [0, 0, 1, 1], [], []>} : vector<5x5xbf16>, vector<5x8xbf16>, vector<5x8xf32> -> vector<5x8xf32>
    %700 = arith.truncf %699 : vector<5x8xf32> to vector<5x8xbf16>
    %701 = vector.extract_strided_slice %447 {offsets = [3, 0, 0], sizes = [1, 8, 32], strides = [1, 1, 1]} : vector<4x8x32xbf16> to vector<1x8x32xbf16>
    %702 = vector.shape_cast %701 : vector<1x8x32xbf16> to vector<8x32xbf16>
    %cst_249 = arith.constant dense<0.000000e+00> : vector<5x32xf32>
    %703 = tpu.matmul %700, %702, %cst_249 {dimension_numbers = #tpu.dot_dimension_numbers<[1], [0], [0], [1], [0, 0, 1, 1], [], []>} : vector<5x8xbf16>, vector<8x32xbf16>, vector<5x32xf32> -> vector<5x32xf32>
    %704 = arith.addf %634, %703 : vector<5x32xf32>
    %705 = vector.extract_strided_slice %679 {offsets = [5, 0], sizes = [5, 8], strides = [1, 1]} : vector<10x8xbf16> to vector<5x8xbf16>
    %706 = vector.extract_strided_slice %680 {offsets = [5, 0], sizes = [5, 8], strides = [1, 1]} : vector<10x8xbf16> to vector<5x8xbf16>
    %707 = vector.extract_strided_slice %681 {offsets = [5, 0], sizes = [5, 8], strides = [1, 1]} : vector<10x8xbf16> to vector<5x8xbf16>
    %cst_250 = arith.constant dense<0.000000e+00> : vector<5x5xf32>
    %708 = tpu.matmul %705, %706, %cst_250 {dimension_numbers = #tpu.dot_dimension_numbers<[1], [1], [0], [0], [0, 0, 1, 0], [], []>} : vector<5x8xbf16>, vector<5x8xbf16>, vector<5x5xf32> -> vector<5x5xf32>
    %cst_251 = arith.constant 0.353553385 : f32
    %709 = vector.broadcast %cst_251 : f32 to vector<5x5xf32>
    %710 = arith.mulf %708, %709 : vector<5x5xf32>
    %cst_252 = arith.constant dense<0xFF800000> : vector<5xf32>
    %711 = vector.multi_reduction <maximumf>, %710, %cst_252 [1] : vector<5x5xf32> to vector<5xf32>
    %712 = vector.shape_cast %711 : vector<5xf32> to vector<5x1xf32>
    %713 = vector.broadcast %712 : vector<5x1xf32> to vector<5x5xf32>
    %714 = arith.subf %710, %713 : vector<5x5xf32>
    %715 = math.exp %714 : vector<5x5xf32>
    %cst_253 = arith.constant dense<0.000000e+00> : vector<5xf32>
    %716 = vector.multi_reduction <add>, %715, %cst_253 [1] : vector<5x5xf32> to vector<5xf32>
    %717 = vector.shape_cast %716 : vector<5xf32> to vector<5x1xf32>
    %718 = tpu.reciprocal %717 {approx = true} : vector<5x1xf32> -> vector<5x1xf32>
    %719 = vector.broadcast %718 : vector<5x1xf32> to vector<5x5xf32>
    %720 = arith.mulf %715, %719 : vector<5x5xf32>
    %721 = arith.truncf %720 : vector<5x5xf32> to vector<5x5xbf16>
    %cst_254 = arith.constant dense<0.000000e+00> : vector<5x8xf32>
    %722 = tpu.matmul %721, %707, %cst_254 {dimension_numbers = #tpu.dot_dimension_numbers<[1], [0], [0], [1], [0, 0, 1, 1], [], []>} : vector<5x5xbf16>, vector<5x8xbf16>, vector<5x8xf32> -> vector<5x8xf32>
    %723 = arith.truncf %722 : vector<5x8xf32> to vector<5x8xbf16>
    %724 = vector.extract_strided_slice %447 {offsets = [3, 0, 0], sizes = [1, 8, 32], strides = [1, 1, 1]} : vector<4x8x32xbf16> to vector<1x8x32xbf16>
    %725 = vector.shape_cast %724 : vector<1x8x32xbf16> to vector<8x32xbf16>
    %cst_255 = arith.constant dense<0.000000e+00> : vector<5x32xf32>
    %726 = tpu.matmul %723, %725, %cst_255 {dimension_numbers = #tpu.dot_dimension_numbers<[1], [0], [0], [1], [0, 0, 1, 1], [], []>} : vector<5x8xbf16>, vector<8x32xbf16>, vector<5x32xf32> -> vector<5x32xf32>
    %727 = arith.addf %657, %726 : vector<5x32xf32>
    %c0_256 = arith.constant 0 : index
    %c0_257 = arith.constant 0 : index
    %728 = vector.load %arg25[%c0_256, %c0_257] : memref<10x32xf32, #tpu.memory_space<vmem>>, vector<5x32xf32>
    tpu.vector_store %arg25[%c0_256, %c0_257], %704 {strides = array<i32>} : memref<10x32xf32, #tpu.memory_space<vmem>>, vector<5x32xf32>,
    %c5_258 = arith.constant 5 : index
    %c0_259 = arith.constant 0 : index
    %729 = vector.load %arg25[%c5_258, %c0_259] : memref<10x32xf32, #tpu.memory_space<vmem>>, vector<5x32xf32>
    tpu.vector_store %arg25[%c5_258, %c0_259], %727 {strides = array<i32>} : memref<10x32xf32, #tpu.memory_space<vmem>>, vector<5x32xf32>,
    %c0_260 = arith.constant 0 : index
    %c0_261 = arith.constant 0 : index
    %730 = vector.load %arg25[%c0_260, %c0_261] : memref<10x32xf32, #tpu.memory_space<vmem>>, vector<10x32xf32>
    %731 = vector.broadcast %449 : vector<1x32xf32> to vector<10x32xf32>
    %732 = arith.addf %730, %731 : vector<10x32xf32>
    %733 = arith.addf %406, %732 : vector<10x32xf32>
    %c1_262 = arith.constant 1 : index
    %c0_263 = arith.constant 0 : index
    %c0_264 = arith.constant 0 : index
    %734 = vector.load %arg16[%c1_262, %c0_263, %c0_264] : memref<2x1x32xf32, #tpu.memory_space<vmem>>, vector<1x1x32xf32>
    %735 = vector.shape_cast %734 : vector<1x1x32xf32> to vector<1x32xf32>
    %c1_265 = arith.constant 1 : index
    %c0_266 = arith.constant 0 : index
    %c0_267 = arith.constant 0 : index
    %736 = vector.load %arg17[%c1_265, %c0_266, %c0_267] : memref<2x1x32xf32, #tpu.memory_space<vmem>>, vector<1x1x32xf32>
    %737 = vector.shape_cast %736 : vector<1x1x32xf32> to vector<1x32xf32>
    %cst_268 = arith.constant dense<0.000000e+00> : vector<10xf32>
    %738 = vector.multi_reduction <add>, %733, %cst_268 [1] : vector<10x32xf32> to vector<10xf32>
    %739 = vector.shape_cast %738 : vector<10xf32> to vector<10x1xf32>
    %cst_269 = arith.constant 3.200000e+01 : f32
    %740 = vector.broadcast %cst_269 : f32 to vector<10x1xf32>
    %741 = arith.divf %739, %740 : vector<10x1xf32>
    %742 = vector.broadcast %741 : vector<10x1xf32> to vector<10x32xf32>
    %743 = arith.subf %733, %742 : vector<10x32xf32>
    %744 = arith.mulf %743, %743 : vector<10x32xf32>
    %cst_270 = arith.constant dense<0.000000e+00> : vector<10xf32>
    %745 = vector.multi_reduction <add>, %744, %cst_270 [1] : vector<10x32xf32> to vector<10xf32>
    %746 = vector.shape_cast %745 : vector<10xf32> to vector<10x1xf32>
    %cst_271 = arith.constant 3.200000e+01 : f32
    %747 = vector.broadcast %cst_271 : f32 to vector<10x1xf32>
    %748 = arith.divf %746, %747 : vector<10x1xf32>
    %749 = vector.broadcast %741 : vector<10x1xf32> to vector<10x32xf32>
    %750 = arith.subf %733, %749 : vector<10x32xf32>
    %cst_272 = arith.constant 9.99999997E-7 : f32
    %751 = vector.broadcast %cst_272 : f32 to vector<10x1xf32>
    %752 = arith.addf %748, %751 : vector<10x1xf32>
    %753 = math.rsqrt %752 : vector<10x1xf32>
    %754 = vector.broadcast %753 : vector<10x1xf32> to vector<10x32xf32>
    %755 = arith.mulf %750, %754 : vector<10x32xf32>
    %756 = vector.broadcast %735 : vector<1x32xf32> to vector<10x32xf32>
    %757 = arith.mulf %755, %756 : vector<10x32xf32>
    %758 = vector.broadcast %737 : vector<1x32xf32> to vector<10x32xf32>
    %759 = arith.addf %757, %758 : vector<10x32xf32>
    %760 = arith.truncf %759 : vector<10x32xf32> to vector<10x32xbf16>
    %c1_273 = arith.constant 1 : index
    %c0_274 = arith.constant 0 : index
    %c0_275 = arith.constant 0 : index
    %761 = vector.load %arg18[%c1_273, %c0_274, %c0_275] : memref<2x32x128xbf16, #tpu.memory_space<vmem>>, vector<1x32x128xbf16>
    %762 = vector.shape_cast %761 : vector<1x32x128xbf16> to vector<32x128xbf16>
    %cst_276 = arith.constant dense<0.000000e+00> : vector<10x128xf32>
    %763 = tpu.matmul %760, %762, %cst_276 {dimension_numbers = #tpu.dot_dimension_numbers<[1], [0], [0], [1], [0, 0, 1, 1], [], []>} : vector<10x32xbf16>, vector<32x128xbf16>, vector<10x128xf32> -> vector<10x128xf32>
    %c1_277 = arith.constant 1 : index
    %c0_278 = arith.constant 0 : index
    %c0_279 = arith.constant 0 : index
    %764 = vector.load %arg19[%c1_277, %c0_278, %c0_279] : memref<2x1x128xf32, #tpu.memory_space<vmem>>, vector<1x1x128xf32>
    %765 = vector.shape_cast %764 : vector<1x1x128xf32> to vector<1x128xf32>
    %766 = vector.broadcast %765 : vector<1x128xf32> to vector<10x128xf32>
    %767 = arith.addf %763, %766 : vector<10x128xf32>
    %768 = arith.mulf %767, %767 : vector<10x128xf32>
    %769 = arith.mulf %767, %768 : vector<10x128xf32>
    %cst_280 = arith.constant 4.471500e-02 : f32
    %770 = vector.broadcast %cst_280 : f32 to vector<10x128xf32>
    %771 = arith.mulf %770, %769 : vector<10x128xf32>
    %772 = arith.addf %767, %771 : vector<10x128xf32>
    %cst_281 = arith.constant 0.797884583 : f32
    %773 = vector.broadcast %cst_281 : f32 to vector<10x128xf32>
    %774 = arith.mulf %773, %772 : vector<10x128xf32>
    %775 = math.tanh %774 : vector<10x128xf32>
    %cst_282 = arith.constant 1.000000e+00 : f32
    %776 = vector.broadcast %cst_282 : f32 to vector<10x128xf32>
    %777 = arith.addf %776, %775 : vector<10x128xf32>
    %cst_283 = arith.constant 5.000000e-01 : f32
    %778 = vector.broadcast %cst_283 : f32 to vector<10x128xf32>
    %779 = arith.mulf %778, %777 : vector<10x128xf32>
    %780 = arith.mulf %767, %779 : vector<10x128xf32>
    %781 = arith.truncf %780 : vector<10x128xf32> to vector<10x128xbf16>
    %c1_284 = arith.constant 1 : index
    %c0_285 = arith.constant 0 : index
    %c0_286 = arith.constant 0 : index
    %782 = vector.load %arg20[%c1_284, %c0_285, %c0_286] : memref<2x128x32xbf16, #tpu.memory_space<vmem>>, vector<1x128x32xbf16>
    %783 = vector.shape_cast %782 : vector<1x128x32xbf16> to vector<128x32xbf16>
    %cst_287 = arith.constant dense<0.000000e+00> : vector<10x32xf32>
    %784 = tpu.matmul %781, %783, %cst_287 {dimension_numbers = #tpu.dot_dimension_numbers<[1], [0], [0], [1], [0, 0, 1, 1], [], []>} : vector<10x128xbf16>, vector<128x32xbf16>, vector<10x32xf32> -> vector<10x32xf32>
    %785 = arith.addf %733, %784 : vector<10x32xf32>
    %c1_288 = arith.constant 1 : index
    %c0_289 = arith.constant 0 : index
    %c0_290 = arith.constant 0 : index
    %786 = vector.load %arg21[%c1_288, %c0_289, %c0_290] : memref<2x1x32xf32, #tpu.memory_space<vmem>>, vector<1x1x32xf32>
    %787 = vector.shape_cast %786 : vector<1x1x32xf32> to vector<1x32xf32>
    %788 = vector.broadcast %787 : vector<1x32xf32> to vector<10x32xf32>
    %789 = arith.addf %785, %788 : vector<10x32xf32>
    %c0_291 = arith.constant 0 : index
    %c0_292 = arith.constant 0 : index
    %790 = vector.load %arg22[%c0_291, %c0_292] : memref<1x32xf32, #tpu.memory_space<vmem>>, vector<1x32xf32>
    %c0_293 = arith.constant 0 : index
    %c0_294 = arith.constant 0 : index
    %791 = vector.load %arg23[%c0_293, %c0_294] : memref<1x32xf32, #tpu.memory_space<vmem>>, vector<1x32xf32>
    %cst_295 = arith.constant dense<0.000000e+00> : vector<10xf32>
    %792 = vector.multi_reduction <add>, %789, %cst_295 [1] : vector<10x32xf32> to vector<10xf32>
    %793 = vector.shape_cast %792 : vector<10xf32> to vector<10x1xf32>
    %cst_296 = arith.constant 3.200000e+01 : f32
    %794 = vector.broadcast %cst_296 : f32 to vector<10x1xf32>
    %795 = arith.divf %793, %794 : vector<10x1xf32>
    %796 = vector.broadcast %795 : vector<10x1xf32> to vector<10x32xf32>
    %797 = arith.subf %789, %796 : vector<10x32xf32>
    %798 = arith.mulf %797, %797 : vector<10x32xf32>
    %cst_297 = arith.constant dense<0.000000e+00> : vector<10xf32>
    %799 = vector.multi_reduction <add>, %798, %cst_297 [1] : vector<10x32xf32> to vector<10xf32>
    %800 = vector.shape_cast %799 : vector<10xf32> to vector<10x1xf32>
    %cst_298 = arith.constant 3.200000e+01 : f32
    %801 = vector.broadcast %cst_298 : f32 to vector<10x1xf32>
    %802 = arith.divf %800, %801 : vector<10x1xf32>
    %803 = vector.broadcast %795 : vector<10x1xf32> to vector<10x32xf32>
    %804 = arith.subf %789, %803 : vector<10x32xf32>
    %cst_299 = arith.constant 9.99999997E-7 : f32
    %805 = vector.broadcast %cst_299 : f32 to vector<10x1xf32>
    %806 = arith.addf %802, %805 : vector<10x1xf32>
    %807 = math.rsqrt %806 : vector<10x1xf32>
    %808 = vector.broadcast %807 : vector<10x1xf32> to vector<10x32xf32>
    %809 = arith.mulf %804, %808 : vector<10x32xf32>
    %810 = vector.broadcast %790 : vector<1x32xf32> to vector<10x32xf32>
    %811 = arith.mulf %809, %810 : vector<10x32xf32>
    %812 = vector.broadcast %791 : vector<1x32xf32> to vector<10x32xf32>
    %813 = arith.addf %811, %812 : vector<10x32xf32>
    %c0_300 = arith.constant 0 : index
    %c0_301 = arith.constant 0 : index
    %c0_302 = arith.constant 0 : index
    %814 = vector.load %arg24[%c0_300, %c0_301, %c0_302] : memref<1x10x32xf32, #tpu.memory_space<vmem>>, vector<1x10x32xf32>
    %815 = vector.shape_cast %814 : vector<1x10x32xf32> to vector<10x32xf32>
    %816 = vector.shape_cast %813 : vector<10x32xf32> to vector<1x10x32xf32>
    tpu.vector_store %arg24[%c0_300, %c0_301, %c0_302], %816 {strides = array<i32>} : memref<1x10x32xf32, #tpu.memory_space<vmem>>, vector<1x10x32xf32>,
    return
  }
  func.func @transform_0(%arg0: i32) -> (i32, i32, i32) {
    %c0_i32 = arith.constant 0 : i32
    %c0_i32_0 = arith.constant 0 : i32
    %c0_i32_1 = arith.constant 0 : i32
    return %arg0, %c0_i32, %c0_i32_0 : i32, i32, i32
  }
  func.func @transform_1(%arg0: i32) -> (i32, i32) {
    %c0_i32 = arith.constant 0 : i32
    %c0_i32_0 = arith.constant 0 : i32
    %c0_i32_1 = arith.constant 0 : i32
    return %c0_i32, %c0_i32_0 : i32, i32
  }
  func.func @transform_2(%arg0: i32) -> (i32, i32) {
    %c0_i32 = arith.constant 0 : i32
    %c0_i32_0 = arith.constant 0 : i32
    %c0_i32_1 = arith.constant 0 : i32
    return %c0_i32, %c0_i32_0 : i32, i32
  }
  func.func @transform_3(%arg0: i32) -> (i32, i32) {
    %c0_i32 = arith.constant 0 : i32
    %c0_i32_0 = arith.constant 0 : i32
    %c0_i32_1 = arith.constant 0 : i32
    return %c0_i32, %c0_i32_0 : i32, i32
  }
  func.func @transform_4(%arg0: i32) -> (i32, i32) {
    %c0_i32 = arith.constant 0 : i32
    %c0_i32_0 = arith.constant 0 : i32
    %c0_i32_1 = arith.constant 0 : i32
    return %c0_i32, %c0_i32_0 : i32, i32
  }
  func.func @transform_5(%arg0: i32) -> (i32, i32, i32) {
    %c0_i32 = arith.constant 0 : i32
    %c0_i32_0 = arith.constant 0 : i32
    %c0_i32_1 = arith.constant 0 : i32
    %c0_i32_2 = arith.constant 0 : i32
    return %c0_i32, %c0_i32_0, %c0_i32_1 : i32, i32, i32
  }
  func.func @transform_6(%arg0: i32) -> (i32, i32, i32) {
    %c0_i32 = arith.constant 0 : i32
    %c0_i32_0 = arith.constant 0 : i32
    %c0_i32_1 = arith.constant 0 : i32
    %c0_i32_2 = arith.constant 0 : i32
    return %c0_i32, %c0_i32_0, %c0_i32_1 : i32, i32, i32
  }
  func.func @transform_7(%arg0: i32) -> (i32, i32, i32, i32) {
    %c0_i32 = arith.constant 0 : i32
    %c0_i32_0 = arith.constant 0 : i32
    %c0_i32_1 = arith.constant 0 : i32
    %c0_i32_2 = arith.constant 0 : i32
    %c0_i32_3 = arith.constant 0 : i32
    return %c0_i32, %c0_i32_0, %c0_i32_1, %c0_i32_2 : i32, i32, i32, i32
  }
  func.func @transform_8(%arg0: i32) -> (i32, i32, i32, i32) {
    %c0_i32 = arith.constant 0 : i32
    %c0_i32_0 = arith.constant 0 : i32
    %c0_i32_1 = arith.constant 0 : i32
    %c0_i32_2 = arith.constant 0 : i32
    %c0_i32_3 = arith.constant 0 : i32
    return %c0_i32, %c0_i32_0, %c0_i32_1, %c0_i32_2 : i32, i32, i32, i32
  }
  func.func @transform_9(%arg0: i32) -> (i32, i32, i32, i32) {
    %c0_i32 = arith.constant 0 : i32
    %c0_i32_0 = arith.constant 0 : i32
    %c0_i32_1 = arith.constant 0 : i32
    %c0_i32_2 = arith.constant 0 : i32
    %c0_i32_3 = arith.constant 0 : i32
    return %c0_i32, %c0_i32_0, %c0_i32_1, %c0_i32_2 : i32, i32, i32, i32
  }
  func.func @transform_10(%arg0: i32) -> (i32, i32, i32, i32) {
    %c0_i32 = arith.constant 0 : i32
    %c0_i32_0 = arith.constant 0 : i32
    %c0_i32_1 = arith.constant 0 : i32
    %c0_i32_2 = arith.constant 0 : i32
    %c0_i32_3 = arith.constant 0 : i32
    return %c0_i32, %c0_i32_0, %c0_i32_1, %c0_i32_2 : i32, i32, i32, i32
  }
  func.func @transform_11(%arg0: i32) -> (i32, i32, i32, i32) {
    %c0_i32 = arith.constant 0 : i32
    %c0_i32_0 = arith.constant 0 : i32
    %c0_i32_1 = arith.constant 0 : i32
    %c0_i32_2 = arith.constant 0 : i32
    %c0_i32_3 = arith.constant 0 : i32
    return %c0_i32, %c0_i32_0, %c0_i32_1, %c0_i32_2 : i32, i32, i32, i32
  }
  func.func @transform_12(%arg0: i32) -> (i32, i32, i32, i32) {
    %c0_i32 = arith.constant 0 : i32
    %c0_i32_0 = arith.constant 0 : i32
    %c0_i32_1 = arith.constant 0 : i32
    %c0_i32_2 = arith.constant 0 : i32
    %c0_i32_3 = arith.constant 0 : i32
    return %c0_i32, %c0_i32_0, %c0_i32_1, %c0_i32_2 : i32, i32, i32, i32
  }
  func.func @transform_13(%arg0: i32) -> (i32, i32, i32, i32) {
    %c0_i32 = arith.constant 0 : i32
    %c0_i32_0 = arith.constant 0 : i32
    %c0_i32_1 = arith.constant 0 : i32
    %c0_i32_2 = arith.constant 0 : i32
    %c0_i32_3 = arith.constant 0 : i32
    return %c0_i32, %c0_i32_0, %c0_i32_1, %c0_i32_2 : i32, i32, i32, i32
  }
  func.func @transform_14(%arg0: i32) -> (i32, i32, i32) {
    %c0_i32 = arith.constant 0 : i32
    %c0_i32_0 = arith.constant 0 : i32
    %c0_i32_1 = arith.constant 0 : i32
    %c0_i32_2 = arith.constant 0 : i32
    return %c0_i32, %c0_i32_0, %c0_i32_1 : i32, i32, i32
  }
  func.func @transform_15(%arg0: i32) -> (i32, i32, i32) {
    %c0_i32 = arith.constant 0 : i32
    %c0_i32_0 = arith.constant 0 : i32
    %c0_i32_1 = arith.constant 0 : i32
    %c0_i32_2 = arith.constant 0 : i32
    return %c0_i32, %c0_i32_0, %c0_i32_1 : i32, i32, i32
  }
  func.func @transform_16(%arg0: i32) -> (i32, i32, i32) {
    %c0_i32 = arith.constant 0 : i32
    %c0_i32_0 = arith.constant 0 : i32
    %c0_i32_1 = arith.constant 0 : i32
    %c0_i32_2 = arith.constant 0 : i32
    return %c0_i32, %c0_i32_0, %c0_i32_1 : i32, i32, i32
  }
  func.func @transform_17(%arg0: i32) -> (i32, i32, i32) {
    %c0_i32 = arith.constant 0 : i32
    %c0_i32_0 = arith.constant 0 : i32
    %c0_i32_1 = arith.constant 0 : i32
    %c0_i32_2 = arith.constant 0 : i32
    return %c0_i32, %c0_i32_0, %c0_i32_1 : i32, i32, i32
  }
  func.func @transform_18(%arg0: i32) -> (i32, i32, i32) {
    %c0_i32 = arith.constant 0 : i32
    %c0_i32_0 = arith.constant 0 : i32
    %c0_i32_1 = arith.constant 0 : i32
    %c0_i32_2 = arith.constant 0 : i32
    return %c0_i32, %c0_i32_0, %c0_i32_1 : i32, i32, i32
  }
  func.func @transform_19(%arg0: i32) -> (i32, i32, i32) {
    %c0_i32 = arith.constant 0 : i32
    %c0_i32_0 = arith.constant 0 : i32
    %c0_i32_1 = arith.constant 0 : i32
    %c0_i32_2 = arith.constant 0 : i32
    return %c0_i32, %c0_i32_0, %c0_i32_1 : i32, i32, i32
  }
  func.func @transform_20(%arg0: i32) -> (i32, i32, i32) {
    %c0_i32 = arith.constant 0 : i32
    %c0_i32_0 = arith.constant 0 : i32
    %c0_i32_1 = arith.constant 0 : i32
    %c0_i32_2 = arith.constant 0 : i32
    return %c0_i32, %c0_i32_0, %c0_i32_1 : i32, i32, i32
  }
  func.func @transform_21(%arg0: i32) -> (i32, i32) {
    %c0_i32 = arith.constant 0 : i32
    %c0_i32_0 = arith.constant 0 : i32
    %c0_i32_1 = arith.constant 0 : i32
    return %c0_i32, %c0_i32_0 : i32, i32
  }
  func.func @transform_22(%arg0: i32) -> (i32, i32) {
    %c0_i32 = arith.constant 0 : i32
    %c0_i32_0 = arith.constant 0 : i32
    %c0_i32_1 = arith.constant 0 : i32
    return %c0_i32, %c0_i32_0 : i32, i32
  }
  func.func @transform_23(%arg0: i32) -> (i32, i32, i32) {
    %c0_i32 = arith.constant 0 : i32
    %c0_i32_0 = arith.constant 0 : i32
    %c0_i32_1 = arith.constant 0 : i32
    return %arg0, %c0_i32, %c0_i32_0 : i32, i32, i32
  }
}

</mosaic_0001>

<llo_original>
// kernel: blip_base_forward.1
$region0: #{blip_base_forward.1}
  #allocation0 [shape = 'u32[]', space=smem, size = 0x4, offset = 0x4, fixed_abs, tag = 'smem constant byte address 0x4 - core index']
  #allocation1 [shape = 'u32[144,128]{1,0:T(1,128)}', space=vmem, size = 0x12000, scoped, tag = 'internal scratch']
  #allocation2 [shape = 'f32[10,32]{1,0:T(8,128)}', space=vmem, size = 0x2000, scoped, tag = 'scratch operand']
  %s0 = inlined_call_operand.vmem [shape: bf16[1,8,768], index: 0, kind: input, shape index: {}]
  %s1 = inlined_call_operand.vmem [shape: bf16[768,32], index: 1, kind: input, shape index: {}]
  %s2 = inlined_call_operand.vmem [shape: f32[1,32], index: 2, kind: input, shape index: {}]
  %s3 = inlined_call_operand.vmem [shape: f32[1,32], index: 3, kind: input, shape index: {}]
  %s4 = inlined_call_operand.vmem [shape: f32[5,32], index: 4, kind: input, shape index: {}]
  %s5 = inlined_call_operand.vmem [shape: f32[2,1,32], index: 5, kind: input, shape index: {}]
  %s6 = inlined_call_operand.vmem [shape: f32[2,1,32], index: 6, kind: input, shape index: {}]
  %s7 = inlined_call_operand.vmem [shape: bf16[2,4,32,8], index: 7, kind: input, shape index: {}]
  %s8 = inlined_call_operand.vmem [shape: f32[2,4,1,8], index: 8, kind: input, shape index: {}]
  %s9 = inlined_call_operand.vmem [shape: bf16[2,4,32,8], index: 9, kind: input, shape index: {}]
  %s10 = inlined_call_operand.vmem [shape: f32[2,4,1,8], index: 10, kind: input, shape index: {}]
  %s11 = inlined_call_operand.vmem [shape: bf16[2,4,32,8], index: 11, kind: input, shape index: {}]
  %s12 = inlined_call_operand.vmem [shape: f32[2,4,1,8], index: 12, kind: input, shape index: {}]
  %s13 = inlined_call_operand.vmem [shape: bf16[2,4,8,32], index: 13, kind: input, shape index: {}]
  %s14 = inlined_call_operand.vmem [shape: f32[2,1,32], index: 14, kind: input, shape index: {}]
  %s15 = inlined_call_operand.vmem [shape: f32[2,1,32], index: 15, kind: input, shape index: {}]
  %s16 = inlined_call_operand.vmem [shape: f32[2,1,32], index: 16, kind: input, shape index: {}]
  %s17 = inlined_call_operand.vmem [shape: bf16[2,32,128], index: 17, kind: input, shape index: {}]
  %s18 = inlined_call_operand.vmem [shape: f32[2,1,128], index: 18, kind: input, shape index: {}]
  %s19 = inlined_call_operand.vmem [shape: bf16[2,128,32], index: 19, kind: input, shape index: {}]
  %s20 = inlined_call_operand.vmem [shape: f32[2,1,32], index: 20, kind: input, shape index: {}]
  %s21 = inlined_call_operand.vmem [shape: f32[1,32], index: 21, kind: input, shape index: {}]
  %s22 = inlined_call_operand.vmem [shape: f32[1,32], index: 22, kind: input, shape index: {}]
  %s23 = inlined_call_operand.vmem [shape: f32[1,10,32], index: 23, kind: output, shape index: {}]
  %s24 = sld [smem:[#allocation0]]
  $region102: #{blip_base_forward.1} parent=0
    _
  %s26 = ssub.s32 1, %s24
  %s27 = scalar_select 0, %s26, %s24
  // Predicated region
  $region2: #{blip_base_forward.1} parent=0 // pred_check
    _
  $region3: #{blip_base_forward.1} parent=0 // pred_check_branch
    %29 = sbr.rel (0) target = $region5
  $region4: #{blip_base_forward.1} parent=0 // pred_region
    _
  $region5: #{blip_base_forward.1} parent=0 // pred_fallthru
    _
  // Predicated region
  $region6: #{blip_base_forward.1} parent=0 // pred_check
    _
  $region7: #{blip_base_forward.1} parent=0 // pred_check_branch
    %31 = sbr.rel (0) target = $region9
  $region8: #{blip_base_forward.1} parent=0 // pred_region
    _
  $region9: #{blip_base_forward.1} parent=0 // pred_fallthru
    _
  // Predicated region
  $region10: #{blip_base_forward.1} parent=0 // pred_check
    _
  $region11: #{blip_base_forward.1} parent=0 // pred_check_branch
    %33 = sbr.rel (0) target = $region13
  $region12: #{blip_base_forward.1} parent=0 // pred_region
    _
  $region13: #{blip_base_forward.1} parent=0 // pred_fallthru
    _
  // Predicated region
  $region14: #{blip_base_forward.1} parent=0 // pred_check
    _
  $region15: #{blip_base_forward.1} parent=0 // pred_check_branch
    %35 = sbr.rel (0) target = $region17
  $region16: #{blip_base_forward.1} parent=0 // pred_region
    _
  $region17: #{blip_base_forward.1} parent=0 // pred_fallthru
    _
  // Predicated region
  $region18: #{blip_base_forward.1} parent=0 // pred_check
    _
  $region19: #{blip_base_forward.1} parent=0 // pred_check_branch
    %37 = sbr.rel (0) target = $region21
  $region20: #{blip_base_forward.1} parent=0 // pred_region
    _
  $region21: #{blip_base_forward.1} parent=0 // pred_fallthru
    _
  // Predicated region
  $region22: #{blip_base_forward.1} parent=0 // pred_check
    _
  $region23: #{blip_base_forward.1} parent=0 // pred_check_branch
    %39 = sbr.rel (0) target = $region25
  $region24: #{blip_base_forward.1} parent=0 // pred_region
    _
  $region25: #{blip_base_forward.1} parent=0 // pred_fallthru
    _
  // Predicated region
  $region26: #{blip_base_forward.1} parent=0 // pred_check
    _
  $region27: #{blip_base_forward.1} parent=0 // pred_check_branch
    %41 = sbr.rel (0) target = $region29
  $region28: #{blip_base_forward.1} parent=0 // pred_region
    _
  $region29: #{blip_base_forward.1} parent=0 // pred_fallthru
    _
  // Predicated region
  $region30: #{blip_base_forward.1} parent=0 // pred_check
    _
  $region31: #{blip_base_forward.1} parent=0 // pred_check_branch
    %43 = sbr.rel (0) target = $region33
  $region32: #{blip_base_forward.1} parent=0 // pred_region
    _
  $region33: #{blip_base_forward.1} parent=0 // pred_fallthru
    _
  // Predicated region
  $region34: #{blip_base_forward.1} parent=0 // pred_check
    _
  $region35: #{blip_base_forward.1} parent=0 // pred_check_branch
    %45 = sbr.rel (0) target = $region37
  $region36: #{blip_base_forward.1} parent=0 // pred_region
    _
  $region37: #{blip_base_forward.1} parent=0 // pred_fallthru
    _
  // Predicated region
  $region38: #{blip_base_forward.1} parent=0 // pred_check
    _
  $region39: #{blip_base_forward.1} parent=0 // pred_check_branch
    %47 = sbr.rel (0) target = $region41
  $region40: #{blip_base_forward.1} parent=0 // pred_region
    _
  $region41: #{blip_base_forward.1} parent=0 // pred_fallthru
    _
  // Predicated region
  $region42: #{blip_base_forward.1} parent=0 // pred_check
    _
  $region43: #{blip_base_forward.1} parent=0 // pred_check_branch
    %49 = sbr.rel (0) target = $region45
  $region44: #{blip_base_forward.1} parent=0 // pred_region
    _
  $region45: #{blip_base_forward.1} parent=0 // pred_fallthru
    _
  // Predicated region
  $region46: #{blip_base_forward.1} parent=0 // pred_check
    _
  $region47: #{blip_base_forward.1} parent=0 // pred_check_branch
    %51 = sbr.rel (0) target = $region49
  $region48: #{blip_base_forward.1} parent=0 // pred_region
    _
  $region49: #{blip_base_forward.1} parent=0 // pred_fallthru
    _
  // Predicated region
  $region50: #{blip_base_forward.1} parent=0 // pred_check
    _
  $region51: #{blip_base_forward.1} parent=0 // pred_check_branch
    %53 = sbr.rel (0) target = $region53
  $region52: #{blip_base_forward.1} parent=0 // pred_region
    _
  $region53: #{blip_base_forward.1} parent=0 // pred_fallthru
    _
  // Predicated region
  $region54: #{blip_base_forward.1} parent=0 // pred_check
    _
  $region55: #{blip_base_forward.1} parent=0 // pred_check_branch
    %55 = sbr.rel (0) target = $region57
  $region56: #{blip_base_forward.1} parent=0 // pred_region
    _
  $region57: #{blip_base_forward.1} parent=0 // pred_fallthru
    _
  // Predicated region
  $region58: #{blip_base_forward.1} parent=0 // pred_check
    _
  $region59: #{blip_base_forward.1} parent=0 // pred_check_branch
    %57 = sbr.rel (0) target = $region61
  $region60: #{blip_base_forward.1} parent=0 // pred_region
    _
  $region61: #{blip_base_forward.1} parent=0 // pred_fallthru
    _
  // Predicated region
  $region62: #{blip_base_forward.1} parent=0 // pred_check
    _
  $region63: #{blip_base_forward.1} parent=0 // pred_check_branch
    %59 = sbr.rel (0) target = $region65
  $region64: #{blip_base_forward.1} parent=0 // pred_region
    _
  $region65: #{blip_base_forward.1} parent=0 // pred_fallthru
    _
  // Predicated region
  $region66: #{blip_base_forward.1} parent=0 // pred_check
    _
  $region67: #{blip_base_forward.1} parent=0 // pred_check_branch
    %61 = sbr.rel (0) target = $region69
  $region68: #{blip_base_forward.1} parent=0 // pred_region
    _
  $region69: #{blip_base_forward.1} parent=0 // pred_fallthru
    _
  // Predicated region
  $region70: #{blip_base_forward.1} parent=0 // pred_check
    _
  $region71: #{blip_base_forward.1} parent=0 // pred_check_branch
    %63 = sbr.rel (0) target = $region73
  $region72: #{blip_base_forward.1} parent=0 // pred_region
    _
  $region73: #{blip_base_forward.1} parent=0 // pred_fallthru
    _
  // Predicated region
  $region74: #{blip_base_forward.1} parent=0 // pred_check
    _
  $region75: #{blip_base_forward.1} parent=0 // pred_check_branch
    %65 = sbr.rel (0) target = $region77
  $region76: #{blip_base_forward.1} parent=0 // pred_region
    _
  $region77: #{blip_base_forward.1} parent=0 // pred_fallthru
    _
  // Predicated region
  $region78: #{blip_base_forward.1} parent=0 // pred_check
    _
  $region79: #{blip_base_forward.1} parent=0 // pred_check_branch
    %67 = sbr.rel (0) target = $region81
  $region80: #{blip_base_forward.1} parent=0 // pred_region
    _
  $region81: #{blip_base_forward.1} parent=0 // pred_fallthru
    _
  // Predicated region
  $region82: #{blip_base_forward.1} parent=0 // pred_check
    _
  $region83: #{blip_base_forward.1} parent=0 // pred_check_branch
    %69 = sbr.rel (0) target = $region85
  $region84: #{blip_base_forward.1} parent=0 // pred_region
    _
  $region85: #{blip_base_forward.1} parent=0 // pred_fallthru
    _
  // Predicated region
  $region86: #{blip_base_forward.1} parent=0 // pred_check
    _
  $region87: #{blip_base_forward.1} parent=0 // pred_check_branch
    %71 = sbr.rel (0) target = $region89
  $region88: #{blip_base_forward.1} parent=0 // pred_region
    _
  $region89: #{blip_base_forward.1} parent=0 // pred_fallthru
    _
  // Predicated region
  $region90: #{blip_base_forward.1} parent=0 // pred_check
    _
  $region91: #{blip_base_forward.1} parent=0 // pred_check_branch
    %73 = sbr.rel (0) target = $region93
  $region92: #{blip_base_forward.1} parent=0 // pred_region
    _
  $region93: #{blip_base_forward.1} parent=0 // pred_fallthru
    _
  %v75 = vld [vmem:[%s0] sm:$0xff]
  %v76 = vld [vmem:[%s0 + $0x8] sm:$0xff]
  %v77 = vld [vmem:[%s0 + $0x10] sm:$0xff]
  %v78 = vld [vmem:[%s1] sm:$0xf]
  %v79 = vld [vmem:[%s1 + $0x4] sm:$0xf]
  %v80 = vld [vmem:[%s1 + $0x8] sm:$0xf]
  %v81 = vld [vmem:[%s1 + $0xc] sm:$0xf]
  %v82 = vld [vmem:[%s1 + $0x10] sm:$0xf]
  %v83 = vld [vmem:[%s1 + $0x14] sm:$0xf]
  %v84 = vld [vmem:[%s1 + $0x18] sm:$0xf]
  %v85 = vld [vmem:[%s1 + $0x1c] sm:$0xf]
  %v86 = vld [vmem:[%s1 + $0x20] sm:$0xf]
  %v87 = vld [vmem:[%s1 + $0x24] sm:$0xf]
  %v88 = vld [vmem:[%s1 + $0x28] sm:$0xf]
  %v89 = vld [vmem:[%s1 + $0x2c] sm:$0xf]
  %v90 = vld [vmem:[%s1 + $0x30] sm:$0xf]
  %v91 = vld [vmem:[%s1 + $0x34] sm:$0xf]
  %v92 = vld [vmem:[%s1 + $0x38] sm:$0xf]
  %v93 = vld [vmem:[%s1 + $0x3c] sm:$0xf]
  %v94 = vld [vmem:[%s1 + $0x40] sm:$0xf]
  %v95 = vld [vmem:[%s1 + $0x44] sm:$0xf]
  %v96 = vld [vmem:[%s1 + $0x48] sm:$0xf]
  %v97 = vld [vmem:[%s1 + $0x4c] sm:$0xf]
  %v98 = vld [vmem:[%s1 + $0x50] sm:$0xf]
  %v99 = vld [vmem:[%s1 + $0x54] sm:$0xf]
  %v100 = vld [vmem:[%s1 + $0x58] sm:$0xf]
  %v101 = vld [vmem:[%s1 + $0x5c] sm:$0xf]
  %v102 = vld [vmem:[%s1 + $0x60] sm:$0xf]
  %v103 = vld [vmem:[%s1 + $0x64] sm:$0xf]
  %v104 = vld [vmem:[%s1 + $0x68] sm:$0xf]
  %v105 = vld [vmem:[%s1 + $0x6c] sm:$0xf]
  %v106 = vld [vmem:[%s1 + $0x70] sm:$0xf]
  %v107 = vld [vmem:[%s1 + $0x74] sm:$0xf]
  %v108 = vld [vmem:[%s1 + $0x78] sm:$0xf]
  %v109 = vld [vmem:[%s1 + $0x7c] sm:$0xf]
  %v110 = vld [vmem:[%s1 + $0x80] sm:$0xf]
  %v111 = vld [vmem:[%s1 + $0x84] sm:$0xf]
  %v112 = vld [vmem:[%s1 + $0x88] sm:$0xf]
  %v113 = vld [vmem:[%s1 + $0x8c] sm:$0xf]
  %v114 = vld [vmem:[%s1 + $0x90] sm:$0xf]
  %v115 = vld [vmem:[%s1 + $0x94] sm:$0xf]
  %v116 = vld [vmem:[%s1 + $0x98] sm:$0xf]
  %v117 = vld [vmem:[%s1 + $0x9c] sm:$0xf]
  %v118 = vld [vmem:[%s1 + $0xa0] sm:$0xf]
  %v119 = vld [vmem:[%s1 + $0xa4] sm:$0xf]
  %v120 = vld [vmem:[%s1 + $0xa8] sm:$0xf]
  %v121 = vld [vmem:[%s1 + $0xac] sm:$0xf]
  %v122 = vld [vmem:[%s1 + $0xb0] sm:$0xf]
  %v123 = vld [vmem:[%s1 + $0xb4] sm:$0xf]
  %v124 = vld [vmem:[%s1 + $0xb8] sm:$0xf]
  %v125 = vld [vmem:[%s1 + $0xbc] sm:$0xf]
  %v126 = vld [vmem:[%s1 + $0xc0] sm:$0xf]
  %v127 = vld [vmem:[%s1 + $0xc4] sm:$0xf]
  %v128 = vld [vmem:[%s1 + $0xc8] sm:$0xf]
  %v129 = vld [vmem:[%s1 + $0xcc] sm:$0xf]
  %v130 = vld [vmem:[%s1 + $0xd0] sm:$0xf]
  %v131 = vld [vmem:[%s1 + $0xd4] sm:$0xf]
  %v132 = vld [vmem:[%s1 + $0xd8] sm:$0xf]
  %v133 = vld [vmem:[%s1 + $0xdc] sm:$0xf]
  %v134 = vld [vmem:[%s1 + $0xe0] sm:$0xf]
  %v135 = vld [vmem:[%s1 + $0xe4] sm:$0xf]
  %v136 = vld [vmem:[%s1 + $0xe8] sm:$0xf]
  %v137 = vld [vmem:[%s1 + $0xec] sm:$0xf]
  %v138 = vld [vmem:[%s1 + $0xf0] sm:$0xf]
  %v139 = vld [vmem:[%s1 + $0xf4] sm:$0xf]
  %v140 = vld [vmem:[%s1 + $0xf8] sm:$0xf]
  %v141 = vld [vmem:[%s1 + $0xfc] sm:$0xf]
  %v142 = vld [vmem:[%s1 + $0x100] sm:$0xf]
  %v143 = vld [vmem:[%s1 + $0x104] sm:$0xf]
  %v144 = vld [vmem:[%s1 + $0x108] sm:$0xf]
  %v145 = vld [vmem:[%s1 + $0x10c] sm:$0xf]
  %v146 = vld [vmem:[%s1 + $0x110] sm:$0xf]
  %v147 = vld [vmem:[%s1 + $0x114] sm:$0xf]
  %v148 = vld [vmem:[%s1 + $0x118] sm:$0xf]
  %v149 = vld [vmem:[%s1 + $0x11c] sm:$0xf]
  %v150 = vld [vmem:[%s1 + $0x120] sm:$0xf]
  %v151 = vld [vmem:[%s1 + $0x124] sm:$0xf]
  %v152 = vld [vmem:[%s1 + $0x128] sm:$0xf]
  %v153 = vld [vmem:[%s1 + $0x12c] sm:$0xf]
  %v154 = vld [vmem:[%s1 + $0x130] sm:$0xf]
  %v155 = vld [vmem:[%s1 + $0x134] sm:$0xf]
  %v156 = vld [vmem:[%s1 + $0x138] sm:$0xf]
  %v157 = vld [vmem:[%s1 + $0x13c] sm:$0xf]
  %v158 = vld [vmem:[%s1 + $0x140] sm:$0xf]
  %v159 = vld [vmem:[%s1 + $0x144] sm:$0xf]
  %v160 = vld [vmem:[%s1 + $0x148] sm:$0xf]
  %v161 = vld [vmem:[%s1 + $0x14c] sm:$0xf]
  %v162 = vld [vmem:[%s1 + $0x150] sm:$0xf]
  %v163 = vld [vmem:[%s1 + $0x154] sm:$0xf]
  %v164 = vld [vmem:[%s1 + $0x158] sm:$0xf]
  %v165 = vld [vmem:[%s1 + $0x15c] sm:$0xf]
  %v166 = vld [vmem:[%s1 + $0x160] sm:$0xf]
  %v167 = vld [vmem:[%s1 + $0x164] sm:$0xf]
  %v168 = vld [vmem:[%s1 + $0x168] sm:$0xf]
  %v169 = vld [vmem:[%s1 + $0x16c] sm:$0xf]
  %v170 = vld [vmem:[%s1 + $0x170] sm:$0xf]
  %v171 = vld [vmem:[%s1 + $0x174] sm:$0xf]
  %v172 = vld [vmem:[%s1 + $0x178] sm:$0xf]
  %v173 = vld [vmem:[%s1 + $0x17c] sm:$0xf]
  %v174 = vld [vmem:[%s2] sm:$0x1]
  %v176 = vlaneseq
  %v177 = vshrl.u32 %v176, 7
  %v178 = vsub.s32 0, %v177
  %v179 = vrot.slane %v174, %v178
  %v184 = vunpack.c.l.b16 %v75
  %v185 = vunpack.c.h.b16 %v75
  %v186 = vunpack.c.l.b16 %v76
  %v187 = vunpack.c.h.b16 %v76
  %v188 = vunpack.c.l.b16 %v77
  %v189 = vunpack.c.h.b16 %v77
  %v190 = vpack.c.b16 %v184, %v184
  %v191 = vpack.c.b16 %v185, %v185
  %v192 = vpack.c.b16 %v186, %v186
  %v193 = vpack.c.b16 %v187, %v187
  %v194 = vpack.c.b16 %v188, %v188
  %v195 = vpack.c.b16 %v189, %v189
  %v298 = vunpack.c.l.b16 %v78
  %v299 = vunpack.c.l.b16 %v79
  %v300 = vunpack.c.l.b16 %v80
  %v301 = vunpack.c.l.b16 %v81
  %v302 = vunpack.c.l.b16 %v82
  %v303 = vunpack.c.l.b16 %v83
  %v304 = vunpack.c.l.b16 %v84
  %v305 = vunpack.c.l.b16 %v85
  %v306 = vunpack.c.l.b16 %v86
  %v307 = vunpack.c.l.b16 %v87
  %v308 = vunpack.c.l.b16 %v88
  %v309 = vunpack.c.l.b16 %v89
  %v310 = vunpack.c.l.b16 %v90
  %v311 = vunpack.c.l.b16 %v91
  %v312 = vunpack.c.l.b16 %v92
  %v313 = vunpack.c.l.b16 %v93
  %v314 = vunpack.c.l.b16 %v94
  %v315 = vunpack.c.l.b16 %v95
  %v316 = vunpack.c.l.b16 %v96
  %v317 = vunpack.c.l.b16 %v97
  %v318 = vunpack.c.l.b16 %v98
  %v319 = vunpack.c.l.b16 %v99
  %v320 = vunpack.c.l.b16 %v100
  %v321 = vunpack.c.l.b16 %v101
  %v322 = vunpack.c.l.b16 %v102
  %v323 = vunpack.c.l.b16 %v103
  %v324 = vunpack.c.l.b16 %v104
  %v325 = vunpack.c.l.b16 %v105
  %v326 = vunpack.c.l.b16 %v106
  %v327 = vunpack.c.l.b16 %v107
  %v328 = vunpack.c.l.b16 %v108
  %v329 = vunpack.c.l.b16 %v109
  %v330 = vunpack.c.l.b16 %v110
  %v331 = vunpack.c.l.b16 %v111
  %v332 = vunpack.c.l.b16 %v112
  %v333 = vunpack.c.l.b16 %v113
  %v334 = vunpack.c.l.b16 %v114
  %v335 = vunpack.c.l.b16 %v115
  %v336 = vunpack.c.l.b16 %v116
  %v337 = vunpack.c.l.b16 %v117
  %v338 = vunpack.c.l.b16 %v118
  %v339 = vunpack.c.l.b16 %v119
  %v340 = vunpack.c.l.b16 %v120
  %v341 = vunpack.c.l.b16 %v121
  %v342 = vunpack.c.l.b16 %v122
  %v343 = vunpack.c.l.b16 %v123
  %v344 = vunpack.c.l.b16 %v124
  %v345 = vunpack.c.l.b16 %v125
  %v346 = vunpack.c.l.b16 %v126
  %v347 = vunpack.c.l.b16 %v127
  %v348 = vunpack.c.l.b16 %v128
  %v349 = vunpack.c.l.b16 %v129
  %v350 = vunpack.c.l.b16 %v130
  %v351 = vunpack.c.l.b16 %v131
  %v352 = vunpack.c.l.b16 %v132
  %v353 = vunpack.c.l.b16 %v133
  %v354 = vunpack.c.l.b16 %v134
  %v355 = vunpack.c.l.b16 %v135
  %v356 = vunpack.c.l.b16 %v136
  %v357 = vunpack.c.l.b16 %v137
  %v358 = vunpack.c.l.b16 %v138
  %v359 = vunpack.c.l.b16 %v139
  %v360 = vunpack.c.l.b16 %v140
  %v361 = vunpack.c.l.b16 %v141
  %v362 = vunpack.c.l.b16 %v142
  %v363 = vunpack.c.l.b16 %v143
  %v364 = vunpack.c.l.b16 %v144
  %v365 = vunpack.c.l.b16 %v145
  %v366 = vunpack.c.l.b16 %v146
  %v367 = vunpack.c.l.b16 %v147
  %v368 = vunpack.c.l.b16 %v148
  %v369 = vunpack.c.l.b16 %v149
  %v370 = vunpack.c.l.b16 %v150
  %v371 = vunpack.c.l.b16 %v151
  %v372 = vunpack.c.l.b16 %v152
  %v373 = vunpack.c.l.b16 %v153
  %v374 = vunpack.c.l.b16 %v154
  %v375 = vunpack.c.l.b16 %v155
  %v376 = vunpack.c.l.b16 %v156
  %v377 = vunpack.c.l.b16 %v157
  %v378 = vunpack.c.l.b16 %v158
  %v379 = vunpack.c.l.b16 %v159
  %v380 = vunpack.c.l.b16 %v160
  %v381 = vunpack.c.l.b16 %v161
  %v382 = vunpack.c.l.b16 %v162
  %v383 = vunpack.c.l.b16 %v163
  %v384 = vunpack.c.l.b16 %v164
  %v385 = vunpack.c.l.b16 %v165
  %v386 = vunpack.c.l.b16 %v166
  %v387 = vunpack.c.l.b16 %v167
  %v388 = vunpack.c.l.b16 %v168
  %v389 = vunpack.c.l.b16 %v169
  %v390 = vunpack.c.l.b16 %v170
  %v391 = vunpack.c.l.b16 %v171
  %v392 = vunpack.c.l.b16 %v172
  %v393 = vunpack.c.l.b16 %v173
  %v394 = vpack.c.b16 %v299, %v298
  %v395 = vpack.c.b16 %v301, %v300
  %v396 = vpack.c.b16 %v303, %v302
  %v397 = vpack.c.b16 %v305, %v304
  %v398 = vpack.c.b16 %v307, %v306
  %v399 = vpack.c.b16 %v309, %v308
  %v400 = vpack.c.b16 %v311, %v310
  %v401 = vpack.c.b16 %v313, %v312
  %v402 = vpack.c.b16 %v315, %v314
  %v403 = vpack.c.b16 %v317, %v316
  %v404 = vpack.c.b16 %v319, %v318
  %v405 = vpack.c.b16 %v321, %v320
  %v406 = vpack.c.b16 %v323, %v322
  %v407 = vpack.c.b16 %v325, %v324
  %v408 = vpack.c.b16 %v327, %v326
  %v409 = vpack.c.b16 %v329, %v328
  %v410 = vpack.c.b16 %v331, %v330
  %v411 = vpack.c.b16 %v333, %v332
  %v412 = vpack.c.b16 %v335, %v334
  %v413 = vpack.c.b16 %v337, %v336
  %v414 = vpack.c.b16 %v339, %v338
  %v415 = vpack.c.b16 %v341, %v340
  %v416 = vpack.c.b16 %v343, %v342
  %v417 = vpack.c.b16 %v345, %v344
  %v418 = vpack.c.b16 %v347, %v346
  %v419 = vpack.c.b16 %v349, %v348
  %v420 = vpack.c.b16 %v351, %v350
  %v421 = vpack.c.b16 %v353, %v352
  %v422 = vpack.c.b16 %v355, %v354
  %v423 = vpack.c.b16 %v357, %v356
  %v424 = vpack.c.b16 %v359, %v358
  %v425 = vpack.c.b16 %v361, %v360
  %v426 = vpack.c.b16 %v363, %v362
  %v427 = vpack.c.b16 %v365, %v364
  %v428 = vpack.c.b16 %v367, %v366
  %v429 = vpack.c.b16 %v369, %v368
  %v430 = vpack.c.b16 %v371, %v370
  %v431 = vpack.c.b16 %v373, %v372
  %v432 = vpack.c.b16 %v375, %v374
  %v433 = vpack.c.b16 %v377, %v376
  %v434 = vpack.c.b16 %v379, %v378
  %v435 = vpack.c.b16 %v381, %v380
  %v436 = vpack.c.b16 %v383, %v382
  %v437 = vpack.c.b16 %v385, %v384
  %v438 = vpack.c.b16 %v387, %v386
  %v439 = vpack.c.b16 %v389, %v388
  %v440 = vpack.c.b16 %v391, %v390
  %v441 = vpack.c.b16 %v393, %v392
  %490 = vmatprep.subr.bf16.mxu0 0
  %491 = vmatpush1.bf16.msra.mxu0 %v401
  %492 = vmatprep.subr.bf16.mxu0 0
  %493 = vmatpush1.bf16.msra.mxu0 %v400
  %494 = vmatprep.subr.bf16.mxu0 0
  %495 = vmatpush1.bf16.msra.mxu0 %v399
  %496 = vmatprep.subr.bf16.mxu0 0
  %497 = vmatpush1.bf16.msra.mxu0 %v398
  %498 = vmatprep.subr.bf16.mxu0 0
  %499 = vmatpush1.bf16.msra.mxu0 %v397
  %500 = vmatprep.subr.bf16.mxu0 0
  %501 = vmatpush1.bf16.msra.mxu0 %v396
  %502 = vmatprep.subr.bf16.mxu0 0
  %503 = vmatpush1.bf16.msra.mxu0 %v395
  %504 = vmatprep.subr.bf16.mxu0 0
  %505 = vmatpush1.bf16.msra.mxu0 %v394
  %506 = vmatprep.subr.bf16.mxu0 0
  %507 = vmatpush2.bf16.msra.mxu0 %v409
  %508 = vmatprep.subr.bf16.mxu0 0
  %509 = vmatpush2.bf16.msra.mxu0 %v408
  %510 = vmatprep.subr.bf16.mxu0 0
  %511 = vmatpush2.bf16.msra.mxu0 %v407
  %512 = vmatprep.subr.bf16.mxu0 0
  %513 = vmatpush2.bf16.msra.mxu0 %v406
  %514 = vmatprep.subr.bf16.mxu0 0
  %515 = vmatpush2.bf16.msra.mxu0 %v405
  %516 = vmatprep.subr.bf16.mxu0 0
  %517 = vmatpush2.bf16.msra.mxu0 %v404
  %518 = vmatprep.subr.bf16.mxu0 0
  %519 = vmatpush2.bf16.msra.mxu0 %v403
  %520 = vmatprep.subr.bf16.mxu0 0
  %521 = vmatpush2.bf16.msra.mxu0 %v402
  %522 = vmatprep.mubr.bf16.mxu0 %v191
  %523 = vmatmul.mubr.bf16.gmra.mxu0 %v190
  %v524 = vpop.f32.mrf.mxu0
  %v525 = vadd.f32 %v179, %v524
  %v526 = vpop.f32.mrf.mxu0
  %v527 = vpop.f32.mrf.mxu0
  %v528 = vpop.f32.mrf.mxu0
  %529 = vdwg.mxu0
  %530 = vmatprep.subr.bf16.mxu0 0
  %531 = vmatpush1.bf16.msra.mxu0 %v417
  %532 = vmatprep.subr.bf16.mxu0 0
  %533 = vmatpush1.bf16.msra.mxu0 %v416
  %534 = vmatprep.subr.bf16.mxu0 0
  %535 = vmatpush1.bf16.msra.mxu0 %v415
  %536 = vmatprep.subr.bf16.mxu0 0
  %537 = vmatpush1.bf16.msra.mxu0 %v414
  %538 = vmatprep.subr.bf16.mxu0 0
  %539 = vmatpush1.bf16.msra.mxu0 %v413
  %540 = vmatprep.subr.bf16.mxu0 0
  %541 = vmatpush1.bf16.msra.mxu0 %v412
  %542 = vmatprep.subr.bf16.mxu0 0
  %543 = vmatpush1.bf16.msra.mxu0 %v411
  %544 = vmatprep.subr.bf16.mxu0 0
  %545 = vmatpush1.bf16.msra.mxu0 %v410
  %546 = vmatprep.subr.bf16.mxu0 0
  %547 = vmatpush2.bf16.msra.mxu0 %v425
  %548 = vmatprep.subr.bf16.mxu0 0
  %549 = vmatpush2.bf16.msra.mxu0 %v424
  %550 = vmatprep.subr.bf16.mxu0 0
  %551 = vmatpush2.bf16.msra.mxu0 %v423
  %552 = vmatprep.subr.bf16.mxu0 0
  %553 = vmatpush2.bf16.msra.mxu0 %v422
  %554 = vmatprep.subr.bf16.mxu0 0
  %555 = vmatpush2.bf16.msra.mxu0 %v421
  %556 = vmatprep.subr.bf16.mxu0 0
  %557 = vmatpush2.bf16.msra.mxu0 %v420
  %558 = vmatprep.subr.bf16.mxu0 0
  %559 = vmatpush2.bf16.msra.mxu0 %v419
  %560 = vmatprep.subr.bf16.mxu0 0
  %561 = vmatpush2.bf16.msra.mxu0 %v418
  %562 = vmatprep.mubr.bf16.mxu0 %v193
  %563 = vmatmul.mubr.bf16.gmra.mxu0 %v192
  %v564 = vpop.f32.mrf.mxu0
  %v565 = vadd.f32 %v525, %v564
  %v566 = vpop.f32.mrf.mxu0
  %v567 = vpop.f32.mrf.mxu0
  %v568 = vpop.f32.mrf.mxu0
  %569 = vdwg.mxu0
  %570 = vmatprep.subr.bf16.mxu0 0
  %571 = vmatpush1.bf16.msra.mxu0 %v433
  %572 = vmatprep.subr.bf16.mxu0 0
  %573 = vmatpush1.bf16.msra.mxu0 %v432
  %574 = vmatprep.subr.bf16.mxu0 0
  %575 = vmatpush1.bf16.msra.mxu0 %v431
  %576 = vmatprep.subr.bf16.mxu0 0
  %577 = vmatpush1.bf16.msra.mxu0 %v430
  %578 = vmatprep.subr.bf16.mxu0 0
  %579 = vmatpush1.bf16.msra.mxu0 %v429
  %580 = vmatprep.subr.bf16.mxu0 0
  %581 = vmatpush1.bf16.msra.mxu0 %v428
  %582 = vmatprep.subr.bf16.mxu0 0
  %583 = vmatpush1.bf16.msra.mxu0 %v427
  %584 = vmatprep.subr.bf16.mxu0 0
  %585 = vmatpush1.bf16.msra.mxu0 %v426
  %586 = vmatprep.subr.bf16.mxu0 0
  %587 = vmatpush2.bf16.msra.mxu0 %v441
  %588 = vmatprep.subr.bf16.mxu0 0
  %589 = vmatpush2.bf16.msra.mxu0 %v440
  %590 = vmatprep.subr.bf16.mxu0 0
  %591 = vmatpush2.bf16.msra.mxu0 %v439
  %592 = vmatprep.subr.bf16.mxu0 0
  %593 = vmatpush2.bf16.msra.mxu0 %v438
  %594 = vmatprep.subr.bf16.mxu0 0
  %595 = vmatpush2.bf16.msra.mxu0 %v437
  %596 = vmatprep.subr.bf16.mxu0 0
  %597 = vmatpush2.bf16.msra.mxu0 %v436
  %598 = vmatprep.subr.bf16.mxu0 0
  %599 = vmatpush2.bf16.msra.mxu0 %v435
  %600 = vmatprep.subr.bf16.mxu0 0
  %601 = vmatpush2.bf16.msra.mxu0 %v434
  %602 = vmatprep.mubr.bf16.mxu0 %v195
  %603 = vmatmul.mubr.bf16.gmra.mxu0 %v194
  %v604 = vpop.f32.mrf.mxu0
  %v605 = vadd.f32 %v565, %v604
  %v606 = vpop.f32.mrf.mxu0
  %v607 = vpop.f32.mrf.mxu0
  %v608 = vpop.f32.mrf.mxu0
  %609 = vdwg.mxu0
  %v610 = vld [vmem:[%s4] sm:$0x1f]
  %v611 = vld [vmem:[%s3] sm:$0x1]
  %v612 = vadd.f32 %v611, %v610
  %vm613 = vcmask 253952
  %614 = vst.msk [vmem:[#allocation2] sm:$0x1] %vm613, %v612
  %v616 = vrot.slane %v610, 1
  %v618 = vadd.f32 %v605, %v616
  %vm619 = vcmask 257024
  %620 = vst.msk [vmem:[#allocation2 + $0x1] sm:$0xf] %vm619, %v618
  %621 = vst.msk [vmem:[#allocation2 + $0x5] sm:$0x1] %vm613, %v612
  %v622 = vrot.slane %v610, 5
  %v624 = vadd.f32 %v605, %v622
  %vm625 = vcmask 261124
  %626 = vst.msk [vmem:[#allocation2 + $0x2] sm:$0xf0] %vm625, %v624
  %v627 = vld [vmem:[#allocation2] sm:$0xff]
  %v628 = vld [vmem:[#allocation2 + $0x8] sm:$0x3]
  %v629 = vld [vmem:[%s5] sm:$0x1]
  %v630 = vld [vmem:[%s6] sm:$0x1]
  %vm631 = vcmask 261120
  %v632 = vsel %vm631, %v627, 0.0
  %633 = vadd.xlane.f32.xlu0 %v632
  %v634 = vpop.xlane.xlu0 %633
  %vm635 = vcmask 254976
  %v636 = vsel %vm635, %v628, 0.0
  %637 = vadd.xlane.f32.xlu0 %v636
  %v638 = vpop.xlane.xlu0 %637
  %v639 = vrcp.pop 32.0
  %v640 = vmul.f32 %v634, %v639
  %v641 = vmul.f32 %v638, %v639
  %v642 = vsub.f32 %v627, %v640
  %v643 = vsub.f32 %v628, %v641
  %v644 = vmul.f32 %v642, %v642
  %v645 = vmul.f32 %v643, %v643
  %v646 = vsel %vm631, %v644, 0.0
  %647 = vadd.xlane.f32.xlu0 %v646
  %v648 = vpop.xlane.xlu0 %647
  %v649 = vsel %vm635, %v645, 0.0
  %650 = vadd.xlane.f32.xlu0 %v649
  %v651 = vpop.xlane.xlu0 %650
  %v652 = vmul.f32 %v648, %v639
  %v653 = vmul.f32 %v651, %v639
  %v654 = vadd.f32 %v652, 1e-06
  %v655 = vadd.f32 %v653, 1e-06
  %v656 = vrsqrt.pop %v654
  %v657 = vrsqrt.pop %v655
  %v658 = vmul.f32 %v642, %v656
  %v659 = vmul.f32 %v643, %v657
  %v661 = vlaneseq
  %v662 = vshrl.u32 %v661, 7
  %v663 = vsub.s32 0, %v662
  %v664 = vrot.slane %v629, %v663
  %v666 = vmul.f32 %v658, %v664
  %v667 = vmul.f32 %v659, %v664
  %v669 = vlaneseq
  %v670 = vshrl.u32 %v669, 7
  %v671 = vsub.s32 0, %v670
  %v672 = vrot.slane %v630, %v671
  %v674 = vadd.f32 %v666, %v672
  %v675 = vadd.f32 %v667, %v672
  %v676 = vpack.c.bf16 %v675, %v674
  %v677 = vld [vmem:[%s7] sm:$0xf]
  %v678 = vld [vmem:[%s7 + $0x4] sm:$0xf]
  %v679 = vld [vmem:[%s7 + $0x8] sm:$0xf]
  %v680 = vld [vmem:[%s7 + $0xc] sm:$0xf]
  %v681 = vld [vmem:[%s7 + $0x10] sm:$0xf]
  %v682 = vld [vmem:[%s7 + $0x14] sm:$0xf]
  %v683 = vld [vmem:[%s7 + $0x18] sm:$0xf]
  %v684 = vld [vmem:[%s7 + $0x1c] sm:$0xf]
  %v685 = vld [vmem:[%s7 + $0x20] sm:$0xf]
  %v686 = vld [vmem:[%s7 + $0x24] sm:$0xf]
  %v687 = vld [vmem:[%s7 + $0x28] sm:$0xf]
  %v688 = vld [vmem:[%s7 + $0x2c] sm:$0xf]
  %v689 = vld [vmem:[%s7 + $0x30] sm:$0xf]
  %v690 = vld [vmem:[%s7 + $0x34] sm:$0xf]
  %v691 = vld [vmem:[%s7 + $0x38] sm:$0xf]
  %v692 = vld [vmem:[%s7 + $0x3c] sm:$0xf]
  %v693 = vld [vmem:[%s8] sm:$0x1]
  %v694 = vld [vmem:[%s8 + $0x1] sm:$0x1]
  %v695 = vld [vmem:[%s8 + $0x2] sm:$0x1]
  %v696 = vld [vmem:[%s8 + $0x3] sm:$0x1]
  %v697 = vld [vmem:[%s9] sm:$0xf]
  %v698 = vld [vmem:[%s9 + $0x4] sm:$0xf]
  %v699 = vld [vmem:[%s9 + $0x8] sm:$0xf]
  %v700 = vld [vmem:[%s9 + $0xc] sm:$0xf]
  %v701 = vld [vmem:[%s9 + $0x10] sm:$0xf]
  %v702 = vld [vmem:[%s9 + $0x14] sm:$0xf]
  %v703 = vld [vmem:[%s9 + $0x18] sm:$0xf]
  %v704 = vld [vmem:[%s9 + $0x1c] sm:$0xf]
  %v705 = vld [vmem:[%s9 + $0x20] sm:$0xf]
  %v706 = vld [vmem:[%s9 + $0x24] sm:$0xf]
  %v707 = vld [vmem:[%s9 + $0x28] sm:$0xf]
  %v708 = vld [vmem:[%s9 + $0x2c] sm:$0xf]
  %v709 = vld [vmem:[%s9 + $0x30] sm:$0xf]
  %v710 = vld [vmem:[%s9 + $0x34] sm:$0xf]
  %v711 = vld [vmem:[%s9 + $0x38] sm:$0xf]
  %v712 = vld [vmem:[%s9 + $0x3c] sm:$0xf]
  %v713 = vld [vmem:[%s10] sm:$0x1]
  %v714 = vld [vmem:[%s10 + $0x1] sm:$0x1]
  %v715 = vld [vmem:[%s10 + $0x2] sm:$0x1]
  %v716 = vld [vmem:[%s10 + $0x3] sm:$0x1]
  %v717 = vld [vmem:[%s11] sm:$0xf]
  %v718 = vld [vmem:[%s11 + $0x4] sm:$0xf]
  %v719 = vld [vmem:[%s11 + $0x8] sm:$0xf]
  %v720 = vld [vmem:[%s11 + $0xc] sm:$0xf]
  %v721 = vld [vmem:[%s11 + $0x10] sm:$0xf]
  %v722 = vld [vmem:[%s11 + $0x14] sm:$0xf]
  %v723 = vld [vmem:[%s11 + $0x18] sm:$0xf]
  %v724 = vld [vmem:[%s11 + $0x1c] sm:$0xf]
  %v725 = vld [vmem:[%s11 + $0x20] sm:$0xf]
  %v726 = vld [vmem:[%s11 + $0x24] sm:$0xf]
  %v727 = vld [vmem:[%s11 + $0x28] sm:$0xf]
  %v728 = vld [vmem:[%s11 + $0x2c] sm:$0xf]
  %v729 = vld [vmem:[%s11 + $0x30] sm:$0xf]
  %v730 = vld [vmem:[%s11 + $0x34] sm:$0xf]
  %v731 = vld [vmem:[%s11 + $0x38] sm:$0xf]
  %v732 = vld [vmem:[%s11 + $0x3c] sm:$0xf]
  %v733 = vld [vmem:[%s12] sm:$0x1]
  %v734 = vld [vmem:[%s12 + $0x1] sm:$0x1]
  %v735 = vld [vmem:[%s12 + $0x2] sm:$0x1]
  %v736 = vld [vmem:[%s12 + $0x3] sm:$0x1]
  %v737 = vld [vmem:[%s13] sm:$0xf]
  %v738 = vld [vmem:[%s13 + $0x4] sm:$0xf]
  %v739 = vld [vmem:[%s13 + $0x8] sm:$0xf]
  %v740 = vld [vmem:[%s13 + $0xc] sm:$0xf]
  %v741 = vld [vmem:[%s14] sm:$0x1]
  %v743 = vlaneseq
  %v744 = vshrl.u32 %v743, 7
  %v745 = vsub.s32 0, %v744
  %v746 = vrot.slane %v693, %v745
  %v752 = vunpack.c.l.b16 %v677
  %v753 = vunpack.c.l.b16 %v678
  %v754 = vunpack.c.l.b16 %v679
  %v755 = vunpack.c.l.b16 %v680
  %v756 = vpack.c.b16 %v753, %v752
  %v757 = vpack.c.b16 %v755, %v754
  %v761 = vsel %vm631, %v676, 0
  %763 = vmatprep.subr.bf16.mxu0 0
  %764 = vmatpush1.bf16.msra.mxu0 0
  %765 = vmatprep.subr.bf16.mxu0 0
  %766 = vmatpush1.bf16.msra.mxu0 0
  %767 = vmatprep.subr.bf16.mxu0 0
  %768 = vmatpush1.bf16.msra.mxu0 0
  %769 = vmatprep.subr.bf16.mxu0 0
  %770 = vmatpush1.bf16.msra.mxu0 0
  %771 = vmatprep.subr.bf16.mxu0 0
  %772 = vmatpush1.bf16.msra.mxu0 0
  %773 = vmatprep.subr.bf16.mxu0 0
  %774 = vmatpush1.bf16.msra.mxu0 0
  %775 = vmatprep.subr.bf16.mxu0 0
  %776 = vmatpush1.bf16.msra.mxu0 %v757
  %777 = vmatprep.subr.bf16.mxu0 0
  %778 = vmatpush1.bf16.msra.mxu0 %v756
  %779 = vmatprep.subr.bf16.mxu0 0
  %780 = vmatpush2.bf16.msra.mxu0 0
  %781 = vmatprep.subr.bf16.mxu0 0
  %782 = vmatpush2.bf16.msra.mxu0 0
  %783 = vmatprep.subr.bf16.mxu0 0
  %784 = vmatpush2.bf16.msra.mxu0 0
  %785 = vmatprep.subr.bf16.mxu0 0
  %786 = vmatpush2.bf16.msra.mxu0 0
  %787 = vmatprep.subr.bf16.mxu0 0
  %788 = vmatpush2.bf16.msra.mxu0 0
  %789 = vmatprep.subr.bf16.mxu0 0
  %790 = vmatpush2.bf16.msra.mxu0 0
  %791 = vmatprep.subr.bf16.mxu0 0
  %792 = vmatpush2.bf16.msra.mxu0 0
  %793 = vmatprep.subr.bf16.mxu0 0
  %794 = vmatpush2.bf16.msra.mxu0 0
  %795 = vmatprep.mubr.bf16.mxu0 0
  %796 = vmatmul.mubr.bf16.gmra.mxu0 %v761
  %v797 = vpop.f32.mrf.mxu0
  %v798 = vadd.f32 %v746, %v797
  %v799 = vpop.f32.mrf.mxu0
  %v800 = vpop.f32.mrf.mxu0
  %v801 = vadd.f32 %v746, %v800
  %v802 = vpop.f32.mrf.mxu0
  %803 = vdwg.mxu0
  %v805 = vlaneseq
  %v806 = vshrl.u32 %v805, 7
  %v807 = vsub.s32 0, %v806
  %v808 = vrot.slane %v713, %v807
  %v814 = vunpack.c.l.b16 %v697
  %v815 = vunpack.c.l.b16 %v698
  %v816 = vunpack.c.l.b16 %v699
  %v817 = vunpack.c.l.b16 %v700
  %v818 = vpack.c.b16 %v815, %v814
  %v819 = vpack.c.b16 %v817, %v816
  %822 = vmatprep.subr.bf16.mxu0 0
  %823 = vmatpush1.bf16.msra.mxu0 0
  %824 = vmatprep.subr.bf16.mxu0 0
  %825 = vmatpush1.bf16.msra.mxu0 0
  %826 = vmatprep.subr.bf16.mxu0 0
  %827 = vmatpush1.bf16.msra.mxu0 0
  %828 = vmatprep.subr.bf16.mxu0 0
  %829 = vmatpush1.bf16.msra.mxu0 0
  %830 = vmatprep.subr.bf16.mxu0 0
  %831 = vmatpush1.bf16.msra.mxu0 0
  %832 = vmatprep.subr.bf16.mxu0 0
  %833 = vmatpush1.bf16.msra.mxu0 0
  %834 = vmatprep.subr.bf16.mxu0 0
  %835 = vmatpush1.bf16.msra.mxu0 %v819
  %836 = vmatprep.subr.bf16.mxu0 0
  %837 = vmatpush1.bf16.msra.mxu0 %v818
  %838 = vmatprep.subr.bf16.mxu0 0
  %839 = vmatpush2.bf16.msra.mxu0 0
  %840 = vmatprep.subr.bf16.mxu0 0
  %841 = vmatpush2.bf16.msra.mxu0 0
  %842 = vmatprep.subr.bf16.mxu0 0
  %843 = vmatpush2.bf16.msra.mxu0 0
  %844 = vmatprep.subr.bf16.mxu0 0
  %845 = vmatpush2.bf16.msra.mxu0 0
  %846 = vmatprep.subr.bf16.mxu0 0
  %847 = vmatpush2.bf16.msra.mxu0 0
  %848 = vmatprep.subr.bf16.mxu0 0
  %849 = vmatpush2.bf16.msra.mxu0 0
  %850 = vmatprep.subr.bf16.mxu0 0
  %851 = vmatpush2.bf16.msra.mxu0 0
  %852 = vmatprep.subr.bf16.mxu0 0
  %853 = vmatpush2.bf16.msra.mxu0 0
  %854 = vmatprep.mubr.bf16.mxu0 0
  %855 = vmatmul.mubr.bf16.gmra.mxu0 %v761
  %v856 = vpop.f32.mrf.mxu0
  %v857 = vadd.f32 %v808, %v856
  %v858 = vpop.f32.mrf.mxu0
  %v859 = vpop.f32.mrf.mxu0
  %v860 = vadd.f32 %v808, %v859
  %v861 = vpop.f32.mrf.mxu0
  %862 = vdwg.mxu0
  %v864 = vlaneseq
  %v865 = vshrl.u32 %v864, 7
  %v866 = vsub.s32 0, %v865
  %v867 = vrot.slane %v733, %v866
  %v873 = vunpack.c.l.b16 %v717
  %v874 = vunpack.c.l.b16 %v718
  %v875 = vunpack.c.l.b16 %v719
  %v876 = vunpack.c.l.b16 %v720
  %v877 = vpack.c.b16 %v874, %v873
  %v878 = vpack.c.b16 %v876, %v875
  %881 = vmatprep.subr.bf16.mxu0 0
  %882 = vmatpush1.bf16.msra.mxu0 0
  %883 = vmatprep.subr.bf16.mxu0 0
  %884 = vmatpush1.bf16.msra.mxu0 0
  %885 = vmatprep.subr.bf16.mxu0 0
  %886 = vmatpush1.bf16.msra.mxu0 0
  %887 = vmatprep.subr.bf16.mxu0 0
  %888 = vmatpush1.bf16.msra.mxu0 0
  %889 = vmatprep.subr.bf16.mxu0 0
  %890 = vmatpush1.bf16.msra.mxu0 0
  %891 = vmatprep.subr.bf16.mxu0 0
  %892 = vmatpush1.bf16.msra.mxu0 0
  %893 = vmatprep.subr.bf16.mxu0 0
  %894 = vmatpush1.bf16.msra.mxu0 %v878
  %895 = vmatprep.subr.bf16.mxu0 0
  %896 = vmatpush1.bf16.msra.mxu0 %v877
  %897 = vmatprep.subr.bf16.mxu0 0
  %898 = vmatpush2.bf16.msra.mxu0 0
  %899 = vmatprep.subr.bf16.mxu0 0
  %900 = vmatpush2.bf16.msra.mxu0 0
  %901 = vmatprep.subr.bf16.mxu0 0
  %902 = vmatpush2.bf16.msra.mxu0 0
  %903 = vmatprep.subr.bf16.mxu0 0
  %904 = vmatpush2.bf16.msra.mxu0 0
  %905 = vmatprep.subr.bf16.mxu0 0
  %906 = vmatpush2.bf16.msra.mxu0 0
  %907 = vmatprep.subr.bf16.mxu0 0
  %908 = vmatpush2.bf16.msra.mxu0 0
  %909 = vmatprep.subr.bf16.mxu0 0
  %910 = vmatpush2.bf16.msra.mxu0 0
  %911 = vmatprep.subr.bf16.mxu0 0
  %912 = vmatpush2.bf16.msra.mxu0 0
  %913 = vmatprep.mubr.bf16.mxu0 0
  %914 = vmatmul.mubr.bf16.gmra.mxu0 %v761
  %v915 = vpop.f32.mrf.mxu0
  %v916 = vadd.f32 %v867, %v915
  %v917 = vpop.f32.mrf.mxu0
  %v918 = vpop.f32.mrf.mxu0
  %v919 = vadd.f32 %v867, %v918
  %v920 = vpop.f32.mrf.mxu0
  %921 = vdwg.mxu0
  %v922 = vpack.c.bf16 %v801, %v798
  %v923 = vpack.c.bf16 %v860, %v857
  %v924 = vpack.c.bf16 %v919, %v916
  %vm925 = vcmask 64512
  %v927 = vsel %vm925, %v922, 0
  %v930 = vsel %vm925, %v923, 0
  %932 = vmatprep.subr.bf16.mxu0 0
  %933 = vmatpush1.bf16.xpose.msra.mxu0 0
  %934 = vmatprep.subr.bf16.mxu0 0
  %935 = vmatpush1.bf16.xpose.msra.mxu0 0
  %936 = vmatprep.subr.bf16.mxu0 0
  %937 = vmatpush1.bf16.xpose.msra.mxu0 0
  %938 = vmatprep.subr.bf16.mxu0 0
  %939 = vmatpush1.bf16.xpose.msra.mxu0 0
  %940 = vmatprep.subr.bf16.mxu0 0
  %941 = vmatpush1.bf16.xpose.msra.mxu0 0
  %942 = vmatprep.subr.bf16.mxu0 0
  %943 = vmatpush1.bf16.xpose.msra.mxu0 0
  %944 = vmatprep.subr.bf16.mxu0 0
  %945 = vmatpush1.bf16.xpose.msra.mxu0 0
  %946 = vmatprep.subr.bf16.mxu0 0
  %947 = vmatpush1.bf16.xpose.msra.mxu0 %v930
  %948 = vmatprep.subr.bf16.mxu0 0
  %949 = vmatpush2.bf16.xpose.msra.mxu0 0
  %950 = vmatprep.subr.bf16.mxu0 0
  %951 = vmatpush2.bf16.xpose.msra.mxu0 0
  %952 = vmatprep.subr.bf16.mxu0 0
  %953 = vmatpush2.bf16.xpose.msra.mxu0 0
  %954 = vmatprep.subr.bf16.mxu0 0
  %955 = vmatpush2.bf16.xpose.msra.mxu0 0
  %956 = vmatprep.subr.bf16.mxu0 0
  %957 = vmatpush2.bf16.xpose.msra.mxu0 0
  %958 = vmatprep.subr.bf16.mxu0 0
  %959 = vmatpush2.bf16.xpose.msra.mxu0 0
  %960 = vmatprep.subr.bf16.mxu0 0
  %961 = vmatpush2.bf16.xpose.msra.mxu0 0
  %962 = vmatprep.subr.bf16.mxu0 0
  %963 = vmatpush2.bf16.xpose.msra.mxu0 0
  %964 = vmatprep.mubr.bf16.mxu0 0
  %965 = vmatmul.mubr.bf16.gmra.mxu0 %v927
  %v966 = vpop.f32.mrf.mxu0
  %v967 = vadd.f32 0.0, %v966
  %v968 = vpop.f32.mrf.mxu0
  %v969 = vpop.f32.mrf.mxu0
  %v970 = vpop.f32.mrf.mxu0
  %971 = vdwg.mxu0
  %v972 = vmul.f32 %v967, 0.35355338
  %vm973 = vcmask 36864
  %v974 = vsel %vm973, %v972, -inf
  %975 = vmax.xlane.f32.xlu0 %v974
  %v976 = vpop.xlane.xlu0 %975
  %v977 = vsub.f32 %v972, %v976
  %v978 = vmul.f32 %v977, 1.442695
  %v979 = vpow.pop %v978
  %v980 = vsel %vm973, %v979, 0.0
  %981 = vadd.xlane.f32.xlu0 %v980
  %v982 = vpop.xlane.xlu0 %981
  %v983 = vrcp.pop %v982
  %v984 = vmul.f32 %v979, %v983
  %v985 = vpack.c.bf16 %v984, %v984
  %vm986 = vcmask 39936
  %v988 = vsel %vm986, %v985, 0
  %vm990 = vcmask 1041408
  %vm991 = vcmask 1042432
  %v992 = vsel %vm990, 4294967295, 65535
  %v993 = vsel %vm991, %v992, 0
  %v995 = vand.u32 %v924, %v993
  %997 = vmatprep.subr.bf16.mxu0 0
  %998 = vmatpush1.bf16.msra.mxu0 0
  %999 = vmatprep.subr.bf16.mxu0 0
  %1000 = vmatpush1.bf16.msra.mxu0 0
  %1001 = vmatprep.subr.bf16.mxu0 0
  %1002 = vmatpush1.bf16.msra.mxu0 0
  %1003 = vmatprep.subr.bf16.mxu0 0
  %1004 = vmatpush1.bf16.msra.mxu0 0
  %1005 = vmatprep.subr.bf16.mxu0 0
  %1006 = vmatpush1.bf16.msra.mxu0 0
  %1007 = vmatprep.subr.bf16.mxu0 0
  %1008 = vmatpush1.bf16.msra.mxu0 0
  %1009 = vmatprep.subr.bf16.mxu0 0
  %1010 = vmatpush1.bf16.msra.mxu0 0
  %1011 = vmatprep.subr.bf16.mxu0 0
  %1012 = vmatpush1.bf16.msra.mxu0 %v995
  %1013 = vmatprep.subr.bf16.mxu0 0
  %1014 = vmatpush2.bf16.msra.mxu0 0
  %1015 = vmatprep.subr.bf16.mxu0 0
  %1016 = vmatpush2.bf16.msra.mxu0 0
  %1017 = vmatprep.subr.bf16.mxu0 0
  %1018 = vmatpush2.bf16.msra.mxu0 0
  %1019 = vmatprep.subr.bf16.mxu0 0
  %1020 = vmatpush2.bf16.msra.mxu0 0
  %1021 = vmatprep.subr.bf16.mxu0 0
  %1022 = vmatpush2.bf16.msra.mxu0 0
  %1023 = vmatprep.subr.bf16.mxu0 0
  %1024 = vmatpush2.bf16.msra.mxu0 0
  %1025 = vmatprep.subr.bf16.mxu0 0
  %1026 = vmatpush2.bf16.msra.mxu0 0
  %1027 = vmatprep.subr.bf16.mxu0 0
  %1028 = vmatpush2.bf16.msra.mxu0 0
  %1029 = vmatprep.mubr.bf16.mxu0 0
  %1030 = vmatmul.mubr.bf16.gmra.mxu0 %v988
  %v1031 = vpop.f32.mrf.mxu0
  %v1032 = vadd.f32 0.0, %v1031
  %v1033 = vpop.f32.mrf.mxu0
  %v1034 = vpop.f32.mrf.mxu0
  %v1035 = vpop.f32.mrf.mxu0
  %1036 = vdwg.mxu0
  %v1037 = vpack.c.bf16 %v1032, %v1032
  %v1038 = vshrl.u32 %v922, 16
  %v1040 = vrot.slane %v1038, 2
  %v1041 = vshll.u32 %v922, 16
  %v1043 = vrot.slane %v1041, 3
  %v1044 = vor.u32 %v1040, %v1043
  %v1045 = vshrl.u32 %v923, 16
  %v1047 = vrot.slane %v1045, 2
  %v1048 = vshll.u32 %v923, 16
  %v1050 = vrot.slane %v1048, 3
  %v1051 = vor.u32 %v1047, %v1050
  %v1053 = vsel %vm925, %v1044, 0
  %v1056 = vsel %vm925, %v1051, 0
  %1058 = vmatprep.subr.bf16.mxu0 0
  %1059 = vmatpush1.bf16.xpose.msra.mxu0 0
  %1060 = vmatprep.subr.bf16.mxu0 0
  %1061 = vmatpush1.bf16.xpose.msra.mxu0 0
  %1062 = vmatprep.subr.bf16.mxu0 0
  %1063 = vmatpush1.bf16.xpose.msra.mxu0 0
  %1064 = vmatprep.subr.bf16.mxu0 0
  %1065 = vmatpush1.bf16.xpose.msra.mxu0 0
  %1066 = vmatprep.subr.bf16.mxu0 0
  %1067 = vmatpush1.bf16.xpose.msra.mxu0 0
  %1068 = vmatprep.subr.bf16.mxu0 0
  %1069 = vmatpush1.bf16.xpose.msra.mxu0 0
  %1070 = vmatprep.subr.bf16.mxu0 0
  %1071 = vmatpush1.bf16.xpose.msra.mxu0 0
  %1072 = vmatprep.subr.bf16.mxu0 0
  %1073 = vmatpush1.bf16.xpose.msra.mxu0 %v1056
  %1074 = vmatprep.subr.bf16.mxu0 0
  %1075 = vmatpush2.bf16.xpose.msra.mxu0 0
  %1076 = vmatprep.subr.bf16.mxu0 0
  %1077 = vmatpush2.bf16.xpose.msra.mxu0 0
  %1078 = vmatprep.subr.bf16.mxu0 0
  %1079 = vmatpush2.bf16.xpose.msra.mxu0 0
  %1080 = vmatprep.subr.bf16.mxu0 0
  %1081 = vmatpush2.bf16.xpose.msra.mxu0 0
  %1082 = vmatprep.subr.bf16.mxu0 0
  %1083 = vmatpush2.bf16.xpose.msra.mxu0 0
  %1084 = vmatprep.subr.bf16.mxu0 0
  %1085 = vmatpush2.bf16.xpose.msra.mxu0 0
  %1086 = vmatprep.subr.bf16.mxu0 0
  %1087 = vmatpush2.bf16.xpose.msra.mxu0 0
  %1088 = vmatprep.subr.bf16.mxu0 0
  %1089 = vmatpush2.bf16.xpose.msra.mxu0 0
  %1090 = vmatprep.mubr.bf16.mxu0 0
  %1091 = vmatmul.mubr.bf16.gmra.mxu0 %v1053
  %v1092 = vpop.f32.mrf.mxu0
  %v1093 = vadd.f32 0.0, %v1092
  %v1094 = vpop.f32.mrf.mxu0
  %v1095 = vpop.f32.mrf.mxu0
  %v1096 = vpop.f32.mrf.mxu0
  %1097 = vdwg.mxu0
  %v1098 = vmul.f32 %v1093, 0.35355338
  %v1099 = vsel %vm973, %v1098, -inf
  %1100 = vmax.xlane.f32.xlu0 %v1099
  %v1101 = vpop.xlane.xlu0 %1100
  %v1102 = vsub.f32 %v1098, %v1101
  %v1103 = vmul.f32 %v1102, 1.442695
  %v1104 = vpow.pop %v1103
  %v1105 = vsel %vm973, %v1104, 0.0
  %1106 = vadd.xlane.f32.xlu0 %v1105
  %v1107 = vpop.xlane.xlu0 %1106
  %v1108 = vrcp.pop %v1107
  %v1109 = vmul.f32 %v1104, %v1108
  %v1110 = vpack.c.bf16 %v1109, %v1109
  %v1111 = vshrl.u32 %v924, 16
  %v1113 = vrot.slane %v1111, 2
  %v1114 = vshll.u32 %v924, 16
  %v1116 = vrot.slane %v1114, 3
  %v1117 = vor.u32 %v1113, %v1116
  %v1119 = vsel %vm986, %v1110, 0
  %v1122 = vand.u32 %v1117, %v993
  %1124 = vmatprep.subr.bf16.mxu0 0
  %1125 = vmatpush1.bf16.msra.mxu0 0
  %1126 = vmatprep.subr.bf16.mxu0 0
  %1127 = vmatpush1.bf16.msra.mxu0 0
  %1128 = vmatprep.subr.bf16.mxu0 0
  %1129 = vmatpush1.bf16.msra.mxu0 0
  %1130 = vmatprep.subr.bf16.mxu0 0
  %1131 = vmatpush1.bf16.msra.mxu0 0
  %1132 = vmatprep.subr.bf16.mxu0 0
  %1133 = vmatpush1.bf16.msra.mxu0 0
  %1134 = vmatprep.subr.bf16.mxu0 0
  %1135 = vmatpush1.bf16.msra.mxu0 0
  %1136 = vmatprep.subr.bf16.mxu0 0
  %1137 = vmatpush1.bf16.msra.mxu0 0
  %1138 = vmatprep.subr.bf16.mxu0 0
  %1139 = vmatpush1.bf16.msra.mxu0 %v1122
  %1140 = vmatprep.subr.bf16.mxu0 0
  %1141 = vmatpush2.bf16.msra.mxu0 0
  %1142 = vmatprep.subr.bf16.mxu0 0
  %1143 = vmatpush2.bf16.msra.mxu0 0
  %1144 = vmatprep.subr.bf16.mxu0 0
  %1145 = vmatpush2.bf16.msra.mxu0 0
  %1146 = vmatprep.subr.bf16.mxu0 0
  %1147 = vmatpush2.bf16.msra.mxu0 0
  %1148 = vmatprep.subr.bf16.mxu0 0
  %1149 = vmatpush2.bf16.msra.mxu0 0
  %1150 = vmatprep.subr.bf16.mxu0 0
  %1151 = vmatpush2.bf16.msra.mxu0 0
  %1152 = vmatprep.subr.bf16.mxu0 0
  %1153 = vmatpush2.bf16.msra.mxu0 0
  %1154 = vmatprep.subr.bf16.mxu0 0
  %1155 = vmatpush2.bf16.msra.mxu0 0
  %1156 = vmatprep.mubr.bf16.mxu0 0
  %1157 = vmatmul.mubr.bf16.gmra.mxu0 %v1119
  %v1158 = vpop.f32.mrf.mxu0
  %v1159 = vadd.f32 0.0, %v1158
  %v1160 = vpop.f32.mrf.mxu0
  %v1161 = vpop.f32.mrf.mxu0
  %v1162 = vpop.f32.mrf.mxu0
  %1163 = vdwg.mxu0
  %v1164 = vpack.c.bf16 %v1159, %v1159
  %v1166 = vlaneseq
  %v1167 = vshrl.u32 %v1166, 7
  %v1168 = vsub.s32 0, %v1167
  %v1169 = vrot.slane %v694, %v1168
  %v1175 = vunpack.c.l.b16 %v681
  %v1176 = vunpack.c.l.b16 %v682
  %v1177 = vunpack.c.l.b16 %v683
  %v1178 = vunpack.c.l.b16 %v684
  %v1179 = vpack.c.b16 %v1176, %v1175
  %v1180 = vpack.c.b16 %v1178, %v1177
  %1183 = vmatprep.subr.bf16.mxu0 0
  %1184 = vmatpush1.bf16.msra.mxu0 0
  %1185 = vmatprep.subr.bf16.mxu0 0
  %1186 = vmatpush1.bf16.msra.mxu0 0
  %1187 = vmatprep.subr.bf16.mxu0 0
  %1188 = vmatpush1.bf16.msra.mxu0 0
  %1189 = vmatprep.subr.bf16.mxu0 0
  %1190 = vmatpush1.bf16.msra.mxu0 0
  %1191 = vmatprep.subr.bf16.mxu0 0
  %1192 = vmatpush1.bf16.msra.mxu0 0
  %1193 = vmatprep.subr.bf16.mxu0 0
  %1194 = vmatpush1.bf16.msra.mxu0 0
  %1195 = vmatprep.subr.bf16.mxu0 0
  %1196 = vmatpush1.bf16.msra.mxu0 %v1180
  %1197 = vmatprep.subr.bf16.mxu0 0
  %1198 = vmatpush1.bf16.msra.mxu0 %v1179
  %1199 = vmatprep.subr.bf16.mxu0 0
  %1200 = vmatpush2.bf16.msra.mxu0 0
  %1201 = vmatprep.subr.bf16.mxu0 0
  %1202 = vmatpush2.bf16.msra.mxu0 0
  %1203 = vmatprep.subr.bf16.mxu0 0
  %1204 = vmatpush2.bf16.msra.mxu0 0
  %1205 = vmatprep.subr.bf16.mxu0 0
  %1206 = vmatpush2.bf16.msra.mxu0 0
  %1207 = vmatprep.subr.bf16.mxu0 0
  %1208 = vmatpush2.bf16.msra.mxu0 0
  %1209 = vmatprep.subr.bf16.mxu0 0
  %1210 = vmatpush2.bf16.msra.mxu0 0
  %1211 = vmatprep.subr.bf16.mxu0 0
  %1212 = vmatpush2.bf16.msra.mxu0 0
  %1213 = vmatprep.subr.bf16.mxu0 0
  %1214 = vmatpush2.bf16.msra.mxu0 0
  %1215 = vmatprep.mubr.bf16.mxu0 0
  %1216 = vmatmul.mubr.bf16.gmra.mxu0 %v761
  %v1217 = vpop.f32.mrf.mxu0
  %v1218 = vadd.f32 %v1169, %v1217
  %v1219 = vpop.f32.mrf.mxu0
  %v1220 = vpop.f32.mrf.mxu0
  %v1221 = vadd.f32 %v1169, %v1220
  %v1222 = vpop.f32.mrf.mxu0
  %1223 = vdwg.mxu0
  %v1225 = vlaneseq
  %v1226 = vshrl.u32 %v1225, 7
  %v1227 = vsub.s32 0, %v1226
  %v1228 = vrot.slane %v714, %v1227
  %v1234 = vunpack.c.l.b16 %v701
  %v1235 = vunpack.c.l.b16 %v702
  %v1236 = vunpack.c.l.b16 %v703
  %v1237 = vunpack.c.l.b16 %v704
  %v1238 = vpack.c.b16 %v1235, %v1234
  %v1239 = vpack.c.b16 %v1237, %v1236
  %1242 = vmatprep.subr.bf16.mxu0 0
  %1243 = vmatpush1.bf16.msra.mxu0 0
  %1244 = vmatprep.subr.bf16.mxu0 0
  %1245 = vmatpush1.bf16.msra.mxu0 0
  %1246 = vmatprep.subr.bf16.mxu0 0
  %1247 = vmatpush1.bf16.msra.mxu0 0
  %1248 = vmatprep.subr.bf16.mxu0 0
  %1249 = vmatpush1.bf16.msra.mxu0 0
  %1250 = vmatprep.subr.bf16.mxu0 0
  %1251 = vmatpush1.bf16.msra.mxu0 0
  %1252 = vmatprep.subr.bf16.mxu0 0
  %1253 = vmatpush1.bf16.msra.mxu0 0
  %1254 = vmatprep.subr.bf16.mxu0 0
  %1255 = vmatpush1.bf16.msra.mxu0 %v1239
  %1256 = vmatprep.subr.bf16.mxu0 0
  %1257 = vmatpush1.bf16.msra.mxu0 %v1238
  %1258 = vmatprep.subr.bf16.mxu0 0
  %1259 = vmatpush2.bf16.msra.mxu0 0
  %1260 = vmatprep.subr.bf16.mxu0 0
  %1261 = vmatpush2.bf16.msra.mxu0 0
  %1262 = vmatprep.subr.bf16.mxu0 0
  %1263 = vmatpush2.bf16.msra.mxu0 0
  %1264 = vmatprep.subr.bf16.mxu0 0
  %1265 = vmatpush2.bf16.msra.mxu0 0
  %1266 = vmatprep.subr.bf16.mxu0 0
  %1267 = vmatpush2.bf16.msra.mxu0 0
  %1268 = vmatprep.subr.bf16.mxu0 0
  %1269 = vmatpush2.bf16.msra.mxu0 0
  %1270 = vmatprep.subr.bf16.mxu0 0
  %1271 = vmatpush2.bf16.msra.mxu0 0
  %1272 = vmatprep.subr.bf16.mxu0 0
  %1273 = vmatpush2.bf16.msra.mxu0 0
  %1274 = vmatprep.mubr.bf16.mxu0 0
  %1275 = vmatmul.mubr.bf16.gmra.mxu0 %v761
  %v1276 = vpop.f32.mrf.mxu0
  %v1277 = vadd.f32 %v1228, %v1276
  %v1278 = vpop.f32.mrf.mxu0
  %v1279 = vpop.f32.mrf.mxu0
  %v1280 = vadd.f32 %v1228, %v1279
  %v1281 = vpop.f32.mrf.mxu0
  %1282 = vdwg.mxu0
  %v1284 = vlaneseq
  %v1285 = vshrl.u32 %v1284, 7
  %v1286 = vsub.s32 0, %v1285
  %v1287 = vrot.slane %v734, %v1286
  %v1293 = vunpack.c.l.b16 %v721
  %v1294 = vunpack.c.l.b16 %v722
  %v1295 = vunpack.c.l.b16 %v723
  %v1296 = vunpack.c.l.b16 %v724
  %v1297 = vpack.c.b16 %v1294, %v1293
  %v1298 = vpack.c.b16 %v1296, %v1295
  %1301 = vmatprep.subr.bf16.mxu0 0
  %1302 = vmatpush1.bf16.msra.mxu0 0
  %1303 = vmatprep.subr.bf16.mxu0 0
  %1304 = vmatpush1.bf16.msra.mxu0 0
  %1305 = vmatprep.subr.bf16.mxu0 0
  %1306 = vmatpush1.bf16.msra.mxu0 0
  %1307 = vmatprep.subr.bf16.mxu0 0
  %1308 = vmatpush1.bf16.msra.mxu0 0
  %1309 = vmatprep.subr.bf16.mxu0 0
  %1310 = vmatpush1.bf16.msra.mxu0 0
  %1311 = vmatprep.subr.bf16.mxu0 0
  %1312 = vmatpush1.bf16.msra.mxu0 0
  %1313 = vmatprep.subr.bf16.mxu0 0
  %1314 = vmatpush1.bf16.msra.mxu0 %v1298
  %1315 = vmatprep.subr.bf16.mxu0 0
  %1316 = vmatpush1.bf16.msra.mxu0 %v1297
  %1317 = vmatprep.subr.bf16.mxu0 0
  %1318 = vmatpush2.bf16.msra.mxu0 0
  %1319 = vmatprep.subr.bf16.mxu0 0
  %1320 = vmatpush2.bf16.msra.mxu0 0
  %1321 = vmatprep.subr.bf16.mxu0 0
  %1322 = vmatpush2.bf16.msra.mxu0 0
  %1323 = vmatprep.subr.bf16.mxu0 0
  %1324 = vmatpush2.bf16.msra.mxu0 0
  %1325 = vmatprep.subr.bf16.mxu0 0
  %1326 = vmatpush2.bf16.msra.mxu0 0
  %1327 = vmatprep.subr.bf16.mxu0 0
  %1328 = vmatpush2.bf16.msra.mxu0 0
  %1329 = vmatprep.subr.bf16.mxu0 0
  %1330 = vmatpush2.bf16.msra.mxu0 0
  %1331 = vmatprep.subr.bf16.mxu0 0
  %1332 = vmatpush2.bf16.msra.mxu0 0
  %1333 = vmatprep.mubr.bf16.mxu0 0
  %1334 = vmatmul.mubr.bf16.gmra.mxu0 %v761
  %v1335 = vpop.f32.mrf.mxu0
  %v1336 = vadd.f32 %v1287, %v1335
  %v1337 = vpop.f32.mrf.mxu0
  %v1338 = vpop.f32.mrf.mxu0
  %v1339 = vadd.f32 %v1287, %v1338
  %v1340 = vpop.f32.mrf.mxu0
  %1341 = vdwg.mxu0
  %v1342 = vpack.c.bf16 %v1221, %v1218
  %v1343 = vpack.c.bf16 %v1280, %v1277
  %v1344 = vpack.c.bf16 %v1339, %v1336
  %v1346 = vsel %vm925, %v1342, 0
  %v1349 = vsel %vm925, %v1343, 0
  %1351 = vmatprep.subr.bf16.mxu0 0
  %1352 = vmatpush1.bf16.xpose.msra.mxu0 0
  %1353 = vmatprep.subr.bf16.mxu0 0
  %1354 = vmatpush1.bf16.xpose.msra.mxu0 0
  %1355 = vmatprep.subr.bf16.mxu0 0
  %1356 = vmatpush1.bf16.xpose.msra.mxu0 0
  %1357 = vmatprep.subr.bf16.mxu0 0
  %1358 = vmatpush1.bf16.xpose.msra.mxu0 0
  %1359 = vmatprep.subr.bf16.mxu0 0
  %1360 = vmatpush1.bf16.xpose.msra.mxu0 0
  %1361 = vmatprep.subr.bf16.mxu0 0
  %1362 = vmatpush1.bf16.xpose.msra.mxu0 0
  %1363 = vmatprep.subr.bf16.mxu0 0
  %1364 = vmatpush1.bf16.xpose.msra.mxu0 0
  %1365 = vmatprep.subr.bf16.mxu0 0
  %1366 = vmatpush1.bf16.xpose.msra.mxu0 %v1349
  %1367 = vmatprep.subr.bf16.mxu0 0
  %1368 = vmatpush2.bf16.xpose.msra.mxu0 0
  %1369 = vmatprep.subr.bf16.mxu0 0
  %1370 = vmatpush2.bf16.xpose.msra.mxu0 0
  %1371 = vmatprep.subr.bf16.mxu0 0
  %1372 = vmatpush2.bf16.xpose.msra.mxu0 0
  %1373 = vmatprep.subr.bf16.mxu0 0
  %1374 = vmatpush2.bf16.xpose.msra.mxu0 0
  %1375 = vmatprep.subr.bf16.mxu0 0
  %1376 = vmatpush2.bf16.xpose.msra.mxu0 0
  %1377 = vmatprep.subr.bf16.mxu0 0
  %1378 = vmatpush2.bf16.xpose.msra.mxu0 0
  %1379 = vmatprep.subr.bf16.mxu0 0
  %1380 = vmatpush2.bf16.xpose.msra.mxu0 0
  %1381 = vmatprep.subr.bf16.mxu0 0
  %1382 = vmatpush2.bf16.xpose.msra.mxu0 0
  %1383 = vmatprep.mubr.bf16.mxu0 0
  %1384 = vmatmul.mubr.bf16.gmra.mxu0 %v1346
  %v1385 = vpop.f32.mrf.mxu0
  %v1386 = vadd.f32 0.0, %v1385
  %v1387 = vpop.f32.mrf.mxu0
  %v1388 = vpop.f32.mrf.mxu0
  %v1389 = vpop.f32.mrf.mxu0
  %1390 = vdwg.mxu0
  %v1391 = vmul.f32 %v1386, 0.35355338
  %v1392 = vsel %vm973, %v1391, -inf
  %1393 = vmax.xlane.f32.xlu0 %v1392
  %v1394 = vpop.xlane.xlu0 %1393
  %v1395 = vsub.f32 %v1391, %v1394
  %v1396 = vmul.f32 %v1395, 1.442695
  %v1397 = vpow.pop %v1396
  %v1398 = vsel %vm973, %v1397, 0.0
  %1399 = vadd.xlane.f32.xlu0 %v1398
  %v1400 = vpop.xlane.xlu0 %1399
  %v1401 = vrcp.pop %v1400
  %v1402 = vmul.f32 %v1397, %v1401
  %v1403 = vpack.c.bf16 %v1402, %v1402
  %v1405 = vsel %vm986, %v1403, 0
  %v1408 = vand.u32 %v1344, %v993
  %1410 = vmatprep.subr.bf16.mxu0 0
  %1411 = vmatpush1.bf16.msra.mxu0 0
  %1412 = vmatprep.subr.bf16.mxu0 0
  %1413 = vmatpush1.bf16.msra.mxu0 0
  %1414 = vmatprep.subr.bf16.mxu0 0
  %1415 = vmatpush1.bf16.msra.mxu0 0
  %1416 = vmatprep.subr.bf16.mxu0 0
  %1417 = vmatpush1.bf16.msra.mxu0 0
  %1418 = vmatprep.subr.bf16.mxu0 0
  %1419 = vmatpush1.bf16.msra.mxu0 0
  %1420 = vmatprep.subr.bf16.mxu0 0
  %1421 = vmatpush1.bf16.msra.mxu0 0
  %1422 = vmatprep.subr.bf16.mxu0 0
  %1423 = vmatpush1.bf16.msra.mxu0 0
  %1424 = vmatprep.subr.bf16.mxu0 0
  %1425 = vmatpush1.bf16.msra.mxu0 %v1408
  %1426 = vmatprep.subr.bf16.mxu0 0
  %1427 = vmatpush2.bf16.msra.mxu0 0
  %1428 = vmatprep.subr.bf16.mxu0 0
  %1429 = vmatpush2.bf16.msra.mxu0 0
  %1430 = vmatprep.subr.bf16.mxu0 0
  %1431 = vmatpush2.bf16.msra.mxu0 0
  %1432 = vmatprep.subr.bf16.mxu0 0
  %1433 = vmatpush2.bf16.msra.mxu0 0
  %1434 = vmatprep.subr.bf16.mxu0 0
  %1435 = vmatpush2.bf16.msra.mxu0 0
  %1436 = vmatprep.subr.bf16.mxu0 0
  %1437 = vmatpush2.bf16.msra.mxu0 0
  %1438 = vmatprep.subr.bf16.mxu0 0
  %1439 = vmatpush2.bf16.msra.mxu0 0
  %1440 = vmatprep.subr.bf16.mxu0 0
  %1441 = vmatpush2.bf16.msra.mxu0 0
  %1442 = vmatprep.mubr.bf16.mxu0 0
  %1443 = vmatmul.mubr.bf16.gmra.mxu0 %v1405
  %v1444 = vpop.f32.mrf.mxu0
  %v1445 = vadd.f32 0.0, %v1444
  %v1446 = vpop.f32.mrf.mxu0
  %v1447 = vpop.f32.mrf.mxu0
  %v1448 = vpop.f32.mrf.mxu0
  %1449 = vdwg.mxu0
  %v1450 = vpack.c.bf16 %v1445, %v1445
  %v1452 = vsel %vm925, %v1450, 0
  %vm1454 = vcmask 1043456
  %v1456 = vsel %vm1454, %v738, 0
  %1458 = vmatprep.subr.bf16.mxu0 0
  %1459 = vmatpush1.bf16.msra.mxu0 0
  %1460 = vmatprep.subr.bf16.mxu0 0
  %1461 = vmatpush1.bf16.msra.mxu0 0
  %1462 = vmatprep.subr.bf16.mxu0 0
  %1463 = vmatpush1.bf16.msra.mxu0 0
  %1464 = vmatprep.subr.bf16.mxu0 0
  %1465 = vmatpush1.bf16.msra.mxu0 0
  %1466 = vmatprep.subr.bf16.mxu0 0
  %1467 = vmatpush1.bf16.msra.mxu0 0
  %1468 = vmatprep.subr.bf16.mxu0 0
  %1469 = vmatpush1.bf16.msra.mxu0 0
  %1470 = vmatprep.subr.bf16.mxu0 0
  %1471 = vmatpush1.bf16.msra.mxu0 0
  %1472 = vmatprep.subr.bf16.mxu0 0
  %1473 = vmatpush1.bf16.msra.mxu0 %v1456
  %1474 = vmatprep.subr.bf16.mxu0 0
  %1475 = vmatpush2.bf16.msra.mxu0 0
  %1476 = vmatprep.subr.bf16.mxu0 0
  %1477 = vmatpush2.bf16.msra.mxu0 0
  %1478 = vmatprep.subr.bf16.mxu0 0
  %1479 = vmatpush2.bf16.msra.mxu0 0
  %1480 = vmatprep.subr.bf16.mxu0 0
  %1481 = vmatpush2.bf16.msra.mxu0 0
  %1482 = vmatprep.subr.bf16.mxu0 0
  %1483 = vmatpush2.bf16.msra.mxu0 0
  %1484 = vmatprep.subr.bf16.mxu0 0
  %1485 = vmatpush2.bf16.msra.mxu0 0
  %1486 = vmatprep.subr.bf16.mxu0 0
  %1487 = vmatpush2.bf16.msra.mxu0 0
  %1488 = vmatprep.subr.bf16.mxu0 0
  %1489 = vmatpush2.bf16.msra.mxu0 0
  %1490 = vmatprep.mubr.bf16.mxu0 0
  %1491 = vmatmul.mubr.bf16.gmra.mxu0 %v1452
  %v1492 = vpop.f32.mrf.mxu0
  %v1493 = vadd.f32 0.0, %v1492
  %v1494 = vpop.f32.mrf.mxu0
  %v1495 = vpop.f32.mrf.mxu0
  %v1496 = vpop.f32.mrf.mxu0
  %1497 = vdwg.mxu0
  %v1499 = vsel %vm925, %v1037, 0
  %v1502 = vsel %vm1454, %v737, 0
  %1504 = vmatprep.subr.bf16.mxu0 0
  %1505 = vmatpush1.bf16.msra.mxu0 0
  %1506 = vmatprep.subr.bf16.mxu0 0
  %1507 = vmatpush1.bf16.msra.mxu0 0
  %1508 = vmatprep.subr.bf16.mxu0 0
  %1509 = vmatpush1.bf16.msra.mxu0 0
  %1510 = vmatprep.subr.bf16.mxu0 0
  %1511 = vmatpush1.bf16.msra.mxu0 0
  %1512 = vmatprep.subr.bf16.mxu0 0
  %1513 = vmatpush1.bf16.msra.mxu0 0
  %1514 = vmatprep.subr.bf16.mxu0 0
  %1515 = vmatpush1.bf16.msra.mxu0 0
  %1516 = vmatprep.subr.bf16.mxu0 0
  %1517 = vmatpush1.bf16.msra.mxu0 0
  %1518 = vmatprep.subr.bf16.mxu0 0
  %1519 = vmatpush1.bf16.msra.mxu0 %v1502
  %1520 = vmatprep.subr.bf16.mxu0 0
  %1521 = vmatpush2.bf16.msra.mxu0 0
  %1522 = vmatprep.subr.bf16.mxu0 0
  %1523 = vmatpush2.bf16.msra.mxu0 0
  %1524 = vmatprep.subr.bf16.mxu0 0
  %1525 = vmatpush2.bf16.msra.mxu0 0
  %1526 = vmatprep.subr.bf16.mxu0 0
  %1527 = vmatpush2.bf16.msra.mxu0 0
  %1528 = vmatprep.subr.bf16.mxu0 0
  %1529 = vmatpush2.bf16.msra.mxu0 0
  %1530 = vmatprep.subr.bf16.mxu0 0
  %1531 = vmatpush2.bf16.msra.mxu0 0
  %1532 = vmatprep.subr.bf16.mxu0 0
  %1533 = vmatpush2.bf16.msra.mxu0 0
  %1534 = vmatprep.subr.bf16.mxu0 0
  %1535 = vmatpush2.bf16.msra.mxu0 0
  %1536 = vmatprep.mubr.bf16.mxu0 0
  %1537 = vmatmul.mubr.bf16.gmra.mxu0 %v1499
  %v1538 = vpop.f32.mrf.mxu0
  %v1539 = vadd.f32 %v1493, %v1538
  %v1540 = vpop.f32.mrf.mxu0
  %v1541 = vpop.f32.mrf.mxu0
  %v1542 = vpop.f32.mrf.mxu0
  %1543 = vdwg.mxu0
  %v1544 = vshrl.u32 %v1342, 16
  %v1546 = vrot.slane %v1544, 2
  %v1547 = vshll.u32 %v1342, 16
  %v1549 = vrot.slane %v1547, 3
  %v1550 = vor.u32 %v1546, %v1549
  %v1551 = vshrl.u32 %v1343, 16
  %v1553 = vrot.slane %v1551, 2
  %v1554 = vshll.u32 %v1343, 16
  %v1556 = vrot.slane %v1554, 3
  %v1557 = vor.u32 %v1553, %v1556
  %v1559 = vsel %vm925, %v1550, 0
  %v1562 = vsel %vm925, %v1557, 0
  %1564 = vmatprep.subr.bf16.mxu0 0
  %1565 = vmatpush1.bf16.xpose.msra.mxu0 0
  %1566 = vmatprep.subr.bf16.mxu0 0
  %1567 = vmatpush1.bf16.xpose.msra.mxu0 0
  %1568 = vmatprep.subr.bf16.mxu0 0
  %1569 = vmatpush1.bf16.xpose.msra.mxu0 0
  %1570 = vmatprep.subr.bf16.mxu0 0
  %1571 = vmatpush1.bf16.xpose.msra.mxu0 0
  %1572 = vmatprep.subr.bf16.mxu0 0
  %1573 = vmatpush1.bf16.xpose.msra.mxu0 0
  %1574 = vmatprep.subr.bf16.mxu0 0
  %1575 = vmatpush1.bf16.xpose.msra.mxu0 0
  %1576 = vmatprep.subr.bf16.mxu0 0
  %1577 = vmatpush1.bf16.xpose.msra.mxu0 0
  %1578 = vmatprep.subr.bf16.mxu0 0
  %1579 = vmatpush1.bf16.xpose.msra.mxu0 %v1562
  %1580 = vmatprep.subr.bf16.mxu0 0
  %1581 = vmatpush2.bf16.xpose.msra.mxu0 0
  %1582 = vmatprep.subr.bf16.mxu0 0
  %1583 = vmatpush2.bf16.xpose.msra.mxu0 0
  %1584 = vmatprep.subr.bf16.mxu0 0
  %1585 = vmatpush2.bf16.xpose.msra.mxu0 0
  %1586 = vmatprep.subr.bf16.mxu0 0
  %1587 = vmatpush2.bf16.xpose.msra.mxu0 0
  %1588 = vmatprep.subr.bf16.mxu0 0
  %1589 = vmatpush2.bf16.xpose.msra.mxu0 0
  %1590 = vmatprep.subr.bf16.mxu0 0
  %1591 = vmatpush2.bf16.xpose.msra.mxu0 0
  %1592 = vmatprep.subr.bf16.mxu0 0
  %1593 = vmatpush2.bf16.xpose.msra.mxu0 0
  %1594 = vmatprep.subr.bf16.mxu0 0
  %1595 = vmatpush2.bf16.xpose.msra.mxu0 0
  %1596 = vmatprep.mubr.bf16.mxu0 0
  %1597 = vmatmul.mubr.bf16.gmra.mxu0 %v1559
  %v1598 = vpop.f32.mrf.mxu0
  %v1599 = vadd.f32 0.0, %v1598
  %v1600 = vpop.f32.mrf.mxu0
  %v1601 = vpop.f32.mrf.mxu0
  %v1602 = vpop.f32.mrf.mxu0
  %1603 = vdwg.mxu0
  %v1604 = vmul.f32 %v1599, 0.35355338
  %v1605 = vsel %vm973, %v1604, -inf
  %1606 = vmax.xlane.f32.xlu0 %v1605
  %v1607 = vpop.xlane.xlu0 %1606
  %v1608 = vsub.f32 %v1604, %v1607
  %v1609 = vmul.f32 %v1608, 1.442695
  %v1610 = vpow.pop %v1609
  %v1611 = vsel %vm973, %v1610, 0.0
  %1612 = vadd.xlane.f32.xlu0 %v1611
  %v1613 = vpop.xlane.xlu0 %1612
  %v1614 = vrcp.pop %v1613
  %v1615 = vmul.f32 %v1610, %v1614
  %v1616 = vpack.c.bf16 %v1615, %v1615
  %v1617 = vshrl.u32 %v1344, 16
  %v1619 = vrot.slane %v1617, 2
  %v1620 = vshll.u32 %v1344, 16
  %v1622 = vrot.slane %v1620, 3
  %v1623 = vor.u32 %v1619, %v1622
  %v1625 = vsel %vm986, %v1616, 0
  %v1628 = vand.u32 %v1623, %v993
  %1630 = vmatprep.subr.bf16.mxu0 0
  %1631 = vmatpush1.bf16.msra.mxu0 0
  %1632 = vmatprep.subr.bf16.mxu0 0
  %1633 = vmatpush1.bf16.msra.mxu0 0
  %1634 = vmatprep.subr.bf16.mxu0 0
  %1635 = vmatpush1.bf16.msra.mxu0 0
  %1636 = vmatprep.subr.bf16.mxu0 0
  %1637 = vmatpush1.bf16.msra.mxu0 0
  %1638 = vmatprep.subr.bf16.mxu0 0
  %1639 = vmatpush1.bf16.msra.mxu0 0
  %1640 = vmatprep.subr.bf16.mxu0 0
  %1641 = vmatpush1.bf16.msra.mxu0 0
  %1642 = vmatprep.subr.bf16.mxu0 0
  %1643 = vmatpush1.bf16.msra.mxu0 0
  %1644 = vmatprep.subr.bf16.mxu0 0
  %1645 = vmatpush1.bf16.msra.mxu0 %v1628
  %1646 = vmatprep.subr.bf16.mxu0 0
  %1647 = vmatpush2.bf16.msra.mxu0 0
  %1648 = vmatprep.subr.bf16.mxu0 0
  %1649 = vmatpush2.bf16.msra.mxu0 0
  %1650 = vmatprep.subr.bf16.mxu0 0
  %1651 = vmatpush2.bf16.msra.mxu0 0
  %1652 = vmatprep.subr.bf16.mxu0 0
  %1653 = vmatpush2.bf16.msra.mxu0 0
  %1654 = vmatprep.subr.bf16.mxu0 0
  %1655 = vmatpush2.bf16.msra.mxu0 0
  %1656 = vmatprep.subr.bf16.mxu0 0
  %1657 = vmatpush2.bf16.msra.mxu0 0
  %1658 = vmatprep.subr.bf16.mxu0 0
  %1659 = vmatpush2.bf16.msra.mxu0 0
  %1660 = vmatprep.subr.bf16.mxu0 0
  %1661 = vmatpush2.bf16.msra.mxu0 0
  %1662 = vmatprep.mubr.bf16.mxu0 0
  %1663 = vmatmul.mubr.bf16.gmra.mxu0 %v1625
  %v1664 = vpop.f32.mrf.mxu0
  %v1665 = vadd.f32 0.0, %v1664
  %v1666 = vpop.f32.mrf.mxu0
  %v1667 = vpop.f32.mrf.mxu0
  %v1668 = vpop.f32.mrf.mxu0
  %1669 = vdwg.mxu0
  %v1670 = vpack.c.bf16 %v1665, %v1665
  %v1672 = vsel %vm925, %v1670, 0
  %1674 = vmatprep.subr.bf16.mxu0 0
  %1675 = vmatpush1.bf16.msra.mxu0 0
  %1676 = vmatprep.subr.bf16.mxu0 0
  %1677 = vmatpush1.bf16.msra.mxu0 0
  %1678 = vmatprep.subr.bf16.mxu0 0
  %1679 = vmatpush1.bf16.msra.mxu0 0
  %1680 = vmatprep.subr.bf16.mxu0 0
  %1681 = vmatpush1.bf16.msra.mxu0 0
  %1682 = vmatprep.subr.bf16.mxu0 0
  %1683 = vmatpush1.bf16.msra.mxu0 0
  %1684 = vmatprep.subr.bf16.mxu0 0
  %1685 = vmatpush1.bf16.msra.mxu0 0
  %1686 = vmatprep.subr.bf16.mxu0 0
  %1687 = vmatpush1.bf16.msra.mxu0 0
  %1688 = vmatprep.subr.bf16.mxu0 0
  %1689 = vmatpush1.bf16.msra.mxu0 %v1456
  %1690 = vmatprep.subr.bf16.mxu0 0
  %1691 = vmatpush2.bf16.msra.mxu0 0
  %1692 = vmatprep.subr.bf16.mxu0 0
  %1693 = vmatpush2.bf16.msra.mxu0 0
  %1694 = vmatprep.subr.bf16.mxu0 0
  %1695 = vmatpush2.bf16.msra.mxu0 0
  %1696 = vmatprep.subr.bf16.mxu0 0
  %1697 = vmatpush2.bf16.msra.mxu0 0
  %1698 = vmatprep.subr.bf16.mxu0 0
  %1699 = vmatpush2.bf16.msra.mxu0 0
  %1700 = vmatprep.subr.bf16.mxu0 0
  %1701 = vmatpush2.bf16.msra.mxu0 0
  %1702 = vmatprep.subr.bf16.mxu0 0
  %1703 = vmatpush2.bf16.msra.mxu0 0
  %1704 = vmatprep.subr.bf16.mxu0 0
  %1705 = vmatpush2.bf16.msra.mxu0 0
  %1706 = vmatprep.mubr.bf16.mxu0 0
  %1707 = vmatmul.mubr.bf16.gmra.mxu0 %v1672
  %v1708 = vpop.f32.mrf.mxu0
  %v1709 = vadd.f32 0.0, %v1708
  %v1710 = vpop.f32.mrf.mxu0
  %v1711 = vpop.f32.mrf.mxu0
  %v1712 = vpop.f32.mrf.mxu0
  %1713 = vdwg.mxu0
  %v1715 = vsel %vm925, %v1164, 0
  %1717 = vmatprep.subr.bf16.mxu0 0
  %1718 = vmatpush1.bf16.msra.mxu0 0
  %1719 = vmatprep.subr.bf16.mxu0 0
  %1720 = vmatpush1.bf16.msra.mxu0 0
  %1721 = vmatprep.subr.bf16.mxu0 0
  %1722 = vmatpush1.bf16.msra.mxu0 0
  %1723 = vmatprep.subr.bf16.mxu0 0
  %1724 = vmatpush1.bf16.msra.mxu0 0
  %1725 = vmatprep.subr.bf16.mxu0 0
  %1726 = vmatpush1.bf16.msra.mxu0 0
  %1727 = vmatprep.subr.bf16.mxu0 0
  %1728 = vmatpush1.bf16.msra.mxu0 0
  %1729 = vmatprep.subr.bf16.mxu0 0
  %1730 = vmatpush1.bf16.msra.mxu0 0
  %1731 = vmatprep.subr.bf16.mxu0 0
  %1732 = vmatpush1.bf16.msra.mxu0 %v1502
  %1733 = vmatprep.subr.bf16.mxu0 0
  %1734 = vmatpush2.bf16.msra.mxu0 0
  %1735 = vmatprep.subr.bf16.mxu0 0
  %1736 = vmatpush2.bf16.msra.mxu0 0
  %1737 = vmatprep.subr.bf16.mxu0 0
  %1738 = vmatpush2.bf16.msra.mxu0 0
  %1739 = vmatprep.subr.bf16.mxu0 0
  %1740 = vmatpush2.bf16.msra.mxu0 0
  %1741 = vmatprep.subr.bf16.mxu0 0
  %1742 = vmatpush2.bf16.msra.mxu0 0
  %1743 = vmatprep.subr.bf16.mxu0 0
  %1744 = vmatpush2.bf16.msra.mxu0 0
  %1745 = vmatprep.subr.bf16.mxu0 0
  %1746 = vmatpush2.bf16.msra.mxu0 0
  %1747 = vmatprep.subr.bf16.mxu0 0
  %1748 = vmatpush2.bf16.msra.mxu0 0
  %1749 = vmatprep.mubr.bf16.mxu0 0
  %1750 = vmatmul.mubr.bf16.gmra.mxu0 %v1715
  %v1751 = vpop.f32.mrf.mxu0
  %v1752 = vadd.f32 %v1709, %v1751
  %v1753 = vpop.f32.mrf.mxu0
  %v1754 = vpop.f32.mrf.mxu0
  %v1755 = vpop.f32.mrf.mxu0
  %1756 = vdwg.mxu0
  %v1758 = vlaneseq
  %v1759 = vshrl.u32 %v1758, 7
  %v1760 = vsub.s32 0, %v1759
  %v1761 = vrot.slane %v695, %v1760
  %v1767 = vunpack.c.l.b16 %v685
  %v1768 = vunpack.c.l.b16 %v686
  %v1769 = vunpack.c.l.b16 %v687
  %v1770 = vunpack.c.l.b16 %v688
  %v1771 = vpack.c.b16 %v1768, %v1767
  %v1772 = vpack.c.b16 %v1770, %v1769
  %1775 = vmatprep.subr.bf16.mxu0 0
  %1776 = vmatpush1.bf16.msra.mxu0 0
  %1777 = vmatprep.subr.bf16.mxu0 0
  %1778 = vmatpush1.bf16.msra.mxu0 0
  %1779 = vmatprep.subr.bf16.mxu0 0
  %1780 = vmatpush1.bf16.msra.mxu0 0
  %1781 = vmatprep.subr.bf16.mxu0 0
  %1782 = vmatpush1.bf16.msra.mxu0 0
  %1783 = vmatprep.subr.bf16.mxu0 0
  %1784 = vmatpush1.bf16.msra.mxu0 0
  %1785 = vmatprep.subr.bf16.mxu0 0
  %1786 = vmatpush1.bf16.msra.mxu0 0
  %1787 = vmatprep.subr.bf16.mxu0 0
  %1788 = vmatpush1.bf16.msra.mxu0 %v1772
  %1789 = vmatprep.subr.bf16.mxu0 0
  %1790 = vmatpush1.bf16.msra.mxu0 %v1771
  %1791 = vmatprep.subr.bf16.mxu0 0
  %1792 = vmatpush2.bf16.msra.mxu0 0
  %1793 = vmatprep.subr.bf16.mxu0 0
  %1794 = vmatpush2.bf16.msra.mxu0 0
  %1795 = vmatprep.subr.bf16.mxu0 0
  %1796 = vmatpush2.bf16.msra.mxu0 0
  %1797 = vmatprep.subr.bf16.mxu0 0
  %1798 = vmatpush2.bf16.msra.mxu0 0
  %1799 = vmatprep.subr.bf16.mxu0 0
  %1800 = vmatpush2.bf16.msra.mxu0 0
  %1801 = vmatprep.subr.bf16.mxu0 0
  %1802 = vmatpush2.bf16.msra.mxu0 0
  %1803 = vmatprep.subr.bf16.mxu0 0
  %1804 = vmatpush2.bf16.msra.mxu0 0
  %1805 = vmatprep.subr.bf16.mxu0 0
  %1806 = vmatpush2.bf16.msra.mxu0 0
  %1807 = vmatprep.mubr.bf16.mxu0 0
  %1808 = vmatmul.mubr.bf16.gmra.mxu0 %v761
  %v1809 = vpop.f32.mrf.mxu0
  %v1810 = vadd.f32 %v1761, %v1809
  %v1811 = vpop.f32.mrf.mxu0
  %v1812 = vpop.f32.mrf.mxu0
  %v1813 = vadd.f32 %v1761, %v1812
  %v1814 = vpop.f32.mrf.mxu0
  %1815 = vdwg.mxu0
  %v1817 = vlaneseq
  %v1818 = vshrl.u32 %v1817, 7
  %v1819 = vsub.s32 0, %v1818
  %v1820 = vrot.slane %v715, %v1819
  %v1826 = vunpack.c.l.b16 %v705
  %v1827 = vunpack.c.l.b16 %v706
  %v1828 = vunpack.c.l.b16 %v707
  %v1829 = vunpack.c.l.b16 %v708
  %v1830 = vpack.c.b16 %v1827, %v1826
  %v1831 = vpack.c.b16 %v1829, %v1828
  %1834 = vmatprep.subr.bf16.mxu0 0
  %1835 = vmatpush1.bf16.msra.mxu0 0
  %1836 = vmatprep.subr.bf16.mxu0 0
  %1837 = vmatpush1.bf16.msra.mxu0 0
  %1838 = vmatprep.subr.bf16.mxu0 0
  %1839 = vmatpush1.bf16.msra.mxu0 0
  %1840 = vmatprep.subr.bf16.mxu0 0
  %1841 = vmatpush1.bf16.msra.mxu0 0
  %1842 = vmatprep.subr.bf16.mxu0 0
  %1843 = vmatpush1.bf16.msra.mxu0 0
  %1844 = vmatprep.subr.bf16.mxu0 0
  %1845 = vmatpush1.bf16.msra.mxu0 0
  %1846 = vmatprep.subr.bf16.mxu0 0
  %1847 = vmatpush1.bf16.msra.mxu0 %v1831
  %1848 = vmatprep.subr.bf16.mxu0 0
  %1849 = vmatpush1.bf16.msra.mxu0 %v1830
  %1850 = vmatprep.subr.bf16.mxu0 0
  %1851 = vmatpush2.bf16.msra.mxu0 0
  %1852 = vmatprep.subr.bf16.mxu0 0
  %1853 = vmatpush2.bf16.msra.mxu0 0
  %1854 = vmatprep.subr.bf16.mxu0 0
  %1855 = vmatpush2.bf16.msra.mxu0 0
  %1856 = vmatprep.subr.bf16.mxu0 0
  %1857 = vmatpush2.bf16.msra.mxu0 0
  %1858 = vmatprep.subr.bf16.mxu0 0
  %1859 = vmatpush2.bf16.msra.mxu0 0
  %1860 = vmatprep.subr.bf16.mxu0 0
  %1861 = vmatpush2.bf16.msra.mxu0 0
  %1862 = vmatprep.subr.bf16.mxu0 0
  %1863 = vmatpush2.bf16.msra.mxu0 0
  %1864 = vmatprep.subr.bf16.mxu0 0
  %1865 = vmatpush2.bf16.msra.mxu0 0
  %1866 = vmatprep.mubr.bf16.mxu0 0
  %1867 = vmatmul.mubr.bf16.gmra.mxu0 %v761
  %v1868 = vpop.f32.mrf.mxu0
  %v1869 = vadd.f32 %v1820, %v1868
  %v1870 = vpop.f32.mrf.mxu0
  %v1871 = vpop.f32.mrf.mxu0
  %v1872 = vadd.f32 %v1820, %v1871
  %v1873 = vpop.f32.mrf.mxu0
  %1874 = vdwg.mxu0
  %v1876 = vlaneseq
  %v1877 = vshrl.u32 %v1876, 7
  %v1878 = vsub.s32 0, %v1877
  %v1879 = vrot.slane %v735, %v1878
  %v1885 = vunpack.c.l.b16 %v725
  %v1886 = vunpack.c.l.b16 %v726
  %v1887 = vunpack.c.l.b16 %v727
  %v1888 = vunpack.c.l.b16 %v728
  %v1889 = vpack.c.b16 %v1886, %v1885
  %v1890 = vpack.c.b16 %v1888, %v1887
  %1893 = vmatprep.subr.bf16.mxu0 0
  %1894 = vmatpush1.bf16.msra.mxu0 0
  %1895 = vmatprep.subr.bf16.mxu0 0
  %1896 = vmatpush1.bf16.msra.mxu0 0
  %1897 = vmatprep.subr.bf16.mxu0 0
  %1898 = vmatpush1.bf16.msra.mxu0 0
  %1899 = vmatprep.subr.bf16.mxu0 0
  %1900 = vmatpush1.bf16.msra.mxu0 0
  %1901 = vmatprep.subr.bf16.mxu0 0
  %1902 = vmatpush1.bf16.msra.mxu0 0
  %1903 = vmatprep.subr.bf16.mxu0 0
  %1904 = vmatpush1.bf16.msra.mxu0 0
  %1905 = vmatprep.subr.bf16.mxu0 0
  %1906 = vmatpush1.bf16.msra.mxu0 %v1890
  %1907 = vmatprep.subr.bf16.mxu0 0
  %1908 = vmatpush1.bf16.msra.mxu0 %v1889
  %1909 = vmatprep.subr.bf16.mxu0 0
  %1910 = vmatpush2.bf16.msra.mxu0 0
  %1911 = vmatprep.subr.bf16.mxu0 0
  %1912 = vmatpush2.bf16.msra.mxu0 0
  %1913 = vmatprep.subr.bf16.mxu0 0
  %1914 = vmatpush2.bf16.msra.mxu0 0
  %1915 = vmatprep.subr.bf16.mxu0 0
  %1916 = vmatpush2.bf16.msra.mxu0 0
  %1917 = vmatprep.subr.bf16.mxu0 0
  %1918 = vmatpush2.bf16.msra.mxu0 0
  %1919 = vmatprep.subr.bf16.mxu0 0
  %1920 = vmatpush2.bf16.msra.mxu0 0
  %1921 = vmatprep.subr.bf16.mxu0 0
  %1922 = vmatpush2.bf16.msra.mxu0 0
  %1923 = vmatprep.subr.bf16.mxu0 0
  %1924 = vmatpush2.bf16.msra.mxu0 0
  %1925 = vmatprep.mubr.bf16.mxu0 0
  %1926 = vmatmul.mubr.bf16.gmra.mxu0 %v761
  %v1927 = vpop.f32.mrf.mxu0
  %v1928 = vadd.f32 %v1879, %v1927
  %v1929 = vpop.f32.mrf.mxu0
  %v1930 = vpop.f32.mrf.mxu0
  %v1931 = vadd.f32 %v1879, %v1930
  %v1932 = vpop.f32.mrf.mxu0
  %1933 = vdwg.mxu0
  %v1934 = vpack.c.bf16 %v1813, %v1810
  %v1935 = vpack.c.bf16 %v1872, %v1869
  %v1936 = vpack.c.bf16 %v1931, %v1928
  %v1938 = vsel %vm925, %v1934, 0
  %v1941 = vsel %vm925, %v1935, 0
  %1943 = vmatprep.subr.bf16.mxu0 0
  %1944 = vmatpush1.bf16.xpose.msra.mxu0 0
  %1945 = vmatprep.subr.bf16.mxu0 0
  %1946 = vmatpush1.bf16.xpose.msra.mxu0 0
  %1947 = vmatprep.subr.bf16.mxu0 0
  %1948 = vmatpush1.bf16.xpose.msra.mxu0 0
  %1949 = vmatprep.subr.bf16.mxu0 0
  %1950 = vmatpush1.bf16.xpose.msra.mxu0 0
  %1951 = vmatprep.subr.bf16.mxu0 0
  %1952 = vmatpush1.bf16.xpose.msra.mxu0 0
  %1953 = vmatprep.subr.bf16.mxu0 0
  %1954 = vmatpush1.bf16.xpose.msra.mxu0 0
  %1955 = vmatprep.subr.bf16.mxu0 0
  %1956 = vmatpush1.bf16.xpose.msra.mxu0 0
  %1957 = vmatprep.subr.bf16.mxu0 0
  %1958 = vmatpush1.bf16.xpose.msra.mxu0 %v1941
  %1959 = vmatprep.subr.bf16.mxu0 0
  %1960 = vmatpush2.bf16.xpose.msra.mxu0 0
  %1961 = vmatprep.subr.bf16.mxu0 0
  %1962 = vmatpush2.bf16.xpose.msra.mxu0 0
  %1963 = vmatprep.subr.bf16.mxu0 0
  %1964 = vmatpush2.bf16.xpose.msra.mxu0 0
  %1965 = vmatprep.subr.bf16.mxu0 0
  %1966 = vmatpush2.bf16.xpose.msra.mxu0 0
  %1967 = vmatprep.subr.bf16.mxu0 0
  %1968 = vmatpush2.bf16.xpose.msra.mxu0 0
  %1969 = vmatprep.subr.bf16.mxu0 0
  %1970 = vmatpush2.bf16.xpose.msra.mxu0 0
  %1971 = vmatprep.subr.bf16.mxu0 0
  %1972 = vmatpush2.bf16.xpose.msra.mxu0 0
  %1973 = vmatprep.subr.bf16.mxu0 0
  %1974 = vmatpush2.bf16.xpose.msra.mxu0 0
  %1975 = vmatprep.mubr.bf16.mxu0 0
  %1976 = vmatmul.mubr.bf16.gmra.mxu0 %v1938
  %v1977 = vpop.f32.mrf.mxu0
  %v1978 = vadd.f32 0.0, %v1977
  %v1979 = vpop.f32.mrf.mxu0
  %v1980 = vpop.f32.mrf.mxu0
  %v1981 = vpop.f32.mrf.mxu0
  %1982 = vdwg.mxu0
  %v1983 = vmul.f32 %v1978, 0.35355338
  %v1984 = vsel %vm973, %v1983, -inf
  %1985 = vmax.xlane.f32.xlu0 %v1984
  %v1986 = vpop.xlane.xlu0 %1985
  %v1987 = vsub.f32 %v1983, %v1986
  %v1988 = vmul.f32 %v1987, 1.442695
  %v1989 = vpow.pop %v1988
  %v1990 = vsel %vm973, %v1989, 0.0
  %1991 = vadd.xlane.f32.xlu0 %v1990
  %v1992 = vpop.xlane.xlu0 %1991
  %v1993 = vrcp.pop %v1992
  %v1994 = vmul.f32 %v1989, %v1993
  %v1995 = vpack.c.bf16 %v1994, %v1994
  %v1997 = vsel %vm986, %v1995, 0
  %v2000 = vand.u32 %v1936, %v993
  %2002 = vmatprep.subr.bf16.mxu0 0
  %2003 = vmatpush1.bf16.msra.mxu0 0
  %2004 = vmatprep.subr.bf16.mxu0 0
  %2005 = vmatpush1.bf16.msra.mxu0 0
  %2006 = vmatprep.subr.bf16.mxu0 0
  %2007 = vmatpush1.bf16.msra.mxu0 0
  %2008 = vmatprep.subr.bf16.mxu0 0
  %2009 = vmatpush1.bf16.msra.mxu0 0
  %2010 = vmatprep.subr.bf16.mxu0 0
  %2011 = vmatpush1.bf16.msra.mxu0 0
  %2012 = vmatprep.subr.bf16.mxu0 0
  %2013 = vmatpush1.bf16.msra.mxu0 0
  %2014 = vmatprep.subr.bf16.mxu0 0
  %2015 = vmatpush1.bf16.msra.mxu0 0
  %2016 = vmatprep.subr.bf16.mxu0 0
  %2017 = vmatpush1.bf16.msra.mxu0 %v2000
  %2018 = vmatprep.subr.bf16.mxu0 0
  %2019 = vmatpush2.bf16.msra.mxu0 0
  %2020 = vmatprep.subr.bf16.mxu0 0
  %2021 = vmatpush2.bf16.msra.mxu0 0
  %2022 = vmatprep.subr.bf16.mxu0 0
  %2023 = vmatpush2.bf16.msra.mxu0 0
  %2024 = vmatprep.subr.bf16.mxu0 0
  %2025 = vmatpush2.bf16.msra.mxu0 0
  %2026 = vmatprep.subr.bf16.mxu0 0
  %2027 = vmatpush2.bf16.msra.mxu0 0
  %2028 = vmatprep.subr.bf16.mxu0 0
  %2029 = vmatpush2.bf16.msra.mxu0 0
  %2030 = vmatprep.subr.bf16.mxu0 0
  %2031 = vmatpush2.bf16.msra.mxu0 0
  %2032 = vmatprep.subr.bf16.mxu0 0
  %2033 = vmatpush2.bf16.msra.mxu0 0
  %2034 = vmatprep.mubr.bf16.mxu0 0
  %2035 = vmatmul.mubr.bf16.gmra.mxu0 %v1997
  %v2036 = vpop.f32.mrf.mxu0
  %v2037 = vadd.f32 0.0, %v2036
  %v2038 = vpop.f32.mrf.mxu0
  %v2039 = vpop.f32.mrf.mxu0
  %v2040 = vpop.f32.mrf.mxu0
  %2041 = vdwg.mxu0
  %v2042 = vpack.c.bf16 %v2037, %v2037
  %v2044 = vsel %vm925, %v2042, 0
  %v2047 = vsel %vm1454, %v739, 0
  %2049 = vmatprep.subr.bf16.mxu0 0
  %2050 = vmatpush1.bf16.msra.mxu0 0
  %2051 = vmatprep.subr.bf16.mxu0 0
  %2052 = vmatpush1.bf16.msra.mxu0 0
  %2053 = vmatprep.subr.bf16.mxu0 0
  %2054 = vmatpush1.bf16.msra.mxu0 0
  %2055 = vmatprep.subr.bf16.mxu0 0
  %2056 = vmatpush1.bf16.msra.mxu0 0
  %2057 = vmatprep.subr.bf16.mxu0 0
  %2058 = vmatpush1.bf16.msra.mxu0 0
  %2059 = vmatprep.subr.bf16.mxu0 0
  %2060 = vmatpush1.bf16.msra.mxu0 0
  %2061 = vmatprep.subr.bf16.mxu0 0
  %2062 = vmatpush1.bf16.msra.mxu0 0
  %2063 = vmatprep.subr.bf16.mxu0 0
  %2064 = vmatpush1.bf16.msra.mxu0 %v2047
  %2065 = vmatprep.subr.bf16.mxu0 0
  %2066 = vmatpush2.bf16.msra.mxu0 0
  %2067 = vmatprep.subr.bf16.mxu0 0
  %2068 = vmatpush2.bf16.msra.mxu0 0
  %2069 = vmatprep.subr.bf16.mxu0 0
  %2070 = vmatpush2.bf16.msra.mxu0 0
  %2071 = vmatprep.subr.bf16.mxu0 0
  %2072 = vmatpush2.bf16.msra.mxu0 0
  %2073 = vmatprep.subr.bf16.mxu0 0
  %2074 = vmatpush2.bf16.msra.mxu0 0
  %2075 = vmatprep.subr.bf16.mxu0 0
  %2076 = vmatpush2.bf16.msra.mxu0 0
  %2077 = vmatprep.subr.bf16.mxu0 0
  %2078 = vmatpush2.bf16.msra.mxu0 0
  %2079 = vmatprep.subr.bf16.mxu0 0
  %2080 = vmatpush2.bf16.msra.mxu0 0
  %2081 = vmatprep.mubr.bf16.mxu0 0
  %2082 = vmatmul.mubr.bf16.gmra.mxu0 %v2044
  %v2083 = vpop.f32.mrf.mxu0
  %v2084 = vadd.f32 0.0, %v2083
  %v2085 = vpop.f32.mrf.mxu0
  %v2086 = vpop.f32.mrf.mxu0
  %v2087 = vpop.f32.mrf.mxu0
  %2088 = vdwg.mxu0
  %v2089 = vadd.f32 %v1539, %v2084
  %v2090 = vshrl.u32 %v1934, 16
  %v2092 = vrot.slane %v2090, 2
  %v2093 = vshll.u32 %v1934, 16
  %v2095 = vrot.slane %v2093, 3
  %v2096 = vor.u32 %v2092, %v2095
  %v2097 = vshrl.u32 %v1935, 16
  %v2099 = vrot.slane %v2097, 2
  %v2100 = vshll.u32 %v1935, 16
  %v2102 = vrot.slane %v2100, 3
  %v2103 = vor.u32 %v2099, %v2102
  %v2105 = vsel %vm925, %v2096, 0
  %v2108 = vsel %vm925, %v2103, 0
  %2110 = vmatprep.subr.bf16.mxu0 0
  %2111 = vmatpush1.bf16.xpose.msra.mxu0 0
  %2112 = vmatprep.subr.bf16.mxu0 0
  %2113 = vmatpush1.bf16.xpose.msra.mxu0 0
  %2114 = vmatprep.subr.bf16.mxu0 0
  %2115 = vmatpush1.bf16.xpose.msra.mxu0 0
  %2116 = vmatprep.subr.bf16.mxu0 0
  %2117 = vmatpush1.bf16.xpose.msra.mxu0 0
  %2118 = vmatprep.subr.bf16.mxu0 0
  %2119 = vmatpush1.bf16.xpose.msra.mxu0 0
  %2120 = vmatprep.subr.bf16.mxu0 0
  %2121 = vmatpush1.bf16.xpose.msra.mxu0 0
  %2122 = vmatprep.subr.bf16.mxu0 0
  %2123 = vmatpush1.bf16.xpose.msra.mxu0 0
  %2124 = vmatprep.subr.bf16.mxu0 0
  %2125 = vmatpush1.bf16.xpose.msra.mxu0 %v2108
  %2126 = vmatprep.subr.bf16.mxu0 0
  %2127 = vmatpush2.bf16.xpose.msra.mxu0 0
  %2128 = vmatprep.subr.bf16.mxu0 0
  %2129 = vmatpush2.bf16.xpose.msra.mxu0 0
  %2130 = vmatprep.subr.bf16.mxu0 0
  %2131 = vmatpush2.bf16.xpose.msra.mxu0 0
  %2132 = vmatprep.subr.bf16.mxu0 0
  %2133 = vmatpush2.bf16.xpose.msra.mxu0 0
  %2134 = vmatprep.subr.bf16.mxu0 0
  %2135 = vmatpush2.bf16.xpose.msra.mxu0 0
  %2136 = vmatprep.subr.bf16.mxu0 0
  %2137 = vmatpush2.bf16.xpose.msra.mxu0 0
  %2138 = vmatprep.subr.bf16.mxu0 0
  %2139 = vmatpush2.bf16.xpose.msra.mxu0 0
  %2140 = vmatprep.subr.bf16.mxu0 0
  %2141 = vmatpush2.bf16.xpose.msra.mxu0 0
  %2142 = vmatprep.mubr.bf16.mxu0 0
  %2143 = vmatmul.mubr.bf16.gmra.mxu0 %v2105
  %v2144 = vpop.f32.mrf.mxu0
  %v2145 = vadd.f32 0.0, %v2144
  %v2146 = vpop.f32.mrf.mxu0
  %v2147 = vpop.f32.mrf.mxu0
  %v2148 = vpop.f32.mrf.mxu0
  %2149 = vdwg.mxu0
  %v2150 = vmul.f32 %v2145, 0.35355338
  %v2151 = vsel %vm973, %v2150, -inf
  %2152 = vmax.xlane.f32.xlu0 %v2151
  %v2153 = vpop.xlane.xlu0 %2152
  %v2154 = vsub.f32 %v2150, %v2153
  %v2155 = vmul.f32 %v2154, 1.442695
  %v2156 = vpow.pop %v2155
  %v2157 = vsel %vm973, %v2156, 0.0
  %2158 = vadd.xlane.f32.xlu0 %v2157
  %v2159 = vpop.xlane.xlu0 %2158
  %v2160 = vrcp.pop %v2159
  %v2161 = vmul.f32 %v2156, %v2160
  %v2162 = vpack.c.bf16 %v2161, %v2161
  %v2163 = vshrl.u32 %v1936, 16
  %v2165 = vrot.slane %v2163, 2
  %v2166 = vshll.u32 %v1936, 16
  %v2168 = vrot.slane %v2166, 3
  %v2169 = vor.u32 %v2165, %v2168
  %v2171 = vsel %vm986, %v2162, 0
  %v2174 = vand.u32 %v2169, %v993
  %2176 = vmatprep.subr.bf16.mxu0 0
  %2177 = vmatpush1.bf16.msra.mxu0 0
  %2178 = vmatprep.subr.bf16.mxu0 0
  %2179 = vmatpush1.bf16.msra.mxu0 0
  %2180 = vmatprep.subr.bf16.mxu0 0
  %2181 = vmatpush1.bf16.msra.mxu0 0
  %2182 = vmatprep.subr.bf16.mxu0 0
  %2183 = vmatpush1.bf16.msra.mxu0 0
  %2184 = vmatprep.subr.bf16.mxu0 0
  %2185 = vmatpush1.bf16.msra.mxu0 0
  %2186 = vmatprep.subr.bf16.mxu0 0
  %2187 = vmatpush1.bf16.msra.mxu0 0
  %2188 = vmatprep.subr.bf16.mxu0 0
  %2189 = vmatpush1.bf16.msra.mxu0 0
  %2190 = vmatprep.subr.bf16.mxu0 0
  %2191 = vmatpush1.bf16.msra.mxu0 %v2174
  %2192 = vmatprep.subr.bf16.mxu0 0
  %2193 = vmatpush2.bf16.msra.mxu0 0
  %2194 = vmatprep.subr.bf16.mxu0 0
  %2195 = vmatpush2.bf16.msra.mxu0 0
  %2196 = vmatprep.subr.bf16.mxu0 0
  %2197 = vmatpush2.bf16.msra.mxu0 0
  %2198 = vmatprep.subr.bf16.mxu0 0
  %2199 = vmatpush2.bf16.msra.mxu0 0
  %2200 = vmatprep.subr.bf16.mxu0 0
  %2201 = vmatpush2.bf16.msra.mxu0 0
  %2202 = vmatprep.subr.bf16.mxu0 0
  %2203 = vmatpush2.bf16.msra.mxu0 0
  %2204 = vmatprep.subr.bf16.mxu0 0
  %2205 = vmatpush2.bf16.msra.mxu0 0
  %2206 = vmatprep.subr.bf16.mxu0 0
  %2207 = vmatpush2.bf16.msra.mxu0 0
  %2208 = vmatprep.mubr.bf16.mxu0 0
  %2209 = vmatmul.mubr.bf16.gmra.mxu0 %v2171
  %v2210 = vpop.f32.mrf.mxu0
  %v2211 = vadd.f32 0.0, %v2210
  %v2212 = vpop.f32.mrf.mxu0
  %v2213 = vpop.f32.mrf.mxu0
  %v2214 = vpop.f32.mrf.mxu0
  %2215 = vdwg.mxu0
  %v2216 = vpack.c.bf16 %v2211, %v2211
  %v2218 = vsel %vm925, %v2216, 0
  %2220 = vmatprep.subr.bf16.mxu0 0
  %2221 = vmatpush1.bf16.msra.mxu0 0
  %2222 = vmatprep.subr.bf16.mxu0 0
  %2223 = vmatpush1.bf16.msra.mxu0 0
  %2224 = vmatprep.subr.bf16.mxu0 0
  %2225 = vmatpush1.bf16.msra.mxu0 0
  %2226 = vmatprep.subr.bf16.mxu0 0
  %2227 = vmatpush1.bf16.msra.mxu0 0
  %2228 = vmatprep.subr.bf16.mxu0 0
  %2229 = vmatpush1.bf16.msra.mxu0 0
  %2230 = vmatprep.subr.bf16.mxu0 0
  %2231 = vmatpush1.bf16.msra.mxu0 0
  %2232 = vmatprep.subr.bf16.mxu0 0
  %2233 = vmatpush1.bf16.msra.mxu0 0
  %2234 = vmatprep.subr.bf16.mxu0 0
  %2235 = vmatpush1.bf16.msra.mxu0 %v2047
  %2236 = vmatprep.subr.bf16.mxu0 0
  %2237 = vmatpush2.bf16.msra.mxu0 0
  %2238 = vmatprep.subr.bf16.mxu0 0
  %2239 = vmatpush2.bf16.msra.mxu0 0
  %2240 = vmatprep.subr.bf16.mxu0 0
  %2241 = vmatpush2.bf16.msra.mxu0 0
  %2242 = vmatprep.subr.bf16.mxu0 0
  %2243 = vmatpush2.bf16.msra.mxu0 0
  %2244 = vmatprep.subr.bf16.mxu0 0
  %2245 = vmatpush2.bf16.msra.mxu0 0
  %2246 = vmatprep.subr.bf16.mxu0 0
  %2247 = vmatpush2.bf16.msra.mxu0 0
  %2248 = vmatprep.subr.bf16.mxu0 0
  %2249 = vmatpush2.bf16.msra.mxu0 0
  %2250 = vmatprep.subr.bf16.mxu0 0
  %2251 = vmatpush2.bf16.msra.mxu0 0
  %2252 = vmatprep.mubr.bf16.mxu0 0
  %2253 = vmatmul.mubr.bf16.gmra.mxu0 %v2218
  %v2254 = vpop.f32.mrf.mxu0
  %v2255 = vadd.f32 0.0, %v2254
  %v2256 = vpop.f32.mrf.mxu0
  %v2257 = vpop.f32.mrf.mxu0
  %v2258 = vpop.f32.mrf.mxu0
  %2259 = vdwg.mxu0
  %v2260 = vadd.f32 %v1752, %v2255
  %v2262 = vlaneseq
  %v2263 = vshrl.u32 %v2262, 7
  %v2264 = vsub.s32 0, %v2263
  %v2265 = vrot.slane %v696, %v2264
  %v2271 = vunpack.c.l.b16 %v689
  %v2272 = vunpack.c.l.b16 %v690
  %v2273 = vunpack.c.l.b16 %v691
  %v2274 = vunpack.c.l.b16 %v692
  %v2275 = vpack.c.b16 %v2272, %v2271
  %v2276 = vpack.c.b16 %v2274, %v2273
  %2279 = vmatprep.subr.bf16.mxu0 0
  %2280 = vmatpush1.bf16.msra.mxu0 0
  %2281 = vmatprep.subr.bf16.mxu0 0
  %2282 = vmatpush1.bf16.msra.mxu0 0
  %2283 = vmatprep.subr.bf16.mxu0 0
  %2284 = vmatpush1.bf16.msra.mxu0 0
  %2285 = vmatprep.subr.bf16.mxu0 0
  %2286 = vmatpush1.bf16.msra.mxu0 0
  %2287 = vmatprep.subr.bf16.mxu0 0
  %2288 = vmatpush1.bf16.msra.mxu0 0
  %2289 = vmatprep.subr.bf16.mxu0 0
  %2290 = vmatpush1.bf16.msra.mxu0 0
  %2291 = vmatprep.subr.bf16.mxu0 0
  %2292 = vmatpush1.bf16.msra.mxu0 %v2276
  %2293 = vmatprep.subr.bf16.mxu0 0
  %2294 = vmatpush1.bf16.msra.mxu0 %v2275
  %2295 = vmatprep.subr.bf16.mxu0 0
  %2296 = vmatpush2.bf16.msra.mxu0 0
  %2297 = vmatprep.subr.bf16.mxu0 0
  %2298 = vmatpush2.bf16.msra.mxu0 0
  %2299 = vmatprep.subr.bf16.mxu0 0
  %2300 = vmatpush2.bf16.msra.mxu0 0
  %2301 = vmatprep.subr.bf16.mxu0 0
  %2302 = vmatpush2.bf16.msra.mxu0 0
  %2303 = vmatprep.subr.bf16.mxu0 0
  %2304 = vmatpush2.bf16.msra.mxu0 0
  %2305 = vmatprep.subr.bf16.mxu0 0
  %2306 = vmatpush2.bf16.msra.mxu0 0
  %2307 = vmatprep.subr.bf16.mxu0 0
  %2308 = vmatpush2.bf16.msra.mxu0 0
  %2309 = vmatprep.subr.bf16.mxu0 0
  %2310 = vmatpush2.bf16.msra.mxu0 0
  %2311 = vmatprep.mubr.bf16.mxu0 0
  %2312 = vmatmul.mubr.bf16.gmra.mxu0 %v761
  %v2313 = vpop.f32.mrf.mxu0
  %v2314 = vadd.f32 %v2265, %v2313
  %v2315 = vpop.f32.mrf.mxu0
  %v2316 = vpop.f32.mrf.mxu0
  %v2317 = vadd.f32 %v2265, %v2316
  %v2318 = vpop.f32.mrf.mxu0
  %2319 = vdwg.mxu0
  %v2321 = vlaneseq
  %v2322 = vshrl.u32 %v2321, 7
  %v2323 = vsub.s32 0, %v2322
  %v2324 = vrot.slane %v716, %v2323
  %v2330 = vunpack.c.l.b16 %v709
  %v2331 = vunpack.c.l.b16 %v710
  %v2332 = vunpack.c.l.b16 %v711
  %v2333 = vunpack.c.l.b16 %v712
  %v2334 = vpack.c.b16 %v2331, %v2330
  %v2335 = vpack.c.b16 %v2333, %v2332
  %2338 = vmatprep.subr.bf16.mxu0 0
  %2339 = vmatpush1.bf16.msra.mxu0 0
  %2340 = vmatprep.subr.bf16.mxu0 0
  %2341 = vmatpush1.bf16.msra.mxu0 0
  %2342 = vmatprep.subr.bf16.mxu0 0
  %2343 = vmatpush1.bf16.msra.mxu0 0
  %2344 = vmatprep.subr.bf16.mxu0 0
  %2345 = vmatpush1.bf16.msra.mxu0 0
  %2346 = vmatprep.subr.bf16.mxu0 0
  %2347 = vmatpush1.bf16.msra.mxu0 0
  %2348 = vmatprep.subr.bf16.mxu0 0
  %2349 = vmatpush1.bf16.msra.mxu0 0
  %2350 = vmatprep.subr.bf16.mxu0 0
  %2351 = vmatpush1.bf16.msra.mxu0 %v2335
  %2352 = vmatprep.subr.bf16.mxu0 0
  %2353 = vmatpush1.bf16.msra.mxu0 %v2334
  %2354 = vmatprep.subr.bf16.mxu0 0
  %2355 = vmatpush2.bf16.msra.mxu0 0
  %2356 = vmatprep.subr.bf16.mxu0 0
  %2357 = vmatpush2.bf16.msra.mxu0 0
  %2358 = vmatprep.subr.bf16.mxu0 0
  %2359 = vmatpush2.bf16.msra.mxu0 0
  %2360 = vmatprep.subr.bf16.mxu0 0
  %2361 = vmatpush2.bf16.msra.mxu0 0
  %2362 = vmatprep.subr.bf16.mxu0 0
  %2363 = vmatpush2.bf16.msra.mxu0 0
  %2364 = vmatprep.subr.bf16.mxu0 0
  %2365 = vmatpush2.bf16.msra.mxu0 0
  %2366 = vmatprep.subr.bf16.mxu0 0
  %2367 = vmatpush2.bf16.msra.mxu0 0
  %2368 = vmatprep.subr.bf16.mxu0 0
  %2369 = vmatpush2.bf16.msra.mxu0 0
  %2370 = vmatprep.mubr.bf16.mxu0 0
  %2371 = vmatmul.mubr.bf16.gmra.mxu0 %v761
  %v2372 = vpop.f32.mrf.mxu0
  %v2373 = vadd.f32 %v2324, %v2372
  %v2374 = vpop.f32.mrf.mxu0
  %v2375 = vpop.f32.mrf.mxu0
  %v2376 = vadd.f32 %v2324, %v2375
  %v2377 = vpop.f32.mrf.mxu0
  %2378 = vdwg.mxu0
  %v2380 = vlaneseq
  %v2381 = vshrl.u32 %v2380, 7
  %v2382 = vsub.s32 0, %v2381
  %v2383 = vrot.slane %v736, %v2382
  %v2389 = vunpack.c.l.b16 %v729
  %v2390 = vunpack.c.l.b16 %v730
  %v2391 = vunpack.c.l.b16 %v731
  %v2392 = vunpack.c.l.b16 %v732
  %v2393 = vpack.c.b16 %v2390, %v2389
  %v2394 = vpack.c.b16 %v2392, %v2391
  %2397 = vmatprep.subr.bf16.mxu0 0
  %2398 = vmatpush1.bf16.msra.mxu0 0
  %2399 = vmatprep.subr.bf16.mxu0 0
  %2400 = vmatpush1.bf16.msra.mxu0 0
  %2401 = vmatprep.subr.bf16.mxu0 0
  %2402 = vmatpush1.bf16.msra.mxu0 0
  %2403 = vmatprep.subr.bf16.mxu0 0
  %2404 = vmatpush1.bf16.msra.mxu0 0
  %2405 = vmatprep.subr.bf16.mxu0 0
  %2406 = vmatpush1.bf16.msra.mxu0 0
  %2407 = vmatprep.subr.bf16.mxu0 0
  %2408 = vmatpush1.bf16.msra.mxu0 0
  %2409 = vmatprep.subr.bf16.mxu0 0
  %2410 = vmatpush1.bf16.msra.mxu0 %v2394
  %2411 = vmatprep.subr.bf16.mxu0 0
  %2412 = vmatpush1.bf16.msra.mxu0 %v2393
  %2413 = vmatprep.subr.bf16.mxu0 0
  %2414 = vmatpush2.bf16.msra.mxu0 0
  %2415 = vmatprep.subr.bf16.mxu0 0
  %2416 = vmatpush2.bf16.msra.mxu0 0
  %2417 = vmatprep.subr.bf16.mxu0 0
  %2418 = vmatpush2.bf16.msra.mxu0 0
  %2419 = vmatprep.subr.bf16.mxu0 0
  %2420 = vmatpush2.bf16.msra.mxu0 0
  %2421 = vmatprep.subr.bf16.mxu0 0
  %2422 = vmatpush2.bf16.msra.mxu0 0
  %2423 = vmatprep.subr.bf16.mxu0 0
  %2424 = vmatpush2.bf16.msra.mxu0 0
  %2425 = vmatprep.subr.bf16.mxu0 0
  %2426 = vmatpush2.bf16.msra.mxu0 0
  %2427 = vmatprep.subr.bf16.mxu0 0
  %2428 = vmatpush2.bf16.msra.mxu0 0
  %2429 = vmatprep.mubr.bf16.mxu0 0
  %2430 = vmatmul.mubr.bf16.gmra.mxu0 %v761
  %v2431 = vpop.f32.mrf.mxu0
  %v2432 = vadd.f32 %v2383, %v2431
  %v2433 = vpop.f32.mrf.mxu0
  %v2434 = vpop.f32.mrf.mxu0
  %v2435 = vadd.f32 %v2383, %v2434
  %v2436 = vpop.f32.mrf.mxu0
  %2437 = vdwg.mxu0
  %v2438 = vpack.c.bf16 %v2317, %v2314
  %v2439 = vpack.c.bf16 %v2376, %v2373
  %v2440 = vpack.c.bf16 %v2435, %v2432
  %v2442 = vsel %vm925, %v2438, 0
  %v2445 = vsel %vm925, %v2439, 0
  %2447 = vmatprep.subr.bf16.mxu0 0
  %2448 = vmatpush1.bf16.xpose.msra.mxu0 0
  %2449 = vmatprep.subr.bf16.mxu0 0
  %2450 = vmatpush1.bf16.xpose.msra.mxu0 0
  %2451 = vmatprep.subr.bf16.mxu0 0
  %2452 = vmatpush1.bf16.xpose.msra.mxu0 0
  %2453 = vmatprep.subr.bf16.mxu0 0
  %2454 = vmatpush1.bf16.xpose.msra.mxu0 0
  %2455 = vmatprep.subr.bf16.mxu0 0
  %2456 = vmatpush1.bf16.xpose.msra.mxu0 0
  %2457 = vmatprep.subr.bf16.mxu0 0
  %2458 = vmatpush1.bf16.xpose.msra.mxu0 0
  %2459 = vmatprep.subr.bf16.mxu0 0
  %2460 = vmatpush1.bf16.xpose.msra.mxu0 0
  %2461 = vmatprep.subr.bf16.mxu0 0
  %2462 = vmatpush1.bf16.xpose.msra.mxu0 %v2445
  %2463 = vmatprep.subr.bf16.mxu0 0
  %2464 = vmatpush2.bf16.xpose.msra.mxu0 0
  %2465 = vmatprep.subr.bf16.mxu0 0
  %2466 = vmatpush2.bf16.xpose.msra.mxu0 0
  %2467 = vmatprep.subr.bf16.mxu0 0
  %2468 = vmatpush2.bf16.xpose.msra.mxu0 0
  %2469 = vmatprep.subr.bf16.mxu0 0
  %2470 = vmatpush2.bf16.xpose.msra.mxu0 0
  %2471 = vmatprep.subr.bf16.mxu0 0
  %2472 = vmatpush2.bf16.xpose.msra.mxu0 0
  %2473 = vmatprep.subr.bf16.mxu0 0
  %2474 = vmatpush2.bf16.xpose.msra.mxu0 0
  %2475 = vmatprep.subr.bf16.mxu0 0
  %2476 = vmatpush2.bf16.xpose.msra.mxu0 0
  %2477 = vmatprep.subr.bf16.mxu0 0
  %2478 = vmatpush2.bf16.xpose.msra.mxu0 0
  %2479 = vmatprep.mubr.bf16.mxu0 0
  %2480 = vmatmul.mubr.bf16.gmra.mxu0 %v2442
  %v2481 = vpop.f32.mrf.mxu0
  %v2482 = vadd.f32 0.0, %v2481
  %v2483 = vpop.f32.mrf.mxu0
  %v2484 = vpop.f32.mrf.mxu0
  %v2485 = vpop.f32.mrf.mxu0
  %2486 = vdwg.mxu0
  %v2487 = vmul.f32 %v2482, 0.35355338
  %v2488 = vsel %vm973, %v2487, -inf
  %2489 = vmax.xlane.f32.xlu0 %v2488
  %v2490 = vpop.xlane.xlu0 %2489
  %v2491 = vsub.f32 %v2487, %v2490
  %v2492 = vmul.f32 %v2491, 1.442695
  %v2493 = vpow.pop %v2492
  %v2494 = vsel %vm973, %v2493, 0.0
  %2495 = vadd.xlane.f32.xlu0 %v2494
  %v2496 = vpop.xlane.xlu0 %2495
  %v2497 = vrcp.pop %v2496
  %v2498 = vmul.f32 %v2493, %v2497
  %v2499 = vpack.c.bf16 %v2498, %v2498
  %v2501 = vsel %vm986, %v2499, 0
  %v2504 = vand.u32 %v2440, %v993
  %2506 = vmatprep.subr.bf16.mxu0 0
  %2507 = vmatpush1.bf16.msra.mxu0 0
  %2508 = vmatprep.subr.bf16.mxu0 0
  %2509 = vmatpush1.bf16.msra.mxu0 0
  %2510 = vmatprep.subr.bf16.mxu0 0
  %2511 = vmatpush1.bf16.msra.mxu0 0
  %2512 = vmatprep.subr.bf16.mxu0 0
  %2513 = vmatpush1.bf16.msra.mxu0 0
  %2514 = vmatprep.subr.bf16.mxu0 0
  %2515 = vmatpush1.bf16.msra.mxu0 0
  %2516 = vmatprep.subr.bf16.mxu0 0
  %2517 = vmatpush1.bf16.msra.mxu0 0
  %2518 = vmatprep.subr.bf16.mxu0 0
  %2519 = vmatpush1.bf16.msra.mxu0 0
  %2520 = vmatprep.subr.bf16.mxu0 0
  %2521 = vmatpush1.bf16.msra.mxu0 %v2504
  %2522 = vmatprep.subr.bf16.mxu0 0
  %2523 = vmatpush2.bf16.msra.mxu0 0
  %2524 = vmatprep.subr.bf16.mxu0 0
  %2525 = vmatpush2.bf16.msra.mxu0 0
  %2526 = vmatprep.subr.bf16.mxu0 0
  %2527 = vmatpush2.bf16.msra.mxu0 0
  %2528 = vmatprep.subr.bf16.mxu0 0
  %2529 = vmatpush2.bf16.msra.mxu0 0
  %2530 = vmatprep.subr.bf16.mxu0 0
  %2531 = vmatpush2.bf16.msra.mxu0 0
  %2532 = vmatprep.subr.bf16.mxu0 0
  %2533 = vmatpush2.bf16.msra.mxu0 0
  %2534 = vmatprep.subr.bf16.mxu0 0
  %2535 = vmatpush2.bf16.msra.mxu0 0
  %2536 = vmatprep.subr.bf16.mxu0 0
  %2537 = vmatpush2.bf16.msra.mxu0 0
  %2538 = vmatprep.mubr.bf16.mxu0 0
  %2539 = vmatmul.mubr.bf16.gmra.mxu0 %v2501
  %v2540 = vpop.f32.mrf.mxu0
  %v2541 = vadd.f32 0.0, %v2540
  %v2542 = vpop.f32.mrf.mxu0
  %v2543 = vpop.f32.mrf.mxu0
  %v2544 = vpop.f32.mrf.mxu0
  %2545 = vdwg.mxu0
  %v2546 = vpack.c.bf16 %v2541, %v2541
  %v2548 = vsel %vm925, %v2546, 0
  %v2551 = vsel %vm1454, %v740, 0
  %2553 = vmatprep.subr.bf16.mxu0 0
  %2554 = vmatpush1.bf16.msra.mxu0 0
  %2555 = vmatprep.subr.bf16.mxu0 0
  %2556 = vmatpush1.bf16.msra.mxu0 0
  %2557 = vmatprep.subr.bf16.mxu0 0
  %2558 = vmatpush1.bf16.msra.mxu0 0
  %2559 = vmatprep.subr.bf16.mxu0 0
  %2560 = vmatpush1.bf16.msra.mxu0 0
  %2561 = vmatprep.subr.bf16.mxu0 0
  %2562 = vmatpush1.bf16.msra.mxu0 0
  %2563 = vmatprep.subr.bf16.mxu0 0
  %2564 = vmatpush1.bf16.msra.mxu0 0
  %2565 = vmatprep.subr.bf16.mxu0 0
  %2566 = vmatpush1.bf16.msra.mxu0 0
  %2567 = vmatprep.subr.bf16.mxu0 0
  %2568 = vmatpush1.bf16.msra.mxu0 %v2551
  %2569 = vmatprep.subr.bf16.mxu0 0
  %2570 = vmatpush2.bf16.msra.mxu0 0
  %2571 = vmatprep.subr.bf16.mxu0 0
  %2572 = vmatpush2.bf16.msra.mxu0 0
  %2573 = vmatprep.subr.bf16.mxu0 0
  %2574 = vmatpush2.bf16.msra.mxu0 0
  %2575 = vmatprep.subr.bf16.mxu0 0
  %2576 = vmatpush2.bf16.msra.mxu0 0
  %2577 = vmatprep.subr.bf16.mxu0 0
  %2578 = vmatpush2.bf16.msra.mxu0 0
  %2579 = vmatprep.subr.bf16.mxu0 0
  %2580 = vmatpush2.bf16.msra.mxu0 0
  %2581 = vmatprep.subr.bf16.mxu0 0
  %2582 = vmatpush2.bf16.msra.mxu0 0
  %2583 = vmatprep.subr.bf16.mxu0 0
  %2584 = vmatpush2.bf16.msra.mxu0 0
  %2585 = vmatprep.mubr.bf16.mxu0 0
  %2586 = vmatmul.mubr.bf16.gmra.mxu0 %v2548
  %v2587 = vpop.f32.mrf.mxu0
  %v2588 = vadd.f32 0.0, %v2587
  %v2589 = vpop.f32.mrf.mxu0
  %v2590 = vpop.f32.mrf.mxu0
  %v2591 = vpop.f32.mrf.mxu0
  %2592 = vdwg.mxu0
  %v2593 = vadd.f32 %v2089, %v2588
  %v2594 = vshrl.u32 %v2438, 16
  %v2596 = vrot.slane %v2594, 2
  %v2597 = vshll.u32 %v2438, 16
  %v2599 = vrot.slane %v2597, 3
  %v2600 = vor.u32 %v2596, %v2599
  %v2601 = vshrl.u32 %v2439, 16
  %v2603 = vrot.slane %v2601, 2
  %v2604 = vshll.u32 %v2439, 16
  %v2606 = vrot.slane %v2604, 3
  %v2607 = vor.u32 %v2603, %v2606
  %v2609 = vsel %vm925, %v2600, 0
  %v2612 = vsel %vm925, %v2607, 0
  %2614 = vmatprep.subr.bf16.mxu0 0
  %2615 = vmatpush1.bf16.xpose.msra.mxu0 0
  %2616 = vmatprep.subr.bf16.mxu0 0
  %2617 = vmatpush1.bf16.xpose.msra.mxu0 0
  %2618 = vmatprep.subr.bf16.mxu0 0
  %2619 = vmatpush1.bf16.xpose.msra.mxu0 0
  %2620 = vmatprep.subr.bf16.mxu0 0
  %2621 = vmatpush1.bf16.xpose.msra.mxu0 0
  %2622 = vmatprep.subr.bf16.mxu0 0
  %2623 = vmatpush1.bf16.xpose.msra.mxu0 0
  %2624 = vmatprep.subr.bf16.mxu0 0
  %2625 = vmatpush1.bf16.xpose.msra.mxu0 0
  %2626 = vmatprep.subr.bf16.mxu0 0
  %2627 = vmatpush1.bf16.xpose.msra.mxu0 0
  %2628 = vmatprep.subr.bf16.mxu0 0
  %2629 = vmatpush1.bf16.xpose.msra.mxu0 %v2612
  %2630 = vmatprep.subr.bf16.mxu0 0
  %2631 = vmatpush2.bf16.xpose.msra.mxu0 0
  %2632 = vmatprep.subr.bf16.mxu0 0
  %2633 = vmatpush2.bf16.xpose.msra.mxu0 0
  %2634 = vmatprep.subr.bf16.mxu0 0
  %2635 = vmatpush2.bf16.xpose.msra.mxu0 0
  %2636 = vmatprep.subr.bf16.mxu0 0
  %2637 = vmatpush2.bf16.xpose.msra.mxu0 0
  %2638 = vmatprep.subr.bf16.mxu0 0
  %2639 = vmatpush2.bf16.xpose.msra.mxu0 0
  %2640 = vmatprep.subr.bf16.mxu0 0
  %2641 = vmatpush2.bf16.xpose.msra.mxu0 0
  %2642 = vmatprep.subr.bf16.mxu0 0
  %2643 = vmatpush2.bf16.xpose.msra.mxu0 0
  %2644 = vmatprep.subr.bf16.mxu0 0
  %2645 = vmatpush2.bf16.xpose.msra.mxu0 0
  %2646 = vmatprep.mubr.bf16.mxu0 0
  %2647 = vmatmul.mubr.bf16.gmra.mxu0 %v2609
  %v2648 = vpop.f32.mrf.mxu0
  %v2649 = vadd.f32 0.0, %v2648
  %v2650 = vpop.f32.mrf.mxu0
  %v2651 = vpop.f32.mrf.mxu0
  %v2652 = vpop.f32.mrf.mxu0
  %2653 = vdwg.mxu0
  %v2654 = vmul.f32 %v2649, 0.35355338
  %v2655 = vsel %vm973, %v2654, -inf
  %2656 = vmax.xlane.f32.xlu0 %v2655
  %v2657 = vpop.xlane.xlu0 %2656
  %v2658 = vsub.f32 %v2654, %v2657
  %v2659 = vmul.f32 %v2658, 1.442695
  %v2660 = vpow.pop %v2659
  %v2661 = vsel %vm973, %v2660, 0.0
  %2662 = vadd.xlane.f32.xlu0 %v2661
  %v2663 = vpop.xlane.xlu0 %2662
  %v2664 = vrcp.pop %v2663
  %v2665 = vmul.f32 %v2660, %v2664
  %v2666 = vpack.c.bf16 %v2665, %v2665
  %v2667 = vshrl.u32 %v2440, 16
  %v2669 = vrot.slane %v2667, 2
  %v2670 = vshll.u32 %v2440, 16
  %v2672 = vrot.slane %v2670, 3
  %v2673 = vor.u32 %v2669, %v2672
  %v2675 = vsel %vm986, %v2666, 0
  %v2678 = vand.u32 %v2673, %v993
  %2680 = vmatprep.subr.bf16.mxu0 0
  %2681 = vmatpush1.bf16.msra.mxu0 0
  %2682 = vmatprep.subr.bf16.mxu0 0
  %2683 = vmatpush1.bf16.msra.mxu0 0
  %2684 = vmatprep.subr.bf16.mxu0 0
  %2685 = vmatpush1.bf16.msra.mxu0 0
  %2686 = vmatprep.subr.bf16.mxu0 0
  %2687 = vmatpush1.bf16.msra.mxu0 0
  %2688 = vmatprep.subr.bf16.mxu0 0
  %2689 = vmatpush1.bf16.msra.mxu0 0
  %2690 = vmatprep.subr.bf16.mxu0 0
  %2691 = vmatpush1.bf16.msra.mxu0 0
  %2692 = vmatprep.subr.bf16.mxu0 0
  %2693 = vmatpush1.bf16.msra.mxu0 0
  %2694 = vmatprep.subr.bf16.mxu0 0
  %2695 = vmatpush1.bf16.msra.mxu0 %v2678
  %2696 = vmatprep.subr.bf16.mxu0 0
  %2697 = vmatpush2.bf16.msra.mxu0 0
  %2698 = vmatprep.subr.bf16.mxu0 0
  %2699 = vmatpush2.bf16.msra.mxu0 0
  %2700 = vmatprep.subr.bf16.mxu0 0
  %2701 = vmatpush2.bf16.msra.mxu0 0
  %2702 = vmatprep.subr.bf16.mxu0 0
  %2703 = vmatpush2.bf16.msra.mxu0 0
  %2704 = vmatprep.subr.bf16.mxu0 0
  %2705 = vmatpush2.bf16.msra.mxu0 0
  %2706 = vmatprep.subr.bf16.mxu0 0
  %2707 = vmatpush2.bf16.msra.mxu0 0
  %2708 = vmatprep.subr.bf16.mxu0 0
  %2709 = vmatpush2.bf16.msra.mxu0 0
  %2710 = vmatprep.subr.bf16.mxu0 0
  %2711 = vmatpush2.bf16.msra.mxu0 0
  %2712 = vmatprep.mubr.bf16.mxu0 0
  %2713 = vmatmul.mubr.bf16.gmra.mxu0 %v2675
  %v2714 = vpop.f32.mrf.mxu0
  %v2715 = vadd.f32 0.0, %v2714
  %v2716 = vpop.f32.mrf.mxu0
  %v2717 = vpop.f32.mrf.mxu0
  %v2718 = vpop.f32.mrf.mxu0
  %2719 = vdwg.mxu0
  %v2720 = vpack.c.bf16 %v2715, %v2715
  %v2722 = vsel %vm925, %v2720, 0
  %2724 = vmatprep.subr.bf16.mxu0 0
  %2725 = vmatpush1.bf16.msra.mxu0 0
  %2726 = vmatprep.subr.bf16.mxu0 0
  %2727 = vmatpush1.bf16.msra.mxu0 0
  %2728 = vmatprep.subr.bf16.mxu0 0
  %2729 = vmatpush1.bf16.msra.mxu0 0
  %2730 = vmatprep.subr.bf16.mxu0 0
  %2731 = vmatpush1.bf16.msra.mxu0 0
  %2732 = vmatprep.subr.bf16.mxu0 0
  %2733 = vmatpush1.bf16.msra.mxu0 0
  %2734 = vmatprep.subr.bf16.mxu0 0
  %2735 = vmatpush1.bf16.msra.mxu0 0
  %2736 = vmatprep.subr.bf16.mxu0 0
  %2737 = vmatpush1.bf16.msra.mxu0 0
  %2738 = vmatprep.subr.bf16.mxu0 0
  %2739 = vmatpush1.bf16.msra.mxu0 %v2551
  %2740 = vmatprep.subr.bf16.mxu0 0
  %2741 = vmatpush2.bf16.msra.mxu0 0
  %2742 = vmatprep.subr.bf16.mxu0 0
  %2743 = vmatpush2.bf16.msra.mxu0 0
  %2744 = vmatprep.subr.bf16.mxu0 0
  %2745 = vmatpush2.bf16.msra.mxu0 0
  %2746 = vmatprep.subr.bf16.mxu0 0
  %2747 = vmatpush2.bf16.msra.mxu0 0
  %2748 = vmatprep.subr.bf16.mxu0 0
  %2749 = vmatpush2.bf16.msra.mxu0 0
  %2750 = vmatprep.subr.bf16.mxu0 0
  %2751 = vmatpush2.bf16.msra.mxu0 0
  %2752 = vmatprep.subr.bf16.mxu0 0
  %2753 = vmatpush2.bf16.msra.mxu0 0
  %2754 = vmatprep.subr.bf16.mxu0 0
  %2755 = vmatpush2.bf16.msra.mxu0 0
  %2756 = vmatprep.mubr.bf16.mxu0 0
  %2757 = vmatmul.mubr.bf16.gmra.mxu0 %v2722
  %v2758 = vpop.f32.mrf.mxu0
  %v2759 = vadd.f32 0.0, %v2758
  %v2760 = vpop.f32.mrf.mxu0
  %v2761 = vpop.f32.mrf.mxu0
  %v2762 = vpop.f32.mrf.mxu0
  %2763 = vdwg.mxu0
  %v2764 = vadd.f32 %v2260, %v2759
  %vm2765 = vcmask 258048
  %2766 = vst.msk [vmem:[#allocation2] sm:$0x1f] %vm2765, %v2593
  %2767 = vst.msk [vmem:[#allocation2 + $0x5] sm:$0x1f] %vm2765, %v2764
  %v2768 = vld [vmem:[#allocation2] sm:$0xff]
  %v2769 = vld [vmem:[#allocation2 + $0x8] sm:$0x3]
  %v2771 = vlaneseq
  %v2772 = vshrl.u32 %v2771, 7
  %v2773 = vsub.s32 0, %v2772
  %v2774 = vrot.slane %v741, %v2773
  %v2776 = vadd.f32 %v2768, %v2774
  %v2777 = vadd.f32 %v2769, %v2774
  %v2778 = vadd.f32 %v627, %v2776
  %v2779 = vadd.f32 %v628, %v2777
  %v2780 = vld [vmem:[%s15] sm:$0x1]
  %v2781 = vld [vmem:[%s16] sm:$0x1]
  %v2782 = vsel %vm631, %v2778, 0.0
  %2783 = vadd.xlane.f32.xlu0 %v2782
  %v2784 = vpop.xlane.xlu0 %2783
  %v2785 = vsel %vm635, %v2779, 0.0
  %2786 = vadd.xlane.f32.xlu0 %v2785
  %v2787 = vpop.xlane.xlu0 %2786
  %v2788 = vmul.f32 %v2784, %v639
  %v2789 = vmul.f32 %v2787, %v639
  %v2790 = vsub.f32 %v2778, %v2788
  %v2791 = vsub.f32 %v2779, %v2789
  %v2792 = vmul.f32 %v2790, %v2790
  %v2793 = vmul.f32 %v2791, %v2791
  %v2794 = vsel %vm631, %v2792, 0.0
  %2795 = vadd.xlane.f32.xlu0 %v2794
  %v2796 = vpop.xlane.xlu0 %2795
  %v2797 = vsel %vm635, %v2793, 0.0
  %2798 = vadd.xlane.f32.xlu0 %v2797
  %v2799 = vpop.xlane.xlu0 %2798
  %v2800 = vmul.f32 %v2796, %v639
  %v2801 = vmul.f32 %v2799, %v639
  %v2802 = vadd.f32 %v2800, 1e-06
  %v2803 = vadd.f32 %v2801, 1e-06
  %v2804 = vrsqrt.pop %v2802
  %v2805 = vrsqrt.pop %v2803
  %v2806 = vmul.f32 %v2790, %v2804
  %v2807 = vmul.f32 %v2791, %v2805
  %v2809 = vlaneseq
  %v2810 = vshrl.u32 %v2809, 7
  %v2811 = vsub.s32 0, %v2810
  %v2812 = vrot.slane %v2780, %v2811
  %v2814 = vmul.f32 %v2806, %v2812
  %v2815 = vmul.f32 %v2807, %v2812
  %v2817 = vlaneseq
  %v2818 = vshrl.u32 %v2817, 7
  %v2819 = vsub.s32 0, %v2818
  %v2820 = vrot.slane %v2781, %v2819
  %v2822 = vadd.f32 %v2814, %v2820
  %v2823 = vadd.f32 %v2815, %v2820
  %v2824 = vpack.c.bf16 %v2823, %v2822
  %v2825 = vld [vmem:[%s17] sm:$0xf]
  %v2826 = vld [vmem:[%s17 + $0x4] sm:$0xf]
  %v2827 = vld [vmem:[%s17 + $0x8] sm:$0xf]
  %v2828 = vld [vmem:[%s17 + $0xc] sm:$0xf]
  %v2829 = vld [vmem:[%s18] sm:$0x1]
  %v2831 = vlaneseq
  %v2832 = vshrl.u32 %v2831, 7
  %v2833 = vsub.s32 0, %v2832
  %v2834 = vrot.slane %v2829, %v2833
  %v2840 = vunpack.c.l.b16 %v2825
  %v2841 = vunpack.c.l.b16 %v2826
  %v2842 = vunpack.c.l.b16 %v2827
  %v2843 = vunpack.c.l.b16 %v2828
  %v2844 = vpack.c.b16 %v2841, %v2840
  %v2845 = vpack.c.b16 %v2843, %v2842
  %v2849 = vsel %vm631, %v2824, 0
  %2851 = vmatprep.subr.bf16.mxu0 0
  %2852 = vmatpush1.bf16.msra.mxu0 0
  %2853 = vmatprep.subr.bf16.mxu0 0
  %2854 = vmatpush1.bf16.msra.mxu0 0
  %2855 = vmatprep.subr.bf16.mxu0 0
  %2856 = vmatpush1.bf16.msra.mxu0 0
  %2857 = vmatprep.subr.bf16.mxu0 0
  %2858 = vmatpush1.bf16.msra.mxu0 0
  %2859 = vmatprep.subr.bf16.mxu0 0
  %2860 = vmatpush1.bf16.msra.mxu0 0
  %2861 = vmatprep.subr.bf16.mxu0 0
  %2862 = vmatpush1.bf16.msra.mxu0 0
  %2863 = vmatprep.subr.bf16.mxu0 0
  %2864 = vmatpush1.bf16.msra.mxu0 %v2845
  %2865 = vmatprep.subr.bf16.mxu0 0
  %2866 = vmatpush1.bf16.msra.mxu0 %v2844
  %2867 = vmatprep.subr.bf16.mxu0 0
  %2868 = vmatpush2.bf16.msra.mxu0 0
  %2869 = vmatprep.subr.bf16.mxu0 0
  %2870 = vmatpush2.bf16.msra.mxu0 0
  %2871 = vmatprep.subr.bf16.mxu0 0
  %2872 = vmatpush2.bf16.msra.mxu0 0
  %2873 = vmatprep.subr.bf16.mxu0 0
  %2874 = vmatpush2.bf16.msra.mxu0 0
  %2875 = vmatprep.subr.bf16.mxu0 0
  %2876 = vmatpush2.bf16.msra.mxu0 0
  %2877 = vmatprep.subr.bf16.mxu0 0
  %2878 = vmatpush2.bf16.msra.mxu0 0
  %2879 = vmatprep.subr.bf16.mxu0 0
  %2880 = vmatpush2.bf16.msra.mxu0 0
  %2881 = vmatprep.subr.bf16.mxu0 0
  %2882 = vmatpush2.bf16.msra.mxu0 0
  %2883 = vmatprep.mubr.bf16.mxu0 0
  %2884 = vmatmul.mubr.bf16.gmra.mxu0 %v2849
  %v2885 = vpop.f32.mrf.mxu0
  %v2886 = vadd.f32 %v2834, %v2885
  %v2887 = vpop.f32.mrf.mxu0
  %v2888 = vpop.f32.mrf.mxu0
  %v2889 = vadd.f32 %v2834, %v2888
  %v2890 = vpop.f32.mrf.mxu0
  %2891 = vdwg.mxu0
  %v2892 = vmul.f32 %v2886, %v2886
  %v2893 = vmul.f32 %v2889, %v2889
  %v2894 = vmul.f32 %v2886, %v2892
  %v2895 = vmul.f32 %v2889, %v2893
  %v2896 = vmul.f32 %v2894, 0.044715
  %v2897 = vmul.f32 %v2895, 0.044715
  %v2898 = vadd.f32 %v2886, %v2896
  %v2899 = vadd.f32 %v2889, %v2897
  %v2900 = vmul.f32 %v2898, 0.7978846
  %v2901 = vmul.f32 %v2899, 0.7978846
  %v2902 = vtanh.pop %v2900
  %v2903 = vtanh.pop %v2901
  %v2904 = vadd.f32 %v2902, 1.0
  %v2905 = vadd.f32 %v2903, 1.0
  %v2906 = vmul.f32 %v2904, 0.5
  %v2907 = vmul.f32 %v2905, 0.5
  %v2908 = vmul.f32 %v2886, %v2906
  %v2909 = vmul.f32 %v2889, %v2907
  %v2910 = vpack.c.bf16 %v2909, %v2908
  %v2911 = vld [vmem:[%s19] sm:$0xf]
  %v2912 = vld [vmem:[%s19 + $0x4] sm:$0xf]
  %v2913 = vld [vmem:[%s19 + $0x8] sm:$0xf]
  %v2914 = vld [vmem:[%s19 + $0xc] sm:$0xf]
  %v2915 = vld [vmem:[%s19 + $0x10] sm:$0xf]
  %v2916 = vld [vmem:[%s19 + $0x14] sm:$0xf]
  %v2917 = vld [vmem:[%s19 + $0x18] sm:$0xf]
  %v2918 = vld [vmem:[%s19 + $0x1c] sm:$0xf]
  %v2919 = vld [vmem:[%s19 + $0x20] sm:$0xf]
  %v2920 = vld [vmem:[%s19 + $0x24] sm:$0xf]
  %v2921 = vld [vmem:[%s19 + $0x28] sm:$0xf]
  %v2922 = vld [vmem:[%s19 + $0x2c] sm:$0xf]
  %v2923 = vld [vmem:[%s19 + $0x30] sm:$0xf]
  %v2924 = vld [vmem:[%s19 + $0x34] sm:$0xf]
  %v2925 = vld [vmem:[%s19 + $0x38] sm:$0xf]
  %v2926 = vld [vmem:[%s19 + $0x3c] sm:$0xf]
  %v2943 = vunpack.c.l.b16 %v2911
  %v2944 = vunpack.c.l.b16 %v2912
  %v2945 = vunpack.c.l.b16 %v2913
  %v2946 = vunpack.c.l.b16 %v2914
  %v2947 = vunpack.c.l.b16 %v2915
  %v2948 = vunpack.c.l.b16 %v2916
  %v2949 = vunpack.c.l.b16 %v2917
  %v2950 = vunpack.c.l.b16 %v2918
  %v2951 = vunpack.c.l.b16 %v2919
  %v2952 = vunpack.c.l.b16 %v2920
  %v2953 = vunpack.c.l.b16 %v2921
  %v2954 = vunpack.c.l.b16 %v2922
  %v2955 = vunpack.c.l.b16 %v2923
  %v2956 = vunpack.c.l.b16 %v2924
  %v2957 = vunpack.c.l.b16 %v2925
  %v2958 = vunpack.c.l.b16 %v2926
  %v2959 = vpack.c.b16 %v2944, %v2943
  %v2960 = vpack.c.b16 %v2946, %v2945
  %v2961 = vpack.c.b16 %v2948, %v2947
  %v2962 = vpack.c.b16 %v2950, %v2949
  %v2963 = vpack.c.b16 %v2952, %v2951
  %v2964 = vpack.c.b16 %v2954, %v2953
  %v2965 = vpack.c.b16 %v2956, %v2955
  %v2966 = vpack.c.b16 %v2958, %v2957
  %2975 = vmatprep.subr.bf16.mxu0 0
  %2976 = vmatpush1.bf16.msra.mxu0 %v2966
  %2977 = vmatprep.subr.bf16.mxu0 0
  %2978 = vmatpush1.bf16.msra.mxu0 %v2965
  %2979 = vmatprep.subr.bf16.mxu0 0
  %2980 = vmatpush1.bf16.msra.mxu0 %v2964
  %2981 = vmatprep.subr.bf16.mxu0 0
  %2982 = vmatpush1.bf16.msra.mxu0 %v2963
  %2983 = vmatprep.subr.bf16.mxu0 0
  %2984 = vmatpush1.bf16.msra.mxu0 %v2962
  %2985 = vmatprep.subr.bf16.mxu0 0
  %2986 = vmatpush1.bf16.msra.mxu0 %v2961
  %2987 = vmatprep.subr.bf16.mxu0 0
  %2988 = vmatpush1.bf16.msra.mxu0 %v2960
  %2989 = vmatprep.subr.bf16.mxu0 0
  %2990 = vmatpush1.bf16.msra.mxu0 %v2959
  %2991 = vmatprep.subr.bf16.mxu0 0
  %2992 = vmatpush2.bf16.msra.mxu0 0
  %2993 = vmatprep.subr.bf16.mxu0 0
  %2994 = vmatpush2.bf16.msra.mxu0 0
  %2995 = vmatprep.subr.bf16.mxu0 0
  %2996 = vmatpush2.bf16.msra.mxu0 0
  %2997 = vmatprep.subr.bf16.mxu0 0
  %2998 = vmatpush2.bf16.msra.mxu0 0
  %2999 = vmatprep.subr.bf16.mxu0 0
  %3000 = vmatpush2.bf16.msra.mxu0 0
  %3001 = vmatprep.subr.bf16.mxu0 0
  %3002 = vmatpush2.bf16.msra.mxu0 0
  %3003 = vmatprep.subr.bf16.mxu0 0
  %3004 = vmatpush2.bf16.msra.mxu0 0
  %3005 = vmatprep.subr.bf16.mxu0 0
  %3006 = vmatpush2.bf16.msra.mxu0 0
  %3007 = vmatprep.mubr.bf16.mxu0 0
  %3008 = vmatmul.mubr.bf16.gmra.mxu0 %v2910
  %v3009 = vpop.f32.mrf.mxu0
  %v3010 = vadd.f32 0.0, %v3009
  %v3011 = vpop.f32.mrf.mxu0
  %v3012 = vpop.f32.mrf.mxu0
  %v3013 = vadd.f32 0.0, %v3012
  %v3014 = vpop.f32.mrf.mxu0
  %3015 = vdwg.mxu0
  %v3016 = vadd.f32 %v2778, %v3010
  %v3017 = vadd.f32 %v2779, %v3013
  %v3018 = vld [vmem:[%s20] sm:$0x1]
  %v3020 = vlaneseq
  %v3021 = vshrl.u32 %v3020, 7
  %v3022 = vsub.s32 0, %v3021
  %v3023 = vrot.slane %v3018, %v3022
  %v3025 = vadd.f32 %v3016, %v3023
  %v3026 = vadd.f32 %v3017, %v3023
  %s3027 = scalar_lea.vmem %s5, 1
  %v3028 = vld [vmem:[%s3027] sm:$0x1]
  %s3029 = scalar_lea.vmem %s6, 1
  %v3030 = vld [vmem:[%s3029] sm:$0x1]
  %v3031 = vsel %vm631, %v3025, 0.0
  %3032 = vadd.xlane.f32.xlu0 %v3031
  %v3033 = vpop.xlane.xlu0 %3032
  %v3034 = vsel %vm635, %v3026, 0.0
  %3035 = vadd.xlane.f32.xlu0 %v3034
  %v3036 = vpop.xlane.xlu0 %3035
  %v3037 = vmul.f32 %v3033, %v639
  %v3038 = vmul.f32 %v3036, %v639
  %v3039 = vsub.f32 %v3025, %v3037
  %v3040 = vsub.f32 %v3026, %v3038
  %v3041 = vmul.f32 %v3039, %v3039
  %v3042 = vmul.f32 %v3040, %v3040
  %v3043 = vsel %vm631, %v3041, 0.0
  %3044 = vadd.xlane.f32.xlu0 %v3043
  %v3045 = vpop.xlane.xlu0 %3044
  %v3046 = vsel %vm635, %v3042, 0.0
  %3047 = vadd.xlane.f32.xlu0 %v3046
  %v3048 = vpop.xlane.xlu0 %3047
  %v3049 = vmul.f32 %v3045, %v639
  %v3050 = vmul.f32 %v3048, %v639
  %v3051 = vadd.f32 %v3049, 1e-06
  %v3052 = vadd.f32 %v3050, 1e-06
  %v3053 = vrsqrt.pop %v3051
  %v3054 = vrsqrt.pop %v3052
  %v3055 = vmul.f32 %v3039, %v3053
  %v3056 = vmul.f32 %v3040, %v3054
  %v3058 = vlaneseq
  %v3059 = vshrl.u32 %v3058, 7
  %v3060 = vsub.s32 0, %v3059
  %v3061 = vrot.slane %v3028, %v3060
  %v3063 = vmul.f32 %v3055, %v3061
  %v3064 = vmul.f32 %v3056, %v3061
  %v3066 = vlaneseq
  %v3067 = vshrl.u32 %v3066, 7
  %v3068 = vsub.s32 0, %v3067
  %v3069 = vrot.slane %v3030, %v3068
  %v3071 = vadd.f32 %v3063, %v3069
  %v3072 = vadd.f32 %v3064, %v3069
  %v3073 = vpack.c.bf16 %v3072, %v3071
  %s3074 = scalar_lea.vmem %s7, 64
  %v3075 = vld [vmem:[%s3074] sm:$0xf]
  %v3076 = vld [vmem:[%s3074 + $0x4] sm:$0xf]
  %v3077 = vld [vmem:[%s3074 + $0x8] sm:$0xf]
  %v3078 = vld [vmem:[%s3074 + $0xc] sm:$0xf]
  %v3079 = vld [vmem:[%s3074 + $0x10] sm:$0xf]
  %v3080 = vld [vmem:[%s3074 + $0x14] sm:$0xf]
  %v3081 = vld [vmem:[%s3074 + $0x18] sm:$0xf]
  %v3082 = vld [vmem:[%s3074 + $0x1c] sm:$0xf]
  %v3083 = vld [vmem:[%s3074 + $0x20] sm:$0xf]
  %v3084 = vld [vmem:[%s3074 + $0x24] sm:$0xf]
  %v3085 = vld [vmem:[%s3074 + $0x28] sm:$0xf]
  %v3086 = vld [vmem:[%s3074 + $0x2c] sm:$0xf]
  %v3087 = vld [vmem:[%s3074 + $0x30] sm:$0xf]
  %v3088 = vld [vmem:[%s3074 + $0x34] sm:$0xf]
  %v3089 = vld [vmem:[%s3074 + $0x38] sm:$0xf]
  %v3090 = vld [vmem:[%s3074 + $0x3c] sm:$0xf]
  %s3091 = scalar_lea.vmem %s8, 4
  %v3092 = vld [vmem:[%s3091] sm:$0x1]
  %v3093 = vld [vmem:[%s3091 + $0x1] sm:$0x1]
  %v3094 = vld [vmem:[%s3091 + $0x2] sm:$0x1]
  %v3095 = vld [vmem:[%s3091 + $0x3] sm:$0x1]
  %s3096 = scalar_lea.vmem %s9, 64
  %v3097 = vld [vmem:[%s3096] sm:$0xf]
  %v3098 = vld [vmem:[%s3096 + $0x4] sm:$0xf]
  %v3099 = vld [vmem:[%s3096 + $0x8] sm:$0xf]
  %v3100 = vld [vmem:[%s3096 + $0xc] sm:$0xf]
  %v3101 = vld [vmem:[%s3096 + $0x10] sm:$0xf]
  %v3102 = vld [vmem:[%s3096 + $0x14] sm:$0xf]
  %v3103 = vld [vmem:[%s3096 + $0x18] sm:$0xf]
  %v3104 = vld [vmem:[%s3096 + $0x1c] sm:$0xf]
  %v3105 = vld [vmem:[%s3096 + $0x20] sm:$0xf]
  %v3106 = vld [vmem:[%s3096 + $0x24] sm:$0xf]
  %v3107 = vld [vmem:[%s3096 + $0x28] sm:$0xf]
  %v3108 = vld [vmem:[%s3096 + $0x2c] sm:$0xf]
  %v3109 = vld [vmem:[%s3096 + $0x30] sm:$0xf]
  %v3110 = vld [vmem:[%s3096 + $0x34] sm:$0xf]
  %v3111 = vld [vmem:[%s3096 + $0x38] sm:$0xf]
  %v3112 = vld [vmem:[%s3096 + $0x3c] sm:$0xf]
  %s3113 = scalar_lea.vmem %s10, 4
  %v3114 = vld [vmem:[%s3113] sm:$0x1]
  %v3115 = vld [vmem:[%s3113 + $0x1] sm:$0x1]
  %v3116 = vld [vmem:[%s3113 + $0x2] sm:$0x1]
  %v3117 = vld [vmem:[%s3113 + $0x3] sm:$0x1]
  %s3118 = scalar_lea.vmem %s11, 64
  %v3119 = vld [vmem:[%s3118] sm:$0xf]
  %v3120 = vld [vmem:[%s3118 + $0x4] sm:$0xf]
  %v3121 = vld [vmem:[%s3118 + $0x8] sm:$0xf]
  %v3122 = vld [vmem:[%s3118 + $0xc] sm:$0xf]
  %v3123 = vld [vmem:[%s3118 + $0x10] sm:$0xf]
  %v3124 = vld [vmem:[%s3118 + $0x14] sm:$0xf]
  %v3125 = vld [vmem:[%s3118 + $0x18] sm:$0xf]
  %v3126 = vld [vmem:[%s3118 + $0x1c] sm:$0xf]
  %v3127 = vld [vmem:[%s3118 + $0x20] sm:$0xf]
  %v3128 = vld [vmem:[%s3118 + $0x24] sm:$0xf]
  %v3129 = vld [vmem:[%s3118 + $0x28] sm:$0xf]
  %v3130 = vld [vmem:[%s3118 + $0x2c] sm:$0xf]
  %v3131 = vld [vmem:[%s3118 + $0x30] sm:$0xf]
  %v3132 = vld [vmem:[%s3118 + $0x34] sm:$0xf]
  %v3133 = vld [vmem:[%s3118 + $0x38] sm:$0xf]
  %v3134 = vld [vmem:[%s3118 + $0x3c] sm:$0xf]
  %s3135 = scalar_lea.vmem %s12, 4
  %v3136 = vld [vmem:[%s3135] sm:$0x1]
  %v3137 = vld [vmem:[%s3135 + $0x1] sm:$0x1]
  %v3138 = vld [vmem:[%s3135 + $0x2] sm:$0x1]
  %v3139 = vld [vmem:[%s3135 + $0x3] sm:$0x1]
  %s3140 = scalar_lea.vmem %s13, 16
  %v3141 = vld [vmem:[%s3140] sm:$0xf]
  %v3142 = vld [vmem:[%s3140 + $0x4] sm:$0xf]
  %v3143 = vld [vmem:[%s3140 + $0x8] sm:$0xf]
  %v3144 = vld [vmem:[%s3140 + $0xc] sm:$0xf]
  %s3145 = scalar_lea.vmem %s14, 1
  %v3146 = vld [vmem:[%s3145] sm:$0x1]
  %v3148 = vlaneseq
  %v3149 = vshrl.u32 %v3148, 7
  %v3150 = vsub.s32 0, %v3149
  %v3151 = vrot.slane %v3092, %v3150
  %v3157 = vunpack.c.l.b16 %v3075
  %v3158 = vunpack.c.l.b16 %v3076
  %v3159 = vunpack.c.l.b16 %v3077
  %v3160 = vunpack.c.l.b16 %v3078
  %v3161 = vpack.c.b16 %v3158, %v3157
  %v3162 = vpack.c.b16 %v3160, %v3159
  %v3166 = vsel %vm631, %v3073, 0
  %3168 = vmatprep.subr.bf16.mxu0 0
  %3169 = vmatpush1.bf16.msra.mxu0 0
  %3170 = vmatprep.subr.bf16.mxu0 0
  %3171 = vmatpush1.bf16.msra.mxu0 0
  %3172 = vmatprep.subr.bf16.mxu0 0
  %3173 = vmatpush1.bf16.msra.mxu0 0
  %3174 = vmatprep.subr.bf16.mxu0 0
  %3175 = vmatpush1.bf16.msra.mxu0 0
  %3176 = vmatprep.subr.bf16.mxu0 0
  %3177 = vmatpush1.bf16.msra.mxu0 0
  %3178 = vmatprep.subr.bf16.mxu0 0
  %3179 = vmatpush1.bf16.msra.mxu0 0
  %3180 = vmatprep.subr.bf16.mxu0 0
  %3181 = vmatpush1.bf16.msra.mxu0 %v3162
  %3182 = vmatprep.subr.bf16.mxu0 0
  %3183 = vmatpush1.bf16.msra.mxu0 %v3161
  %3184 = vmatprep.subr.bf16.mxu0 0
  %3185 = vmatpush2.bf16.msra.mxu0 0
  %3186 = vmatprep.subr.bf16.mxu0 0
  %3187 = vmatpush2.bf16.msra.mxu0 0
  %3188 = vmatprep.subr.bf16.mxu0 0
  %3189 = vmatpush2.bf16.msra.mxu0 0
  %3190 = vmatprep.subr.bf16.mxu0 0
  %3191 = vmatpush2.bf16.msra.mxu0 0
  %3192 = vmatprep.subr.bf16.mxu0 0
  %3193 = vmatpush2.bf16.msra.mxu0 0
  %3194 = vmatprep.subr.bf16.mxu0 0
  %3195 = vmatpush2.bf16.msra.mxu0 0
  %3196 = vmatprep.subr.bf16.mxu0 0
  %3197 = vmatpush2.bf16.msra.mxu0 0
  %3198 = vmatprep.subr.bf16.mxu0 0
  %3199 = vmatpush2.bf16.msra.mxu0 0
  %3200 = vmatprep.mubr.bf16.mxu0 0
  %3201 = vmatmul.mubr.bf16.gmra.mxu0 %v3166
  %v3202 = vpop.f32.mrf.mxu0
  %v3203 = vadd.f32 %v3151, %v3202
  %v3204 = vpop.f32.mrf.mxu0
  %v3205 = vpop.f32.mrf.mxu0
  %v3206 = vadd.f32 %v3151, %v3205
  %v3207 = vpop.f32.mrf.mxu0
  %3208 = vdwg.mxu0
  %v3210 = vlaneseq
  %v3211 = vshrl.u32 %v3210, 7
  %v3212 = vsub.s32 0, %v3211
  %v3213 = vrot.slane %v3114, %v3212
  %v3219 = vunpack.c.l.b16 %v3097
  %v3220 = vunpack.c.l.b16 %v3098
  %v3221 = vunpack.c.l.b16 %v3099
  %v3222 = vunpack.c.l.b16 %v3100
  %v3223 = vpack.c.b16 %v3220, %v3219
  %v3224 = vpack.c.b16 %v3222, %v3221
  %3227 = vmatprep.subr.bf16.mxu0 0
  %3228 = vmatpush1.bf16.msra.mxu0 0
  %3229 = vmatprep.subr.bf16.mxu0 0
  %3230 = vmatpush1.bf16.msra.mxu0 0
  %3231 = vmatprep.subr.bf16.mxu0 0
  %3232 = vmatpush1.bf16.msra.mxu0 0
  %3233 = vmatprep.subr.bf16.mxu0 0
  %3234 = vmatpush1.bf16.msra.mxu0 0
  %3235 = vmatprep.subr.bf16.mxu0 0
  %3236 = vmatpush1.bf16.msra.mxu0 0
  %3237 = vmatprep.subr.bf16.mxu0 0
  %3238 = vmatpush1.bf16.msra.mxu0 0
  %3239 = vmatprep.subr.bf16.mxu0 0
  %3240 = vmatpush1.bf16.msra.mxu0 %v3224
  %3241 = vmatprep.subr.bf16.mxu0 0
  %3242 = vmatpush1.bf16.msra.mxu0 %v3223
  %3243 = vmatprep.subr.bf16.mxu0 0
  %3244 = vmatpush2.bf16.msra.mxu0 0
  %3245 = vmatprep.subr.bf16.mxu0 0
  %3246 = vmatpush2.bf16.msra.mxu0 0
  %3247 = vmatprep.subr.bf16.mxu0 0
  %3248 = vmatpush2.bf16.msra.mxu0 0
  %3249 = vmatprep.subr.bf16.mxu0 0
  %3250 = vmatpush2.bf16.msra.mxu0 0
  %3251 = vmatprep.subr.bf16.mxu0 0
  %3252 = vmatpush2.bf16.msra.mxu0 0
  %3253 = vmatprep.subr.bf16.mxu0 0
  %3254 = vmatpush2.bf16.msra.mxu0 0
  %3255 = vmatprep.subr.bf16.mxu0 0
  %3256 = vmatpush2.bf16.msra.mxu0 0
  %3257 = vmatprep.subr.bf16.mxu0 0
  %3258 = vmatpush2.bf16.msra.mxu0 0
  %3259 = vmatprep.mubr.bf16.mxu0 0
  %3260 = vmatmul.mubr.bf16.gmra.mxu0 %v3166
  %v3261 = vpop.f32.mrf.mxu0
  %v3262 = vadd.f32 %v3213, %v3261
  %v3263 = vpop.f32.mrf.mxu0
  %v3264 = vpop.f32.mrf.mxu0
  %v3265 = vadd.f32 %v3213, %v3264
  %v3266 = vpop.f32.mrf.mxu0
  %3267 = vdwg.mxu0
  %v3269 = vlaneseq
  %v3270 = vshrl.u32 %v3269, 7
  %v3271 = vsub.s32 0, %v3270
  %v3272 = vrot.slane %v3136, %v3271
  %v3278 = vunpack.c.l.b16 %v3119
  %v3279 = vunpack.c.l.b16 %v3120
  %v3280 = vunpack.c.l.b16 %v3121
  %v3281 = vunpack.c.l.b16 %v3122
  %v3282 = vpack.c.b16 %v3279, %v3278
  %v3283 = vpack.c.b16 %v3281, %v3280
  %3286 = vmatprep.subr.bf16.mxu0 0
  %3287 = vmatpush1.bf16.msra.mxu0 0
  %3288 = vmatprep.subr.bf16.mxu0 0
  %3289 = vmatpush1.bf16.msra.mxu0 0
  %3290 = vmatprep.subr.bf16.mxu0 0
  %3291 = vmatpush1.bf16.msra.mxu0 0
  %3292 = vmatprep.subr.bf16.mxu0 0
  %3293 = vmatpush1.bf16.msra.mxu0 0
  %3294 = vmatprep.subr.bf16.mxu0 0
  %3295 = vmatpush1.bf16.msra.mxu0 0
  %3296 = vmatprep.subr.bf16.mxu0 0
  %3297 = vmatpush1.bf16.msra.mxu0 0
  %3298 = vmatprep.subr.bf16.mxu0 0
  %3299 = vmatpush1.bf16.msra.mxu0 %v3283
  %3300 = vmatprep.subr.bf16.mxu0 0
  %3301 = vmatpush1.bf16.msra.mxu0 %v3282
  %3302 = vmatprep.subr.bf16.mxu0 0
  %3303 = vmatpush2.bf16.msra.mxu0 0
  %3304 = vmatprep.subr.bf16.mxu0 0
  %3305 = vmatpush2.bf16.msra.mxu0 0
  %3306 = vmatprep.subr.bf16.mxu0 0
  %3307 = vmatpush2.bf16.msra.mxu0 0
  %3308 = vmatprep.subr.bf16.mxu0 0
  %3309 = vmatpush2.bf16.msra.mxu0 0
  %3310 = vmatprep.subr.bf16.mxu0 0
  %3311 = vmatpush2.bf16.msra.mxu0 0
  %3312 = vmatprep.subr.bf16.mxu0 0
  %3313 = vmatpush2.bf16.msra.mxu0 0
  %3314 = vmatprep.subr.bf16.mxu0 0
  %3315 = vmatpush2.bf16.msra.mxu0 0
  %3316 = vmatprep.subr.bf16.mxu0 0
  %3317 = vmatpush2.bf16.msra.mxu0 0
  %3318 = vmatprep.mubr.bf16.mxu0 0
  %3319 = vmatmul.mubr.bf16.gmra.mxu0 %v3166
  %v3320 = vpop.f32.mrf.mxu0
  %v3321 = vadd.f32 %v3272, %v3320
  %v3322 = vpop.f32.mrf.mxu0
  %v3323 = vpop.f32.mrf.mxu0
  %v3324 = vadd.f32 %v3272, %v3323
  %v3325 = vpop.f32.mrf.mxu0
  %3326 = vdwg.mxu0
  %v3327 = vpack.c.bf16 %v3206, %v3203
  %v3328 = vpack.c.bf16 %v3265, %v3262
  %v3329 = vpack.c.bf16 %v3324, %v3321
  %v3331 = vsel %vm925, %v3327, 0
  %v3334 = vsel %vm925, %v3328, 0
  %3336 = vmatprep.subr.bf16.mxu0 0
  %3337 = vmatpush1.bf16.xpose.msra.mxu0 0
  %3338 = vmatprep.subr.bf16.mxu0 0
  %3339 = vmatpush1.bf16.xpose.msra.mxu0 0
  %3340 = vmatprep.subr.bf16.mxu0 0
  %3341 = vmatpush1.bf16.xpose.msra.mxu0 0
  %3342 = vmatprep.subr.bf16.mxu0 0
  %3343 = vmatpush1.bf16.xpose.msra.mxu0 0
  %3344 = vmatprep.subr.bf16.mxu0 0
  %3345 = vmatpush1.bf16.xpose.msra.mxu0 0
  %3346 = vmatprep.subr.bf16.mxu0 0
  %3347 = vmatpush1.bf16.xpose.msra.mxu0 0
  %3348 = vmatprep.subr.bf16.mxu0 0
  %3349 = vmatpush1.bf16.xpose.msra.mxu0 0
  %3350 = vmatprep.subr.bf16.mxu0 0
  %3351 = vmatpush1.bf16.xpose.msra.mxu0 %v3334
  %3352 = vmatprep.subr.bf16.mxu0 0
  %3353 = vmatpush2.bf16.xpose.msra.mxu0 0
  %3354 = vmatprep.subr.bf16.mxu0 0
  %3355 = vmatpush2.bf16.xpose.msra.mxu0 0
  %3356 = vmatprep.subr.bf16.mxu0 0
  %3357 = vmatpush2.bf16.xpose.msra.mxu0 0
  %3358 = vmatprep.subr.bf16.mxu0 0
  %3359 = vmatpush2.bf16.xpose.msra.mxu0 0
  %3360 = vmatprep.subr.bf16.mxu0 0
  %3361 = vmatpush2.bf16.xpose.msra.mxu0 0
  %3362 = vmatprep.subr.bf16.mxu0 0
  %3363 = vmatpush2.bf16.xpose.msra.mxu0 0
  %3364 = vmatprep.subr.bf16.mxu0 0
  %3365 = vmatpush2.bf16.xpose.msra.mxu0 0
  %3366 = vmatprep.subr.bf16.mxu0 0
  %3367 = vmatpush2.bf16.xpose.msra.mxu0 0
  %3368 = vmatprep.mubr.bf16.mxu0 0
  %3369 = vmatmul.mubr.bf16.gmra.mxu0 %v3331
  %v3370 = vpop.f32.mrf.mxu0
  %v3371 = vadd.f32 0.0, %v3370
  %v3372 = vpop.f32.mrf.mxu0
  %v3373 = vpop.f32.mrf.mxu0
  %v3374 = vpop.f32.mrf.mxu0
  %3375 = vdwg.mxu0
  %v3376 = vmul.f32 %v3371, 0.35355338
  %v3377 = vsel %vm973, %v3376, -inf
  %3378 = vmax.xlane.f32.xlu0 %v3377
  %v3379 = vpop.xlane.xlu0 %3378
  %v3380 = vsub.f32 %v3376, %v3379
  %v3381 = vmul.f32 %v3380, 1.442695
  %v3382 = vpow.pop %v3381
  %v3383 = vsel %vm973, %v3382, 0.0
  %3384 = vadd.xlane.f32.xlu0 %v3383
  %v3385 = vpop.xlane.xlu0 %3384
  %v3386 = vrcp.pop %v3385
  %v3387 = vmul.f32 %v3382, %v3386
  %v3388 = vpack.c.bf16 %v3387, %v3387
  %v3390 = vsel %vm986, %v3388, 0
  %v3393 = vand.u32 %v3329, %v993
  %3395 = vmatprep.subr.bf16.mxu0 0
  %3396 = vmatpush1.bf16.msra.mxu0 0
  %3397 = vmatprep.subr.bf16.mxu0 0
  %3398 = vmatpush1.bf16.msra.mxu0 0
  %3399 = vmatprep.subr.bf16.mxu0 0
  %3400 = vmatpush1.bf16.msra.mxu0 0
  %3401 = vmatprep.subr.bf16.mxu0 0
  %3402 = vmatpush1.bf16.msra.mxu0 0
  %3403 = vmatprep.subr.bf16.mxu0 0
  %3404 = vmatpush1.bf16.msra.mxu0 0
  %3405 = vmatprep.subr.bf16.mxu0 0
  %3406 = vmatpush1.bf16.msra.mxu0 0
  %3407 = vmatprep.subr.bf16.mxu0 0
  %3408 = vmatpush1.bf16.msra.mxu0 0
  %3409 = vmatprep.subr.bf16.mxu0 0
  %3410 = vmatpush1.bf16.msra.mxu0 %v3393
  %3411 = vmatprep.subr.bf16.mxu0 0
  %3412 = vmatpush2.bf16.msra.mxu0 0
  %3413 = vmatprep.subr.bf16.mxu0 0
  %3414 = vmatpush2.bf16.msra.mxu0 0
  %3415 = vmatprep.subr.bf16.mxu0 0
  %3416 = vmatpush2.bf16.msra.mxu0 0
  %3417 = vmatprep.subr.bf16.mxu0 0
  %3418 = vmatpush2.bf16.msra.mxu0 0
  %3419 = vmatprep.subr.bf16.mxu0 0
  %3420 = vmatpush2.bf16.msra.mxu0 0
  %3421 = vmatprep.subr.bf16.mxu0 0
  %3422 = vmatpush2.bf16.msra.mxu0 0
  %3423 = vmatprep.subr.bf16.mxu0 0
  %3424 = vmatpush2.bf16.msra.mxu0 0
  %3425 = vmatprep.subr.bf16.mxu0 0
  %3426 = vmatpush2.bf16.msra.mxu0 0
  %3427 = vmatprep.mubr.bf16.mxu0 0
  %3428 = vmatmul.mubr.bf16.gmra.mxu0 %v3390
  %v3429 = vpop.f32.mrf.mxu0
  %v3430 = vadd.f32 0.0, %v3429
  %v3431 = vpop.f32.mrf.mxu0
  %v3432 = vpop.f32.mrf.mxu0
  %v3433 = vpop.f32.mrf.mxu0
  %3434 = vdwg.mxu0
  %v3435 = vpack.c.bf16 %v3430, %v3430
  %v3436 = vshrl.u32 %v3327, 16
  %v3438 = vrot.slane %v3436, 2
  %v3439 = vshll.u32 %v3327, 16
  %v3441 = vrot.slane %v3439, 3
  %v3442 = vor.u32 %v3438, %v3441
  %v3443 = vshrl.u32 %v3328, 16
  %v3445 = vrot.slane %v3443, 2
  %v3446 = vshll.u32 %v3328, 16
  %v3448 = vrot.slane %v3446, 3
  %v3449 = vor.u32 %v3445, %v3448
  %v3451 = vsel %vm925, %v3442, 0
  %v3454 = vsel %vm925, %v3449, 0
  %3456 = vmatprep.subr.bf16.mxu0 0
  %3457 = vmatpush1.bf16.xpose.msra.mxu0 0
  %3458 = vmatprep.subr.bf16.mxu0 0
  %3459 = vmatpush1.bf16.xpose.msra.mxu0 0
  %3460 = vmatprep.subr.bf16.mxu0 0
  %3461 = vmatpush1.bf16.xpose.msra.mxu0 0
  %3462 = vmatprep.subr.bf16.mxu0 0
  %3463 = vmatpush1.bf16.xpose.msra.mxu0 0
  %3464 = vmatprep.subr.bf16.mxu0 0
  %3465 = vmatpush1.bf16.xpose.msra.mxu0 0
  %3466 = vmatprep.subr.bf16.mxu0 0
  %3467 = vmatpush1.bf16.xpose.msra.mxu0 0
  %3468 = vmatprep.subr.bf16.mxu0 0
  %3469 = vmatpush1.bf16.xpose.msra.mxu0 0
  %3470 = vmatprep.subr.bf16.mxu0 0
  %3471 = vmatpush1.bf16.xpose.msra.mxu0 %v3454
  %3472 = vmatprep.subr.bf16.mxu0 0
  %3473 = vmatpush2.bf16.xpose.msra.mxu0 0
  %3474 = vmatprep.subr.bf16.mxu0 0
  %3475 = vmatpush2.bf16.xpose.msra.mxu0 0
  %3476 = vmatprep.subr.bf16.mxu0 0
  %3477 = vmatpush2.bf16.xpose.msra.mxu0 0
  %3478 = vmatprep.subr.bf16.mxu0 0
  %3479 = vmatpush2.bf16.xpose.msra.mxu0 0
  %3480 = vmatprep.subr.bf16.mxu0 0
  %3481 = vmatpush2.bf16.xpose.msra.mxu0 0
  %3482 = vmatprep.subr.bf16.mxu0 0
  %3483 = vmatpush2.bf16.xpose.msra.mxu0 0
  %3484 = vmatprep.subr.bf16.mxu0 0
  %3485 = vmatpush2.bf16.xpose.msra.mxu0 0
  %3486 = vmatprep.subr.bf16.mxu0 0
  %3487 = vmatpush2.bf16.xpose.msra.mxu0 0
  %3488 = vmatprep.mubr.bf16.mxu0 0
  %3489 = vmatmul.mubr.bf16.gmra.mxu0 %v3451
  %v3490 = vpop.f32.mrf.mxu0
  %v3491 = vadd.f32 0.0, %v3490
  %v3492 = vpop.f32.mrf.mxu0
  %v3493 = vpop.f32.mrf.mxu0
  %v3494 = vpop.f32.mrf.mxu0
  %3495 = vdwg.mxu0
  %v3496 = vmul.f32 %v3491, 0.35355338
  %v3497 = vsel %vm973, %v3496, -inf
  %3498 = vmax.xlane.f32.xlu0 %v3497
  %v3499 = vpop.xlane.xlu0 %3498
  %v3500 = vsub.f32 %v3496, %v3499
  %v3501 = vmul.f32 %v3500, 1.442695
  %v3502 = vpow.pop %v3501
  %v3503 = vsel %vm973, %v3502, 0.0
  %3504 = vadd.xlane.f32.xlu0 %v3503
  %v3505 = vpop.xlane.xlu0 %3504
  %v3506 = vrcp.pop %v3505
  %v3507 = vmul.f32 %v3502, %v3506
  %v3508 = vpack.c.bf16 %v3507, %v3507
  %v3509 = vshrl.u32 %v3329, 16
  %v3511 = vrot.slane %v3509, 2
  %v3512 = vshll.u32 %v3329, 16
  %v3514 = vrot.slane %v3512, 3
  %v3515 = vor.u32 %v3511, %v3514
  %v3517 = vsel %vm986, %v3508, 0
  %v3520 = vand.u32 %v3515, %v993
  %3522 = vmatprep.subr.bf16.mxu0 0
  %3523 = vmatpush1.bf16.msra.mxu0 0
  %3524 = vmatprep.subr.bf16.mxu0 0
  %3525 = vmatpush1.bf16.msra.mxu0 0
  %3526 = vmatprep.subr.bf16.mxu0 0
  %3527 = vmatpush1.bf16.msra.mxu0 0
  %3528 = vmatprep.subr.bf16.mxu0 0
  %3529 = vmatpush1.bf16.msra.mxu0 0
  %3530 = vmatprep.subr.bf16.mxu0 0
  %3531 = vmatpush1.bf16.msra.mxu0 0
  %3532 = vmatprep.subr.bf16.mxu0 0
  %3533 = vmatpush1.bf16.msra.mxu0 0
  %3534 = vmatprep.subr.bf16.mxu0 0
  %3535 = vmatpush1.bf16.msra.mxu0 0
  %3536 = vmatprep.subr.bf16.mxu0 0
  %3537 = vmatpush1.bf16.msra.mxu0 %v3520
  %3538 = vmatprep.subr.bf16.mxu0 0
  %3539 = vmatpush2.bf16.msra.mxu0 0
  %3540 = vmatprep.subr.bf16.mxu0 0
  %3541 = vmatpush2.bf16.msra.mxu0 0
  %3542 = vmatprep.subr.bf16.mxu0 0
  %3543 = vmatpush2.bf16.msra.mxu0 0
  %3544 = vmatprep.subr.bf16.mxu0 0
  %3545 = vmatpush2.bf16.msra.mxu0 0
  %3546 = vmatprep.subr.bf16.mxu0 0
  %3547 = vmatpush2.bf16.msra.mxu0 0
  %3548 = vmatprep.subr.bf16.mxu0 0
  %3549 = vmatpush2.bf16.msra.mxu0 0
  %3550 = vmatprep.subr.bf16.mxu0 0
  %3551 = vmatpush2.bf16.msra.mxu0 0
  %3552 = vmatprep.subr.bf16.mxu0 0
  %3553 = vmatpush2.bf16.msra.mxu0 0
  %3554 = vmatprep.mubr.bf16.mxu0 0
  %3555 = vmatmul.mubr.bf16.gmra.mxu0 %v3517
  %v3556 = vpop.f32.mrf.mxu0
  %v3557 = vadd.f32 0.0, %v3556
  %v3558 = vpop.f32.mrf.mxu0
  %v3559 = vpop.f32.mrf.mxu0
  %v3560 = vpop.f32.mrf.mxu0
  %3561 = vdwg.mxu0
  %v3562 = vpack.c.bf16 %v3557, %v3557
  %v3564 = vlaneseq
  %v3565 = vshrl.u32 %v3564, 7
  %v3566 = vsub.s32 0, %v3565
  %v3567 = vrot.slane %v3093, %v3566
  %v3573 = vunpack.c.l.b16 %v3079
  %v3574 = vunpack.c.l.b16 %v3080
  %v3575 = vunpack.c.l.b16 %v3081
  %v3576 = vunpack.c.l.b16 %v3082
  %v3577 = vpack.c.b16 %v3574, %v3573
  %v3578 = vpack.c.b16 %v3576, %v3575
  %3581 = vmatprep.subr.bf16.mxu0 0
  %3582 = vmatpush1.bf16.msra.mxu0 0
  %3583 = vmatprep.subr.bf16.mxu0 0
  %3584 = vmatpush1.bf16.msra.mxu0 0
  %3585 = vmatprep.subr.bf16.mxu0 0
  %3586 = vmatpush1.bf16.msra.mxu0 0
  %3587 = vmatprep.subr.bf16.mxu0 0
  %3588 = vmatpush1.bf16.msra.mxu0 0
  %3589 = vmatprep.subr.bf16.mxu0 0
  %3590 = vmatpush1.bf16.msra.mxu0 0
  %3591 = vmatprep.subr.bf16.mxu0 0
  %3592 = vmatpush1.bf16.msra.mxu0 0
  %3593 = vmatprep.subr.bf16.mxu0 0
  %3594 = vmatpush1.bf16.msra.mxu0 %v3578
  %3595 = vmatprep.subr.bf16.mxu0 0
  %3596 = vmatpush1.bf16.msra.mxu0 %v3577
  %3597 = vmatprep.subr.bf16.mxu0 0
  %3598 = vmatpush2.bf16.msra.mxu0 0
  %3599 = vmatprep.subr.bf16.mxu0 0
  %3600 = vmatpush2.bf16.msra.mxu0 0
  %3601 = vmatprep.subr.bf16.mxu0 0
  %3602 = vmatpush2.bf16.msra.mxu0 0
  %3603 = vmatprep.subr.bf16.mxu0 0
  %3604 = vmatpush2.bf16.msra.mxu0 0
  %3605 = vmatprep.subr.bf16.mxu0 0
  %3606 = vmatpush2.bf16.msra.mxu0 0
  %3607 = vmatprep.subr.bf16.mxu0 0
  %3608 = vmatpush2.bf16.msra.mxu0 0
  %3609 = vmatprep.subr.bf16.mxu0 0
  %3610 = vmatpush2.bf16.msra.mxu0 0
  %3611 = vmatprep.subr.bf16.mxu0 0
  %3612 = vmatpush2.bf16.msra.mxu0 0
  %3613 = vmatprep.mubr.bf16.mxu0 0
  %3614 = vmatmul.mubr.bf16.gmra.mxu0 %v3166
  %v3615 = vpop.f32.mrf.mxu0
  %v3616 = vadd.f32 %v3567, %v3615
  %v3617 = vpop.f32.mrf.mxu0
  %v3618 = vpop.f32.mrf.mxu0
  %v3619 = vadd.f32 %v3567, %v3618
  %v3620 = vpop.f32.mrf.mxu0
  %3621 = vdwg.mxu0
  %v3623 = vlaneseq
  %v3624 = vshrl.u32 %v3623, 7
  %v3625 = vsub.s32 0, %v3624
  %v3626 = vrot.slane %v3115, %v3625
  %v3632 = vunpack.c.l.b16 %v3101
  %v3633 = vunpack.c.l.b16 %v3102
  %v3634 = vunpack.c.l.b16 %v3103
  %v3635 = vunpack.c.l.b16 %v3104
  %v3636 = vpack.c.b16 %v3633, %v3632
  %v3637 = vpack.c.b16 %v3635, %v3634
  %3640 = vmatprep.subr.bf16.mxu0 0
  %3641 = vmatpush1.bf16.msra.mxu0 0
  %3642 = vmatprep.subr.bf16.mxu0 0
  %3643 = vmatpush1.bf16.msra.mxu0 0
  %3644 = vmatprep.subr.bf16.mxu0 0
  %3645 = vmatpush1.bf16.msra.mxu0 0
  %3646 = vmatprep.subr.bf16.mxu0 0
  %3647 = vmatpush1.bf16.msra.mxu0 0
  %3648 = vmatprep.subr.bf16.mxu0 0
  %3649 = vmatpush1.bf16.msra.mxu0 0
  %3650 = vmatprep.subr.bf16.mxu0 0
  %3651 = vmatpush1.bf16.msra.mxu0 0
  %3652 = vmatprep.subr.bf16.mxu0 0
  %3653 = vmatpush1.bf16.msra.mxu0 %v3637
  %3654 = vmatprep.subr.bf16.mxu0 0
  %3655 = vmatpush1.bf16.msra.mxu0 %v3636
  %3656 = vmatprep.subr.bf16.mxu0 0
  %3657 = vmatpush2.bf16.msra.mxu0 0
  %3658 = vmatprep.subr.bf16.mxu0 0
  %3659 = vmatpush2.bf16.msra.mxu0 0
  %3660 = vmatprep.subr.bf16.mxu0 0
  %3661 = vmatpush2.bf16.msra.mxu0 0
  %3662 = vmatprep.subr.bf16.mxu0 0
  %3663 = vmatpush2.bf16.msra.mxu0 0
  %3664 = vmatprep.subr.bf16.mxu0 0
  %3665 = vmatpush2.bf16.msra.mxu0 0
  %3666 = vmatprep.subr.bf16.mxu0 0
  %3667 = vmatpush2.bf16.msra.mxu0 0
  %3668 = vmatprep.subr.bf16.mxu0 0
  %3669 = vmatpush2.bf16.msra.mxu0 0
  %3670 = vmatprep.subr.bf16.mxu0 0
  %3671 = vmatpush2.bf16.msra.mxu0 0
  %3672 = vmatprep.mubr.bf16.mxu0 0
  %3673 = vmatmul.mubr.bf16.gmra.mxu0 %v3166
  %v3674 = vpop.f32.mrf.mxu0
  %v3675 = vadd.f32 %v3626, %v3674
  %v3676 = vpop.f32.mrf.mxu0
  %v3677 = vpop.f32.mrf.mxu0
  %v3678 = vadd.f32 %v3626, %v3677
  %v3679 = vpop.f32.mrf.mxu0
  %3680 = vdwg.mxu0
  %v3682 = vlaneseq
  %v3683 = vshrl.u32 %v3682, 7
  %v3684 = vsub.s32 0, %v3683
  %v3685 = vrot.slane %v3137, %v3684
  %v3691 = vunpack.c.l.b16 %v3123
  %v3692 = vunpack.c.l.b16 %v3124
  %v3693 = vunpack.c.l.b16 %v3125
  %v3694 = vunpack.c.l.b16 %v3126
  %v3695 = vpack.c.b16 %v3692, %v3691
  %v3696 = vpack.c.b16 %v3694, %v3693
  %3699 = vmatprep.subr.bf16.mxu0 0
  %3700 = vmatpush1.bf16.msra.mxu0 0
  %3701 = vmatprep.subr.bf16.mxu0 0
  %3702 = vmatpush1.bf16.msra.mxu0 0
  %3703 = vmatprep.subr.bf16.mxu0 0
  %3704 = vmatpush1.bf16.msra.mxu0 0
  %3705 = vmatprep.subr.bf16.mxu0 0
  %3706 = vmatpush1.bf16.msra.mxu0 0
  %3707 = vmatprep.subr.bf16.mxu0 0
  %3708 = vmatpush1.bf16.msra.mxu0 0
  %3709 = vmatprep.subr.bf16.mxu0 0
  %3710 = vmatpush1.bf16.msra.mxu0 0
  %3711 = vmatprep.subr.bf16.mxu0 0
  %3712 = vmatpush1.bf16.msra.mxu0 %v3696
  %3713 = vmatprep.subr.bf16.mxu0 0
  %3714 = vmatpush1.bf16.msra.mxu0 %v3695
  %3715 = vmatprep.subr.bf16.mxu0 0
  %3716 = vmatpush2.bf16.msra.mxu0 0
  %3717 = vmatprep.subr.bf16.mxu0 0
  %3718 = vmatpush2.bf16.msra.mxu0 0
  %3719 = vmatprep.subr.bf16.mxu0 0
  %3720 = vmatpush2.bf16.msra.mxu0 0
  %3721 = vmatprep.subr.bf16.mxu0 0
  %3722 = vmatpush2.bf16.msra.mxu0 0
  %3723 = vmatprep.subr.bf16.mxu0 0
  %3724 = vmatpush2.bf16.msra.mxu0 0
  %3725 = vmatprep.subr.bf16.mxu0 0
  %3726 = vmatpush2.bf16.msra.mxu0 0
  %3727 = vmatprep.subr.bf16.mxu0 0
  %3728 = vmatpush2.bf16.msra.mxu0 0
  %3729 = vmatprep.subr.bf16.mxu0 0
  %3730 = vmatpush2.bf16.msra.mxu0 0
  %3731 = vmatprep.mubr.bf16.mxu0 0
  %3732 = vmatmul.mubr.bf16.gmra.mxu0 %v3166
  %v3733 = vpop.f32.mrf.mxu0
  %v3734 = vadd.f32 %v3685, %v3733
  %v3735 = vpop.f32.mrf.mxu0
  %v3736 = vpop.f32.mrf.mxu0
  %v3737 = vadd.f32 %v3685, %v3736
  %v3738 = vpop.f32.mrf.mxu0
  %3739 = vdwg.mxu0
  %v3740 = vpack.c.bf16 %v3619, %v3616
  %v3741 = vpack.c.bf16 %v3678, %v3675
  %v3742 = vpack.c.bf16 %v3737, %v3734
  %v3744 = vsel %vm925, %v3740, 0
  %v3747 = vsel %vm925, %v3741, 0
  %3749 = vmatprep.subr.bf16.mxu0 0
  %3750 = vmatpush1.bf16.xpose.msra.mxu0 0
  %3751 = vmatprep.subr.bf16.mxu0 0
  %3752 = vmatpush1.bf16.xpose.msra.mxu0 0
  %3753 = vmatprep.subr.bf16.mxu0 0
  %3754 = vmatpush1.bf16.xpose.msra.mxu0 0
  %3755 = vmatprep.subr.bf16.mxu0 0
  %3756 = vmatpush1.bf16.xpose.msra.mxu0 0
  %3757 = vmatprep.subr.bf16.mxu0 0
  %3758 = vmatpush1.bf16.xpose.msra.mxu0 0
  %3759 = vmatprep.subr.bf16.mxu0 0
  %3760 = vmatpush1.bf16.xpose.msra.mxu0 0
  %3761 = vmatprep.subr.bf16.mxu0 0
  %3762 = vmatpush1.bf16.xpose.msra.mxu0 0
  %3763 = vmatprep.subr.bf16.mxu0 0
  %3764 = vmatpush1.bf16.xpose.msra.mxu0 %v3747
  %3765 = vmatprep.subr.bf16.mxu0 0
  %3766 = vmatpush2.bf16.xpose.msra.mxu0 0
  %3767 = vmatprep.subr.bf16.mxu0 0
  %3768 = vmatpush2.bf16.xpose.msra.mxu0 0
  %3769 = vmatprep.subr.bf16.mxu0 0
  %3770 = vmatpush2.bf16.xpose.msra.mxu0 0
  %3771 = vmatprep.subr.bf16.mxu0 0
  %3772 = vmatpush2.bf16.xpose.msra.mxu0 0
  %3773 = vmatprep.subr.bf16.mxu0 0
  %3774 = vmatpush2.bf16.xpose.msra.mxu0 0
  %3775 = vmatprep.subr.bf16.mxu0 0
  %3776 = vmatpush2.bf16.xpose.msra.mxu0 0
  %3777 = vmatprep.subr.bf16.mxu0 0
  %3778 = vmatpush2.bf16.xpose.msra.mxu0 0
  %3779 = vmatprep.subr.bf16.mxu0 0
  %3780 = vmatpush2.bf16.xpose.msra.mxu0 0
  %3781 = vmatprep.mubr.bf16.mxu0 0
  %3782 = vmatmul.mubr.bf16.gmra.mxu0 %v3744
  %v3783 = vpop.f32.mrf.mxu0
  %v3784 = vadd.f32 0.0, %v3783
  %v3785 = vpop.f32.mrf.mxu0
  %v3786 = vpop.f32.mrf.mxu0
  %v3787 = vpop.f32.mrf.mxu0
  %3788 = vdwg.mxu0
  %v3789 = vmul.f32 %v3784, 0.35355338
  %v3790 = vsel %vm973, %v3789, -inf
  %3791 = vmax.xlane.f32.xlu0 %v3790
  %v3792 = vpop.xlane.xlu0 %3791
  %v3793 = vsub.f32 %v3789, %v3792
  %v3794 = vmul.f32 %v3793, 1.442695
  %v3795 = vpow.pop %v3794
  %v3796 = vsel %vm973, %v3795, 0.0
  %3797 = vadd.xlane.f32.xlu0 %v3796
  %v3798 = vpop.xlane.xlu0 %3797
  %v3799 = vrcp.pop %v3798
  %v3800 = vmul.f32 %v3795, %v3799
  %v3801 = vpack.c.bf16 %v3800, %v3800
  %v3803 = vsel %vm986, %v3801, 0
  %v3806 = vand.u32 %v3742, %v993
  %3808 = vmatprep.subr.bf16.mxu0 0
  %3809 = vmatpush1.bf16.msra.mxu0 0
  %3810 = vmatprep.subr.bf16.mxu0 0
  %3811 = vmatpush1.bf16.msra.mxu0 0
  %3812 = vmatprep.subr.bf16.mxu0 0
  %3813 = vmatpush1.bf16.msra.mxu0 0
  %3814 = vmatprep.subr.bf16.mxu0 0
  %3815 = vmatpush1.bf16.msra.mxu0 0
  %3816 = vmatprep.subr.bf16.mxu0 0
  %3817 = vmatpush1.bf16.msra.mxu0 0
  %3818 = vmatprep.subr.bf16.mxu0 0
  %3819 = vmatpush1.bf16.msra.mxu0 0
  %3820 = vmatprep.subr.bf16.mxu0 0
  %3821 = vmatpush1.bf16.msra.mxu0 0
  %3822 = vmatprep.subr.bf16.mxu0 0
  %3823 = vmatpush1.bf16.msra.mxu0 %v3806
  %3824 = vmatprep.subr.bf16.mxu0 0
  %3825 = vmatpush2.bf16.msra.mxu0 0
  %3826 = vmatprep.subr.bf16.mxu0 0
  %3827 = vmatpush2.bf16.msra.mxu0 0
  %3828 = vmatprep.subr.bf16.mxu0 0
  %3829 = vmatpush2.bf16.msra.mxu0 0
  %3830 = vmatprep.subr.bf16.mxu0 0
  %3831 = vmatpush2.bf16.msra.mxu0 0
  %3832 = vmatprep.subr.bf16.mxu0 0
  %3833 = vmatpush2.bf16.msra.mxu0 0
  %3834 = vmatprep.subr.bf16.mxu0 0
  %3835 = vmatpush2.bf16.msra.mxu0 0
  %3836 = vmatprep.subr.bf16.mxu0 0
  %3837 = vmatpush2.bf16.msra.mxu0 0
  %3838 = vmatprep.subr.bf16.mxu0 0
  %3839 = vmatpush2.bf16.msra.mxu0 0
  %3840 = vmatprep.mubr.bf16.mxu0 0
  %3841 = vmatmul.mubr.bf16.gmra.mxu0 %v3803
  %v3842 = vpop.f32.mrf.mxu0
  %v3843 = vadd.f32 0.0, %v3842
  %v3844 = vpop.f32.mrf.mxu0
  %v3845 = vpop.f32.mrf.mxu0
  %v3846 = vpop.f32.mrf.mxu0
  %3847 = vdwg.mxu0
  %v3848 = vpack.c.bf16 %v3843, %v3843
  %v3850 = vsel %vm925, %v3848, 0
  %v3853 = vsel %vm1454, %v3142, 0
  %3855 = vmatprep.subr.bf16.mxu0 0
  %3856 = vmatpush1.bf16.msra.mxu0 0
  %3857 = vmatprep.subr.bf16.mxu0 0
  %3858 = vmatpush1.bf16.msra.mxu0 0
  %3859 = vmatprep.subr.bf16.mxu0 0
  %3860 = vmatpush1.bf16.msra.mxu0 0
  %3861 = vmatprep.subr.bf16.mxu0 0
  %3862 = vmatpush1.bf16.msra.mxu0 0
  %3863 = vmatprep.subr.bf16.mxu0 0
  %3864 = vmatpush1.bf16.msra.mxu0 0
  %3865 = vmatprep.subr.bf16.mxu0 0
  %3866 = vmatpush1.bf16.msra.mxu0 0
  %3867 = vmatprep.subr.bf16.mxu0 0
  %3868 = vmatpush1.bf16.msra.mxu0 0
  %3869 = vmatprep.subr.bf16.mxu0 0
  %3870 = vmatpush1.bf16.msra.mxu0 %v3853
  %3871 = vmatprep.subr.bf16.mxu0 0
  %3872 = vmatpush2.bf16.msra.mxu0 0
  %3873 = vmatprep.subr.bf16.mxu0 0
  %3874 = vmatpush2.bf16.msra.mxu0 0
  %3875 = vmatprep.subr.bf16.mxu0 0
  %3876 = vmatpush2.bf16.msra.mxu0 0
  %3877 = vmatprep.subr.bf16.mxu0 0
  %3878 = vmatpush2.bf16.msra.mxu0 0
  %3879 = vmatprep.subr.bf16.mxu0 0
  %3880 = vmatpush2.bf16.msra.mxu0 0
  %3881 = vmatprep.subr.bf16.mxu0 0
  %3882 = vmatpush2.bf16.msra.mxu0 0
  %3883 = vmatprep.subr.bf16.mxu0 0
  %3884 = vmatpush2.bf16.msra.mxu0 0
  %3885 = vmatprep.subr.bf16.mxu0 0
  %3886 = vmatpush2.bf16.msra.mxu0 0
  %3887 = vmatprep.mubr.bf16.mxu0 0
  %3888 = vmatmul.mubr.bf16.gmra.mxu0 %v3850
  %v3889 = vpop.f32.mrf.mxu0
  %v3890 = vadd.f32 0.0, %v3889
  %v3891 = vpop.f32.mrf.mxu0
  %v3892 = vpop.f32.mrf.mxu0
  %v3893 = vpop.f32.mrf.mxu0
  %3894 = vdwg.mxu0
  %v3896 = vsel %vm925, %v3435, 0
  %v3899 = vsel %vm1454, %v3141, 0
  %3901 = vmatprep.subr.bf16.mxu0 0
  %3902 = vmatpush1.bf16.msra.mxu0 0
  %3903 = vmatprep.subr.bf16.mxu0 0
  %3904 = vmatpush1.bf16.msra.mxu0 0
  %3905 = vmatprep.subr.bf16.mxu0 0
  %3906 = vmatpush1.bf16.msra.mxu0 0
  %3907 = vmatprep.subr.bf16.mxu0 0
  %3908 = vmatpush1.bf16.msra.mxu0 0
  %3909 = vmatprep.subr.bf16.mxu0 0
  %3910 = vmatpush1.bf16.msra.mxu0 0
  %3911 = vmatprep.subr.bf16.mxu0 0
  %3912 = vmatpush1.bf16.msra.mxu0 0
  %3913 = vmatprep.subr.bf16.mxu0 0
  %3914 = vmatpush1.bf16.msra.mxu0 0
  %3915 = vmatprep.subr.bf16.mxu0 0
  %3916 = vmatpush1.bf16.msra.mxu0 %v3899
  %3917 = vmatprep.subr.bf16.mxu0 0
  %3918 = vmatpush2.bf16.msra.mxu0 0
  %3919 = vmatprep.subr.bf16.mxu0 0
  %3920 = vmatpush2.bf16.msra.mxu0 0
  %3921 = vmatprep.subr.bf16.mxu0 0
  %3922 = vmatpush2.bf16.msra.mxu0 0
  %3923 = vmatprep.subr.bf16.mxu0 0
  %3924 = vmatpush2.bf16.msra.mxu0 0
  %3925 = vmatprep.subr.bf16.mxu0 0
  %3926 = vmatpush2.bf16.msra.mxu0 0
  %3927 = vmatprep.subr.bf16.mxu0 0
  %3928 = vmatpush2.bf16.msra.mxu0 0
  %3929 = vmatprep.subr.bf16.mxu0 0
  %3930 = vmatpush2.bf16.msra.mxu0 0
  %3931 = vmatprep.subr.bf16.mxu0 0
  %3932 = vmatpush2.bf16.msra.mxu0 0
  %3933 = vmatprep.mubr.bf16.mxu0 0
  %3934 = vmatmul.mubr.bf16.gmra.mxu0 %v3896
  %v3935 = vpop.f32.mrf.mxu0
  %v3936 = vadd.f32 %v3890, %v3935
  %v3937 = vpop.f32.mrf.mxu0
  %v3938 = vpop.f32.mrf.mxu0
  %v3939 = vpop.f32.mrf.mxu0
  %3940 = vdwg.mxu0
  %v3941 = vshrl.u32 %v3740, 16
  %v3943 = vrot.slane %v3941, 2
  %v3944 = vshll.u32 %v3740, 16
  %v3946 = vrot.slane %v3944, 3
  %v3947 = vor.u32 %v3943, %v3946
  %v3948 = vshrl.u32 %v3741, 16
  %v3950 = vrot.slane %v3948, 2
  %v3951 = vshll.u32 %v3741, 16
  %v3953 = vrot.slane %v3951, 3
  %v3954 = vor.u32 %v3950, %v3953
  %v3956 = vsel %vm925, %v3947, 0
  %v3959 = vsel %vm925, %v3954, 0
  %3961 = vmatprep.subr.bf16.mxu0 0
  %3962 = vmatpush1.bf16.xpose.msra.mxu0 0
  %3963 = vmatprep.subr.bf16.mxu0 0
  %3964 = vmatpush1.bf16.xpose.msra.mxu0 0
  %3965 = vmatprep.subr.bf16.mxu0 0
  %3966 = vmatpush1.bf16.xpose.msra.mxu0 0
  %3967 = vmatprep.subr.bf16.mxu0 0
  %3968 = vmatpush1.bf16.xpose.msra.mxu0 0
  %3969 = vmatprep.subr.bf16.mxu0 0
  %3970 = vmatpush1.bf16.xpose.msra.mxu0 0
  %3971 = vmatprep.subr.bf16.mxu0 0
  %3972 = vmatpush1.bf16.xpose.msra.mxu0 0
  %3973 = vmatprep.subr.bf16.mxu0 0
  %3974 = vmatpush1.bf16.xpose.msra.mxu0 0
  %3975 = vmatprep.subr.bf16.mxu0 0
  %3976 = vmatpush1.bf16.xpose.msra.mxu0 %v3959
  %3977 = vmatprep.subr.bf16.mxu0 0
  %3978 = vmatpush2.bf16.xpose.msra.mxu0 0
  %3979 = vmatprep.subr.bf16.mxu0 0
  %3980 = vmatpush2.bf16.xpose.msra.mxu0 0
  %3981 = vmatprep.subr.bf16.mxu0 0
  %3982 = vmatpush2.bf16.xpose.msra.mxu0 0
  %3983 = vmatprep.subr.bf16.mxu0 0
  %3984 = vmatpush2.bf16.xpose.msra.mxu0 0
  %3985 = vmatprep.subr.bf16.mxu0 0
  %3986 = vmatpush2.bf16.xpose.msra.mxu0 0
  %3987 = vmatprep.subr.bf16.mxu0 0
  %3988 = vmatpush2.bf16.xpose.msra.mxu0 0
  %3989 = vmatprep.subr.bf16.mxu0 0
  %3990 = vmatpush2.bf16.xpose.msra.mxu0 0
  %3991 = vmatprep.subr.bf16.mxu0 0
  %3992 = vmatpush2.bf16.xpose.msra.mxu0 0
  %3993 = vmatprep.mubr.bf16.mxu0 0
  %3994 = vmatmul.mubr.bf16.gmra.mxu0 %v3956
  %v3995 = vpop.f32.mrf.mxu0
  %v3996 = vadd.f32 0.0, %v3995
  %v3997 = vpop.f32.mrf.mxu0
  %v3998 = vpop.f32.mrf.mxu0
  %v3999 = vpop.f32.mrf.mxu0
  %4000 = vdwg.mxu0
  %v4001 = vmul.f32 %v3996, 0.35355338
  %v4002 = vsel %vm973, %v4001, -inf
  %4003 = vmax.xlane.f32.xlu0 %v4002
  %v4004 = vpop.xlane.xlu0 %4003
  %v4005 = vsub.f32 %v4001, %v4004
  %v4006 = vmul.f32 %v4005, 1.442695
  %v4007 = vpow.pop %v4006
  %v4008 = vsel %vm973, %v4007, 0.0
  %4009 = vadd.xlane.f32.xlu0 %v4008
  %v4010 = vpop.xlane.xlu0 %4009
  %v4011 = vrcp.pop %v4010
  %v4012 = vmul.f32 %v4007, %v4011
  %v4013 = vpack.c.bf16 %v4012, %v4012
  %v4014 = vshrl.u32 %v3742, 16
  %v4016 = vrot.slane %v4014, 2
  %v4017 = vshll.u32 %v3742, 16
  %v4019 = vrot.slane %v4017, 3
  %v4020 = vor.u32 %v4016, %v4019
  %v4022 = vsel %vm986, %v4013, 0
  %v4025 = vand.u32 %v4020, %v993
  %4027 = vmatprep.subr.bf16.mxu0 0
  %4028 = vmatpush1.bf16.msra.mxu0 0
  %4029 = vmatprep.subr.bf16.mxu0 0
  %4030 = vmatpush1.bf16.msra.mxu0 0
  %4031 = vmatprep.subr.bf16.mxu0 0
  %4032 = vmatpush1.bf16.msra.mxu0 0
  %4033 = vmatprep.subr.bf16.mxu0 0
  %4034 = vmatpush1.bf16.msra.mxu0 0
  %4035 = vmatprep.subr.bf16.mxu0 0
  %4036 = vmatpush1.bf16.msra.mxu0 0
  %4037 = vmatprep.subr.bf16.mxu0 0
  %4038 = vmatpush1.bf16.msra.mxu0 0
  %4039 = vmatprep.subr.bf16.mxu0 0
  %4040 = vmatpush1.bf16.msra.mxu0 0
  %4041 = vmatprep.subr.bf16.mxu0 0
  %4042 = vmatpush1.bf16.msra.mxu0 %v4025
  %4043 = vmatprep.subr.bf16.mxu0 0
  %4044 = vmatpush2.bf16.msra.mxu0 0
  %4045 = vmatprep.subr.bf16.mxu0 0
  %4046 = vmatpush2.bf16.msra.mxu0 0
  %4047 = vmatprep.subr.bf16.mxu0 0
  %4048 = vmatpush2.bf16.msra.mxu0 0
  %4049 = vmatprep.subr.bf16.mxu0 0
  %4050 = vmatpush2.bf16.msra.mxu0 0
  %4051 = vmatprep.subr.bf16.mxu0 0
  %4052 = vmatpush2.bf16.msra.mxu0 0
  %4053 = vmatprep.subr.bf16.mxu0 0
  %4054 = vmatpush2.bf16.msra.mxu0 0
  %4055 = vmatprep.subr.bf16.mxu0 0
  %4056 = vmatpush2.bf16.msra.mxu0 0
  %4057 = vmatprep.subr.bf16.mxu0 0
  %4058 = vmatpush2.bf16.msra.mxu0 0
  %4059 = vmatprep.mubr.bf16.mxu0 0
  %4060 = vmatmul.mubr.bf16.gmra.mxu0 %v4022
  %v4061 = vpop.f32.mrf.mxu0
  %v4062 = vadd.f32 0.0, %v4061
  %v4063 = vpop.f32.mrf.mxu0
  %v4064 = vpop.f32.mrf.mxu0
  %v4065 = vpop.f32.mrf.mxu0
  %4066 = vdwg.mxu0
  %v4067 = vpack.c.bf16 %v4062, %v4062
  %v4069 = vsel %vm925, %v4067, 0
  %4071 = vmatprep.subr.bf16.mxu0 0
  %4072 = vmatpush1.bf16.msra.mxu0 0
  %4073 = vmatprep.subr.bf16.mxu0 0
  %4074 = vmatpush1.bf16.msra.mxu0 0
  %4075 = vmatprep.subr.bf16.mxu0 0
  %4076 = vmatpush1.bf16.msra.mxu0 0
  %4077 = vmatprep.subr.bf16.mxu0 0
  %4078 = vmatpush1.bf16.msra.mxu0 0
  %4079 = vmatprep.subr.bf16.mxu0 0
  %4080 = vmatpush1.bf16.msra.mxu0 0
  %4081 = vmatprep.subr.bf16.mxu0 0
  %4082 = vmatpush1.bf16.msra.mxu0 0
  %4083 = vmatprep.subr.bf16.mxu0 0
  %4084 = vmatpush1.bf16.msra.mxu0 0
  %4085 = vmatprep.subr.bf16.mxu0 0
  %4086 = vmatpush1.bf16.msra.mxu0 %v3853
  %4087 = vmatprep.subr.bf16.mxu0 0
  %4088 = vmatpush2.bf16.msra.mxu0 0
  %4089 = vmatprep.subr.bf16.mxu0 0
  %4090 = vmatpush2.bf16.msra.mxu0 0
  %4091 = vmatprep.subr.bf16.mxu0 0
  %4092 = vmatpush2.bf16.msra.mxu0 0
  %4093 = vmatprep.subr.bf16.mxu0 0
  %4094 = vmatpush2.bf16.msra.mxu0 0
  %4095 = vmatprep.subr.bf16.mxu0 0
  %4096 = vmatpush2.bf16.msra.mxu0 0
  %4097 = vmatprep.subr.bf16.mxu0 0
  %4098 = vmatpush2.bf16.msra.mxu0 0
  %4099 = vmatprep.subr.bf16.mxu0 0
  %4100 = vmatpush2.bf16.msra.mxu0 0
  %4101 = vmatprep.subr.bf16.mxu0 0
  %4102 = vmatpush2.bf16.msra.mxu0 0
  %4103 = vmatprep.mubr.bf16.mxu0 0
  %4104 = vmatmul.mubr.bf16.gmra.mxu0 %v4069
  %v4105 = vpop.f32.mrf.mxu0
  %v4106 = vadd.f32 0.0, %v4105
  %v4107 = vpop.f32.mrf.mxu0
  %v4108 = vpop.f32.mrf.mxu0
  %v4109 = vpop.f32.mrf.mxu0
  %4110 = vdwg.mxu0
  %v4112 = vsel %vm925, %v3562, 0
  %4114 = vmatprep.subr.bf16.mxu0 0
  %4115 = vmatpush1.bf16.msra.mxu0 0
  %4116 = vmatprep.subr.bf16.mxu0 0
  %4117 = vmatpush1.bf16.msra.mxu0 0
  %4118 = vmatprep.subr.bf16.mxu0 0
  %4119 = vmatpush1.bf16.msra.mxu0 0
  %4120 = vmatprep.subr.bf16.mxu0 0
  %4121 = vmatpush1.bf16.msra.mxu0 0
  %4122 = vmatprep.subr.bf16.mxu0 0
  %4123 = vmatpush1.bf16.msra.mxu0 0
  %4124 = vmatprep.subr.bf16.mxu0 0
  %4125 = vmatpush1.bf16.msra.mxu0 0
  %4126 = vmatprep.subr.bf16.mxu0 0
  %4127 = vmatpush1.bf16.msra.mxu0 0
  %4128 = vmatprep.subr.bf16.mxu0 0
  %4129 = vmatpush1.bf16.msra.mxu0 %v3899
  %4130 = vmatprep.subr.bf16.mxu0 0
  %4131 = vmatpush2.bf16.msra.mxu0 0
  %4132 = vmatprep.subr.bf16.mxu0 0
  %4133 = vmatpush2.bf16.msra.mxu0 0
  %4134 = vmatprep.subr.bf16.mxu0 0
  %4135 = vmatpush2.bf16.msra.mxu0 0
  %4136 = vmatprep.subr.bf16.mxu0 0
  %4137 = vmatpush2.bf16.msra.mxu0 0
  %4138 = vmatprep.subr.bf16.mxu0 0
  %4139 = vmatpush2.bf16.msra.mxu0 0
  %4140 = vmatprep.subr.bf16.mxu0 0
  %4141 = vmatpush2.bf16.msra.mxu0 0
  %4142 = vmatprep.subr.bf16.mxu0 0
  %4143 = vmatpush2.bf16.msra.mxu0 0
  %4144 = vmatprep.subr.bf16.mxu0 0
  %4145 = vmatpush2.bf16.msra.mxu0 0
  %4146 = vmatprep.mubr.bf16.mxu0 0
  %4147 = vmatmul.mubr.bf16.gmra.mxu0 %v4112
  %v4148 = vpop.f32.mrf.mxu0
  %v4149 = vadd.f32 %v4106, %v4148
  %v4150 = vpop.f32.mrf.mxu0
  %v4151 = vpop.f32.mrf.mxu0
  %v4152 = vpop.f32.mrf.mxu0
  %4153 = vdwg.mxu0
  %v4155 = vlaneseq
  %v4156 = vshrl.u32 %v4155, 7
  %v4157 = vsub.s32 0, %v4156
  %v4158 = vrot.slane %v3094, %v4157
  %v4164 = vunpack.c.l.b16 %v3083
  %v4165 = vunpack.c.l.b16 %v3084
  %v4166 = vunpack.c.l.b16 %v3085
  %v4167 = vunpack.c.l.b16 %v3086
  %v4168 = vpack.c.b16 %v4165, %v4164
  %v4169 = vpack.c.b16 %v4167, %v4166
  %4172 = vmatprep.subr.bf16.mxu0 0
  %4173 = vmatpush1.bf16.msra.mxu0 0
  %4174 = vmatprep.subr.bf16.mxu0 0
  %4175 = vmatpush1.bf16.msra.mxu0 0
  %4176 = vmatprep.subr.bf16.mxu0 0
  %4177 = vmatpush1.bf16.msra.mxu0 0
  %4178 = vmatprep.subr.bf16.mxu0 0
  %4179 = vmatpush1.bf16.msra.mxu0 0
  %4180 = vmatprep.subr.bf16.mxu0 0
  %4181 = vmatpush1.bf16.msra.mxu0 0
  %4182 = vmatprep.subr.bf16.mxu0 0
  %4183 = vmatpush1.bf16.msra.mxu0 0
  %4184 = vmatprep.subr.bf16.mxu0 0
  %4185 = vmatpush1.bf16.msra.mxu0 %v4169
  %4186 = vmatprep.subr.bf16.mxu0 0
  %4187 = vmatpush1.bf16.msra.mxu0 %v4168
  %4188 = vmatprep.subr.bf16.mxu0 0
  %4189 = vmatpush2.bf16.msra.mxu0 0
  %4190 = vmatprep.subr.bf16.mxu0 0
  %4191 = vmatpush2.bf16.msra.mxu0 0
  %4192 = vmatprep.subr.bf16.mxu0 0
  %4193 = vmatpush2.bf16.msra.mxu0 0
  %4194 = vmatprep.subr.bf16.mxu0 0
  %4195 = vmatpush2.bf16.msra.mxu0 0
  %4196 = vmatprep.subr.bf16.mxu0 0
  %4197 = vmatpush2.bf16.msra.mxu0 0
  %4198 = vmatprep.subr.bf16.mxu0 0
  %4199 = vmatpush2.bf16.msra.mxu0 0
  %4200 = vmatprep.subr.bf16.mxu0 0
  %4201 = vmatpush2.bf16.msra.mxu0 0
  %4202 = vmatprep.subr.bf16.mxu0 0
  %4203 = vmatpush2.bf16.msra.mxu0 0
  %4204 = vmatprep.mubr.bf16.mxu0 0
  %4205 = vmatmul.mubr.bf16.gmra.mxu0 %v3166
  %v4206 = vpop.f32.mrf.mxu0
  %v4207 = vadd.f32 %v4158, %v4206
  %v4208 = vpop.f32.mrf.mxu0
  %v4209 = vpop.f32.mrf.mxu0
  %v4210 = vadd.f32 %v4158, %v4209
  %v4211 = vpop.f32.mrf.mxu0
  %4212 = vdwg.mxu0
  %v4214 = vlaneseq
  %v4215 = vshrl.u32 %v4214, 7
  %v4216 = vsub.s32 0, %v4215
  %v4217 = vrot.slane %v3116, %v4216
  %v4223 = vunpack.c.l.b16 %v3105
  %v4224 = vunpack.c.l.b16 %v3106
  %v4225 = vunpack.c.l.b16 %v3107
  %v4226 = vunpack.c.l.b16 %v3108
  %v4227 = vpack.c.b16 %v4224, %v4223
  %v4228 = vpack.c.b16 %v4226, %v4225
  %4231 = vmatprep.subr.bf16.mxu0 0
  %4232 = vmatpush1.bf16.msra.mxu0 0
  %4233 = vmatprep.subr.bf16.mxu0 0
  %4234 = vmatpush1.bf16.msra.mxu0 0
  %4235 = vmatprep.subr.bf16.mxu0 0
  %4236 = vmatpush1.bf16.msra.mxu0 0
  %4237 = vmatprep.subr.bf16.mxu0 0
  %4238 = vmatpush1.bf16.msra.mxu0 0
  %4239 = vmatprep.subr.bf16.mxu0 0
  %4240 = vmatpush1.bf16.msra.mxu0 0
  %4241 = vmatprep.subr.bf16.mxu0 0
  %4242 = vmatpush1.bf16.msra.mxu0 0
  %4243 = vmatprep.subr.bf16.mxu0 0
  %4244 = vmatpush1.bf16.msra.mxu0 %v4228
  %4245 = vmatprep.subr.bf16.mxu0 0
  %4246 = vmatpush1.bf16.msra.mxu0 %v4227
  %4247 = vmatprep.subr.bf16.mxu0 0
  %4248 = vmatpush2.bf16.msra.mxu0 0
  %4249 = vmatprep.subr.bf16.mxu0 0
  %4250 = vmatpush2.bf16.msra.mxu0 0
  %4251 = vmatprep.subr.bf16.mxu0 0
  %4252 = vmatpush2.bf16.msra.mxu0 0
  %4253 = vmatprep.subr.bf16.mxu0 0
  %4254 = vmatpush2.bf16.msra.mxu0 0
  %4255 = vmatprep.subr.bf16.mxu0 0
  %4256 = vmatpush2.bf16.msra.mxu0 0
  %4257 = vmatprep.subr.bf16.mxu0 0
  %4258 = vmatpush2.bf16.msra.mxu0 0
  %4259 = vmatprep.subr.bf16.mxu0 0
  %4260 = vmatpush2.bf16.msra.mxu0 0
  %4261 = vmatprep.subr.bf16.mxu0 0
  %4262 = vmatpush2.bf16.msra.mxu0 0
  %4263 = vmatprep.mubr.bf16.mxu0 0
  %4264 = vmatmul.mubr.bf16.gmra.mxu0 %v3166
  %v4265 = vpop.f32.mrf.mxu0
  %v4266 = vadd.f32 %v4217, %v4265
  %v4267 = vpop.f32.mrf.mxu0
  %v4268 = vpop.f32.mrf.mxu0
  %v4269 = vadd.f32 %v4217, %v4268
  %v4270 = vpop.f32.mrf.mxu0
  %4271 = vdwg.mxu0
  %v4273 = vlaneseq
  %v4274 = vshrl.u32 %v4273, 7
  %v4275 = vsub.s32 0, %v4274
  %v4276 = vrot.slane %v3138, %v4275
  %v4282 = vunpack.c.l.b16 %v3127
  %v4283 = vunpack.c.l.b16 %v3128
  %v4284 = vunpack.c.l.b16 %v3129
  %v4285 = vunpack.c.l.b16 %v3130
  %v4286 = vpack.c.b16 %v4283, %v4282
  %v4287 = vpack.c.b16 %v4285, %v4284
  %4290 = vmatprep.subr.bf16.mxu0 0
  %4291 = vmatpush1.bf16.msra.mxu0 0
  %4292 = vmatprep.subr.bf16.mxu0 0
  %4293 = vmatpush1.bf16.msra.mxu0 0
  %4294 = vmatprep.subr.bf16.mxu0 0
  %4295 = vmatpush1.bf16.msra.mxu0 0
  %4296 = vmatprep.subr.bf16.mxu0 0
  %4297 = vmatpush1.bf16.msra.mxu0 0
  %4298 = vmatprep.subr.bf16.mxu0 0
  %4299 = vmatpush1.bf16.msra.mxu0 0
  %4300 = vmatprep.subr.bf16.mxu0 0
  %4301 = vmatpush1.bf16.msra.mxu0 0
  %4302 = vmatprep.subr.bf16.mxu0 0
  %4303 = vmatpush1.bf16.msra.mxu0 %v4287
  %4304 = vmatprep.subr.bf16.mxu0 0
  %4305 = vmatpush1.bf16.msra.mxu0 %v4286
  %4306 = vmatprep.subr.bf16.mxu0 0
  %4307 = vmatpush2.bf16.msra.mxu0 0
  %4308 = vmatprep.subr.bf16.mxu0 0
  %4309 = vmatpush2.bf16.msra.mxu0 0
  %4310 = vmatprep.subr.bf16.mxu0 0
  %4311 = vmatpush2.bf16.msra.mxu0 0
  %4312 = vmatprep.subr.bf16.mxu0 0
  %4313 = vmatpush2.bf16.msra.mxu0 0
  %4314 = vmatprep.subr.bf16.mxu0 0
  %4315 = vmatpush2.bf16.msra.mxu0 0
  %4316 = vmatprep.subr.bf16.mxu0 0
  %4317 = vmatpush2.bf16.msra.mxu0 0
  %4318 = vmatprep.subr.bf16.mxu0 0
  %4319 = vmatpush2.bf16.msra.mxu0 0
  %4320 = vmatprep.subr.bf16.mxu0 0
  %4321 = vmatpush2.bf16.msra.mxu0 0
  %4322 = vmatprep.mubr.bf16.mxu0 0
  %4323 = vmatmul.mubr.bf16.gmra.mxu0 %v3166
  %v4324 = vpop.f32.mrf.mxu0
  %v4325 = vadd.f32 %v4276, %v4324
  %v4326 = vpop.f32.mrf.mxu0
  %v4327 = vpop.f32.mrf.mxu0
  %v4328 = vadd.f32 %v4276, %v4327
  %v4329 = vpop.f32.mrf.mxu0
  %4330 = vdwg.mxu0
  %v4331 = vpack.c.bf16 %v4210, %v4207
  %v4332 = vpack.c.bf16 %v4269, %v4266
  %v4333 = vpack.c.bf16 %v4328, %v4325
  %v4335 = vsel %vm925, %v4331, 0
  %v4338 = vsel %vm925, %v4332, 0
  %4340 = vmatprep.subr.bf16.mxu0 0
  %4341 = vmatpush1.bf16.xpose.msra.mxu0 0
  %4342 = vmatprep.subr.bf16.mxu0 0
  %4343 = vmatpush1.bf16.xpose.msra.mxu0 0
  %4344 = vmatprep.subr.bf16.mxu0 0
  %4345 = vmatpush1.bf16.xpose.msra.mxu0 0
  %4346 = vmatprep.subr.bf16.mxu0 0
  %4347 = vmatpush1.bf16.xpose.msra.mxu0 0
  %4348 = vmatprep.subr.bf16.mxu0 0
  %4349 = vmatpush1.bf16.xpose.msra.mxu0 0
  %4350 = vmatprep.subr.bf16.mxu0 0
  %4351 = vmatpush1.bf16.xpose.msra.mxu0 0
  %4352 = vmatprep.subr.bf16.mxu0 0
  %4353 = vmatpush1.bf16.xpose.msra.mxu0 0
  %4354 = vmatprep.subr.bf16.mxu0 0
  %4355 = vmatpush1.bf16.xpose.msra.mxu0 %v4338
  %4356 = vmatprep.subr.bf16.mxu0 0
  %4357 = vmatpush2.bf16.xpose.msra.mxu0 0
  %4358 = vmatprep.subr.bf16.mxu0 0
  %4359 = vmatpush2.bf16.xpose.msra.mxu0 0
  %4360 = vmatprep.subr.bf16.mxu0 0
  %4361 = vmatpush2.bf16.xpose.msra.mxu0 0
  %4362 = vmatprep.subr.bf16.mxu0 0
  %4363 = vmatpush2.bf16.xpose.msra.mxu0 0
  %4364 = vmatprep.subr.bf16.mxu0 0
  %4365 = vmatpush2.bf16.xpose.msra.mxu0 0
  %4366 = vmatprep.subr.bf16.mxu0 0
  %4367 = vmatpush2.bf16.xpose.msra.mxu0 0
  %4368 = vmatprep.subr.bf16.mxu0 0
  %4369 = vmatpush2.bf16.xpose.msra.mxu0 0
  %4370 = vmatprep.subr.bf16.mxu0 0
  %4371 = vmatpush2.bf16.xpose.msra.mxu0 0
  %4372 = vmatprep.mubr.bf16.mxu0 0
  %4373 = vmatmul.mubr.bf16.gmra.mxu0 %v4335
  %v4374 = vpop.f32.mrf.mxu0
  %v4375 = vadd.f32 0.0, %v4374
  %v4376 = vpop.f32.mrf.mxu0
  %v4377 = vpop.f32.mrf.mxu0
  %v4378 = vpop.f32.mrf.mxu0
  %4379 = vdwg.mxu0
  %v4380 = vmul.f32 %v4375, 0.35355338
  %v4381 = vsel %vm973, %v4380, -inf
  %4382 = vmax.xlane.f32.xlu0 %v4381
  %v4383 = vpop.xlane.xlu0 %4382
  %v4384 = vsub.f32 %v4380, %v4383
  %v4385 = vmul.f32 %v4384, 1.442695
  %v4386 = vpow.pop %v4385
  %v4387 = vsel %vm973, %v4386, 0.0
  %4388 = vadd.xlane.f32.xlu0 %v4387
  %v4389 = vpop.xlane.xlu0 %4388
  %v4390 = vrcp.pop %v4389
  %v4391 = vmul.f32 %v4386, %v4390
  %v4392 = vpack.c.bf16 %v4391, %v4391
  %v4394 = vsel %vm986, %v4392, 0
  %v4397 = vand.u32 %v4333, %v993
  %4399 = vmatprep.subr.bf16.mxu0 0
  %4400 = vmatpush1.bf16.msra.mxu0 0
  %4401 = vmatprep.subr.bf16.mxu0 0
  %4402 = vmatpush1.bf16.msra.mxu0 0
  %4403 = vmatprep.subr.bf16.mxu0 0
  %4404 = vmatpush1.bf16.msra.mxu0 0
  %4405 = vmatprep.subr.bf16.mxu0 0
  %4406 = vmatpush1.bf16.msra.mxu0 0
  %4407 = vmatprep.subr.bf16.mxu0 0
  %4408 = vmatpush1.bf16.msra.mxu0 0
  %4409 = vmatprep.subr.bf16.mxu0 0
  %4410 = vmatpush1.bf16.msra.mxu0 0
  %4411 = vmatprep.subr.bf16.mxu0 0
  %4412 = vmatpush1.bf16.msra.mxu0 0
  %4413 = vmatprep.subr.bf16.mxu0 0
  %4414 = vmatpush1.bf16.msra.mxu0 %v4397
  %4415 = vmatprep.subr.bf16.mxu0 0
  %4416 = vmatpush2.bf16.msra.mxu0 0
  %4417 = vmatprep.subr.bf16.mxu0 0
  %4418 = vmatpush2.bf16.msra.mxu0 0
  %4419 = vmatprep.subr.bf16.mxu0 0
  %4420 = vmatpush2.bf16.msra.mxu0 0
  %4421 = vmatprep.subr.bf16.mxu0 0
  %4422 = vmatpush2.bf16.msra.mxu0 0
  %4423 = vmatprep.subr.bf16.mxu0 0
  %4424 = vmatpush2.bf16.msra.mxu0 0
  %4425 = vmatprep.subr.bf16.mxu0 0
  %4426 = vmatpush2.bf16.msra.mxu0 0
  %4427 = vmatprep.subr.bf16.mxu0 0
  %4428 = vmatpush2.bf16.msra.mxu0 0
  %4429 = vmatprep.subr.bf16.mxu0 0
  %4430 = vmatpush2.bf16.msra.mxu0 0
  %4431 = vmatprep.mubr.bf16.mxu0 0
  %4432 = vmatmul.mubr.bf16.gmra.mxu0 %v4394
  %v4433 = vpop.f32.mrf.mxu0
  %v4434 = vadd.f32 0.0, %v4433
  %v4435 = vpop.f32.mrf.mxu0
  %v4436 = vpop.f32.mrf.mxu0
  %v4437 = vpop.f32.mrf.mxu0
  %4438 = vdwg.mxu0
  %v4439 = vpack.c.bf16 %v4434, %v4434
  %v4441 = vsel %vm925, %v4439, 0
  %v4444 = vsel %vm1454, %v3143, 0
  %4446 = vmatprep.subr.bf16.mxu0 0
  %4447 = vmatpush1.bf16.msra.mxu0 0
  %4448 = vmatprep.subr.bf16.mxu0 0
  %4449 = vmatpush1.bf16.msra.mxu0 0
  %4450 = vmatprep.subr.bf16.mxu0 0
  %4451 = vmatpush1.bf16.msra.mxu0 0
  %4452 = vmatprep.subr.bf16.mxu0 0
  %4453 = vmatpush1.bf16.msra.mxu0 0
  %4454 = vmatprep.subr.bf16.mxu0 0
  %4455 = vmatpush1.bf16.msra.mxu0 0
  %4456 = vmatprep.subr.bf16.mxu0 0
  %4457 = vmatpush1.bf16.msra.mxu0 0
  %4458 = vmatprep.subr.bf16.mxu0 0
  %4459 = vmatpush1.bf16.msra.mxu0 0
  %4460 = vmatprep.subr.bf16.mxu0 0
  %4461 = vmatpush1.bf16.msra.mxu0 %v4444
  %4462 = vmatprep.subr.bf16.mxu0 0
  %4463 = vmatpush2.bf16.msra.mxu0 0
  %4464 = vmatprep.subr.bf16.mxu0 0
  %4465 = vmatpush2.bf16.msra.mxu0 0
  %4466 = vmatprep.subr.bf16.mxu0 0
  %4467 = vmatpush2.bf16.msra.mxu0 0
  %4468 = vmatprep.subr.bf16.mxu0 0
  %4469 = vmatpush2.bf16.msra.mxu0 0
  %4470 = vmatprep.subr.bf16.mxu0 0
  %4471 = vmatpush2.bf16.msra.mxu0 0
  %4472 = vmatprep.subr.bf16.mxu0 0
  %4473 = vmatpush2.bf16.msra.mxu0 0
  %4474 = vmatprep.subr.bf16.mxu0 0
  %4475 = vmatpush2.bf16.msra.mxu0 0
  %4476 = vmatprep.subr.bf16.mxu0 0
  %4477 = vmatpush2.bf16.msra.mxu0 0
  %4478 = vmatprep.mubr.bf16.mxu0 0
  %4479 = vmatmul.mubr.bf16.gmra.mxu0 %v4441
  %v4480 = vpop.f32.mrf.mxu0
  %v4481 = vadd.f32 0.0, %v4480
  %v4482 = vpop.f32.mrf.mxu0
  %v4483 = vpop.f32.mrf.mxu0
  %v4484 = vpop.f32.mrf.mxu0
  %4485 = vdwg.mxu0
  %v4486 = vadd.f32 %v3936, %v4481
  %v4487 = vshrl.u32 %v4331, 16
  %v4489 = vrot.slane %v4487, 2
  %v4490 = vshll.u32 %v4331, 16
  %v4492 = vrot.slane %v4490, 3
  %v4493 = vor.u32 %v4489, %v4492
  %v4494 = vshrl.u32 %v4332, 16
  %v4496 = vrot.slane %v4494, 2
  %v4497 = vshll.u32 %v4332, 16
  %v4499 = vrot.slane %v4497, 3
  %v4500 = vor.u32 %v4496, %v4499
  %v4502 = vsel %vm925, %v4493, 0
  %v4505 = vsel %vm925, %v4500, 0
  %4507 = vmatprep.subr.bf16.mxu0 0
  %4508 = vmatpush1.bf16.xpose.msra.mxu0 0
  %4509 = vmatprep.subr.bf16.mxu0 0
  %4510 = vmatpush1.bf16.xpose.msra.mxu0 0
  %4511 = vmatprep.subr.bf16.mxu0 0
  %4512 = vmatpush1.bf16.xpose.msra.mxu0 0
  %4513 = vmatprep.subr.bf16.mxu0 0
  %4514 = vmatpush1.bf16.xpose.msra.mxu0 0
  %4515 = vmatprep.subr.bf16.mxu0 0
  %4516 = vmatpush1.bf16.xpose.msra.mxu0 0
  %4517 = vmatprep.subr.bf16.mxu0 0
  %4518 = vmatpush1.bf16.xpose.msra.mxu0 0
  %4519 = vmatprep.subr.bf16.mxu0 0
  %4520 = vmatpush1.bf16.xpose.msra.mxu0 0
  %4521 = vmatprep.subr.bf16.mxu0 0
  %4522 = vmatpush1.bf16.xpose.msra.mxu0 %v4505
  %4523 = vmatprep.subr.bf16.mxu0 0
  %4524 = vmatpush2.bf16.xpose.msra.mxu0 0
  %4525 = vmatprep.subr.bf16.mxu0 0
  %4526 = vmatpush2.bf16.xpose.msra.mxu0 0
  %4527 = vmatprep.subr.bf16.mxu0 0
  %4528 = vmatpush2.bf16.xpose.msra.mxu0 0
  %4529 = vmatprep.subr.bf16.mxu0 0
  %4530 = vmatpush2.bf16.xpose.msra.mxu0 0
  %4531 = vmatprep.subr.bf16.mxu0 0
  %4532 = vmatpush2.bf16.xpose.msra.mxu0 0
  %4533 = vmatprep.subr.bf16.mxu0 0
  %4534 = vmatpush2.bf16.xpose.msra.mxu0 0
  %4535 = vmatprep.subr.bf16.mxu0 0
  %4536 = vmatpush2.bf16.xpose.msra.mxu0 0
  %4537 = vmatprep.subr.bf16.mxu0 0
  %4538 = vmatpush2.bf16.xpose.msra.mxu0 0
  %4539 = vmatprep.mubr.bf16.mxu0 0
  %4540 = vmatmul.mubr.bf16.gmra.mxu0 %v4502
  %v4541 = vpop.f32.mrf.mxu0
  %v4542 = vadd.f32 0.0, %v4541
  %v4543 = vpop.f32.mrf.mxu0
  %v4544 = vpop.f32.mrf.mxu0
  %v4545 = vpop.f32.mrf.mxu0
  %4546 = vdwg.mxu0
  %v4547 = vmul.f32 %v4542, 0.35355338
  %v4548 = vsel %vm973, %v4547, -inf
  %4549 = vmax.xlane.f32.xlu0 %v4548
  %v4550 = vpop.xlane.xlu0 %4549
  %v4551 = vsub.f32 %v4547, %v4550
  %v4552 = vmul.f32 %v4551, 1.442695
  %v4553 = vpow.pop %v4552
  %v4554 = vsel %vm973, %v4553, 0.0
  %4555 = vadd.xlane.f32.xlu0 %v4554
  %v4556 = vpop.xlane.xlu0 %4555
  %v4557 = vrcp.pop %v4556
  %v4558 = vmul.f32 %v4553, %v4557
  %v4559 = vpack.c.bf16 %v4558, %v4558
  %v4560 = vshrl.u32 %v4333, 16
  %v4562 = vrot.slane %v4560, 2
  %v4563 = vshll.u32 %v4333, 16
  %v4565 = vrot.slane %v4563, 3
  %v4566 = vor.u32 %v4562, %v4565
  %v4568 = vsel %vm986, %v4559, 0
  %v4571 = vand.u32 %v4566, %v993
  %4573 = vmatprep.subr.bf16.mxu0 0
  %4574 = vmatpush1.bf16.msra.mxu0 0
  %4575 = vmatprep.subr.bf16.mxu0 0
  %4576 = vmatpush1.bf16.msra.mxu0 0
  %4577 = vmatprep.subr.bf16.mxu0 0
  %4578 = vmatpush1.bf16.msra.mxu0 0
  %4579 = vmatprep.subr.bf16.mxu0 0
  %4580 = vmatpush1.bf16.msra.mxu0 0
  %4581 = vmatprep.subr.bf16.mxu0 0
  %4582 = vmatpush1.bf16.msra.mxu0 0
  %4583 = vmatprep.subr.bf16.mxu0 0
  %4584 = vmatpush1.bf16.msra.mxu0 0
  %4585 = vmatprep.subr.bf16.mxu0 0
  %4586 = vmatpush1.bf16.msra.mxu0 0
  %4587 = vmatprep.subr.bf16.mxu0 0
  %4588 = vmatpush1.bf16.msra.mxu0 %v4571
  %4589 = vmatprep.subr.bf16.mxu0 0
  %4590 = vmatpush2.bf16.msra.mxu0 0
  %4591 = vmatprep.subr.bf16.mxu0 0
  %4592 = vmatpush2.bf16.msra.mxu0 0
  %4593 = vmatprep.subr.bf16.mxu0 0
  %4594 = vmatpush2.bf16.msra.mxu0 0
  %4595 = vmatprep.subr.bf16.mxu0 0
  %4596 = vmatpush2.bf16.msra.mxu0 0
  %4597 = vmatprep.subr.bf16.mxu0 0
  %4598 = vmatpush2.bf16.msra.mxu0 0
  %4599 = vmatprep.subr.bf16.mxu0 0
  %4600 = vmatpush2.bf16.msra.mxu0 0
  %4601 = vmatprep.subr.bf16.mxu0 0
  %4602 = vmatpush2.bf16.msra.mxu0 0
  %4603 = vmatprep.subr.bf16.mxu0 0
  %4604 = vmatpush2.bf16.msra.mxu0 0
  %4605 = vmatprep.mubr.bf16.mxu0 0
  %4606 = vmatmul.mubr.bf16.gmra.mxu0 %v4568
  %v4607 = vpop.f32.mrf.mxu0
  %v4608 = vadd.f32 0.0, %v4607
  %v4609 = vpop.f32.mrf.mxu0
  %v4610 = vpop.f32.mrf.mxu0
  %v4611 = vpop.f32.mrf.mxu0
  %4612 = vdwg.mxu0
  %v4613 = vpack.c.bf16 %v4608, %v4608
  %v4615 = vsel %vm925, %v4613, 0
  %4617 = vmatprep.subr.bf16.mxu0 0
  %4618 = vmatpush1.bf16.msra.mxu0 0
  %4619 = vmatprep.subr.bf16.mxu0 0
  %4620 = vmatpush1.bf16.msra.mxu0 0
  %4621 = vmatprep.subr.bf16.mxu0 0
  %4622 = vmatpush1.bf16.msra.mxu0 0
  %4623 = vmatprep.subr.bf16.mxu0 0
  %4624 = vmatpush1.bf16.msra.mxu0 0
  %4625 = vmatprep.subr.bf16.mxu0 0
  %4626 = vmatpush1.bf16.msra.mxu0 0
  %4627 = vmatprep.subr.bf16.mxu0 0
  %4628 = vmatpush1.bf16.msra.mxu0 0
  %4629 = vmatprep.subr.bf16.mxu0 0
  %4630 = vmatpush1.bf16.msra.mxu0 0
  %4631 = vmatprep.subr.bf16.mxu0 0
  %4632 = vmatpush1.bf16.msra.mxu0 %v4444
  %4633 = vmatprep.subr.bf16.mxu0 0
  %4634 = vmatpush2.bf16.msra.mxu0 0
  %4635 = vmatprep.subr.bf16.mxu0 0
  %4636 = vmatpush2.bf16.msra.mxu0 0
  %4637 = vmatprep.subr.bf16.mxu0 0
  %4638 = vmatpush2.bf16.msra.mxu0 0
  %4639 = vmatprep.subr.bf16.mxu0 0
  %4640 = vmatpush2.bf16.msra.mxu0 0
  %4641 = vmatprep.subr.bf16.mxu0 0
  %4642 = vmatpush2.bf16.msra.mxu0 0
  %4643 = vmatprep.subr.bf16.mxu0 0
  %4644 = vmatpush2.bf16.msra.mxu0 0
  %4645 = vmatprep.subr.bf16.mxu0 0
  %4646 = vmatpush2.bf16.msra.mxu0 0
  %4647 = vmatprep.subr.bf16.mxu0 0
  %4648 = vmatpush2.bf16.msra.mxu0 0
  %4649 = vmatprep.mubr.bf16.mxu0 0
  %4650 = vmatmul.mubr.bf16.gmra.mxu0 %v4615
  %v4651 = vpop.f32.mrf.mxu0
  %v4652 = vadd.f32 0.0, %v4651
  %v4653 = vpop.f32.mrf.mxu0
  %v4654 = vpop.f32.mrf.mxu0
  %v4655 = vpop.f32.mrf.mxu0
  %4656 = vdwg.mxu0
  %v4657 = vadd.f32 %v4149, %v4652
  %v4659 = vlaneseq
  %v4660 = vshrl.u32 %v4659, 7
  %v4661 = vsub.s32 0, %v4660
  %v4662 = vrot.slane %v3095, %v4661
  %v4668 = vunpack.c.l.b16 %v3087
  %v4669 = vunpack.c.l.b16 %v3088
  %v4670 = vunpack.c.l.b16 %v3089
  %v4671 = vunpack.c.l.b16 %v3090
  %v4672 = vpack.c.b16 %v4669, %v4668
  %v4673 = vpack.c.b16 %v4671, %v4670
  %4676 = vmatprep.subr.bf16.mxu0 0
  %4677 = vmatpush1.bf16.msra.mxu0 0
  %4678 = vmatprep.subr.bf16.mxu0 0
  %4679 = vmatpush1.bf16.msra.mxu0 0
  %4680 = vmatprep.subr.bf16.mxu0 0
  %4681 = vmatpush1.bf16.msra.mxu0 0
  %4682 = vmatprep.subr.bf16.mxu0 0
  %4683 = vmatpush1.bf16.msra.mxu0 0
  %4684 = vmatprep.subr.bf16.mxu0 0
  %4685 = vmatpush1.bf16.msra.mxu0 0
  %4686 = vmatprep.subr.bf16.mxu0 0
  %4687 = vmatpush1.bf16.msra.mxu0 0
  %4688 = vmatprep.subr.bf16.mxu0 0
  %4689 = vmatpush1.bf16.msra.mxu0 %v4673
  %4690 = vmatprep.subr.bf16.mxu0 0
  %4691 = vmatpush1.bf16.msra.mxu0 %v4672
  %4692 = vmatprep.subr.bf16.mxu0 0
  %4693 = vmatpush2.bf16.msra.mxu0 0
  %4694 = vmatprep.subr.bf16.mxu0 0
  %4695 = vmatpush2.bf16.msra.mxu0 0
  %4696 = vmatprep.subr.bf16.mxu0 0
  %4697 = vmatpush2.bf16.msra.mxu0 0
  %4698 = vmatprep.subr.bf16.mxu0 0
  %4699 = vmatpush2.bf16.msra.mxu0 0
  %4700 = vmatprep.subr.bf16.mxu0 0
  %4701 = vmatpush2.bf16.msra.mxu0 0
  %4702 = vmatprep.subr.bf16.mxu0 0
  %4703 = vmatpush2.bf16.msra.mxu0 0
  %4704 = vmatprep.subr.bf16.mxu0 0
  %4705 = vmatpush2.bf16.msra.mxu0 0
  %4706 = vmatprep.subr.bf16.mxu0 0
  %4707 = vmatpush2.bf16.msra.mxu0 0
  %4708 = vmatprep.mubr.bf16.mxu0 0
  %4709 = vmatmul.mubr.bf16.gmra.mxu0 %v3166
  %v4710 = vpop.f32.mrf.mxu0
  %v4711 = vadd.f32 %v4662, %v4710
  %v4712 = vpop.f32.mrf.mxu0
  %v4713 = vpop.f32.mrf.mxu0
  %v4714 = vadd.f32 %v4662, %v4713
  %v4715 = vpop.f32.mrf.mxu0
  %4716 = vdwg.mxu0
  %v4718 = vlaneseq
  %v4719 = vshrl.u32 %v4718, 7
  %v4720 = vsub.s32 0, %v4719
  %v4721 = vrot.slane %v3117, %v4720
  %v4727 = vunpack.c.l.b16 %v3109
  %v4728 = vunpack.c.l.b16 %v3110
  %v4729 = vunpack.c.l.b16 %v3111
  %v4730 = vunpack.c.l.b16 %v3112
  %v4731 = vpack.c.b16 %v4728, %v4727
  %v4732 = vpack.c.b16 %v4730, %v4729
  %4735 = vmatprep.subr.bf16.mxu0 0
  %4736 = vmatpush1.bf16.msra.mxu0 0
  %4737 = vmatprep.subr.bf16.mxu0 0
  %4738 = vmatpush1.bf16.msra.mxu0 0
  %4739 = vmatprep.subr.bf16.mxu0 0
  %4740 = vmatpush1.bf16.msra.mxu0 0
  %4741 = vmatprep.subr.bf16.mxu0 0
  %4742 = vmatpush1.bf16.msra.mxu0 0
  %4743 = vmatprep.subr.bf16.mxu0 0
  %4744 = vmatpush1.bf16.msra.mxu0 0
  %4745 = vmatprep.subr.bf16.mxu0 0
  %4746 = vmatpush1.bf16.msra.mxu0 0
  %4747 = vmatprep.subr.bf16.mxu0 0
  %4748 = vmatpush1.bf16.msra.mxu0 %v4732
  %4749 = vmatprep.subr.bf16.mxu0 0
  %4750 = vmatpush1.bf16.msra.mxu0 %v4731
  %4751 = vmatprep.subr.bf16.mxu0 0
  %4752 = vmatpush2.bf16.msra.mxu0 0
  %4753 = vmatprep.subr.bf16.mxu0 0
  %4754 = vmatpush2.bf16.msra.mxu0 0
  %4755 = vmatprep.subr.bf16.mxu0 0
  %4756 = vmatpush2.bf16.msra.mxu0 0
  %4757 = vmatprep.subr.bf16.mxu0 0
  %4758 = vmatpush2.bf16.msra.mxu0 0
  %4759 = vmatprep.subr.bf16.mxu0 0
  %4760 = vmatpush2.bf16.msra.mxu0 0
  %4761 = vmatprep.subr.bf16.mxu0 0
  %4762 = vmatpush2.bf16.msra.mxu0 0
  %4763 = vmatprep.subr.bf16.mxu0 0
  %4764 = vmatpush2.bf16.msra.mxu0 0
  %4765 = vmatprep.subr.bf16.mxu0 0
  %4766 = vmatpush2.bf16.msra.mxu0 0
  %4767 = vmatprep.mubr.bf16.mxu0 0
  %4768 = vmatmul.mubr.bf16.gmra.mxu0 %v3166
  %v4769 = vpop.f32.mrf.mxu0
  %v4770 = vadd.f32 %v4721, %v4769
  %v4771 = vpop.f32.mrf.mxu0
  %v4772 = vpop.f32.mrf.mxu0
  %v4773 = vadd.f32 %v4721, %v4772
  %v4774 = vpop.f32.mrf.mxu0
  %4775 = vdwg.mxu0
  %v4777 = vlaneseq
  %v4778 = vshrl.u32 %v4777, 7
  %v4779 = vsub.s32 0, %v4778
  %v4780 = vrot.slane %v3139, %v4779
  %v4786 = vunpack.c.l.b16 %v3131
  %v4787 = vunpack.c.l.b16 %v3132
  %v4788 = vunpack.c.l.b16 %v3133
  %v4789 = vunpack.c.l.b16 %v3134
  %v4790 = vpack.c.b16 %v4787, %v4786
  %v4791 = vpack.c.b16 %v4789, %v4788
  %4794 = vmatprep.subr.bf16.mxu0 0
  %4795 = vmatpush1.bf16.msra.mxu0 0
  %4796 = vmatprep.subr.bf16.mxu0 0
  %4797 = vmatpush1.bf16.msra.mxu0 0
  %4798 = vmatprep.subr.bf16.mxu0 0
  %4799 = vmatpush1.bf16.msra.mxu0 0
  %4800 = vmatprep.subr.bf16.mxu0 0
  %4801 = vmatpush1.bf16.msra.mxu0 0
  %4802 = vmatprep.subr.bf16.mxu0 0
  %4803 = vmatpush1.bf16.msra.mxu0 0
  %4804 = vmatprep.subr.bf16.mxu0 0
  %4805 = vmatpush1.bf16.msra.mxu0 0
  %4806 = vmatprep.subr.bf16.mxu0 0
  %4807 = vmatpush1.bf16.msra.mxu0 %v4791
  %4808 = vmatprep.subr.bf16.mxu0 0
  %4809 = vmatpush1.bf16.msra.mxu0 %v4790
  %4810 = vmatprep.subr.bf16.mxu0 0
  %4811 = vmatpush2.bf16.msra.mxu0 0
  %4812 = vmatprep.subr.bf16.mxu0 0
  %4813 = vmatpush2.bf16.msra.mxu0 0
  %4814 = vmatprep.subr.bf16.mxu0 0
  %4815 = vmatpush2.bf16.msra.mxu0 0
  %4816 = vmatprep.subr.bf16.mxu0 0
  %4817 = vmatpush2.bf16.msra.mxu0 0
  %4818 = vmatprep.subr.bf16.mxu0 0
  %4819 = vmatpush2.bf16.msra.mxu0 0
  %4820 = vmatprep.subr.bf16.mxu0 0
  %4821 = vmatpush2.bf16.msra.mxu0 0
  %4822 = vmatprep.subr.bf16.mxu0 0
  %4823 = vmatpush2.bf16.msra.mxu0 0
  %4824 = vmatprep.subr.bf16.mxu0 0
  %4825 = vmatpush2.bf16.msra.mxu0 0
  %4826 = vmatprep.mubr.bf16.mxu0 0
  %4827 = vmatmul.mubr.bf16.gmra.mxu0 %v3166
  %v4828 = vpop.f32.mrf.mxu0
  %v4829 = vadd.f32 %v4780, %v4828
  %v4830 = vpop.f32.mrf.mxu0
  %v4831 = vpop.f32.mrf.mxu0
  %v4832 = vadd.f32 %v4780, %v4831
  %v4833 = vpop.f32.mrf.mxu0
  %4834 = vdwg.mxu0
  %v4835 = vpack.c.bf16 %v4714, %v4711
  %v4836 = vpack.c.bf16 %v4773, %v4770
  %v4837 = vpack.c.bf16 %v4832, %v4829
  %v4839 = vsel %vm925, %v4835, 0
  %v4842 = vsel %vm925, %v4836, 0
  %4844 = vmatprep.subr.bf16.mxu0 0
  %4845 = vmatpush1.bf16.xpose.msra.mxu0 0
  %4846 = vmatprep.subr.bf16.mxu0 0
  %4847 = vmatpush1.bf16.xpose.msra.mxu0 0
  %4848 = vmatprep.subr.bf16.mxu0 0
  %4849 = vmatpush1.bf16.xpose.msra.mxu0 0
  %4850 = vmatprep.subr.bf16.mxu0 0
  %4851 = vmatpush1.bf16.xpose.msra.mxu0 0
  %4852 = vmatprep.subr.bf16.mxu0 0
  %4853 = vmatpush1.bf16.xpose.msra.mxu0 0
  %4854 = vmatprep.subr.bf16.mxu0 0
  %4855 = vmatpush1.bf16.xpose.msra.mxu0 0
  %4856 = vmatprep.subr.bf16.mxu0 0
  %4857 = vmatpush1.bf16.xpose.msra.mxu0 0
  %4858 = vmatprep.subr.bf16.mxu0 0
  %4859 = vmatpush1.bf16.xpose.msra.mxu0 %v4842
  %4860 = vmatprep.subr.bf16.mxu0 0
  %4861 = vmatpush2.bf16.xpose.msra.mxu0 0
  %4862 = vmatprep.subr.bf16.mxu0 0
  %4863 = vmatpush2.bf16.xpose.msra.mxu0 0
  %4864 = vmatprep.subr.bf16.mxu0 0
  %4865 = vmatpush2.bf16.xpose.msra.mxu0 0
  %4866 = vmatprep.subr.bf16.mxu0 0
  %4867 = vmatpush2.bf16.xpose.msra.mxu0 0
  %4868 = vmatprep.subr.bf16.mxu0 0
  %4869 = vmatpush2.bf16.xpose.msra.mxu0 0
  %4870 = vmatprep.subr.bf16.mxu0 0
  %4871 = vmatpush2.bf16.xpose.msra.mxu0 0
  %4872 = vmatprep.subr.bf16.mxu0 0
  %4873 = vmatpush2.bf16.xpose.msra.mxu0 0
  %4874 = vmatprep.subr.bf16.mxu0 0
  %4875 = vmatpush2.bf16.xpose.msra.mxu0 0
  %4876 = vmatprep.mubr.bf16.mxu0 0
  %4877 = vmatmul.mubr.bf16.gmra.mxu0 %v4839
  %v4878 = vpop.f32.mrf.mxu0
  %v4879 = vadd.f32 0.0, %v4878
  %v4880 = vpop.f32.mrf.mxu0
  %v4881 = vpop.f32.mrf.mxu0
  %v4882 = vpop.f32.mrf.mxu0
  %4883 = vdwg.mxu0
  %v4884 = vmul.f32 %v4879, 0.35355338
  %v4885 = vsel %vm973, %v4884, -inf
  %4886 = vmax.xlane.f32.xlu0 %v4885
  %v4887 = vpop.xlane.xlu0 %4886
  %v4888 = vsub.f32 %v4884, %v4887
  %v4889 = vmul.f32 %v4888, 1.442695
  %v4890 = vpow.pop %v4889
  %v4891 = vsel %vm973, %v4890, 0.0
  %4892 = vadd.xlane.f32.xlu0 %v4891
  %v4893 = vpop.xlane.xlu0 %4892
  %v4894 = vrcp.pop %v4893
  %v4895 = vmul.f32 %v4890, %v4894
  %v4896 = vpack.c.bf16 %v4895, %v4895
  %v4898 = vsel %vm986, %v4896, 0
  %v4901 = vand.u32 %v4837, %v993
  %4903 = vmatprep.subr.bf16.mxu0 0
  %4904 = vmatpush1.bf16.msra.mxu0 0
  %4905 = vmatprep.subr.bf16.mxu0 0
  %4906 = vmatpush1.bf16.msra.mxu0 0
  %4907 = vmatprep.subr.bf16.mxu0 0
  %4908 = vmatpush1.bf16.msra.mxu0 0
  %4909 = vmatprep.subr.bf16.mxu0 0
  %4910 = vmatpush1.bf16.msra.mxu0 0
  %4911 = vmatprep.subr.bf16.mxu0 0
  %4912 = vmatpush1.bf16.msra.mxu0 0
  %4913 = vmatprep.subr.bf16.mxu0 0
  %4914 = vmatpush1.bf16.msra.mxu0 0
  %4915 = vmatprep.subr.bf16.mxu0 0
  %4916 = vmatpush1.bf16.msra.mxu0 0
  %4917 = vmatprep.subr.bf16.mxu0 0
  %4918 = vmatpush1.bf16.msra.mxu0 %v4901
  %4919 = vmatprep.subr.bf16.mxu0 0
  %4920 = vmatpush2.bf16.msra.mxu0 0
  %4921 = vmatprep.subr.bf16.mxu0 0
  %4922 = vmatpush2.bf16.msra.mxu0 0
  %4923 = vmatprep.subr.bf16.mxu0 0
  %4924 = vmatpush2.bf16.msra.mxu0 0
  %4925 = vmatprep.subr.bf16.mxu0 0
  %4926 = vmatpush2.bf16.msra.mxu0 0
  %4927 = vmatprep.subr.bf16.mxu0 0
  %4928 = vmatpush2.bf16.msra.mxu0 0
  %4929 = vmatprep.subr.bf16.mxu0 0
  %4930 = vmatpush2.bf16.msra.mxu0 0
  %4931 = vmatprep.subr.bf16.mxu0 0
  %4932 = vmatpush2.bf16.msra.mxu0 0
  %4933 = vmatprep.subr.bf16.mxu0 0
  %4934 = vmatpush2.bf16.msra.mxu0 0
  %4935 = vmatprep.mubr.bf16.mxu0 0
  %4936 = vmatmul.mubr.bf16.gmra.mxu0 %v4898
  %v4937 = vpop.f32.mrf.mxu0
  %v4938 = vadd.f32 0.0, %v4937
  %v4939 = vpop.f32.mrf.mxu0
  %v4940 = vpop.f32.mrf.mxu0
  %v4941 = vpop.f32.mrf.mxu0
  %4942 = vdwg.mxu0
  %v4943 = vpack.c.bf16 %v4938, %v4938
  %v4945 = vsel %vm925, %v4943, 0
  %v4948 = vsel %vm1454, %v3144, 0
  %4950 = vmatprep.subr.bf16.mxu0 0
  %4951 = vmatpush1.bf16.msra.mxu0 0
  %4952 = vmatprep.subr.bf16.mxu0 0
  %4953 = vmatpush1.bf16.msra.mxu0 0
  %4954 = vmatprep.subr.bf16.mxu0 0
  %4955 = vmatpush1.bf16.msra.mxu0 0
  %4956 = vmatprep.subr.bf16.mxu0 0
  %4957 = vmatpush1.bf16.msra.mxu0 0
  %4958 = vmatprep.subr.bf16.mxu0 0
  %4959 = vmatpush1.bf16.msra.mxu0 0
  %4960 = vmatprep.subr.bf16.mxu0 0
  %4961 = vmatpush1.bf16.msra.mxu0 0
  %4962 = vmatprep.subr.bf16.mxu0 0
  %4963 = vmatpush1.bf16.msra.mxu0 0
  %4964 = vmatprep.subr.bf16.mxu0 0
  %4965 = vmatpush1.bf16.msra.mxu0 %v4948
  %4966 = vmatprep.subr.bf16.mxu0 0
  %4967 = vmatpush2.bf16.msra.mxu0 0
  %4968 = vmatprep.subr.bf16.mxu0 0
  %4969 = vmatpush2.bf16.msra.mxu0 0
  %4970 = vmatprep.subr.bf16.mxu0 0
  %4971 = vmatpush2.bf16.msra.mxu0 0
  %4972 = vmatprep.subr.bf16.mxu0 0
  %4973 = vmatpush2.bf16.msra.mxu0 0
  %4974 = vmatprep.subr.bf16.mxu0 0
  %4975 = vmatpush2.bf16.msra.mxu0 0
  %4976 = vmatprep.subr.bf16.mxu0 0
  %4977 = vmatpush2.bf16.msra.mxu0 0
  %4978 = vmatprep.subr.bf16.mxu0 0
  %4979 = vmatpush2.bf16.msra.mxu0 0
  %4980 = vmatprep.subr.bf16.mxu0 0
  %4981 = vmatpush2.bf16.msra.mxu0 0
  %4982 = vmatprep.mubr.bf16.mxu0 0
  %4983 = vmatmul.mubr.bf16.gmra.mxu0 %v4945
  %v4984 = vpop.f32.mrf.mxu0
  %v4985 = vadd.f32 0.0, %v4984
  %v4986 = vpop.f32.mrf.mxu0
  %v4987 = vpop.f32.mrf.mxu0
  %v4988 = vpop.f32.mrf.mxu0
  %4989 = vdwg.mxu0
  %v4990 = vadd.f32 %v4486, %v4985
  %v4991 = vshrl.u32 %v4835, 16
  %v4993 = vrot.slane %v4991, 2
  %v4994 = vshll.u32 %v4835, 16
  %v4996 = vrot.slane %v4994, 3
  %v4997 = vor.u32 %v4993, %v4996
  %v4998 = vshrl.u32 %v4836, 16
  %v5000 = vrot.slane %v4998, 2
  %v5001 = vshll.u32 %v4836, 16
  %v5003 = vrot.slane %v5001, 3
  %v5004 = vor.u32 %v5000, %v5003
  %v5006 = vsel %vm925, %v4997, 0
  %v5009 = vsel %vm925, %v5004, 0
  %5011 = vmatprep.subr.bf16.mxu0 0
  %5012 = vmatpush1.bf16.xpose.msra.mxu0 0
  %5013 = vmatprep.subr.bf16.mxu0 0
  %5014 = vmatpush1.bf16.xpose.msra.mxu0 0
  %5015 = vmatprep.subr.bf16.mxu0 0
  %5016 = vmatpush1.bf16.xpose.msra.mxu0 0
  %5017 = vmatprep.subr.bf16.mxu0 0
  %5018 = vmatpush1.bf16.xpose.msra.mxu0 0
  %5019 = vmatprep.subr.bf16.mxu0 0
  %5020 = vmatpush1.bf16.xpose.msra.mxu0 0
  %5021 = vmatprep.subr.bf16.mxu0 0
  %5022 = vmatpush1.bf16.xpose.msra.mxu0 0
  %5023 = vmatprep.subr.bf16.mxu0 0
  %5024 = vmatpush1.bf16.xpose.msra.mxu0 0
  %5025 = vmatprep.subr.bf16.mxu0 0
  %5026 = vmatpush1.bf16.xpose.msra.mxu0 %v5009
  %5027 = vmatprep.subr.bf16.mxu0 0
  %5028 = vmatpush2.bf16.xpose.msra.mxu0 0
  %5029 = vmatprep.subr.bf16.mxu0 0
  %5030 = vmatpush2.bf16.xpose.msra.mxu0 0
  %5031 = vmatprep.subr.bf16.mxu0 0
  %5032 = vmatpush2.bf16.xpose.msra.mxu0 0
  %5033 = vmatprep.subr.bf16.mxu0 0
  %5034 = vmatpush2.bf16.xpose.msra.mxu0 0
  %5035 = vmatprep.subr.bf16.mxu0 0
  %5036 = vmatpush2.bf16.xpose.msra.mxu0 0
  %5037 = vmatprep.subr.bf16.mxu0 0
  %5038 = vmatpush2.bf16.xpose.msra.mxu0 0
  %5039 = vmatprep.subr.bf16.mxu0 0
  %5040 = vmatpush2.bf16.xpose.msra.mxu0 0
  %5041 = vmatprep.subr.bf16.mxu0 0
  %5042 = vmatpush2.bf16.xpose.msra.mxu0 0
  %5043 = vmatprep.mubr.bf16.mxu0 0
  %5044 = vmatmul.mubr.bf16.gmra.mxu0 %v5006
  %v5045 = vpop.f32.mrf.mxu0
  %v5046 = vadd.f32 0.0, %v5045
  %v5047 = vpop.f32.mrf.mxu0
  %v5048 = vpop.f32.mrf.mxu0
  %v5049 = vpop.f32.mrf.mxu0
  %5050 = vdwg.mxu0
  %v5051 = vmul.f32 %v5046, 0.35355338
  %v5052 = vsel %vm973, %v5051, -inf
  %5053 = vmax.xlane.f32.xlu0 %v5052
  %v5054 = vpop.xlane.xlu0 %5053
  %v5055 = vsub.f32 %v5051, %v5054
  %v5056 = vmul.f32 %v5055, 1.442695
  %v5057 = vpow.pop %v5056
  %v5058 = vsel %vm973, %v5057, 0.0
  %5059 = vadd.xlane.f32.xlu0 %v5058
  %v5060 = vpop.xlane.xlu0 %5059
  %v5061 = vrcp.pop %v5060
  %v5062 = vmul.f32 %v5057, %v5061
  %v5063 = vpack.c.bf16 %v5062, %v5062
  %v5064 = vshrl.u32 %v4837, 16
  %v5066 = vrot.slane %v5064, 2
  %v5067 = vshll.u32 %v4837, 16
  %v5069 = vrot.slane %v5067, 3
  %v5070 = vor.u32 %v5066, %v5069
  %v5072 = vsel %vm986, %v5063, 0
  %v5075 = vand.u32 %v5070, %v993
  %5077 = vmatprep.subr.bf16.mxu0 0
  %5078 = vmatpush1.bf16.msra.mxu0 0
  %5079 = vmatprep.subr.bf16.mxu0 0
  %5080 = vmatpush1.bf16.msra.mxu0 0
  %5081 = vmatprep.subr.bf16.mxu0 0
  %5082 = vmatpush1.bf16.msra.mxu0 0
  %5083 = vmatprep.subr.bf16.mxu0 0
  %5084 = vmatpush1.bf16.msra.mxu0 0
  %5085 = vmatprep.subr.bf16.mxu0 0
  %5086 = vmatpush1.bf16.msra.mxu0 0
  %5087 = vmatprep.subr.bf16.mxu0 0
  %5088 = vmatpush1.bf16.msra.mxu0 0
  %5089 = vmatprep.subr.bf16.mxu0 0
  %5090 = vmatpush1.bf16.msra.mxu0 0
  %5091 = vmatprep.subr.bf16.mxu0 0
  %5092 = vmatpush1.bf16.msra.mxu0 %v5075
  %5093 = vmatprep.subr.bf16.mxu0 0
  %5094 = vmatpush2.bf16.msra.mxu0 0
  %5095 = vmatprep.subr.bf16.mxu0 0
  %5096 = vmatpush2.bf16.msra.mxu0 0
  %5097 = vmatprep.subr.bf16.mxu0 0
  %5098 = vmatpush2.bf16.msra.mxu0 0
  %5099 = vmatprep.subr.bf16.mxu0 0
  %5100 = vmatpush2.bf16.msra.mxu0 0
  %5101 = vmatprep.subr.bf16.mxu0 0
  %5102 = vmatpush2.bf16.msra.mxu0 0
  %5103 = vmatprep.subr.bf16.mxu0 0
  %5104 = vmatpush2.bf16.msra.mxu0 0
  %5105 = vmatprep.subr.bf16.mxu0 0
  %5106 = vmatpush2.bf16.msra.mxu0 0
  %5107 = vmatprep.subr.bf16.mxu0 0
  %5108 = vmatpush2.bf16.msra.mxu0 0
  %5109 = vmatprep.mubr.bf16.mxu0 0
  %5110 = vmatmul.mubr.bf16.gmra.mxu0 %v5072
  %v5111 = vpop.f32.mrf.mxu0
  %v5112 = vadd.f32 0.0, %v5111
  %v5113 = vpop.f32.mrf.mxu0
  %v5114 = vpop.f32.mrf.mxu0
  %v5115 = vpop.f32.mrf.mxu0
  %5116 = vdwg.mxu0
  %v5117 = vpack.c.bf16 %v5112, %v5112
  %v5119 = vsel %vm925, %v5117, 0
  %5121 = vmatprep.subr.bf16.mxu0 0
  %5122 = vmatpush1.bf16.msra.mxu0 0
  %5123 = vmatprep.subr.bf16.mxu0 0
  %5124 = vmatpush1.bf16.msra.mxu0 0
  %5125 = vmatprep.subr.bf16.mxu0 0
  %5126 = vmatpush1.bf16.msra.mxu0 0
  %5127 = vmatprep.subr.bf16.mxu0 0
  %5128 = vmatpush1.bf16.msra.mxu0 0
  %5129 = vmatprep.subr.bf16.mxu0 0
  %5130 = vmatpush1.bf16.msra.mxu0 0
  %5131 = vmatprep.subr.bf16.mxu0 0
  %5132 = vmatpush1.bf16.msra.mxu0 0
  %5133 = vmatprep.subr.bf16.mxu0 0
  %5134 = vmatpush1.bf16.msra.mxu0 0
  %5135 = vmatprep.subr.bf16.mxu0 0
  %5136 = vmatpush1.bf16.msra.mxu0 %v4948
  %5137 = vmatprep.subr.bf16.mxu0 0
  %5138 = vmatpush2.bf16.msra.mxu0 0
  %5139 = vmatprep.subr.bf16.mxu0 0
  %5140 = vmatpush2.bf16.msra.mxu0 0
  %5141 = vmatprep.subr.bf16.mxu0 0
  %5142 = vmatpush2.bf16.msra.mxu0 0
  %5143 = vmatprep.subr.bf16.mxu0 0
  %5144 = vmatpush2.bf16.msra.mxu0 0
  %5145 = vmatprep.subr.bf16.mxu0 0
  %5146 = vmatpush2.bf16.msra.mxu0 0
  %5147 = vmatprep.subr.bf16.mxu0 0
  %5148 = vmatpush2.bf16.msra.mxu0 0
  %5149 = vmatprep.subr.bf16.mxu0 0
  %5150 = vmatpush2.bf16.msra.mxu0 0
  %5151 = vmatprep.subr.bf16.mxu0 0
  %5152 = vmatpush2.bf16.msra.mxu0 0
  %5153 = vmatprep.mubr.bf16.mxu0 0
  %5154 = vmatmul.mubr.bf16.gmra.mxu0 %v5119
  %v5155 = vpop.f32.mrf.mxu0
  %v5156 = vadd.f32 0.0, %v5155
  %v5157 = vpop.f32.mrf.mxu0
  %v5158 = vpop.f32.mrf.mxu0
  %v5159 = vpop.f32.mrf.mxu0
  %5160 = vdwg.mxu0
  %v5161 = vadd.f32 %v4657, %v5156
  %5162 = vst.msk [vmem:[#allocation2] sm:$0x1f] %vm2765, %v4990
  %5163 = vst.msk [vmem:[#allocation2 + $0x5] sm:$0x1f] %vm2765, %v5161
  %v5164 = vld [vmem:[#allocation2] sm:$0xff]
  %v5165 = vld [vmem:[#allocation2 + $0x8] sm:$0x3]
  %v5167 = vlaneseq
  %v5168 = vshrl.u32 %v5167, 7
  %v5169 = vsub.s32 0, %v5168
  %v5170 = vrot.slane %v3146, %v5169
  %v5172 = vadd.f32 %v5164, %v5170
  %v5173 = vadd.f32 %v5165, %v5170
  %v5174 = vadd.f32 %v3025, %v5172
  %v5175 = vadd.f32 %v3026, %v5173
  %s5176 = scalar_lea.vmem %s15, 1
  %v5177 = vld [vmem:[%s5176] sm:$0x1]
  %s5178 = scalar_lea.vmem %s16, 1
  %v5179 = vld [vmem:[%s5178] sm:$0x1]
  %v5180 = vsel %vm631, %v5174, 0.0
  %5181 = vadd.xlane.f32.xlu0 %v5180
  %v5182 = vpop.xlane.xlu0 %5181
  %v5183 = vsel %vm635, %v5175, 0.0
  %5184 = vadd.xlane.f32.xlu0 %v5183
  %v5185 = vpop.xlane.xlu0 %5184
  %v5186 = vmul.f32 %v5182, %v639
  %v5187 = vmul.f32 %v5185, %v639
  %v5188 = vsub.f32 %v5174, %v5186
  %v5189 = vsub.f32 %v5175, %v5187
  %v5190 = vmul.f32 %v5188, %v5188
  %v5191 = vmul.f32 %v5189, %v5189
  %v5192 = vsel %vm631, %v5190, 0.0
  %5193 = vadd.xlane.f32.xlu0 %v5192
  %v5194 = vpop.xlane.xlu0 %5193
  %v5195 = vsel %vm635, %v5191, 0.0
  %5196 = vadd.xlane.f32.xlu0 %v5195
  %v5197 = vpop.xlane.xlu0 %5196
  %v5198 = vmul.f32 %v5194, %v639
  %v5199 = vmul.f32 %v5197, %v639
  %v5200 = vadd.f32 %v5198, 1e-06
  %v5201 = vadd.f32 %v5199, 1e-06
  %v5202 = vrsqrt.pop %v5200
  %v5203 = vrsqrt.pop %v5201
  %v5204 = vmul.f32 %v5188, %v5202
  %v5205 = vmul.f32 %v5189, %v5203
  %v5207 = vlaneseq
  %v5208 = vshrl.u32 %v5207, 7
  %v5209 = vsub.s32 0, %v5208
  %v5210 = vrot.slane %v5177, %v5209
  %v5212 = vmul.f32 %v5204, %v5210
  %v5213 = vmul.f32 %v5205, %v5210
  %v5215 = vlaneseq
  %v5216 = vshrl.u32 %v5215, 7
  %v5217 = vsub.s32 0, %v5216
  %v5218 = vrot.slane %v5179, %v5217
  %v5220 = vadd.f32 %v5212, %v5218
  %v5221 = vadd.f32 %v5213, %v5218
  %v5222 = vpack.c.bf16 %v5221, %v5220
  %s5223 = scalar_lea.vmem %s17, 16
  %v5224 = vld [vmem:[%s5223] sm:$0xf]
  %v5225 = vld [vmem:[%s5223 + $0x4] sm:$0xf]
  %v5226 = vld [vmem:[%s5223 + $0x8] sm:$0xf]
  %v5227 = vld [vmem:[%s5223 + $0xc] sm:$0xf]
  %s5228 = scalar_lea.vmem %s18, 1
  %v5229 = vld [vmem:[%s5228] sm:$0x1]
  %v5231 = vlaneseq
  %v5232 = vshrl.u32 %v5231, 7
  %v5233 = vsub.s32 0, %v5232
  %v5234 = vrot.slane %v5229, %v5233
  %v5240 = vunpack.c.l.b16 %v5224
  %v5241 = vunpack.c.l.b16 %v5225
  %v5242 = vunpack.c.l.b16 %v5226
  %v5243 = vunpack.c.l.b16 %v5227
  %v5244 = vpack.c.b16 %v5241, %v5240
  %v5245 = vpack.c.b16 %v5243, %v5242
  %v5249 = vsel %vm631, %v5222, 0
  %5251 = vmatprep.subr.bf16.mxu0 0
  %5252 = vmatpush1.bf16.msra.mxu0 0
  %5253 = vmatprep.subr.bf16.mxu0 0
  %5254 = vmatpush1.bf16.msra.mxu0 0
  %5255 = vmatprep.subr.bf16.mxu0 0
  %5256 = vmatpush1.bf16.msra.mxu0 0
  %5257 = vmatprep.subr.bf16.mxu0 0
  %5258 = vmatpush1.bf16.msra.mxu0 0
  %5259 = vmatprep.subr.bf16.mxu0 0
  %5260 = vmatpush1.bf16.msra.mxu0 0
  %5261 = vmatprep.subr.bf16.mxu0 0
  %5262 = vmatpush1.bf16.msra.mxu0 0
  %5263 = vmatprep.subr.bf16.mxu0 0
  %5264 = vmatpush1.bf16.msra.mxu0 %v5245
  %5265 = vmatprep.subr.bf16.mxu0 0
  %5266 = vmatpush1.bf16.msra.mxu0 %v5244
  %5267 = vmatprep.subr.bf16.mxu0 0
  %5268 = vmatpush2.bf16.msra.mxu0 0
  %5269 = vmatprep.subr.bf16.mxu0 0
  %5270 = vmatpush2.bf16.msra.mxu0 0
  %5271 = vmatprep.subr.bf16.mxu0 0
  %5272 = vmatpush2.bf16.msra.mxu0 0
  %5273 = vmatprep.subr.bf16.mxu0 0
  %5274 = vmatpush2.bf16.msra.mxu0 0
  %5275 = vmatprep.subr.bf16.mxu0 0
  %5276 = vmatpush2.bf16.msra.mxu0 0
  %5277 = vmatprep.subr.bf16.mxu0 0
  %5278 = vmatpush2.bf16.msra.mxu0 0
  %5279 = vmatprep.subr.bf16.mxu0 0
  %5280 = vmatpush2.bf16.msra.mxu0 0
  %5281 = vmatprep.subr.bf16.mxu0 0
  %5282 = vmatpush2.bf16.msra.mxu0 0
  %5283 = vmatprep.mubr.bf16.mxu0 0
  %5284 = vmatmul.mubr.bf16.gmra.mxu0 %v5249
  %v5285 = vpop.f32.mrf.mxu0
  %v5286 = vadd.f32 %v5234, %v5285
  %v5287 = vpop.f32.mrf.mxu0
  %v5288 = vpop.f32.mrf.mxu0
  %v5289 = vadd.f32 %v5234, %v5288
  %v5290 = vpop.f32.mrf.mxu0
  %5291 = vdwg.mxu0
  %v5292 = vmul.f32 %v5286, %v5286
  %v5293 = vmul.f32 %v5289, %v5289
  %v5294 = vmul.f32 %v5286, %v5292
  %v5295 = vmul.f32 %v5289, %v5293
  %v5296 = vmul.f32 %v5294, 0.044715
  %v5297 = vmul.f32 %v5295, 0.044715
  %v5298 = vadd.f32 %v5286, %v5296
  %v5299 = vadd.f32 %v5289, %v5297
  %v5300 = vmul.f32 %v5298, 0.7978846
  %v5301 = vmul.f32 %v5299, 0.7978846
  %v5302 = vtanh.pop %v5300
  %v5303 = vtanh.pop %v5301
  %v5304 = vadd.f32 %v5302, 1.0
  %v5305 = vadd.f32 %v5303, 1.0
  %v5306 = vmul.f32 %v5304, 0.5
  %v5307 = vmul.f32 %v5305, 0.5
  %v5308 = vmul.f32 %v5286, %v5306
  %v5309 = vmul.f32 %v5289, %v5307
  %v5310 = vpack.c.bf16 %v5309, %v5308
  %s5311 = scalar_lea.vmem %s19, 64
  %v5312 = vld [vmem:[%s5311] sm:$0xf]
  %v5313 = vld [vmem:[%s5311 + $0x4] sm:$0xf]
  %v5314 = vld [vmem:[%s5311 + $0x8] sm:$0xf]
  %v5315 = vld [vmem:[%s5311 + $0xc] sm:$0xf]
  %v5316 = vld [vmem:[%s5311 + $0x10] sm:$0xf]
  %v5317 = vld [vmem:[%s5311 + $0x14] sm:$0xf]
  %v5318 = vld [vmem:[%s5311 + $0x18] sm:$0xf]
  %v5319 = vld [vmem:[%s5311 + $0x1c] sm:$0xf]
  %v5320 = vld [vmem:[%s5311 + $0x20] sm:$0xf]
  %v5321 = vld [vmem:[%s5311 + $0x24] sm:$0xf]
  %v5322 = vld [vmem:[%s5311 + $0x28] sm:$0xf]
  %v5323 = vld [vmem:[%s5311 + $0x2c] sm:$0xf]
  %v5324 = vld [vmem:[%s5311 + $0x30] sm:$0xf]
  %v5325 = vld [vmem:[%s5311 + $0x34] sm:$0xf]
  %v5326 = vld [vmem:[%s5311 + $0x38] sm:$0xf]
  %v5327 = vld [vmem:[%s5311 + $0x3c] sm:$0xf]
  %v5344 = vunpack.c.l.b16 %v5312
  %v5345 = vunpack.c.l.b16 %v5313
  %v5346 = vunpack.c.l.b16 %v5314
  %v5347 = vunpack.c.l.b16 %v5315
  %v5348 = vunpack.c.l.b16 %v5316
  %v5349 = vunpack.c.l.b16 %v5317
  %v5350 = vunpack.c.l.b16 %v5318
  %v5351 = vunpack.c.l.b16 %v5319
  %v5352 = vunpack.c.l.b16 %v5320
  %v5353 = vunpack.c.l.b16 %v5321
  %v5354 = vunpack.c.l.b16 %v5322
  %v5355 = vunpack.c.l.b16 %v5323
  %v5356 = vunpack.c.l.b16 %v5324
  %v5357 = vunpack.c.l.b16 %v5325
  %v5358 = vunpack.c.l.b16 %v5326
  %v5359 = vunpack.c.l.b16 %v5327
  %v5360 = vpack.c.b16 %v5345, %v5344
  %v5361 = vpack.c.b16 %v5347, %v5346
  %v5362 = vpack.c.b16 %v5349, %v5348
  %v5363 = vpack.c.b16 %v5351, %v5350
  %v5364 = vpack.c.b16 %v5353, %v5352
  %v5365 = vpack.c.b16 %v5355, %v5354
  %v5366 = vpack.c.b16 %v5357, %v5356
  %v5367 = vpack.c.b16 %v5359, %v5358
  %5376 = vmatprep.subr.bf16.mxu0 0
  %5377 = vmatpush1.bf16.msra.mxu0 %v5367
  %5378 = vmatprep.subr.bf16.mxu0 0
  %5379 = vmatpush1.bf16.msra.mxu0 %v5366
  %5380 = vmatprep.subr.bf16.mxu0 0
  %5381 = vmatpush1.bf16.msra.mxu0 %v5365
  %5382 = vmatprep.subr.bf16.mxu0 0
  %5383 = vmatpush1.bf16.msra.mxu0 %v5364
  %5384 = vmatprep.subr.bf16.mxu0 0
  %5385 = vmatpush1.bf16.msra.mxu0 %v5363
  %5386 = vmatprep.subr.bf16.mxu0 0
  %5387 = vmatpush1.bf16.msra.mxu0 %v5362
  %5388 = vmatprep.subr.bf16.mxu0 0
  %5389 = vmatpush1.bf16.msra.mxu0 %v5361
  %5390 = vmatprep.subr.bf16.mxu0 0
  %5391 = vmatpush1.bf16.msra.mxu0 %v5360
  %5392 = vmatprep.subr.bf16.mxu0 0
  %5393 = vmatpush2.bf16.msra.mxu0 0
  %5394 = vmatprep.subr.bf16.mxu0 0
  %5395 = vmatpush2.bf16.msra.mxu0 0
  %5396 = vmatprep.subr.bf16.mxu0 0
  %5397 = vmatpush2.bf16.msra.mxu0 0
  %5398 = vmatprep.subr.bf16.mxu0 0
  %5399 = vmatpush2.bf16.msra.mxu0 0
  %5400 = vmatprep.subr.bf16.mxu0 0
  %5401 = vmatpush2.bf16.msra.mxu0 0
  %5402 = vmatprep.subr.bf16.mxu0 0
  %5403 = vmatpush2.bf16.msra.mxu0 0
  %5404 = vmatprep.subr.bf16.mxu0 0
  %5405 = vmatpush2.bf16.msra.mxu0 0
  %5406 = vmatprep.subr.bf16.mxu0 0
  %5407 = vmatpush2.bf16.msra.mxu0 0
  %5408 = vmatprep.mubr.bf16.mxu0 0
  %5409 = vmatmul.mubr.bf16.gmra.mxu0 %v5310
  %v5410 = vpop.f32.mrf.mxu0
  %v5411 = vadd.f32 0.0, %v5410
  %v5412 = vpop.f32.mrf.mxu0
  %v5413 = vpop.f32.mrf.mxu0
  %v5414 = vadd.f32 0.0, %v5413
  %v5415 = vpop.f32.mrf.mxu0
  %5416 = vdwg.mxu0
  %v5417 = vadd.f32 %v5174, %v5411
  %v5418 = vadd.f32 %v5175, %v5414
  %s5419 = scalar_lea.vmem %s20, 1
  %v5420 = vld [vmem:[%s5419] sm:$0x1]
  %v5422 = vlaneseq
  %v5423 = vshrl.u32 %v5422, 7
  %v5424 = vsub.s32 0, %v5423
  %v5425 = vrot.slane %v5420, %v5424
  %v5427 = vadd.f32 %v5417, %v5425
  %v5428 = vadd.f32 %v5418, %v5425
  %v5429 = vld [vmem:[%s21] sm:$0x1]
  %v5430 = vld [vmem:[%s22] sm:$0x1]
  %v5431 = vsel %vm631, %v5427, 0.0
  %5432 = vadd.xlane.f32.xlu0 %v5431
  %v5433 = vpop.xlane.xlu0 %5432
  %v5434 = vsel %vm635, %v5428, 0.0
  %5435 = vadd.xlane.f32.xlu0 %v5434
  %v5436 = vpop.xlane.xlu0 %5435
  %v5437 = vmul.f32 %v5433, %v639
  %v5438 = vmul.f32 %v5436, %v639
  %v5439 = vsub.f32 %v5427, %v5437
  %v5440 = vsub.f32 %v5428, %v5438
  %v5441 = vmul.f32 %v5439, %v5439
  %v5442 = vmul.f32 %v5440, %v5440
  %v5443 = vsel %vm631, %v5441, 0.0
  %5444 = vadd.xlane.f32.xlu0 %v5443
  %v5445 = vpop.xlane.xlu0 %5444
  %v5446 = vsel %vm635, %v5442, 0.0
  %5447 = vadd.xlane.f32.xlu0 %v5446
  %v5448 = vpop.xlane.xlu0 %5447
  %v5449 = vmul.f32 %v5445, %v639
  %v5450 = vmul.f32 %v5448, %v639
  %v5451 = vadd.f32 %v5449, 1e-06
  %v5452 = vadd.f32 %v5450, 1e-06
  %v5453 = vrsqrt.pop %v5451
  %v5454 = vrsqrt.pop %v5452
  %v5455 = vmul.f32 %v5439, %v5453
  %v5456 = vmul.f32 %v5440, %v5454
  %v5458 = vlaneseq
  %v5459 = vshrl.u32 %v5458, 7
  %v5460 = vsub.s32 0, %v5459
  %v5461 = vrot.slane %v5429, %v5460
  %v5463 = vmul.f32 %v5455, %v5461
  %v5464 = vmul.f32 %v5456, %v5461
  %v5466 = vlaneseq
  %v5467 = vshrl.u32 %v5466, 7
  %v5468 = vsub.s32 0, %v5467
  %v5469 = vrot.slane %v5430, %v5468
  %v5471 = vadd.f32 %v5463, %v5469
  %v5472 = vadd.f32 %v5464, %v5469
  %5473 = vst.msk [vmem:[%s23] sm:$0xff] %vm631, %v5471
  %5474 = vst.msk [vmem:[%s23 + $0x8] sm:$0x3] %vm635, %v5472
  // Predicated region
  $region94: #{blip_base_forward.1} parent=0 // pred_check
    _
  $region95: #{blip_base_forward.1} parent=0 // pred_check_branch
    %5476 = sbr.rel (0) target = $region97
  $region96: #{blip_base_forward.1} parent=0 // pred_region
    _
  $region97: #{blip_base_forward.1} parent=0 // pred_fallthru
    _
  // Predicated region
  $region98: #{blip_base_forward.1} parent=0 // pred_check
    _
  $region99: #{blip_base_forward.1} parent=0 // pred_check_branch
    %5478 = sbr.rel (0) target = $region101
  $region100: #{blip_base_forward.1} parent=0 // pred_region
    _
  $region101: #{blip_base_forward.1} parent=0 // pred_fallthru
    _

</llo_original>
